<compile_context>
chip_gen: v7x
topology: tpu7x:2x2x1
jax: 0.10.0
libtpu: 0.0.40
codegen_flags: <defaults>
</compile_context>

<pallas_src>
import functools

import jax
import jax.numpy as jnp
from jax import lax
from jax.experimental import pallas as pl
from jax.experimental.pallas import tpu as pltpu

INPUT_NC = 3
OUTPUT_NC = 3
NGF = 4                 # local ngf
N_DOWN_G = 2            # n_downsample_global
N_BLOCKS_G = 2          # n_blocks_global
N_BLOCKS_L = 2          # n_blocks_local
BN_EPS = 1e-5           # PyTorch BatchNorm2d default


def _round_up(x, m):
    return -(-x // m) * m


# --------------------------- fused conv-layer kernel -------------------------

def _fused_conv_kernel(*refs, act, use_bn, groups, count, has_res):
    """Whole conv(+BN+act+residual) layer in one Pallas invocation.

    refs = (w, a, b[, gamma, beta][, residual], out)
      w: (Co, Kp) bf16          im2col weight matrix (rows = output channels)
      a: (Kp, M)  bf16          im2col patch matrix  (M = N*Ho*Wo on lanes)
      b: (Co, 1)  f32           conv bias
      gamma/beta: (Co//groups, 1) f32
      residual:   (Co, M) bf16
      out:        (Co, M) bf16
    """
    w_ref, a_ref, b_ref = refs[:3]
    rest = list(refs[3:])
    g_ref = bt_ref = r_ref = None
    if use_bn:
        g_ref, bt_ref = rest[0], rest[1]
        rest = rest[2:]
    if has_res:
        r_ref = rest[0]
        rest = rest[1:]
    o_ref = rest[0]

    # (Co,Kp) @ (Kp,M) -> (Co,M): the large M dim sits on lanes (lane-dense
    # unmasked store, full MXU column use).  Result stays in vregs/VMEM.
    y = jnp.dot(w_ref[...], a_ref[...], preferred_element_type=jnp.float32)
    y = y + b_ref[...]

    if use_bn:
        s = jnp.sum(y, axis=1, keepdims=True)            # lane reduce -> XLU
        ss = jnp.sum(y * y, axis=1, keepdims=True)
        if groups > 1:                                    # ConvT parity pooling
            cg = y.shape[0] // groups
            s = sum(s[g * cg:(g + 1) * cg] for g in range(groups))
            ss = sum(ss[g * cg:(g + 1) * cg] for g in range(groups))
        inv = 1.0 / count
        mean = s * inv
        var = jnp.maximum(ss * inv - mean * mean, 0.0)    # biased (train) var
        scale = g_ref[...] * lax.rsqrt(var + BN_EPS)      # EUP
        shift = bt_ref[...] - mean * scale
        if groups > 1:
            scale = jnp.concatenate([scale] * groups, axis=0)
            shift = jnp.concatenate([shift] * groups, axis=0)
        y = y * scale + shift

    if act == "relu":
        y = jnp.maximum(y, 0.0)
    elif act == "tanh":
        y = jnp.tanh(y)
    if has_res:
        y = y + r_ref[...].astype(jnp.float32)            # residual AFTER act
    o_ref[...] = y.astype(o_ref.dtype)


def _fused_conv(w_mat, patches, bias, gamma=None, beta=None, *, act="none",
                groups=1, residual=None, out_dtype=jnp.bfloat16):
    """Single-invocation fused layer; everything resident in VMEM (<2 MiB here).
    # TODO(synk): no megacore split on v7x - fusing BN batch stats into the
    # layer would need a cross-core reduction; model is overhead-bound anyway.
    """
    co, kp = w_mat.shape
    kp2, m = patches.shape
    assert kp == kp2
    use_bn = gamma is not None
    args = [w_mat, patches, bias.reshape(-1, 1).astype(jnp.float32)]
    if use_bn:
        args += [gamma.reshape(-1, 1).astype(jnp.float32),
                 beta.reshape(-1, 1).astype(jnp.float32)]
    if residual is not None:
        args.append(residual)
    vmem = pl.BlockSpec(memory_space=pltpu.MemorySpace.VMEM)
    return pl.pallas_call(
        functools.partial(_fused_conv_kernel, act=act, use_bn=use_bn,
                          groups=groups, count=float(groups * m),
                          has_res=residual is not None),
        out_shape=jax.ShapeDtypeStruct((co, m), out_dtype),
        in_specs=[vmem] * len(args),
        out_specs=vmem,
    )(*args)


# ------------------------------ layer glue -----------------------------------

def _pad_vec(v, n, fill=0.0):
    out = jnp.full((n,), fill, jnp.float32)
    return out.at[:v.shape[0]].set(v.astype(jnp.float32))


def _im2col_cf(x, kh, kw, stride, pad, pad_mode):
    """Channel-first im2col: x (C,N,H,W) -> patches (Kp, N*Ho*Wo) bf16.
    K is tap-major (kh, kw, C) and zero-padded up to a multiple of 128.
    # TODO(synk): patch extraction is still materialized by XLA in HBM; fusing
    # it into the kernel via halo BlockSpec windows would remove that traffic
    # at production resolutions."""
    c, n, h, w = x.shape
    if pad > 0:
        x = jnp.pad(x, ((0, 0), (0, 0), (pad, pad), (pad, pad)), mode=pad_mode)
    x = x.astype(jnp.bfloat16)
    ho = (h + 2 * pad - kh) // stride + 1
    wo = (w + 2 * pad - kw) // stride + 1
    m = n * ho * wo
    cols = []
    for di in range(kh):
        for dj in range(kw):
            sl = x[:, :, di:di + (ho - 1) * stride + 1:stride,
                         dj:dj + (wo - 1) * stride + 1:stride]
            cols.append(sl.reshape(c, m))
    k = kh * kw * c
    kp = _round_up(k, 128)
    if kp > k:
        cols.append(jnp.zeros((kp - k, m), jnp.bfloat16))
    return jnp.concatenate(cols, axis=0), (n, ho, wo)


def _conv_weight_mat(w, cin_p, cout_p, kp):
    """Conv2d weight (Cout,Cin,kh,kw) -> (Cout_p, Kp) bf16, K tap-major
    (kh, kw, Cin_p); padded channels / taps are exact zeros."""
    cout, cin, kh, kw = w.shape
    wt = jnp.zeros((cout_p, kh, kw, cin_p), jnp.float32)
    wt = wt.at[:cout, :, :, :cin].set(jnp.transpose(w, (0, 2, 3, 1)))
    wm = wt.reshape(cout_p, kh * kw * cin_p)
    wm = jnp.pad(wm, ((0, 0), (0, kp - kh * kw * cin_p)))
    return wm.astype(jnp.bfloat16)


def conv_layer(x, cp, bp=None, *, stride=1, pad=0, pad_mode="constant",
               act="relu", residual=None):
    """Conv2d (+BatchNorm2d batch-stats) (+act) (+residual), one Pallas call.
    x: (Cin_p, N, H, W) bf16/f32 channel-first; returns (Cout_p, N, Ho, Wo) bf16."""
    w, b = cp["w"], cp["b"]
    cout, _, kh, kw = w.shape
    cout_p = _round_up(cout, 8)
    patches, (n, ho, wo) = _im2col_cf(x, kh, kw, stride, pad, pad_mode)
    wm = _conv_weight_mat(w, x.shape[0], cout_p, patches.shape[0])
    bias = _pad_vec(b, cout_p)
    gamma = beta = None
    if bp is not None:
        gamma = _pad_vec(bp["g"], cout_p, 1.0)
        beta = _pad_vec(bp["b"], cout_p, 0.0)
    r = None if residual is None else residual.reshape(cout_p, n * ho * wo)
    y = _fused_conv(wm, patches, bias, gamma, beta, act=act, residual=r)
    return y.reshape(cout_p, n, ho, wo)


def conv_transpose_bn_relu(x, cp, bp):
    """ConvTranspose2d(k=3,s=2,p=1,output_padding=1) -> BN -> ReLU as a single
    fused sub-pixel conv: (4*Cout, 4*Cin) x (4*Cin, M) with BN stats pooled
    over the 4 output-parity groups inside the kernel, then pixel shuffle."""
    w, b = cp["w"], cp["b"]                     # (Cin, Cout, 3, 3), (Cout,)
    cin, cout, kh, kw = w.shape
    assert kh == 3 and kw == 3
    cin_p, n, h, wd = x.shape
    cout_p = _round_up(cout, 8)
    m = n * h * wd

    xp = jnp.pad(x, ((0, 0), (0, 0), (0, 1), (0, 1))).astype(jnp.bfloat16)
    cols = [xp[:, :, dy:dy + h, dx:dx + wd].reshape(cin_p, m)
            for dy in (0, 1) for dx in (0, 1)]
    k = 4 * cin_p
    kp = _round_up(k, 128)
    if kp > k:
        cols.append(jnp.zeros((kp - k, m), jnp.bfloat16))
    patches = jnp.concatenate(cols, axis=0)     # K order = (dy, dx, ci)

    # transposed-conv tap used by (output parity, input delta); missing -> 0
    ktap = {(0, 0): 1, (1, 0): 2, (1, 1): 0}
    weq = jnp.zeros((2, 2, cout_p, 2, 2, cin_p), jnp.float32)
    for py in (0, 1):
        for px in (0, 1):
            for dy in (0, 1):
                for dx in (0, 1):
                    if (py, dy) in ktap and (px, dx) in ktap:
                        weq = weq.at[py, px, :cout, dy, dx, :cin].set(
                            w[:, :, ktap[(py, dy)], ktap[(px, dx)]].T)
    wm = weq.reshape(4 * cout_p, 4 * cin_p)
    if kp > 4 * cin_p:
        wm = jnp.pad(wm, ((0, 0), (0, kp - 4 * cin_p)))
    wm = wm.astype(jnp.bfloat16)

    bias = jnp.tile(_pad_vec(b, cout_p), 4)     # per parity group
    gamma = _pad_vec(bp["g"], cout_p, 1.0)
    beta = _pad_vec(bp["b"], cout_p, 0.0)
    y = _fused_conv(wm, patches, bias, gamma, beta, act="relu", groups=4)

    # pixel shuffle: rows (py,px,co) x cols (n,h,w) -> (co, n, 2h, 2w)
    y = y.reshape(2, 2, cout_p, n, h, wd)
    y = jnp.transpose(y, (2, 3, 4, 0, 5, 1)).reshape(cout_p, n, 2 * h, 2 * wd)
    return y


def avg_pool_3x3_s2(x):
    """AvgPool2d(3, stride=2, padding=1, count_include_pad=False), (C,N,H,W)."""
    # TODO(synk): pooling stays as lax.reduce_window glue; all heavy conv/norm
    # compute runs in the fused Pallas kernels.
    win, strides = (1, 1, 3, 3), (1, 1, 2, 2)
    padcfg = [(0, 0), (0, 0), (1, 1), (1, 1)]
    xf = x.astype(jnp.float32)
    sums = lax.reduce_window(xf, 0.0, lax.add, win, strides, padcfg)
    ones = jnp.ones((1, 1) + x.shape[2:], jnp.float32)
    cnt = lax.reduce_window(ones, 0.0, lax.add, win, strides, padcfg)
    return (sums / cnt).astype(x.dtype)


# ----------------------------- model definition ------------------------------

def init_params(key):
    kit = iter(jax.random.split(key, 256))

    def conv(cout, cin, k):
        w = 0.05 * jax.random.normal(next(kit), (cout, cin, k, k), jnp.float32)
        b = 0.02 * jax.random.normal(next(kit), (cout,), jnp.float32)
        return {"w": w, "b": b}

    def convT(cin, cout, k):
        w = 0.05 * jax.random.normal(next(kit), (cin, cout, k, k), jnp.float32)
        b = 0.02 * jax.random.normal(next(kit), (cout,), jnp.float32)
        return {"w": w, "b": b}

    def bn(c):
        return {"g": jnp.ones((c,), jnp.float32), "b": jnp.zeros((c,), jnp.float32)}

    def resblock(dim):
        return {"conv1": conv(dim, dim, 3), "bn1": bn(dim),
                "conv2": conv(dim, dim, 3), "bn2": bn(dim)}

    # --- truncated GlobalGenerator (last ReflectionPad/Conv7/Tanh removed) ---
    ngf_g = NGF * 2  # ngf * 2 ** n_local_enhancers
    g = {"conv0": conv(ngf_g, INPUT_NC, 7), "bn0": bn(ngf_g), "down": [], "up": []}
    for i in range(N_DOWN_G):
        mult = 2 ** i
        g["down"].append({"conv": conv(ngf_g * mult * 2, ngf_g * mult, 3),
                          "bn": bn(ngf_g * mult * 2)})
    mult = 2 ** N_DOWN_G
    g["res"] = [resblock(ngf_g * mult) for _ in range(N_BLOCKS_G)]
    for i in range(N_DOWN_G):
        mult = 2 ** (N_DOWN_G - i)
        g["up"].append({"conv": convT(ngf_g * mult, ngf_g * mult // 2, 3),
                        "bn": bn(ngf_g * mult // 2)})

    # --- local enhancer branch (n = 1, ngf_global = NGF) ---
    l = {"conv0": conv(NGF, INPUT_NC, 7), "bn0": bn(NGF),
         "conv1": conv(NGF * 2, NGF, 3), "bn1": bn(NGF * 2),
         "res": [resblock(NGF * 2) for _ in range(N_BLOCKS_L)],
         "up_conv": convT(NGF * 2, NGF, 3), "up_bn": bn(NGF),
         "conv_out": conv(OUTPUT_NC, NGF, 7)}
    return {"global": g, "local": l}


def resnet_block_fwd(x, p):
    h = conv_layer(x, p["conv1"], p["bn1"], stride=1, pad=1,
                   pad_mode="reflect", act="relu")
    # out = x + conv_block(x): residual fused into the same Pallas call
    return conv_layer(h, p["conv2"], p["bn2"], stride=1, pad=1,
                      pad_mode="reflect", act="none", residual=x)


def local_enhancer_forward(params, x_nchw):
    # NCHW -> channel-first (C, N, H, W), channels zero-padded to a multiple of 8
    x = jnp.transpose(x_nchw, (1, 0, 2, 3)).astype(jnp.float32)
    cpad = _round_up(INPUT_NC, 8) - INPUT_NC
    x = jnp.pad(x, ((0, cpad), (0, 0), (0, 0), (0, 0)))
    x_ds = avg_pool_3x3_s2(x)                         # downsampled input

    # -------- truncated GlobalGenerator on the downsampled input --------
    g = params["global"]
    y = conv_layer(x_ds, g["conv0"], g["bn0"], stride=1, pad=3,
                   pad_mode="reflect", act="relu")
    for blk in g["down"]:
        y = conv_layer(y, blk["conv"], blk["bn"], stride=2, pad=1, act="relu")
    for blk in g["res"]:
        y = resnet_block_fwd(y, blk)
    for blk in g["up"]:
        y = conv_transpose_bn_relu(y, blk["conv"], blk["bn"])
    output_prev = y

    # -------- local enhancer branch on the full-resolution input --------
    l = params["local"]
    d = conv_layer(x, l["conv0"], l["bn0"], stride=1, pad=3,
                   pad_mode="reflect", act="relu")
    # model_downsample(input_i) + output_prev, residual fused after BN+ReLU
    y = conv_layer(d, l["conv1"], l["bn1"], stride=2, pad=1, act="relu",
                   residual=output_prev)
    for blk in l["res"]:
        y = resnet_block_fwd(y, blk)
    y = conv_transpose_bn_relu(y, l["up_conv"], l["up_bn"])
    y = conv_layer(y, l["conv_out"], None, stride=1, pad=3,
                   pad_mode="reflect", act="tanh")
    # trim channel padding, channel-first -> NCHW, f32
    y = y[:OUTPUT_NC].astype(jnp.float32)
    return jnp.transpose(y, (1, 0, 2, 3))


# ----------------------------- main ------------------------------------------

if __name__ == "__main__":
    key = jax.random.PRNGKey(0)
    pkey, xkey = jax.random.split(key)
    params = init_params(pkey)
    x = jax.random.normal(xkey, (2, INPUT_NC, 32, 32), jnp.float32)

    fwd = jax.jit(local_enhancer_forward)
    out = jax.block_until_ready(fwd(params, x))

    assert out.shape == (2, OUTPUT_NC, 32, 32), out.shape
    assert bool(jnp.all(jnp.isfinite(out)))
    print("KERNEL_OK")
</pallas_src>

<mosaic_0001>
module attributes {stable_mosaic.version = 11 : i64} {
  func.func @_fused_conv_kernel(%arg0: memref<8x512xbf16, #tpu.memory_space<vmem>>, %arg1: memref<512x512xbf16, #tpu.memory_space<vmem>>, %arg2: memref<8x1xf32, #tpu.memory_space<vmem>>, %arg3: memref<8x1xf32, #tpu.memory_space<vmem>>, %arg4: memref<8x1xf32, #tpu.memory_space<vmem>>, %arg5: memref<8x512xbf16, #tpu.memory_space<vmem>>) attributes {dimension_semantics = [], scalar_prefetch = 0 : i64, scratch_operands = 0 : i64, tpu.core_type = #tpu.core_type<tc>} {
    %c0 = arith.constant 0 : index
    %c0_0 = arith.constant 0 : index
    %0 = vector.load %arg0[%c0, %c0_0] : memref<8x512xbf16, #tpu.memory_space<vmem>>, vector<8x512xbf16>
    %c0_1 = arith.constant 0 : index
    %c0_2 = arith.constant 0 : index
    %1 = vector.load %arg1[%c0_1, %c0_2] : memref<512x512xbf16, #tpu.memory_space<vmem>>, vector<512x512xbf16>
    %cst = arith.constant dense<0.000000e+00> : vector<8x512xf32>
    %2 = tpu.matmul %0, %1, %cst {dimension_numbers = #tpu.dot_dimension_numbers<[1], [0], [0], [1], [0, 0, 1, 1], [], []>} : vector<8x512xbf16>, vector<512x512xbf16>, vector<8x512xf32> -> vector<8x512xf32>
    %c0_3 = arith.constant 0 : index
    %c0_4 = arith.constant 0 : index
    %3 = vector.load %arg2[%c0_3, %c0_4] : memref<8x1xf32, #tpu.memory_space<vmem>>, vector<8x1xf32>
    %4 = vector.broadcast %3 : vector<8x1xf32> to vector<8x512xf32>
    %5 = arith.addf %2, %4 : vector<8x512xf32>
    %cst_5 = arith.constant dense<0.000000e+00> : vector<8xf32>
    %6 = vector.multi_reduction <add>, %5, %cst_5 [1] : vector<8x512xf32> to vector<8xf32>
    %7 = vector.shape_cast %6 : vector<8xf32> to vector<8x1xf32>
    %8 = arith.mulf %5, %5 : vector<8x512xf32>
    %cst_6 = arith.constant dense<0.000000e+00> : vector<8xf32>
    %9 = vector.multi_reduction <add>, %8, %cst_6 [1] : vector<8x512xf32> to vector<8xf32>
    %10 = vector.shape_cast %9 : vector<8xf32> to vector<8x1xf32>
    %cst_7 = arith.constant 0.001953125 : f32
    %11 = vector.broadcast %cst_7 : f32 to vector<8x1xf32>
    %12 = arith.mulf %7, %11 : vector<8x1xf32>
    %cst_8 = arith.constant 0.001953125 : f32
    %13 = vector.broadcast %cst_8 : f32 to vector<8x1xf32>
    %14 = arith.mulf %10, %13 : vector<8x1xf32>
    %15 = arith.mulf %12, %12 : vector<8x1xf32>
    %16 = arith.subf %14, %15 : vector<8x1xf32>
    %cst_9 = arith.constant 0.000000e+00 : f32
    %17 = vector.broadcast %cst_9 : f32 to vector<8x1xf32>
    %18 = arith.maximumf %16, %17 : vector<8x1xf32>
    %c0_10 = arith.constant 0 : index
    %c0_11 = arith.constant 0 : index
    %19 = vector.load %arg3[%c0_10, %c0_11] : memref<8x1xf32, #tpu.memory_space<vmem>>, vector<8x1xf32>
    %cst_12 = arith.constant 9.99999974E-6 : f32
    %20 = vector.broadcast %cst_12 : f32 to vector<8x1xf32>
    %21 = arith.addf %18, %20 : vector<8x1xf32>
    %22 = math.rsqrt %21 : vector<8x1xf32>
    %23 = arith.mulf %19, %22 : vector<8x1xf32>
    %c0_13 = arith.constant 0 : index
    %c0_14 = arith.constant 0 : index
    %24 = vector.load %arg4[%c0_13, %c0_14] : memref<8x1xf32, #tpu.memory_space<vmem>>, vector<8x1xf32>
    %25 = arith.mulf %12, %23 : vector<8x1xf32>
    %26 = arith.subf %24, %25 : vector<8x1xf32>
    %27 = vector.broadcast %23 : vector<8x1xf32> to vector<8x512xf32>
    %28 = arith.mulf %5, %27 : vector<8x512xf32>
    %29 = vector.broadcast %26 : vector<8x1xf32> to vector<8x512xf32>
    %30 = arith.addf %28, %29 : vector<8x512xf32>
    %cst_15 = arith.constant 0.000000e+00 : f32
    %31 = vector.broadcast %cst_15 : f32 to vector<8x512xf32>
    %32 = arith.maximumf %30, %31 : vector<8x512xf32>
    %33 = arith.truncf %32 : vector<8x512xf32> to vector<8x512xbf16>
    %c0_16 = arith.constant 0 : index
    %c0_17 = arith.constant 0 : index
    %34 = vector.load %arg5[%c0_16, %c0_17] : memref<8x512xbf16, #tpu.memory_space<vmem>>, vector<8x512xbf16>
    tpu.vector_store %arg5[%c0_16, %c0_17], %33 {strides = array<i32>} : memref<8x512xbf16, #tpu.memory_space<vmem>>, vector<8x512xbf16>,
    return
  }
}

module attributes {stable_mosaic.version = 11 : i64} {
  func.func @_fused_conv_kernel(%arg0: memref<16x128xbf16, #tpu.memory_space<vmem>>, %arg1: memref<128x128xbf16, #tpu.memory_space<vmem>>, %arg2: memref<16x1xf32, #tpu.memory_space<vmem>>, %arg3: memref<16x1xf32, #tpu.memory_space<vmem>>, %arg4: memref<16x1xf32, #tpu.memory_space<vmem>>, %arg5: memref<16x128xbf16, #tpu.memory_space<vmem>>) attributes {dimension_semantics = [], scalar_prefetch = 0 : i64, scratch_operands = 0 : i64, tpu.core_type = #tpu.core_type<tc>} {
    %c0 = arith.constant 0 : index
    %c0_0 = arith.constant 0 : index
    %0 = vector.load %arg0[%c0, %c0_0] : memref<16x128xbf16, #tpu.memory_space<vmem>>, vector<16x128xbf16>
    %c0_1 = arith.constant 0 : index
    %c0_2 = arith.constant 0 : index
    %1 = vector.load %arg1[%c0_1, %c0_2] : memref<128x128xbf16, #tpu.memory_space<vmem>>, vector<128x128xbf16>
    %cst = arith.constant dense<0.000000e+00> : vector<16x128xf32>
    %2 = tpu.matmul %0, %1, %cst {dimension_numbers = #tpu.dot_dimension_numbers<[1], [0], [0], [1], [0, 0, 1, 1], [], []>} : vector<16x128xbf16>, vector<128x128xbf16>, vector<16x128xf32> -> vector<16x128xf32>
    %c0_3 = arith.constant 0 : index
    %c0_4 = arith.constant 0 : index
    %3 = vector.load %arg2[%c0_3, %c0_4] : memref<16x1xf32, #tpu.memory_space<vmem>>, vector<16x1xf32>
    %4 = vector.broadcast %3 : vector<16x1xf32> to vector<16x128xf32>
    %5 = arith.addf %2, %4 : vector<16x128xf32>
    %cst_5 = arith.constant dense<0.000000e+00> : vector<16xf32>
    %6 = vector.multi_reduction <add>, %5, %cst_5 [1] : vector<16x128xf32> to vector<16xf32>
    %7 = vector.shape_cast %6 : vector<16xf32> to vector<16x1xf32>
    %8 = arith.mulf %5, %5 : vector<16x128xf32>
    %cst_6 = arith.constant dense<0.000000e+00> : vector<16xf32>
    %9 = vector.multi_reduction <add>, %8, %cst_6 [1] : vector<16x128xf32> to vector<16xf32>
    %10 = vector.shape_cast %9 : vector<16xf32> to vector<16x1xf32>
    %cst_7 = arith.constant 7.812500e-03 : f32
    %11 = vector.broadcast %cst_7 : f32 to vector<16x1xf32>
    %12 = arith.mulf %7, %11 : vector<16x1xf32>
    %cst_8 = arith.constant 7.812500e-03 : f32
    %13 = vector.broadcast %cst_8 : f32 to vector<16x1xf32>
    %14 = arith.mulf %10, %13 : vector<16x1xf32>
    %15 = arith.mulf %12, %12 : vector<16x1xf32>
    %16 = arith.subf %14, %15 : vector<16x1xf32>
    %cst_9 = arith.constant 0.000000e+00 : f32
    %17 = vector.broadcast %cst_9 : f32 to vector<16x1xf32>
    %18 = arith.maximumf %16, %17 : vector<16x1xf32>
    %c0_10 = arith.constant 0 : index
    %c0_11 = arith.constant 0 : index
    %19 = vector.load %arg3[%c0_10, %c0_11] : memref<16x1xf32, #tpu.memory_space<vmem>>, vector<16x1xf32>
    %cst_12 = arith.constant 9.99999974E-6 : f32
    %20 = vector.broadcast %cst_12 : f32 to vector<16x1xf32>
    %21 = arith.addf %18, %20 : vector<16x1xf32>
    %22 = math.rsqrt %21 : vector<16x1xf32>
    %23 = arith.mulf %19, %22 : vector<16x1xf32>
    %c0_13 = arith.constant 0 : index
    %c0_14 = arith.constant 0 : index
    %24 = vector.load %arg4[%c0_13, %c0_14] : memref<16x1xf32, #tpu.memory_space<vmem>>, vector<16x1xf32>
    %25 = arith.mulf %12, %23 : vector<16x1xf32>
    %26 = arith.subf %24, %25 : vector<16x1xf32>
    %27 = vector.broadcast %23 : vector<16x1xf32> to vector<16x128xf32>
    %28 = arith.mulf %5, %27 : vector<16x128xf32>
    %29 = vector.broadcast %26 : vector<16x1xf32> to vector<16x128xf32>
    %30 = arith.addf %28, %29 : vector<16x128xf32>
    %cst_15 = arith.constant 0.000000e+00 : f32
    %31 = vector.broadcast %cst_15 : f32 to vector<16x128xf32>
    %32 = arith.maximumf %30, %31 : vector<16x128xf32>
    %33 = arith.truncf %32 : vector<16x128xf32> to vector<16x128xbf16>
    %c0_16 = arith.constant 0 : index
    %c0_17 = arith.constant 0 : index
    %34 = vector.load %arg5[%c0_16, %c0_17] : memref<16x128xbf16, #tpu.memory_space<vmem>>, vector<16x128xbf16>
    tpu.vector_store %arg5[%c0_16, %c0_17], %33 {strides = array<i32>} : memref<16x128xbf16, #tpu.memory_space<vmem>>, vector<16x128xbf16>,
    return
  }
}

module attributes {stable_mosaic.version = 11 : i64} {
  func.func @_fused_conv_kernel(%arg0: memref<32x256xbf16, #tpu.memory_space<vmem>>, %arg1: memref<256x32xbf16, #tpu.memory_space<vmem>>, %arg2: memref<32x1xf32, #tpu.memory_space<vmem>>, %arg3: memref<32x1xf32, #tpu.memory_space<vmem>>, %arg4: memref<32x1xf32, #tpu.memory_space<vmem>>, %arg5: memref<32x32xbf16, #tpu.memory_space<vmem>>) attributes {dimension_semantics = [], scalar_prefetch = 0 : i64, scratch_operands = 0 : i64, tpu.core_type = #tpu.core_type<tc>} {
    %c0 = arith.constant 0 : index
    %c0_0 = arith.constant 0 : index
    %0 = vector.load %arg0[%c0, %c0_0] : memref<32x256xbf16, #tpu.memory_space<vmem>>, vector<32x256xbf16>
    %c0_1 = arith.constant 0 : index
    %c0_2 = arith.constant 0 : index
    %1 = vector.load %arg1[%c0_1, %c0_2] : memref<256x32xbf16, #tpu.memory_space<vmem>>, vector<256x32xbf16>
    %cst = arith.constant dense<0.000000e+00> : vector<32x32xf32>
    %2 = tpu.matmul %0, %1, %cst {dimension_numbers = #tpu.dot_dimension_numbers<[1], [0], [0], [1], [0, 0, 1, 1], [], []>} : vector<32x256xbf16>, vector<256x32xbf16>, vector<32x32xf32> -> vector<32x32xf32>
    %c0_3 = arith.constant 0 : index
    %c0_4 = arith.constant 0 : index
    %3 = vector.load %arg2[%c0_3, %c0_4] : memref<32x1xf32, #tpu.memory_space<vmem>>, vector<32x1xf32>
    %4 = vector.broadcast %3 : vector<32x1xf32> to vector<32x32xf32>
    %5 = arith.addf %2, %4 : vector<32x32xf32>
    %cst_5 = arith.constant dense<0.000000e+00> : vector<32xf32>
    %6 = vector.multi_reduction <add>, %5, %cst_5 [1] : vector<32x32xf32> to vector<32xf32>
    %7 = vector.shape_cast %6 : vector<32xf32> to vector<32x1xf32>
    %8 = arith.mulf %5, %5 : vector<32x32xf32>
    %cst_6 = arith.constant dense<0.000000e+00> : vector<32xf32>
    %9 = vector.multi_reduction <add>, %8, %cst_6 [1] : vector<32x32xf32> to vector<32xf32>
    %10 = vector.shape_cast %9 : vector<32xf32> to vector<32x1xf32>
    %cst_7 = arith.constant 3.125000e-02 : f32
    %11 = vector.broadcast %cst_7 : f32 to vector<32x1xf32>
    %12 = arith.mulf %7, %11 : vector<32x1xf32>
    %cst_8 = arith.constant 3.125000e-02 : f32
    %13 = vector.broadcast %cst_8 : f32 to vector<32x1xf32>
    %14 = arith.mulf %10, %13 : vector<32x1xf32>
    %15 = arith.mulf %12, %12 : vector<32x1xf32>
    %16 = arith.subf %14, %15 : vector<32x1xf32>
    %cst_9 = arith.constant 0.000000e+00 : f32
    %17 = vector.broadcast %cst_9 : f32 to vector<32x1xf32>
    %18 = arith.maximumf %16, %17 : vector<32x1xf32>
    %c0_10 = arith.constant 0 : index
    %c0_11 = arith.constant 0 : index
    %19 = vector.load %arg3[%c0_10, %c0_11] : memref<32x1xf32, #tpu.memory_space<vmem>>, vector<32x1xf32>
    %cst_12 = arith.constant 9.99999974E-6 : f32
    %20 = vector.broadcast %cst_12 : f32 to vector<32x1xf32>
    %21 = arith.addf %18, %20 : vector<32x1xf32>
    %22 = math.rsqrt %21 : vector<32x1xf32>
    %23 = arith.mulf %19, %22 : vector<32x1xf32>
    %c0_13 = arith.constant 0 : index
    %c0_14 = arith.constant 0 : index
    %24 = vector.load %arg4[%c0_13, %c0_14] : memref<32x1xf32, #tpu.memory_space<vmem>>, vector<32x1xf32>
    %25 = arith.mulf %12, %23 : vector<32x1xf32>
    %26 = arith.subf %24, %25 : vector<32x1xf32>
    %27 = vector.broadcast %23 : vector<32x1xf32> to vector<32x32xf32>
    %28 = arith.mulf %5, %27 : vector<32x32xf32>
    %29 = vector.broadcast %26 : vector<32x1xf32> to vector<32x32xf32>
    %30 = arith.addf %28, %29 : vector<32x32xf32>
    %cst_15 = arith.constant 0.000000e+00 : f32
    %31 = vector.broadcast %cst_15 : f32 to vector<32x32xf32>
    %32 = arith.maximumf %30, %31 : vector<32x32xf32>
    %33 = arith.truncf %32 : vector<32x32xf32> to vector<32x32xbf16>
    %c0_16 = arith.constant 0 : index
    %c0_17 = arith.constant 0 : index
    %34 = vector.load %arg5[%c0_16, %c0_17] : memref<32x32xbf16, #tpu.memory_space<vmem>>, vector<32x32xbf16>
    tpu.vector_store %arg5[%c0_16, %c0_17], %33 {strides = array<i32>} : memref<32x32xbf16, #tpu.memory_space<vmem>>, vector<32x32xbf16>,
    return
  }
}

module attributes {stable_mosaic.version = 11 : i64} {
  func.func @_fused_conv_kernel(%arg0: memref<32x384xbf16, #tpu.memory_space<vmem>>, %arg1: memref<384x32xbf16, #tpu.memory_space<vmem>>, %arg2: memref<32x1xf32, #tpu.memory_space<vmem>>, %arg3: memref<32x1xf32, #tpu.memory_space<vmem>>, %arg4: memref<32x1xf32, #tpu.memory_space<vmem>>, %arg5: memref<32x32xbf16, #tpu.memory_space<vmem>>) attributes {dimension_semantics = [], scalar_prefetch = 0 : i64, scratch_operands = 0 : i64, tpu.core_type = #tpu.core_type<tc>} {
    %c0 = arith.constant 0 : index
    %c0_0 = arith.constant 0 : index
    %0 = vector.load %arg0[%c0, %c0_0] : memref<32x384xbf16, #tpu.memory_space<vmem>>, vector<32x384xbf16>
    %c0_1 = arith.constant 0 : index
    %c0_2 = arith.constant 0 : index
    %1 = vector.load %arg1[%c0_1, %c0_2] : memref<384x32xbf16, #tpu.memory_space<vmem>>, vector<384x32xbf16>
    %cst = arith.constant dense<0.000000e+00> : vector<32x32xf32>
    %2 = tpu.matmul %0, %1, %cst {dimension_numbers = #tpu.dot_dimension_numbers<[1], [0], [0], [1], [0, 0, 1, 1], [], []>} : vector<32x384xbf16>, vector<384x32xbf16>, vector<32x32xf32> -> vector<32x32xf32>
    %c0_3 = arith.constant 0 : index
    %c0_4 = arith.constant 0 : index
    %3 = vector.load %arg2[%c0_3, %c0_4] : memref<32x1xf32, #tpu.memory_space<vmem>>, vector<32x1xf32>
    %4 = vector.broadcast %3 : vector<32x1xf32> to vector<32x32xf32>
    %5 = arith.addf %2, %4 : vector<32x32xf32>
    %cst_5 = arith.constant dense<0.000000e+00> : vector<32xf32>
    %6 = vector.multi_reduction <add>, %5, %cst_5 [1] : vector<32x32xf32> to vector<32xf32>
    %7 = vector.shape_cast %6 : vector<32xf32> to vector<32x1xf32>
    %8 = arith.mulf %5, %5 : vector<32x32xf32>
    %cst_6 = arith.constant dense<0.000000e+00> : vector<32xf32>
    %9 = vector.multi_reduction <add>, %8, %cst_6 [1] : vector<32x32xf32> to vector<32xf32>
    %10 = vector.shape_cast %9 : vector<32xf32> to vector<32x1xf32>
    %cst_7 = arith.constant 3.125000e-02 : f32
    %11 = vector.broadcast %cst_7 : f32 to vector<32x1xf32>
    %12 = arith.mulf %7, %11 : vector<32x1xf32>
    %cst_8 = arith.constant 3.125000e-02 : f32
    %13 = vector.broadcast %cst_8 : f32 to vector<32x1xf32>
    %14 = arith.mulf %10, %13 : vector<32x1xf32>
    %15 = arith.mulf %12, %12 : vector<32x1xf32>
    %16 = arith.subf %14, %15 : vector<32x1xf32>
    %cst_9 = arith.constant 0.000000e+00 : f32
    %17 = vector.broadcast %cst_9 : f32 to vector<32x1xf32>
    %18 = arith.maximumf %16, %17 : vector<32x1xf32>
    %c0_10 = arith.constant 0 : index
    %c0_11 = arith.constant 0 : index
    %19 = vector.load %arg3[%c0_10, %c0_11] : memref<32x1xf32, #tpu.memory_space<vmem>>, vector<32x1xf32>
    %cst_12 = arith.constant 9.99999974E-6 : f32
    %20 = vector.broadcast %cst_12 : f32 to vector<32x1xf32>
    %21 = arith.addf %18, %20 : vector<32x1xf32>
    %22 = math.rsqrt %21 : vector<32x1xf32>
    %23 = arith.mulf %19, %22 : vector<32x1xf32>
    %c0_13 = arith.constant 0 : index
    %c0_14 = arith.constant 0 : index
    %24 = vector.load %arg4[%c0_13, %c0_14] : memref<32x1xf32, #tpu.memory_space<vmem>>, vector<32x1xf32>
    %25 = arith.mulf %12, %23 : vector<32x1xf32>
    %26 = arith.subf %24, %25 : vector<32x1xf32>
    %27 = vector.broadcast %23 : vector<32x1xf32> to vector<32x32xf32>
    %28 = arith.mulf %5, %27 : vector<32x32xf32>
    %29 = vector.broadcast %26 : vector<32x1xf32> to vector<32x32xf32>
    %30 = arith.addf %28, %29 : vector<32x32xf32>
    %cst_15 = arith.constant 0.000000e+00 : f32
    %31 = vector.broadcast %cst_15 : f32 to vector<32x32xf32>
    %32 = arith.maximumf %30, %31 : vector<32x32xf32>
    %33 = arith.truncf %32 : vector<32x32xf32> to vector<32x32xbf16>
    %c0_16 = arith.constant 0 : index
    %c0_17 = arith.constant 0 : index
    %34 = vector.load %arg5[%c0_16, %c0_17] : memref<32x32xbf16, #tpu.memory_space<vmem>>, vector<32x32xbf16>
    tpu.vector_store %arg5[%c0_16, %c0_17], %33 {strides = array<i32>} : memref<32x32xbf16, #tpu.memory_space<vmem>>, vector<32x32xbf16>,
    return
  }
}

module attributes {stable_mosaic.version = 11 : i64} {
  func.func @_fused_conv_kernel(%arg0: memref<32x384xbf16, #tpu.memory_space<vmem>>, %arg1: memref<384x32xbf16, #tpu.memory_space<vmem>>, %arg2: memref<32x1xf32, #tpu.memory_space<vmem>>, %arg3: memref<32x1xf32, #tpu.memory_space<vmem>>, %arg4: memref<32x1xf32, #tpu.memory_space<vmem>>, %arg5: memref<32x32xbf16, #tpu.memory_space<vmem>>, %arg6: memref<32x32xbf16, #tpu.memory_space<vmem>>) attributes {dimension_semantics = [], scalar_prefetch = 0 : i64, scratch_operands = 0 : i64, tpu.core_type = #tpu.core_type<tc>} {
    %c0 = arith.constant 0 : index
    %c0_0 = arith.constant 0 : index
    %0 = vector.load %arg0[%c0, %c0_0] : memref<32x384xbf16, #tpu.memory_space<vmem>>, vector<32x384xbf16>
    %c0_1 = arith.constant 0 : index
    %c0_2 = arith.constant 0 : index
    %1 = vector.load %arg1[%c0_1, %c0_2] : memref<384x32xbf16, #tpu.memory_space<vmem>>, vector<384x32xbf16>
    %cst = arith.constant dense<0.000000e+00> : vector<32x32xf32>
    %2 = tpu.matmul %0, %1, %cst {dimension_numbers = #tpu.dot_dimension_numbers<[1], [0], [0], [1], [0, 0, 1, 1], [], []>} : vector<32x384xbf16>, vector<384x32xbf16>, vector<32x32xf32> -> vector<32x32xf32>
    %c0_3 = arith.constant 0 : index
    %c0_4 = arith.constant 0 : index
    %3 = vector.load %arg2[%c0_3, %c0_4] : memref<32x1xf32, #tpu.memory_space<vmem>>, vector<32x1xf32>
    %4 = vector.broadcast %3 : vector<32x1xf32> to vector<32x32xf32>
    %5 = arith.addf %2, %4 : vector<32x32xf32>
    %cst_5 = arith.constant dense<0.000000e+00> : vector<32xf32>
    %6 = vector.multi_reduction <add>, %5, %cst_5 [1] : vector<32x32xf32> to vector<32xf32>
    %7 = vector.shape_cast %6 : vector<32xf32> to vector<32x1xf32>
    %8 = arith.mulf %5, %5 : vector<32x32xf32>
    %cst_6 = arith.constant dense<0.000000e+00> : vector<32xf32>
    %9 = vector.multi_reduction <add>, %8, %cst_6 [1] : vector<32x32xf32> to vector<32xf32>
    %10 = vector.shape_cast %9 : vector<32xf32> to vector<32x1xf32>
    %cst_7 = arith.constant 3.125000e-02 : f32
    %11 = vector.broadcast %cst_7 : f32 to vector<32x1xf32>
    %12 = arith.mulf %7, %11 : vector<32x1xf32>
    %cst_8 = arith.constant 3.125000e-02 : f32
    %13 = vector.broadcast %cst_8 : f32 to vector<32x1xf32>
    %14 = arith.mulf %10, %13 : vector<32x1xf32>
    %15 = arith.mulf %12, %12 : vector<32x1xf32>
    %16 = arith.subf %14, %15 : vector<32x1xf32>
    %cst_9 = arith.constant 0.000000e+00 : f32
    %17 = vector.broadcast %cst_9 : f32 to vector<32x1xf32>
    %18 = arith.maximumf %16, %17 : vector<32x1xf32>
    %c0_10 = arith.constant 0 : index
    %c0_11 = arith.constant 0 : index
    %19 = vector.load %arg3[%c0_10, %c0_11] : memref<32x1xf32, #tpu.memory_space<vmem>>, vector<32x1xf32>
    %cst_12 = arith.constant 9.99999974E-6 : f32
    %20 = vector.broadcast %cst_12 : f32 to vector<32x1xf32>
    %21 = arith.addf %18, %20 : vector<32x1xf32>
    %22 = math.rsqrt %21 : vector<32x1xf32>
    %23 = arith.mulf %19, %22 : vector<32x1xf32>
    %c0_13 = arith.constant 0 : index
    %c0_14 = arith.constant 0 : index
    %24 = vector.load %arg4[%c0_13, %c0_14] : memref<32x1xf32, #tpu.memory_space<vmem>>, vector<32x1xf32>
    %25 = arith.mulf %12, %23 : vector<32x1xf32>
    %26 = arith.subf %24, %25 : vector<32x1xf32>
    %27 = vector.broadcast %23 : vector<32x1xf32> to vector<32x32xf32>
    %28 = arith.mulf %5, %27 : vector<32x32xf32>
    %29 = vector.broadcast %26 : vector<32x1xf32> to vector<32x32xf32>
    %30 = arith.addf %28, %29 : vector<32x32xf32>
    %c0_15 = arith.constant 0 : index
    %c0_16 = arith.constant 0 : index
    %31 = vector.load %arg5[%c0_15, %c0_16] : memref<32x32xbf16, #tpu.memory_space<vmem>>, vector<32x32xbf16>
    %32 = arith.extf %31 : vector<32x32xbf16> to vector<32x32xf32>
    %33 = arith.addf %30, %32 : vector<32x32xf32>
    %34 = arith.truncf %33 : vector<32x32xf32> to vector<32x32xbf16>
    %c0_17 = arith.constant 0 : index
    %c0_18 = arith.constant 0 : index
    %35 = vector.load %arg6[%c0_17, %c0_18] : memref<32x32xbf16, #tpu.memory_space<vmem>>, vector<32x32xbf16>
    tpu.vector_store %arg6[%c0_17, %c0_18], %34 {strides = array<i32>} : memref<32x32xbf16, #tpu.memory_space<vmem>>, vector<32x32xbf16>,
    return
  }
}

module attributes {stable_mosaic.version = 11 : i64} {
  func.func @_fused_conv_kernel(%arg0: memref<64x128xbf16, #tpu.memory_space<vmem>>, %arg1: memref<128x32xbf16, #tpu.memory_space<vmem>>, %arg2: memref<64x1xf32, #tpu.memory_space<vmem>>, %arg3: memref<16x1xf32, #tpu.memory_space<vmem>>, %arg4: memref<16x1xf32, #tpu.memory_space<vmem>>, %arg5: memref<64x32xbf16, #tpu.memory_space<vmem>>) attributes {dimension_semantics = [], scalar_prefetch = 0 : i64, scratch_operands = 0 : i64, tpu.core_type = #tpu.core_type<tc>} {
    %c0 = arith.constant 0 : index
    %c0_0 = arith.constant 0 : index
    %0 = vector.load %arg0[%c0, %c0_0] : memref<64x128xbf16, #tpu.memory_space<vmem>>, vector<64x128xbf16>
    %c0_1 = arith.constant 0 : index
    %c0_2 = arith.constant 0 : index
    %1 = vector.load %arg1[%c0_1, %c0_2] : memref<128x32xbf16, #tpu.memory_space<vmem>>, vector<128x32xbf16>
    %cst = arith.constant dense<0.000000e+00> : vector<64x32xf32>
    %2 = tpu.matmul %0, %1, %cst {dimension_numbers = #tpu.dot_dimension_numbers<[1], [0], [0], [1], [0, 0, 1, 1], [], []>} : vector<64x128xbf16>, vector<128x32xbf16>, vector<64x32xf32> -> vector<64x32xf32>
    %c0_3 = arith.constant 0 : index
    %c0_4 = arith.constant 0 : index
    %3 = vector.load %arg2[%c0_3, %c0_4] : memref<64x1xf32, #tpu.memory_space<vmem>>, vector<64x1xf32>
    %4 = vector.broadcast %3 : vector<64x1xf32> to vector<64x32xf32>
    %5 = arith.addf %2, %4 : vector<64x32xf32>
    %cst_5 = arith.constant dense<0.000000e+00> : vector<64xf32>
    %6 = vector.multi_reduction <add>, %5, %cst_5 [1] : vector<64x32xf32> to vector<64xf32>
    %7 = vector.shape_cast %6 : vector<64xf32> to vector<64x1xf32>
    %8 = arith.mulf %5, %5 : vector<64x32xf32>
    %cst_6 = arith.constant dense<0.000000e+00> : vector<64xf32>
    %9 = vector.multi_reduction <add>, %8, %cst_6 [1] : vector<64x32xf32> to vector<64xf32>
    %10 = vector.shape_cast %9 : vector<64xf32> to vector<64x1xf32>
    %11 = vector.extract_strided_slice %7 {offsets = [0, 0], sizes = [16, 1], strides = [1, 1]} : vector<64x1xf32> to vector<16x1xf32>
    %cst_7 = arith.constant 0.000000e+00 : f32
    %12 = vector.broadcast %cst_7 : f32 to vector<16x1xf32>
    %13 = arith.addf %12, %11 : vector<16x1xf32>
    %14 = vector.extract_strided_slice %7 {offsets = [16, 0], sizes = [16, 1], strides = [1, 1]} : vector<64x1xf32> to vector<16x1xf32>
    %15 = arith.addf %13, %14 : vector<16x1xf32>
    %16 = vector.extract_strided_slice %7 {offsets = [32, 0], sizes = [16, 1], strides = [1, 1]} : vector<64x1xf32> to vector<16x1xf32>
    %17 = arith.addf %15, %16 : vector<16x1xf32>
    %18 = vector.extract_strided_slice %7 {offsets = [48, 0], sizes = [16, 1], strides = [1, 1]} : vector<64x1xf32> to vector<16x1xf32>
    %19 = arith.addf %17, %18 : vector<16x1xf32>
    %20 = vector.extract_strided_slice %10 {offsets = [0, 0], sizes = [16, 1], strides = [1, 1]} : vector<64x1xf32> to vector<16x1xf32>
    %cst_8 = arith.constant 0.000000e+00 : f32
    %21 = vector.broadcast %cst_8 : f32 to vector<16x1xf32>
    %22 = arith.addf %21, %20 : vector<16x1xf32>
    %23 = vector.extract_strided_slice %10 {offsets = [16, 0], sizes = [16, 1], strides = [1, 1]} : vector<64x1xf32> to vector<16x1xf32>
    %24 = arith.addf %22, %23 : vector<16x1xf32>
    %25 = vector.extract_strided_slice %10 {offsets = [32, 0], sizes = [16, 1], strides = [1, 1]} : vector<64x1xf32> to vector<16x1xf32>
    %26 = arith.addf %24, %25 : vector<16x1xf32>
    %27 = vector.extract_strided_slice %10 {offsets = [48, 0], sizes = [16, 1], strides = [1, 1]} : vector<64x1xf32> to vector<16x1xf32>
    %28 = arith.addf %26, %27 : vector<16x1xf32>
    %cst_9 = arith.constant 7.812500e-03 : f32
    %29 = vector.broadcast %cst_9 : f32 to vector<16x1xf32>
    %30 = arith.mulf %19, %29 : vector<16x1xf32>
    %cst_10 = arith.constant 7.812500e-03 : f32
    %31 = vector.broadcast %cst_10 : f32 to vector<16x1xf32>
    %32 = arith.mulf %28, %31 : vector<16x1xf32>
    %33 = arith.mulf %30, %30 : vector<16x1xf32>
    %34 = arith.subf %32, %33 : vector<16x1xf32>
    %cst_11 = arith.constant 0.000000e+00 : f32
    %35 = vector.broadcast %cst_11 : f32 to vector<16x1xf32>
    %36 = arith.maximumf %34, %35 : vector<16x1xf32>
    %c0_12 = arith.constant 0 : index
    %c0_13 = arith.constant 0 : index
    %37 = vector.load %arg3[%c0_12, %c0_13] : memref<16x1xf32, #tpu.memory_space<vmem>>, vector<16x1xf32>
    %cst_14 = arith.constant 9.99999974E-6 : f32
    %38 = vector.broadcast %cst_14 : f32 to vector<16x1xf32>
    %39 = arith.addf %36, %38 : vector<16x1xf32>
    %40 = math.rsqrt %39 : vector<16x1xf32>
    %41 = arith.mulf %37, %40 : vector<16x1xf32>
    %c0_15 = arith.constant 0 : index
    %c0_16 = arith.constant 0 : index
    %42 = vector.load %arg4[%c0_15, %c0_16] : memref<16x1xf32, #tpu.memory_space<vmem>>, vector<16x1xf32>
    %43 = arith.mulf %30, %41 : vector<16x1xf32>
    %44 = arith.subf %42, %43 : vector<16x1xf32>
    %45 = tpu.concatenate %41, %41, %41, %41 in 0 : vector<16x1xf32>, vector<16x1xf32>, vector<16x1xf32>, vector<16x1xf32> -> vector<64x1xf32>
    %46 = tpu.concatenate %44, %44, %44, %44 in 0 : vector<16x1xf32>, vector<16x1xf32>, vector<16x1xf32>, vector<16x1xf32> -> vector<64x1xf32>
    %47 = vector.broadcast %45 : vector<64x1xf32> to vector<64x32xf32>
    %48 = arith.mulf %5, %47 : vector<64x32xf32>
    %49 = vector.broadcast %46 : vector<64x1xf32> to vector<64x32xf32>
    %50 = arith.addf %48, %49 : vector<64x32xf32>
    %cst_17 = arith.constant 0.000000e+00 : f32
    %51 = vector.broadcast %cst_17 : f32 to vector<64x32xf32>
    %52 = arith.maximumf %50, %51 : vector<64x32xf32>
    %53 = arith.truncf %52 : vector<64x32xf32> to vector<64x32xbf16>
    %c0_18 = arith.constant 0 : index
    %c0_19 = arith.constant 0 : index
    %54 = vector.load %arg5[%c0_18, %c0_19] : memref<64x32xbf16, #tpu.memory_space<vmem>>, vector<64x32xbf16>
    tpu.vector_store %arg5[%c0_18, %c0_19], %53 {strides = array<i32>} : memref<64x32xbf16, #tpu.memory_space<vmem>>, vector<64x32xbf16>,
    return
  }
}

module attributes {stable_mosaic.version = 11 : i64} {
  func.func @_fused_conv_kernel(%arg0: memref<32x128xbf16, #tpu.memory_space<vmem>>, %arg1: memref<128x128xbf16, #tpu.memory_space<vmem>>, %arg2: memref<32x1xf32, #tpu.memory_space<vmem>>, %arg3: memref<8x1xf32, #tpu.memory_space<vmem>>, %arg4: memref<8x1xf32, #tpu.memory_space<vmem>>, %arg5: memref<32x128xbf16, #tpu.memory_space<vmem>>) attributes {dimension_semantics = [], scalar_prefetch = 0 : i64, scratch_operands = 0 : i64, tpu.core_type = #tpu.core_type<tc>} {
    %c0 = arith.constant 0 : index
    %c0_0 = arith.constant 0 : index
    %0 = vector.load %arg0[%c0, %c0_0] : memref<32x128xbf16, #tpu.memory_space<vmem>>, vector<32x128xbf16>
    %c0_1 = arith.constant 0 : index
    %c0_2 = arith.constant 0 : index
    %1 = vector.load %arg1[%c0_1, %c0_2] : memref<128x128xbf16, #tpu.memory_space<vmem>>, vector<128x128xbf16>
    %cst = arith.constant dense<0.000000e+00> : vector<32x128xf32>
    %2 = tpu.matmul %0, %1, %cst {dimension_numbers = #tpu.dot_dimension_numbers<[1], [0], [0], [1], [0, 0, 1, 1], [], []>} : vector<32x128xbf16>, vector<128x128xbf16>, vector<32x128xf32> -> vector<32x128xf32>
    %c0_3 = arith.constant 0 : index
    %c0_4 = arith.constant 0 : index
    %3 = vector.load %arg2[%c0_3, %c0_4] : memref<32x1xf32, #tpu.memory_space<vmem>>, vector<32x1xf32>
    %4 = vector.broadcast %3 : vector<32x1xf32> to vector<32x128xf32>
    %5 = arith.addf %2, %4 : vector<32x128xf32>
    %cst_5 = arith.constant dense<0.000000e+00> : vector<32xf32>
    %6 = vector.multi_reduction <add>, %5, %cst_5 [1] : vector<32x128xf32> to vector<32xf32>
    %7 = vector.shape_cast %6 : vector<32xf32> to vector<32x1xf32>
    %8 = arith.mulf %5, %5 : vector<32x128xf32>
    %cst_6 = arith.constant dense<0.000000e+00> : vector<32xf32>
    %9 = vector.multi_reduction <add>, %8, %cst_6 [1] : vector<32x128xf32> to vector<32xf32>
    %10 = vector.shape_cast %9 : vector<32xf32> to vector<32x1xf32>
    %11 = vector.extract_strided_slice %7 {offsets = [0, 0], sizes = [8, 1], strides = [1, 1]} : vector<32x1xf32> to vector<8x1xf32>
    %cst_7 = arith.constant 0.000000e+00 : f32
    %12 = vector.broadcast %cst_7 : f32 to vector<8x1xf32>
    %13 = arith.addf %12, %11 : vector<8x1xf32>
    %14 = vector.extract_strided_slice %7 {offsets = [8, 0], sizes = [8, 1], strides = [1, 1]} : vector<32x1xf32> to vector<8x1xf32>
    %15 = arith.addf %13, %14 : vector<8x1xf32>
    %16 = vector.extract_strided_slice %7 {offsets = [16, 0], sizes = [8, 1], strides = [1, 1]} : vector<32x1xf32> to vector<8x1xf32>
    %17 = arith.addf %15, %16 : vector<8x1xf32>
    %18 = vector.extract_strided_slice %7 {offsets = [24, 0], sizes = [8, 1], strides = [1, 1]} : vector<32x1xf32> to vector<8x1xf32>
    %19 = arith.addf %17, %18 : vector<8x1xf32>
    %20 = vector.extract_strided_slice %10 {offsets = [0, 0], sizes = [8, 1], strides = [1, 1]} : vector<32x1xf32> to vector<8x1xf32>
    %cst_8 = arith.constant 0.000000e+00 : f32
    %21 = vector.broadcast %cst_8 : f32 to vector<8x1xf32>
    %22 = arith.addf %21, %20 : vector<8x1xf32>
    %23 = vector.extract_strided_slice %10 {offsets = [8, 0], sizes = [8, 1], strides = [1, 1]} : vector<32x1xf32> to vector<8x1xf32>
    %24 = arith.addf %22, %23 : vector<8x1xf32>
    %25 = vector.extract_strided_slice %10 {offsets = [16, 0], sizes = [8, 1], strides = [1, 1]} : vector<32x1xf32> to vector<8x1xf32>
    %26 = arith.addf %24, %25 : vector<8x1xf32>
    %27 = vector.extract_strided_slice %10 {offsets = [24, 0], sizes = [8, 1], strides = [1, 1]} : vector<32x1xf32> to vector<8x1xf32>
    %28 = arith.addf %26, %27 : vector<8x1xf32>
    %cst_9 = arith.constant 0.001953125 : f32
    %29 = vector.broadcast %cst_9 : f32 to vector<8x1xf32>
    %30 = arith.mulf %19, %29 : vector<8x1xf32>
    %cst_10 = arith.constant 0.001953125 : f32
    %31 = vector.broadcast %cst_10 : f32 to vector<8x1xf32>
    %32 = arith.mulf %28, %31 : vector<8x1xf32>
    %33 = arith.mulf %30, %30 : vector<8x1xf32>
    %34 = arith.subf %32, %33 : vector<8x1xf32>
    %cst_11 = arith.constant 0.000000e+00 : f32
    %35 = vector.broadcast %cst_11 : f32 to vector<8x1xf32>
    %36 = arith.maximumf %34, %35 : vector<8x1xf32>
    %c0_12 = arith.constant 0 : index
    %c0_13 = arith.constant 0 : index
    %37 = vector.load %arg3[%c0_12, %c0_13] : memref<8x1xf32, #tpu.memory_space<vmem>>, vector<8x1xf32>
    %cst_14 = arith.constant 9.99999974E-6 : f32
    %38 = vector.broadcast %cst_14 : f32 to vector<8x1xf32>
    %39 = arith.addf %36, %38 : vector<8x1xf32>
    %40 = math.rsqrt %39 : vector<8x1xf32>
    %41 = arith.mulf %37, %40 : vector<8x1xf32>
    %c0_15 = arith.constant 0 : index
    %c0_16 = arith.constant 0 : index
    %42 = vector.load %arg4[%c0_15, %c0_16] : memref<8x1xf32, #tpu.memory_space<vmem>>, vector<8x1xf32>
    %43 = arith.mulf %30, %41 : vector<8x1xf32>
    %44 = arith.subf %42, %43 : vector<8x1xf32>
    %45 = tpu.concatenate %41, %41, %41, %41 in 0 : vector<8x1xf32>, vector<8x1xf32>, vector<8x1xf32>, vector<8x1xf32> -> vector<32x1xf32>
    %46 = tpu.concatenate %44, %44, %44, %44 in 0 : vector<8x1xf32>, vector<8x1xf32>, vector<8x1xf32>, vector<8x1xf32> -> vector<32x1xf32>
    %47 = vector.broadcast %45 : vector<32x1xf32> to vector<32x128xf32>
    %48 = arith.mulf %5, %47 : vector<32x128xf32>
    %49 = vector.broadcast %46 : vector<32x1xf32> to vector<32x128xf32>
    %50 = arith.addf %48, %49 : vector<32x128xf32>
    %cst_17 = arith.constant 0.000000e+00 : f32
    %51 = vector.broadcast %cst_17 : f32 to vector<32x128xf32>
    %52 = arith.maximumf %50, %51 : vector<32x128xf32>
    %53 = arith.truncf %52 : vector<32x128xf32> to vector<32x128xbf16>
    %c0_18 = arith.constant 0 : index
    %c0_19 = arith.constant 0 : index
    %54 = vector.load %arg5[%c0_18, %c0_19] : memref<32x128xbf16, #tpu.memory_space<vmem>>, vector<32x128xbf16>
    tpu.vector_store %arg5[%c0_18, %c0_19], %53 {strides = array<i32>} : memref<32x128xbf16, #tpu.memory_space<vmem>>, vector<32x128xbf16>,
    return
  }
}

module attributes {stable_mosaic.version = 11 : i64} {
  func.func @_fused_conv_kernel(%arg0: memref<8x512xbf16, #tpu.memory_space<vmem>>, %arg1: memref<512x2048xbf16, #tpu.memory_space<vmem>>, %arg2: memref<8x1xf32, #tpu.memory_space<vmem>>, %arg3: memref<8x1xf32, #tpu.memory_space<vmem>>, %arg4: memref<8x1xf32, #tpu.memory_space<vmem>>, %arg5: memref<8x2048xbf16, #tpu.memory_space<vmem>>) attributes {dimension_semantics = [], scalar_prefetch = 0 : i64, scratch_operands = 0 : i64, tpu.core_type = #tpu.core_type<tc>} {
    %c0 = arith.constant 0 : index
    %c0_0 = arith.constant 0 : index
    %0 = vector.load %arg0[%c0, %c0_0] : memref<8x512xbf16, #tpu.memory_space<vmem>>, vector<8x512xbf16>
    %c0_1 = arith.constant 0 : index
    %c0_2 = arith.constant 0 : index
    %1 = vector.load %arg1[%c0_1, %c0_2] : memref<512x2048xbf16, #tpu.memory_space<vmem>>, vector<512x2048xbf16>
    %cst = arith.constant dense<0.000000e+00> : vector<8x2048xf32>
    %2 = tpu.matmul %0, %1, %cst {dimension_numbers = #tpu.dot_dimension_numbers<[1], [0], [0], [1], [0, 0, 1, 1], [], []>} : vector<8x512xbf16>, vector<512x2048xbf16>, vector<8x2048xf32> -> vector<8x2048xf32>
    %c0_3 = arith.constant 0 : index
    %c0_4 = arith.constant 0 : index
    %3 = vector.load %arg2[%c0_3, %c0_4] : memref<8x1xf32, #tpu.memory_space<vmem>>, vector<8x1xf32>
    %4 = vector.broadcast %3 : vector<8x1xf32> to vector<8x2048xf32>
    %5 = arith.addf %2, %4 : vector<8x2048xf32>
    %cst_5 = arith.constant dense<0.000000e+00> : vector<8xf32>
    %6 = vector.multi_reduction <add>, %5, %cst_5 [1] : vector<8x2048xf32> to vector<8xf32>
    %7 = vector.shape_cast %6 : vector<8xf32> to vector<8x1xf32>
    %8 = arith.mulf %5, %5 : vector<8x2048xf32>
    %cst_6 = arith.constant dense<0.000000e+00> : vector<8xf32>
    %9 = vector.multi_reduction <add>, %8, %cst_6 [1] : vector<8x2048xf32> to vector<8xf32>
    %10 = vector.shape_cast %9 : vector<8xf32> to vector<8x1xf32>
    %cst_7 = arith.constant 4.8828125E-4 : f32
    %11 = vector.broadcast %cst_7 : f32 to vector<8x1xf32>
    %12 = arith.mulf %7, %11 : vector<8x1xf32>
    %cst_8 = arith.constant 4.8828125E-4 : f32
    %13 = vector.broadcast %cst_8 : f32 to vector<8x1xf32>
    %14 = arith.mulf %10, %13 : vector<8x1xf32>
    %15 = arith.mulf %12, %12 : vector<8x1xf32>
    %16 = arith.subf %14, %15 : vector<8x1xf32>
    %cst_9 = arith.constant 0.000000e+00 : f32
    %17 = vector.broadcast %cst_9 : f32 to vector<8x1xf32>
    %18 = arith.maximumf %16, %17 : vector<8x1xf32>
    %c0_10 = arith.constant 0 : index
    %c0_11 = arith.constant 0 : index
    %19 = vector.load %arg3[%c0_10, %c0_11] : memref<8x1xf32, #tpu.memory_space<vmem>>, vector<8x1xf32>
    %cst_12 = arith.constant 9.99999974E-6 : f32
    %20 = vector.broadcast %cst_12 : f32 to vector<8x1xf32>
    %21 = arith.addf %18, %20 : vector<8x1xf32>
    %22 = math.rsqrt %21 : vector<8x1xf32>
    %23 = arith.mulf %19, %22 : vector<8x1xf32>
    %c0_13 = arith.constant 0 : index
    %c0_14 = arith.constant 0 : index
    %24 = vector.load %arg4[%c0_13, %c0_14] : memref<8x1xf32, #tpu.memory_space<vmem>>, vector<8x1xf32>
    %25 = arith.mulf %12, %23 : vector<8x1xf32>
    %26 = arith.subf %24, %25 : vector<8x1xf32>
    %27 = vector.broadcast %23 : vector<8x1xf32> to vector<8x2048xf32>
    %28 = arith.mulf %5, %27 : vector<8x2048xf32>
    %29 = vector.broadcast %26 : vector<8x1xf32> to vector<8x2048xf32>
    %30 = arith.addf %28, %29 : vector<8x2048xf32>
    %cst_15 = arith.constant 0.000000e+00 : f32
    %31 = vector.broadcast %cst_15 : f32 to vector<8x2048xf32>
    %32 = arith.maximumf %30, %31 : vector<8x2048xf32>
    %33 = arith.truncf %32 : vector<8x2048xf32> to vector<8x2048xbf16>
    %c0_16 = arith.constant 0 : index
    %c0_17 = arith.constant 0 : index
    %34 = vector.load %arg5[%c0_16, %c0_17] : memref<8x2048xbf16, #tpu.memory_space<vmem>>, vector<8x2048xbf16>
    tpu.vector_store %arg5[%c0_16, %c0_17], %33 {strides = array<i32>} : memref<8x2048xbf16, #tpu.memory_space<vmem>>, vector<8x2048xbf16>,
    return
  }
}

module attributes {stable_mosaic.version = 11 : i64} {
  func.func @_fused_conv_kernel(%arg0: memref<8x128xbf16, #tpu.memory_space<vmem>>, %arg1: memref<128x512xbf16, #tpu.memory_space<vmem>>, %arg2: memref<8x1xf32, #tpu.memory_space<vmem>>, %arg3: memref<8x1xf32, #tpu.memory_space<vmem>>, %arg4: memref<8x1xf32, #tpu.memory_space<vmem>>, %arg5: memref<8x512xbf16, #tpu.memory_space<vmem>>, %arg6: memref<8x512xbf16, #tpu.memory_space<vmem>>) attributes {dimension_semantics = [], scalar_prefetch = 0 : i64, scratch_operands = 0 : i64, tpu.core_type = #tpu.core_type<tc>} {
    %c0 = arith.constant 0 : index
    %c0_0 = arith.constant 0 : index
    %0 = vector.load %arg0[%c0, %c0_0] : memref<8x128xbf16, #tpu.memory_space<vmem>>, vector<8x128xbf16>
    %c0_1 = arith.constant 0 : index
    %c0_2 = arith.constant 0 : index
    %1 = vector.load %arg1[%c0_1, %c0_2] : memref<128x512xbf16, #tpu.memory_space<vmem>>, vector<128x512xbf16>
    %cst = arith.constant dense<0.000000e+00> : vector<8x512xf32>
    %2 = tpu.matmul %0, %1, %cst {dimension_numbers = #tpu.dot_dimension_numbers<[1], [0], [0], [1], [0, 0, 1, 1], [], []>} : vector<8x128xbf16>, vector<128x512xbf16>, vector<8x512xf32> -> vector<8x512xf32>
    %c0_3 = arith.constant 0 : index
    %c0_4 = arith.constant 0 : index
    %3 = vector.load %arg2[%c0_3, %c0_4] : memref<8x1xf32, #tpu.memory_space<vmem>>, vector<8x1xf32>
    %4 = vector.broadcast %3 : vector<8x1xf32> to vector<8x512xf32>
    %5 = arith.addf %2, %4 : vector<8x512xf32>
    %cst_5 = arith.constant dense<0.000000e+00> : vector<8xf32>
    %6 = vector.multi_reduction <add>, %5, %cst_5 [1] : vector<8x512xf32> to vector<8xf32>
    %7 = vector.shape_cast %6 : vector<8xf32> to vector<8x1xf32>
    %8 = arith.mulf %5, %5 : vector<8x512xf32>
    %cst_6 = arith.constant dense<0.000000e+00> : vector<8xf32>
    %9 = vector.multi_reduction <add>, %8, %cst_6 [1] : vector<8x512xf32> to vector<8xf32>
    %10 = vector.shape_cast %9 : vector<8xf32> to vector<8x1xf32>
    %cst_7 = arith.constant 0.001953125 : f32
    %11 = vector.broadcast %cst_7 : f32 to vector<8x1xf32>
    %12 = arith.mulf %7, %11 : vector<8x1xf32>
    %cst_8 = arith.constant 0.001953125 : f32
    %13 = vector.broadcast %cst_8 : f32 to vector<8x1xf32>
    %14 = arith.mulf %10, %13 : vector<8x1xf32>
    %15 = arith.mulf %12, %12 : vector<8x1xf32>
    %16 = arith.subf %14, %15 : vector<8x1xf32>
    %cst_9 = arith.constant 0.000000e+00 : f32
    %17 = vector.broadcast %cst_9 : f32 to vector<8x1xf32>
    %18 = arith.maximumf %16, %17 : vector<8x1xf32>
    %c0_10 = arith.constant 0 : index
    %c0_11 = arith.constant 0 : index
    %19 = vector.load %arg3[%c0_10, %c0_11] : memref<8x1xf32, #tpu.memory_space<vmem>>, vector<8x1xf32>
    %cst_12 = arith.constant 9.99999974E-6 : f32
    %20 = vector.broadcast %cst_12 : f32 to vector<8x1xf32>
    %21 = arith.addf %18, %20 : vector<8x1xf32>
    %22 = math.rsqrt %21 : vector<8x1xf32>
    %23 = arith.mulf %19, %22 : vector<8x1xf32>
    %c0_13 = arith.constant 0 : index
    %c0_14 = arith.constant 0 : index
    %24 = vector.load %arg4[%c0_13, %c0_14] : memref<8x1xf32, #tpu.memory_space<vmem>>, vector<8x1xf32>
    %25 = arith.mulf %12, %23 : vector<8x1xf32>
    %26 = arith.subf %24, %25 : vector<8x1xf32>
    %27 = vector.broadcast %23 : vector<8x1xf32> to vector<8x512xf32>
    %28 = arith.mulf %5, %27 : vector<8x512xf32>
    %29 = vector.broadcast %26 : vector<8x1xf32> to vector<8x512xf32>
    %30 = arith.addf %28, %29 : vector<8x512xf32>
    %cst_15 = arith.constant 0.000000e+00 : f32
    %31 = vector.broadcast %cst_15 : f32 to vector<8x512xf32>
    %32 = arith.maximumf %30, %31 : vector<8x512xf32>
    %c0_16 = arith.constant 0 : index
    %c0_17 = arith.constant 0 : index
    %33 = vector.load %arg5[%c0_16, %c0_17] : memref<8x512xbf16, #tpu.memory_space<vmem>>, vector<8x512xbf16>
    %34 = arith.extf %33 : vector<8x512xbf16> to vector<8x512xf32>
    %35 = arith.addf %32, %34 : vector<8x512xf32>
    %36 = arith.truncf %35 : vector<8x512xf32> to vector<8x512xbf16>
    %c0_18 = arith.constant 0 : index
    %c0_19 = arith.constant 0 : index
    %37 = vector.load %arg6[%c0_18, %c0_19] : memref<8x512xbf16, #tpu.memory_space<vmem>>, vector<8x512xbf16>
    tpu.vector_store %arg6[%c0_18, %c0_19], %36 {strides = array<i32>} : memref<8x512xbf16, #tpu.memory_space<vmem>>, vector<8x512xbf16>,
    return
  }
}

module attributes {stable_mosaic.version = 11 : i64} {
  func.func @_fused_conv_kernel(%arg0: memref<8x128xbf16, #tpu.memory_space<vmem>>, %arg1: memref<128x512xbf16, #tpu.memory_space<vmem>>, %arg2: memref<8x1xf32, #tpu.memory_space<vmem>>, %arg3: memref<8x1xf32, #tpu.memory_space<vmem>>, %arg4: memref<8x1xf32, #tpu.memory_space<vmem>>, %arg5: memref<8x512xbf16, #tpu.memory_space<vmem>>) attributes {dimension_semantics = [], scalar_prefetch = 0 : i64, scratch_operands = 0 : i64, tpu.core_type = #tpu.core_type<tc>} {
    %c0 = arith.constant 0 : index
    %c0_0 = arith.constant 0 : index
    %0 = vector.load %arg0[%c0, %c0_0] : memref<8x128xbf16, #tpu.memory_space<vmem>>, vector<8x128xbf16>
    %c0_1 = arith.constant 0 : index
    %c0_2 = arith.constant 0 : index
    %1 = vector.load %arg1[%c0_1, %c0_2] : memref<128x512xbf16, #tpu.memory_space<vmem>>, vector<128x512xbf16>
    %cst = arith.constant dense<0.000000e+00> : vector<8x512xf32>
    %2 = tpu.matmul %0, %1, %cst {dimension_numbers = #tpu.dot_dimension_numbers<[1], [0], [0], [1], [0, 0, 1, 1], [], []>} : vector<8x128xbf16>, vector<128x512xbf16>, vector<8x512xf32> -> vector<8x512xf32>
    %c0_3 = arith.constant 0 : index
    %c0_4 = arith.constant 0 : index
    %3 = vector.load %arg2[%c0_3, %c0_4] : memref<8x1xf32, #tpu.memory_space<vmem>>, vector<8x1xf32>
    %4 = vector.broadcast %3 : vector<8x1xf32> to vector<8x512xf32>
    %5 = arith.addf %2, %4 : vector<8x512xf32>
    %cst_5 = arith.constant dense<0.000000e+00> : vector<8xf32>
    %6 = vector.multi_reduction <add>, %5, %cst_5 [1] : vector<8x512xf32> to vector<8xf32>
    %7 = vector.shape_cast %6 : vector<8xf32> to vector<8x1xf32>
    %8 = arith.mulf %5, %5 : vector<8x512xf32>
    %cst_6 = arith.constant dense<0.000000e+00> : vector<8xf32>
    %9 = vector.multi_reduction <add>, %8, %cst_6 [1] : vector<8x512xf32> to vector<8xf32>
    %10 = vector.shape_cast %9 : vector<8xf32> to vector<8x1xf32>
    %cst_7 = arith.constant 0.001953125 : f32
    %11 = vector.broadcast %cst_7 : f32 to vector<8x1xf32>
    %12 = arith.mulf %7, %11 : vector<8x1xf32>
    %cst_8 = arith.constant 0.001953125 : f32
    %13 = vector.broadcast %cst_8 : f32 to vector<8x1xf32>
    %14 = arith.mulf %10, %13 : vector<8x1xf32>
    %15 = arith.mulf %12, %12 : vector<8x1xf32>
    %16 = arith.subf %14, %15 : vector<8x1xf32>
    %cst_9 = arith.constant 0.000000e+00 : f32
    %17 = vector.broadcast %cst_9 : f32 to vector<8x1xf32>
    %18 = arith.maximumf %16, %17 : vector<8x1xf32>
    %c0_10 = arith.constant 0 : index
    %c0_11 = arith.constant 0 : index
    %19 = vector.load %arg3[%c0_10, %c0_11] : memref<8x1xf32, #tpu.memory_space<vmem>>, vector<8x1xf32>
    %cst_12 = arith.constant 9.99999974E-6 : f32
    %20 = vector.broadcast %cst_12 : f32 to vector<8x1xf32>
    %21 = arith.addf %18, %20 : vector<8x1xf32>
    %22 = math.rsqrt %21 : vector<8x1xf32>
    %23 = arith.mulf %19, %22 : vector<8x1xf32>
    %c0_13 = arith.constant 0 : index
    %c0_14 = arith.constant 0 : index
    %24 = vector.load %arg4[%c0_13, %c0_14] : memref<8x1xf32, #tpu.memory_space<vmem>>, vector<8x1xf32>
    %25 = arith.mulf %12, %23 : vector<8x1xf32>
    %26 = arith.subf %24, %25 : vector<8x1xf32>
    %27 = vector.broadcast %23 : vector<8x1xf32> to vector<8x512xf32>
    %28 = arith.mulf %5, %27 : vector<8x512xf32>
    %29 = vector.broadcast %26 : vector<8x1xf32> to vector<8x512xf32>
    %30 = arith.addf %28, %29 : vector<8x512xf32>
    %cst_15 = arith.constant 0.000000e+00 : f32
    %31 = vector.broadcast %cst_15 : f32 to vector<8x512xf32>
    %32 = arith.maximumf %30, %31 : vector<8x512xf32>
    %33 = arith.truncf %32 : vector<8x512xf32> to vector<8x512xbf16>
    %c0_16 = arith.constant 0 : index
    %c0_17 = arith.constant 0 : index
    %34 = vector.load %arg5[%c0_16, %c0_17] : memref<8x512xbf16, #tpu.memory_space<vmem>>, vector<8x512xbf16>
    tpu.vector_store %arg5[%c0_16, %c0_17], %33 {strides = array<i32>} : memref<8x512xbf16, #tpu.memory_space<vmem>>, vector<8x512xbf16>,
    return
  }
}

module attributes {stable_mosaic.version = 11 : i64} {
  func.func @_fused_conv_kernel(%arg0: memref<8x128xbf16, #tpu.memory_space<vmem>>, %arg1: memref<128x512xbf16, #tpu.memory_space<vmem>>, %arg2: memref<8x1xf32, #tpu.memory_space<vmem>>, %arg3: memref<8x1xf32, #tpu.memory_space<vmem>>, %arg4: memref<8x1xf32, #tpu.memory_space<vmem>>, %arg5: memref<8x512xbf16, #tpu.memory_space<vmem>>, %arg6: memref<8x512xbf16, #tpu.memory_space<vmem>>) attributes {dimension_semantics = [], scalar_prefetch = 0 : i64, scratch_operands = 0 : i64, tpu.core_type = #tpu.core_type<tc>} {
    %c0 = arith.constant 0 : index
    %c0_0 = arith.constant 0 : index
    %0 = vector.load %arg0[%c0, %c0_0] : memref<8x128xbf16, #tpu.memory_space<vmem>>, vector<8x128xbf16>
    %c0_1 = arith.constant 0 : index
    %c0_2 = arith.constant 0 : index
    %1 = vector.load %arg1[%c0_1, %c0_2] : memref<128x512xbf16, #tpu.memory_space<vmem>>, vector<128x512xbf16>
    %cst = arith.constant dense<0.000000e+00> : vector<8x512xf32>
    %2 = tpu.matmul %0, %1, %cst {dimension_numbers = #tpu.dot_dimension_numbers<[1], [0], [0], [1], [0, 0, 1, 1], [], []>} : vector<8x128xbf16>, vector<128x512xbf16>, vector<8x512xf32> -> vector<8x512xf32>
    %c0_3 = arith.constant 0 : index
    %c0_4 = arith.constant 0 : index
    %3 = vector.load %arg2[%c0_3, %c0_4] : memref<8x1xf32, #tpu.memory_space<vmem>>, vector<8x1xf32>
    %4 = vector.broadcast %3 : vector<8x1xf32> to vector<8x512xf32>
    %5 = arith.addf %2, %4 : vector<8x512xf32>
    %cst_5 = arith.constant dense<0.000000e+00> : vector<8xf32>
    %6 = vector.multi_reduction <add>, %5, %cst_5 [1] : vector<8x512xf32> to vector<8xf32>
    %7 = vector.shape_cast %6 : vector<8xf32> to vector<8x1xf32>
    %8 = arith.mulf %5, %5 : vector<8x512xf32>
    %cst_6 = arith.constant dense<0.000000e+00> : vector<8xf32>
    %9 = vector.multi_reduction <add>, %8, %cst_6 [1] : vector<8x512xf32> to vector<8xf32>
    %10 = vector.shape_cast %9 : vector<8xf32> to vector<8x1xf32>
    %cst_7 = arith.constant 0.001953125 : f32
    %11 = vector.broadcast %cst_7 : f32 to vector<8x1xf32>
    %12 = arith.mulf %7, %11 : vector<8x1xf32>
    %cst_8 = arith.constant 0.001953125 : f32
    %13 = vector.broadcast %cst_8 : f32 to vector<8x1xf32>
    %14 = arith.mulf %10, %13 : vector<8x1xf32>
    %15 = arith.mulf %12, %12 : vector<8x1xf32>
    %16 = arith.subf %14, %15 : vector<8x1xf32>
    %cst_9 = arith.constant 0.000000e+00 : f32
    %17 = vector.broadcast %cst_9 : f32 to vector<8x1xf32>
    %18 = arith.maximumf %16, %17 : vector<8x1xf32>
    %c0_10 = arith.constant 0 : index
    %c0_11 = arith.constant 0 : index
    %19 = vector.load %arg3[%c0_10, %c0_11] : memref<8x1xf32, #tpu.memory_space<vmem>>, vector<8x1xf32>
    %cst_12 = arith.constant 9.99999974E-6 : f32
    %20 = vector.broadcast %cst_12 : f32 to vector<8x1xf32>
    %21 = arith.addf %18, %20 : vector<8x1xf32>
    %22 = math.rsqrt %21 : vector<8x1xf32>
    %23 = arith.mulf %19, %22 : vector<8x1xf32>
    %c0_13 = arith.constant 0 : index
    %c0_14 = arith.constant 0 : index
    %24 = vector.load %arg4[%c0_13, %c0_14] : memref<8x1xf32, #tpu.memory_space<vmem>>, vector<8x1xf32>
    %25 = arith.mulf %12, %23 : vector<8x1xf32>
    %26 = arith.subf %24, %25 : vector<8x1xf32>
    %27 = vector.broadcast %23 : vector<8x1xf32> to vector<8x512xf32>
    %28 = arith.mulf %5, %27 : vector<8x512xf32>
    %29 = vector.broadcast %26 : vector<8x1xf32> to vector<8x512xf32>
    %30 = arith.addf %28, %29 : vector<8x512xf32>
    %c0_15 = arith.constant 0 : index
    %c0_16 = arith.constant 0 : index
    %31 = vector.load %arg5[%c0_15, %c0_16] : memref<8x512xbf16, #tpu.memory_space<vmem>>, vector<8x512xbf16>
    %32 = arith.extf %31 : vector<8x512xbf16> to vector<8x512xf32>
    %33 = arith.addf %30, %32 : vector<8x512xf32>
    %34 = arith.truncf %33 : vector<8x512xf32> to vector<8x512xbf16>
    %c0_17 = arith.constant 0 : index
    %c0_18 = arith.constant 0 : index
    %35 = vector.load %arg6[%c0_17, %c0_18] : memref<8x512xbf16, #tpu.memory_space<vmem>>, vector<8x512xbf16>
    tpu.vector_store %arg6[%c0_17, %c0_18], %34 {strides = array<i32>} : memref<8x512xbf16, #tpu.memory_space<vmem>>, vector<8x512xbf16>,
    return
  }
}

module attributes {stable_mosaic.version = 11 : i64} {
  func.func @_fused_conv_kernel(%arg0: memref<32x128xbf16, #tpu.memory_space<vmem>>, %arg1: memref<128x512xbf16, #tpu.memory_space<vmem>>, %arg2: memref<32x1xf32, #tpu.memory_space<vmem>>, %arg3: memref<8x1xf32, #tpu.memory_space<vmem>>, %arg4: memref<8x1xf32, #tpu.memory_space<vmem>>, %arg5: memref<32x512xbf16, #tpu.memory_space<vmem>>) attributes {dimension_semantics = [], scalar_prefetch = 0 : i64, scratch_operands = 0 : i64, tpu.core_type = #tpu.core_type<tc>} {
    %c0 = arith.constant 0 : index
    %c0_0 = arith.constant 0 : index
    %0 = vector.load %arg0[%c0, %c0_0] : memref<32x128xbf16, #tpu.memory_space<vmem>>, vector<32x128xbf16>
    %c0_1 = arith.constant 0 : index
    %c0_2 = arith.constant 0 : index
    %1 = vector.load %arg1[%c0_1, %c0_2] : memref<128x512xbf16, #tpu.memory_space<vmem>>, vector<128x512xbf16>
    %cst = arith.constant dense<0.000000e+00> : vector<32x512xf32>
    %2 = tpu.matmul %0, %1, %cst {dimension_numbers = #tpu.dot_dimension_numbers<[1], [0], [0], [1], [0, 0, 1, 1], [], []>} : vector<32x128xbf16>, vector<128x512xbf16>, vector<32x512xf32> -> vector<32x512xf32>
    %c0_3 = arith.constant 0 : index
    %c0_4 = arith.constant 0 : index
    %3 = vector.load %arg2[%c0_3, %c0_4] : memref<32x1xf32, #tpu.memory_space<vmem>>, vector<32x1xf32>
    %4 = vector.broadcast %3 : vector<32x1xf32> to vector<32x512xf32>
    %5 = arith.addf %2, %4 : vector<32x512xf32>
    %cst_5 = arith.constant dense<0.000000e+00> : vector<32xf32>
    %6 = vector.multi_reduction <add>, %5, %cst_5 [1] : vector<32x512xf32> to vector<32xf32>
    %7 = vector.shape_cast %6 : vector<32xf32> to vector<32x1xf32>
    %8 = arith.mulf %5, %5 : vector<32x512xf32>
    %cst_6 = arith.constant dense<0.000000e+00> : vector<32xf32>
    %9 = vector.multi_reduction <add>, %8, %cst_6 [1] : vector<32x512xf32> to vector<32xf32>
    %10 = vector.shape_cast %9 : vector<32xf32> to vector<32x1xf32>
    %11 = vector.extract_strided_slice %7 {offsets = [0, 0], sizes = [8, 1], strides = [1, 1]} : vector<32x1xf32> to vector<8x1xf32>
    %cst_7 = arith.constant 0.000000e+00 : f32
    %12 = vector.broadcast %cst_7 : f32 to vector<8x1xf32>
    %13 = arith.addf %12, %11 : vector<8x1xf32>
    %14 = vector.extract_strided_slice %7 {offsets = [8, 0], sizes = [8, 1], strides = [1, 1]} : vector<32x1xf32> to vector<8x1xf32>
    %15 = arith.addf %13, %14 : vector<8x1xf32>
    %16 = vector.extract_strided_slice %7 {offsets = [16, 0], sizes = [8, 1], strides = [1, 1]} : vector<32x1xf32> to vector<8x1xf32>
    %17 = arith.addf %15, %16 : vector<8x1xf32>
    %18 = vector.extract_strided_slice %7 {offsets = [24, 0], sizes = [8, 1], strides = [1, 1]} : vector<32x1xf32> to vector<8x1xf32>
    %19 = arith.addf %17, %18 : vector<8x1xf32>
    %20 = vector.extract_strided_slice %10 {offsets = [0, 0], sizes = [8, 1], strides = [1, 1]} : vector<32x1xf32> to vector<8x1xf32>
    %cst_8 = arith.constant 0.000000e+00 : f32
    %21 = vector.broadcast %cst_8 : f32 to vector<8x1xf32>
    %22 = arith.addf %21, %20 : vector<8x1xf32>
    %23 = vector.extract_strided_slice %10 {offsets = [8, 0], sizes = [8, 1], strides = [1, 1]} : vector<32x1xf32> to vector<8x1xf32>
    %24 = arith.addf %22, %23 : vector<8x1xf32>
    %25 = vector.extract_strided_slice %10 {offsets = [16, 0], sizes = [8, 1], strides = [1, 1]} : vector<32x1xf32> to vector<8x1xf32>
    %26 = arith.addf %24, %25 : vector<8x1xf32>
    %27 = vector.extract_strided_slice %10 {offsets = [24, 0], sizes = [8, 1], strides = [1, 1]} : vector<32x1xf32> to vector<8x1xf32>
    %28 = arith.addf %26, %27 : vector<8x1xf32>
    %cst_9 = arith.constant 4.8828125E-4 : f32
    %29 = vector.broadcast %cst_9 : f32 to vector<8x1xf32>
    %30 = arith.mulf %19, %29 : vector<8x1xf32>
    %cst_10 = arith.constant 4.8828125E-4 : f32
    %31 = vector.broadcast %cst_10 : f32 to vector<8x1xf32>
    %32 = arith.mulf %28, %31 : vector<8x1xf32>
    %33 = arith.mulf %30, %30 : vector<8x1xf32>
    %34 = arith.subf %32, %33 : vector<8x1xf32>
    %cst_11 = arith.constant 0.000000e+00 : f32
    %35 = vector.broadcast %cst_11 : f32 to vector<8x1xf32>
    %36 = arith.maximumf %34, %35 : vector<8x1xf32>
    %c0_12 = arith.constant 0 : index
    %c0_13 = arith.constant 0 : index
    %37 = vector.load %arg3[%c0_12, %c0_13] : memref<8x1xf32, #tpu.memory_space<vmem>>, vector<8x1xf32>
    %cst_14 = arith.constant 9.99999974E-6 : f32
    %38 = vector.broadcast %cst_14 : f32 to vector<8x1xf32>
    %39 = arith.addf %36, %38 : vector<8x1xf32>
    %40 = math.rsqrt %39 : vector<8x1xf32>
    %41 = arith.mulf %37, %40 : vector<8x1xf32>
    %c0_15 = arith.constant 0 : index
    %c0_16 = arith.constant 0 : index
    %42 = vector.load %arg4[%c0_15, %c0_16] : memref<8x1xf32, #tpu.memory_space<vmem>>, vector<8x1xf32>
    %43 = arith.mulf %30, %41 : vector<8x1xf32>
    %44 = arith.subf %42, %43 : vector<8x1xf32>
    %45 = tpu.concatenate %41, %41, %41, %41 in 0 : vector<8x1xf32>, vector<8x1xf32>, vector<8x1xf32>, vector<8x1xf32> -> vector<32x1xf32>
    %46 = tpu.concatenate %44, %44, %44, %44 in 0 : vector<8x1xf32>, vector<8x1xf32>, vector<8x1xf32>, vector<8x1xf32> -> vector<32x1xf32>
    %47 = vector.broadcast %45 : vector<32x1xf32> to vector<32x512xf32>
    %48 = arith.mulf %5, %47 : vector<32x512xf32>
    %49 = vector.broadcast %46 : vector<32x1xf32> to vector<32x512xf32>
    %50 = arith.addf %48, %49 : vector<32x512xf32>
    %cst_17 = arith.constant 0.000000e+00 : f32
    %51 = vector.broadcast %cst_17 : f32 to vector<32x512xf32>
    %52 = arith.maximumf %50, %51 : vector<32x512xf32>
    %53 = arith.truncf %52 : vector<32x512xf32> to vector<32x512xbf16>
    %c0_18 = arith.constant 0 : index
    %c0_19 = arith.constant 0 : index
    %54 = vector.load %arg5[%c0_18, %c0_19] : memref<32x512xbf16, #tpu.memory_space<vmem>>, vector<32x512xbf16>
    tpu.vector_store %arg5[%c0_18, %c0_19], %53 {strides = array<i32>} : memref<32x512xbf16, #tpu.memory_space<vmem>>, vector<32x512xbf16>,
    return
  }
}

module attributes {stable_mosaic.version = 11 : i64} {
  func.func @_fused_conv_kernel(%arg0: memref<8x512xbf16, #tpu.memory_space<vmem>>, %arg1: memref<512x2048xbf16, #tpu.memory_space<vmem>>, %arg2: memref<8x1xf32, #tpu.memory_space<vmem>>, %arg3: memref<8x2048xbf16, #tpu.memory_space<vmem>>) attributes {dimension_semantics = [], scalar_prefetch = 0 : i64, scratch_operands = 0 : i64, tpu.core_type = #tpu.core_type<tc>} {
    %c0 = arith.constant 0 : index
    %c0_0 = arith.constant 0 : index
    %0 = vector.load %arg0[%c0, %c0_0] : memref<8x512xbf16, #tpu.memory_space<vmem>>, vector<8x512xbf16>
    %c0_1 = arith.constant 0 : index
    %c0_2 = arith.constant 0 : index
    %1 = vector.load %arg1[%c0_1, %c0_2] : memref<512x2048xbf16, #tpu.memory_space<vmem>>, vector<512x2048xbf16>
    %cst = arith.constant dense<0.000000e+00> : vector<8x2048xf32>
    %2 = tpu.matmul %0, %1, %cst {dimension_numbers = #tpu.dot_dimension_numbers<[1], [0], [0], [1], [0, 0, 1, 1], [], []>} : vector<8x512xbf16>, vector<512x2048xbf16>, vector<8x2048xf32> -> vector<8x2048xf32>
    %c0_3 = arith.constant 0 : index
    %c0_4 = arith.constant 0 : index
    %3 = vector.load %arg2[%c0_3, %c0_4] : memref<8x1xf32, #tpu.memory_space<vmem>>, vector<8x1xf32>
    %4 = vector.broadcast %3 : vector<8x1xf32> to vector<8x2048xf32>
    %5 = arith.addf %2, %4 : vector<8x2048xf32>
    %6 = math.tanh %5 : vector<8x2048xf32>
    %7 = arith.truncf %6 : vector<8x2048xf32> to vector<8x2048xbf16>
    %c0_5 = arith.constant 0 : index
    %c0_6 = arith.constant 0 : index
    %8 = vector.load %arg3[%c0_5, %c0_6] : memref<8x2048xbf16, #tpu.memory_space<vmem>>, vector<8x2048xbf16>
    tpu.vector_store %arg3[%c0_5, %c0_6], %7 {strides = array<i32>} : memref<8x2048xbf16, #tpu.memory_space<vmem>>, vector<8x2048xbf16>,
    return
  }
}

</mosaic_0001>

<llo_original>
// kernel: tile.18
$region0: #{tile.18}
  #allocation2 [shape = 's32[1]{0}', space=sflag, size = 0x4, scoped, tag = 'scoped memory for tile.18']
  %s0 = inlined_call_operand.hbm [shape: f32[16], index: 0, kind: input, shape index: {}]
  %s1 = inlined_call_operand.vmem [shape: f32[4,16], index: 1, kind: output, shape index: {}]
  $region1: #{tile.18} parent=0
    #allocation0 [shape = 'u8[512]{0}', space=vmem, size = 0x400, scoped, tag = 'operand span for operand 0']
    #allocation1 [shape = 's32[1]{0}', space=sflag, size = 0x4, scoped, tag = 'scoped memory for tile.18']
    %2 = vsyncpa [#allocation1], 0
    // Predicated region
    $region2: #{tile.18} parent=1 // pred_check
      _
    $region3: #{tile.18} parent=1 // pred_check_branch
      %4 = sbr.rel (0) target = $region5
    $region4: #{tile.18} parent=1 // pred_region
      %s6 = ssub.s32 16, 16
      %7 = vsyncadd [#allocation1], %s6
      %s9 = sshll.u32 [#allocation0], 4
      %s10 = int_to_ptr.vmem [resolvable:$true] %s9
      %12 = dma.hbm_to_vmem [thread:$0]  %s0, 16, %s10, [#allocation1]
    $region5: #{tile.18} parent=1 // pred_fallthru
      _
    // Predicated region
    $region6: #{tile.18} parent=1 // pred_check
      _
    $region7: #{tile.18} parent=1 // pred_check_branch
      %14 = sbr.rel (0) target = $region9
    $region8: #{tile.18} parent=1 // pred_region
      %15 = dma.done [#allocation1], 16
    $region9: #{tile.18} parent=1 // pred_fallthru
      _
    %v16 = vld [vmem:[#allocation0] ss:$0 sm:$0xff]
    %17 = vst [vmem:[%s1] sm:$0xf] %v16
    %18 = vsyncpa [#allocation1], 1

// kernel: tile.28
$region0: #{tile.28}
  #allocation0 [shape = 's32[1]{0}', space=sflag, size = 0x4, scoped, tag = 'scoped memory for tile.28']
  %s0 = inlined_call_operand.vmem [shape: f32[8], index: 0, kind: input, shape index: {}]
  %s1 = inlined_call_operand.vmem [shape: f32[4,8], index: 1, kind: output, shape index: {}]
  // Predicated region
  $region2: #{tile.28} parent=0 // pred_check
    _
  $region3: #{tile.28} parent=0 // pred_check_branch
    %3 = sbr.rel (0) target = $region5
  $region4: #{tile.28} parent=0 // pred_region
    _
  $region5: #{tile.28} parent=0 // pred_fallthru
    _
  %v4 = vld [vmem:[%s0] ss:$0 sm:$0xff]
  %5 = vst [vmem:[%s1] sm:$0xf] %v4

// kernel: tile.23
$region0: #{tile.23}
  #allocation2 [shape = 's32[1]{0}', space=sflag, size = 0x4, scoped, tag = 'scoped memory for tile.23']
  %s0 = inlined_call_operand.hbm [shape: f32[8], index: 0, kind: input, shape index: {}]
  %s1 = inlined_call_operand.vmem [shape: f32[4,8], index: 1, kind: output, shape index: {}]
  $region1: #{tile.23} parent=0
    #allocation0 [shape = 'u8[512]{0}', space=vmem, size = 0x400, scoped, tag = 'operand span for operand 0']
    #allocation1 [shape = 's32[1]{0}', space=sflag, size = 0x4, scoped, tag = 'scoped memory for tile.23']
    %2 = vsyncpa [#allocation1], 0
    // Predicated region
    $region2: #{tile.23} parent=1 // pred_check
      _
    $region3: #{tile.23} parent=1 // pred_check_branch
      %4 = sbr.rel (0) target = $region5
    $region4: #{tile.23} parent=1 // pred_region
      %s6 = ssub.s32 16, 16
      %7 = vsyncadd [#allocation1], %s6
      %s9 = sshll.u32 [#allocation0], 4
      %s10 = int_to_ptr.vmem [resolvable:$true] %s9
      %12 = dma.hbm_to_vmem [thread:$0]  %s0, 16, %s10, [#allocation1]
    $region5: #{tile.23} parent=1 // pred_fallthru
      _
    // Predicated region
    $region6: #{tile.23} parent=1 // pred_check
      _
    $region7: #{tile.23} parent=1 // pred_check_branch
      %14 = sbr.rel (0) target = $region9
    $region8: #{tile.23} parent=1 // pred_region
      %15 = dma.done [#allocation1], 16
    $region9: #{tile.23} parent=1 // pred_fallthru
      _
    %v16 = vld [vmem:[#allocation0] ss:$0 sm:$0xff]
    %17 = vst [vmem:[%s1] sm:$0xf] %v16
    %18 = vsyncpa [#allocation1], 1

// kernel: tile.1
$region0: #{tile.1}
  %s0 = inlined_call_operand.vmem [shape: f32[4,8], index: 0, kind: input, shape index: {}]
  %s1 = inlined_call_operand.vmem [shape: f32[32,1], index: 1, kind: output, shape index: {}]
  $region1: #{tile.1} parent=0
    #allocation0 [shape = 'u8[4096]{0}', space=vmem, size = 0x1000, scoped, tag = 'scoped mem for input reshape']
    %s3 = sshllo.u32 0, 4
    %v4 = vld [vmem:[%s0] sm:%s3]
    %5 = vst [vmem:[#allocation0] sm:%s3] %v4
    %v6 = vld [vmem:[#allocation0] sm:$0xf]
    %vm7 = vcmask 7168
    %8 = vst.msk [vmem:[%s1] ss:$8 sm:$0xf] %vm7, %v6
    %v9 = vld [vmem:[#allocation0] sm:$0xf]
    %10 = vrot.lane.b32.xlu0 %v9, 127
    %v11 = vpop.permute.xlu0 %10
    %vm12 = vcmask 7168
    %s13 = scalar_lea.vmem %s1, 1
    %14 = vst.msk [vmem:[%s13] ss:$8 sm:$0xf] %vm12, %v11
    %v15 = vld [vmem:[#allocation0] sm:$0xf]
    %16 = vrot.lane.b32.xlu0 %v15, 126
    %v17 = vpop.permute.xlu0 %16
    %vm18 = vcmask 7168
    %s19 = scalar_lea.vmem %s1, 2
    %20 = vst.msk [vmem:[%s19] ss:$8 sm:$0xf] %vm18, %v17
    %v21 = vld [vmem:[#allocation0] sm:$0xf]
    %22 = vrot.lane.b32.xlu0 %v21, 125
    %v23 = vpop.permute.xlu0 %22
    %vm24 = vcmask 7168
    %s25 = scalar_lea.vmem %s1, 3
    %26 = vst.msk [vmem:[%s25] ss:$8 sm:$0xf] %vm24, %v23
    %v27 = vld [vmem:[#allocation0] sm:$0xf]
    %28 = vrot.lane.b32.xlu0 %v27, 124
    %v29 = vpop.permute.xlu0 %28
    %vm30 = vcmask 7168
    %s31 = scalar_lea.vmem %s1, 4
    %32 = vst.msk [vmem:[%s31] ss:$8 sm:$0xf] %vm30, %v29
    %v33 = vld [vmem:[#allocation0] sm:$0xf]
    %34 = vrot.lane.b32.xlu0 %v33, 123
    %v35 = vpop.permute.xlu0 %34
    %vm36 = vcmask 7168
    %s37 = scalar_lea.vmem %s1, 5
    %38 = vst.msk [vmem:[%s37] ss:$8 sm:$0xf] %vm36, %v35
    %v39 = vld [vmem:[#allocation0] sm:$0xf]
    %40 = vrot.lane.b32.xlu0 %v39, 122
    %v41 = vpop.permute.xlu0 %40
    %vm42 = vcmask 7168
    %s43 = scalar_lea.vmem %s1, 6
    %44 = vst.msk [vmem:[%s43] ss:$8 sm:$0xf] %vm42, %v41
    %v45 = vld [vmem:[#allocation0] sm:$0xf]
    %46 = vrot.lane.b32.xlu0 %v45, 121
    %v47 = vpop.permute.xlu0 %46
    %vm48 = vcmask 7168
    %s49 = scalar_lea.vmem %s1, 7
    %50 = vst.msk [vmem:[%s49] ss:$8 sm:$0xf] %vm48, %v47

// kernel: tile.0
$region0: #{tile.0}
  %s0 = inlined_call_operand.vmem [shape: f32[4,16], index: 0, kind: input, shape index: {}]
  %s1 = inlined_call_operand.vmem [shape: f32[64,1], index: 1, kind: output, shape index: {}]
  $region1: #{tile.0} parent=0
    #allocation0 [shape = 'u8[4096]{0}', space=vmem, size = 0x1000, scoped, tag = 'scoped mem for input reshape']
    %s3 = sshllo.u32 0, 4
    %v4 = vld [vmem:[%s0] sm:%s3]
    %5 = vst [vmem:[#allocation0] sm:%s3] %v4
    %v6 = vld [vmem:[#allocation0] sm:$0xf]
    %vm7 = vcmask 7168
    %8 = vst.msk [vmem:[%s1] ss:$16 sm:$0x3] %vm7, %v6
    %9 = vst.msk [vmem:[%s1] ss:$16 sm:$0xc] %vm7, %v6
    %v10 = vld [vmem:[#allocation0] sm:$0xf]
    %11 = vrot.lane.b32.xlu0 %v10, 127
    %v12 = vpop.permute.xlu0 %11
    %vm13 = vcmask 7168
    %s14 = scalar_lea.vmem %s1, 1
    %15 = vst.msk [vmem:[%s14] ss:$16 sm:$0x3] %vm13, %v12
    %s16 = scalar_lea.vmem %s1, 1
    %17 = vst.msk [vmem:[%s16] ss:$16 sm:$0xc] %vm13, %v12
    %v18 = vld [vmem:[#allocation0] sm:$0xf]
    %19 = vrot.lane.b32.xlu0 %v18, 126
    %v20 = vpop.permute.xlu0 %19
    %vm21 = vcmask 7168
    %s22 = scalar_lea.vmem %s1, 2
    %23 = vst.msk [vmem:[%s22] ss:$16 sm:$0x3] %vm21, %v20
    %s24 = scalar_lea.vmem %s1, 2
    %25 = vst.msk [vmem:[%s24] ss:$16 sm:$0xc] %vm21, %v20
    %v26 = vld [vmem:[#allocation0] sm:$0xf]
    %27 = vrot.lane.b32.xlu0 %v26, 125
    %v28 = vpop.permute.xlu0 %27
    %vm29 = vcmask 7168
    %s30 = scalar_lea.vmem %s1, 3
    %31 = vst.msk [vmem:[%s30] ss:$16 sm:$0x3] %vm29, %v28
    %s32 = scalar_lea.vmem %s1, 3
    %33 = vst.msk [vmem:[%s32] ss:$16 sm:$0xc] %vm29, %v28
    %v34 = vld [vmem:[#allocation0] sm:$0xf]
    %35 = vrot.lane.b32.xlu0 %v34, 124
    %v36 = vpop.permute.xlu0 %35
    %vm37 = vcmask 7168
    %s38 = scalar_lea.vmem %s1, 4
    %39 = vst.msk [vmem:[%s38] ss:$16 sm:$0x3] %vm37, %v36
    %s40 = scalar_lea.vmem %s1, 4
    %41 = vst.msk [vmem:[%s40] ss:$16 sm:$0xc] %vm37, %v36
    %v42 = vld [vmem:[#allocation0] sm:$0xf]
    %43 = vrot.lane.b32.xlu0 %v42, 123
    %v44 = vpop.permute.xlu0 %43
    %vm45 = vcmask 7168
    %s46 = scalar_lea.vmem %s1, 5
    %47 = vst.msk [vmem:[%s46] ss:$16 sm:$0x3] %vm45, %v44
    %s48 = scalar_lea.vmem %s1, 5
    %49 = vst.msk [vmem:[%s48] ss:$16 sm:$0xc] %vm45, %v44
    %v50 = vld [vmem:[#allocation0] sm:$0xf]
    %51 = vrot.lane.b32.xlu0 %v50, 122
    %v52 = vpop.permute.xlu0 %51
    %vm53 = vcmask 7168
    %s54 = scalar_lea.vmem %s1, 6
    %55 = vst.msk [vmem:[%s54] ss:$16 sm:$0x3] %vm53, %v52
    %s56 = scalar_lea.vmem %s1, 6
    %57 = vst.msk [vmem:[%s56] ss:$16 sm:$0xc] %vm53, %v52
    %v58 = vld [vmem:[#allocation0] sm:$0xf]
    %59 = vrot.lane.b32.xlu0 %v58, 121
    %v60 = vpop.permute.xlu0 %59
    %vm61 = vcmask 7168
    %s62 = scalar_lea.vmem %s1, 7
    %63 = vst.msk [vmem:[%s62] ss:$16 sm:$0x3] %vm61, %v60
    %s64 = scalar_lea.vmem %s1, 7
    %65 = vst.msk [vmem:[%s64] ss:$16 sm:$0xc] %vm61, %v60
    %v66 = vld [vmem:[#allocation0] sm:$0xf]
    %67 = vrot.lane.b32.xlu0 %v66, 120
    %v68 = vpop.permute.xlu0 %67
    %vm69 = vcmask 7168
    %s70 = scalar_lea.vmem %s1, 8
    %71 = vst.msk [vmem:[%s70] ss:$16 sm:$0x3] %vm69, %v68
    %s72 = scalar_lea.vmem %s1, 8
    %73 = vst.msk [vmem:[%s72] ss:$16 sm:$0xc] %vm69, %v68
    %v74 = vld [vmem:[#allocation0] sm:$0xf]
    %75 = vrot.lane.b32.xlu0 %v74, 119
    %v76 = vpop.permute.xlu0 %75
    %vm77 = vcmask 7168
    %s78 = scalar_lea.vmem %s1, 9
    %79 = vst.msk [vmem:[%s78] ss:$16 sm:$0x3] %vm77, %v76
    %s80 = scalar_lea.vmem %s1, 9
    %81 = vst.msk [vmem:[%s80] ss:$16 sm:$0xc] %vm77, %v76
    %v82 = vld [vmem:[#allocation0] sm:$0xf]
    %83 = vrot.lane.b32.xlu0 %v82, 118
    %v84 = vpop.permute.xlu0 %83
    %vm85 = vcmask 7168
    %s86 = scalar_lea.vmem %s1, 10
    %87 = vst.msk [vmem:[%s86] ss:$16 sm:$0x3] %vm85, %v84
    %s88 = scalar_lea.vmem %s1, 10
    %89 = vst.msk [vmem:[%s88] ss:$16 sm:$0xc] %vm85, %v84
    %v90 = vld [vmem:[#allocation0] sm:$0xf]
    %91 = vrot.lane.b32.xlu0 %v90, 117
    %v92 = vpop.permute.xlu0 %91
    %vm93 = vcmask 7168
    %s94 = scalar_lea.vmem %s1, 11
    %95 = vst.msk [vmem:[%s94] ss:$16 sm:$0x3] %vm93, %v92
    %s96 = scalar_lea.vmem %s1, 11
    %97 = vst.msk [vmem:[%s96] ss:$16 sm:$0xc] %vm93, %v92
    %v98 = vld [vmem:[#allocation0] sm:$0xf]
    %99 = vrot.lane.b32.xlu0 %v98, 116
    %v100 = vpop.permute.xlu0 %99
    %vm101 = vcmask 7168
    %s102 = scalar_lea.vmem %s1, 12
    %103 = vst.msk [vmem:[%s102] ss:$16 sm:$0x3] %vm101, %v100
    %s104 = scalar_lea.vmem %s1, 12
    %105 = vst.msk [vmem:[%s104] ss:$16 sm:$0xc] %vm101, %v100
    %v106 = vld [vmem:[#allocation0] sm:$0xf]
    %107 = vrot.lane.b32.xlu0 %v106, 115
    %v108 = vpop.permute.xlu0 %107
    %vm109 = vcmask 7168
    %s110 = scalar_lea.vmem %s1, 13
    %111 = vst.msk [vmem:[%s110] ss:$16 sm:$0x3] %vm109, %v108
    %s112 = scalar_lea.vmem %s1, 13
    %113 = vst.msk [vmem:[%s112] ss:$16 sm:$0xc] %vm109, %v108
    %v114 = vld [vmem:[#allocation0] sm:$0xf]
    %115 = vrot.lane.b32.xlu0 %v114, 114
    %v116 = vpop.permute.xlu0 %115
    %vm117 = vcmask 7168
    %s118 = scalar_lea.vmem %s1, 14
    %119 = vst.msk [vmem:[%s118] ss:$16 sm:$0x3] %vm117, %v116
    %s120 = scalar_lea.vmem %s1, 14
    %121 = vst.msk [vmem:[%s120] ss:$16 sm:$0xc] %vm117, %v116
    %v122 = vld [vmem:[#allocation0] sm:$0xf]
    %123 = vrot.lane.b32.xlu0 %v122, 113
    %v124 = vpop.permute.xlu0 %123
    %vm125 = vcmask 7168
    %s126 = scalar_lea.vmem %s1, 15
    %127 = vst.msk [vmem:[%s126] ss:$16 sm:$0x3] %vm125, %v124
    %s128 = scalar_lea.vmem %s1, 15
    %129 = vst.msk [vmem:[%s128] ss:$16 sm:$0xc] %vm125, %v124

// kernel: local_enhancer_forward.17
$region0: #{local_enhancer_forward.17}
  #allocation0 [shape = 'u32[]', space=smem, size = 0x4, offset = 0x4, fixed_abs, tag = 'smem constant byte address 0x4 - core index']
  #allocation1 [shape = 'u32[144,128]{1,0:T(1,128)}', space=vmem, size = 0x12000, scoped, tag = 'internal scratch']
  %s0 = inlined_call_operand.vmem [shape: bf16[8,512], index: 0, kind: input, shape index: {}]
  %s1 = inlined_call_operand.vmem [shape: bf16[512,512], index: 1, kind: input, shape index: {}]
  %s2 = inlined_call_operand.vmem [shape: f32[8,1], index: 2, kind: input, shape index: {}]
  %s3 = inlined_call_operand.vmem [shape: f32[8,1], index: 3, kind: input, shape index: {}]
  %s4 = inlined_call_operand.vmem [shape: f32[8,1], index: 4, kind: input, shape index: {}]
  %s5 = inlined_call_operand.vmem [shape: bf16[8,512], index: 5, kind: output, shape index: {}]
  %s6 = sld [smem:[#allocation0]]
  $region30: #{local_enhancer_forward.17} parent=0
    _
  %s8 = ssub.s32 1, %s6
  %s9 = scalar_select 0, %s8, %s6
  // Predicated region
  $region2: #{local_enhancer_forward.17} parent=0 // pred_check
    _
  $region3: #{local_enhancer_forward.17} parent=0 // pred_check_branch
    %11 = sbr.rel (0) target = $region5
  $region4: #{local_enhancer_forward.17} parent=0 // pred_region
    _
  $region5: #{local_enhancer_forward.17} parent=0 // pred_fallthru
    _
  // Predicated region
  $region6: #{local_enhancer_forward.17} parent=0 // pred_check
    _
  $region7: #{local_enhancer_forward.17} parent=0 // pred_check_branch
    %13 = sbr.rel (0) target = $region9
  $region8: #{local_enhancer_forward.17} parent=0 // pred_region
    _
  $region9: #{local_enhancer_forward.17} parent=0 // pred_fallthru
    _
  // Predicated region
  $region10: #{local_enhancer_forward.17} parent=0 // pred_check
    _
  $region11: #{local_enhancer_forward.17} parent=0 // pred_check_branch
    %15 = sbr.rel (0) target = $region13
  $region12: #{local_enhancer_forward.17} parent=0 // pred_region
    _
  $region13: #{local_enhancer_forward.17} parent=0 // pred_fallthru
    _
  // Predicated region
  $region14: #{local_enhancer_forward.17} parent=0 // pred_check
    _
  $region15: #{local_enhancer_forward.17} parent=0 // pred_check_branch
    %17 = sbr.rel (0) target = $region17
  $region16: #{local_enhancer_forward.17} parent=0 // pred_region
    _
  $region17: #{local_enhancer_forward.17} parent=0 // pred_fallthru
    _
  // Predicated region
  $region18: #{local_enhancer_forward.17} parent=0 // pred_check
    _
  $region19: #{local_enhancer_forward.17} parent=0 // pred_check_branch
    %19 = sbr.rel (0) target = $region21
  $region20: #{local_enhancer_forward.17} parent=0 // pred_region
    _
  $region21: #{local_enhancer_forward.17} parent=0 // pred_fallthru
    _
  %v20 = vld [vmem:[%s0] sm:$0xff]
  %v21 = vld [vmem:[%s0 + $0x8] sm:$0xff]
  %v22 = vld [vmem:[%s1] sm:$0xff]
  %v23 = vld [vmem:[%s1 + $0x8] sm:$0xff]
  %v24 = vld [vmem:[%s1 + $0x10] sm:$0xff]
  %v25 = vld [vmem:[%s1 + $0x18] sm:$0xff]
  %v26 = vld [vmem:[%s1 + $0x20] sm:$0xff]
  %v27 = vld [vmem:[%s1 + $0x28] sm:$0xff]
  %v28 = vld [vmem:[%s1 + $0x30] sm:$0xff]
  %v29 = vld [vmem:[%s1 + $0x38] sm:$0xff]
  %v30 = vld [vmem:[%s1 + $0x40] sm:$0xff]
  %v31 = vld [vmem:[%s1 + $0x48] sm:$0xff]
  %v32 = vld [vmem:[%s1 + $0x50] sm:$0xff]
  %v33 = vld [vmem:[%s1 + $0x58] sm:$0xff]
  %v34 = vld [vmem:[%s1 + $0x60] sm:$0xff]
  %v35 = vld [vmem:[%s1 + $0x68] sm:$0xff]
  %v36 = vld [vmem:[%s1 + $0x70] sm:$0xff]
  %v37 = vld [vmem:[%s1 + $0x78] sm:$0xff]
  %v38 = vld [vmem:[%s1 + $0x80] sm:$0xff]
  %v39 = vld [vmem:[%s1 + $0x88] sm:$0xff]
  %v40 = vld [vmem:[%s1 + $0x90] sm:$0xff]
  %v41 = vld [vmem:[%s1 + $0x98] sm:$0xff]
  %v42 = vld [vmem:[%s1 + $0xa0] sm:$0xff]
  %v43 = vld [vmem:[%s1 + $0xa8] sm:$0xff]
  %v44 = vld [vmem:[%s1 + $0xb0] sm:$0xff]
  %v45 = vld [vmem:[%s1 + $0xb8] sm:$0xff]
  %v46 = vld [vmem:[%s1 + $0xc0] sm:$0xff]
  %v47 = vld [vmem:[%s1 + $0xc8] sm:$0xff]
  %v48 = vld [vmem:[%s1 + $0xd0] sm:$0xff]
  %v49 = vld [vmem:[%s1 + $0xd8] sm:$0xff]
  %v50 = vld [vmem:[%s1 + $0xe0] sm:$0xff]
  %v51 = vld [vmem:[%s1 + $0xe8] sm:$0xff]
  %v52 = vld [vmem:[%s1 + $0xf0] sm:$0xff]
  %v53 = vld [vmem:[%s1 + $0xf8] sm:$0xff]
  %v54 = vld [vmem:[%s1 + $0x100] sm:$0xff]
  %v55 = vld [vmem:[%s1 + $0x108] sm:$0xff]
  %v56 = vld [vmem:[%s1 + $0x110] sm:$0xff]
  %v57 = vld [vmem:[%s1 + $0x118] sm:$0xff]
  %v58 = vld [vmem:[%s1 + $0x120] sm:$0xff]
  %v59 = vld [vmem:[%s1 + $0x128] sm:$0xff]
  %v60 = vld [vmem:[%s1 + $0x130] sm:$0xff]
  %v61 = vld [vmem:[%s1 + $0x138] sm:$0xff]
  %v62 = vld [vmem:[%s1 + $0x140] sm:$0xff]
  %v63 = vld [vmem:[%s1 + $0x148] sm:$0xff]
  %v64 = vld [vmem:[%s1 + $0x150] sm:$0xff]
  %v65 = vld [vmem:[%s1 + $0x158] sm:$0xff]
  %v66 = vld [vmem:[%s1 + $0x160] sm:$0xff]
  %v67 = vld [vmem:[%s1 + $0x168] sm:$0xff]
  %v68 = vld [vmem:[%s1 + $0x170] sm:$0xff]
  %v69 = vld [vmem:[%s1 + $0x178] sm:$0xff]
  %v70 = vld [vmem:[%s1 + $0x180] sm:$0xff]
  %v71 = vld [vmem:[%s1 + $0x188] sm:$0xff]
  %v72 = vld [vmem:[%s1 + $0x190] sm:$0xff]
  %v73 = vld [vmem:[%s1 + $0x198] sm:$0xff]
  %v74 = vld [vmem:[%s1 + $0x1a0] sm:$0xff]
  %v75 = vld [vmem:[%s1 + $0x1a8] sm:$0xff]
  %v76 = vld [vmem:[%s1 + $0x1b0] sm:$0xff]
  %v77 = vld [vmem:[%s1 + $0x1b8] sm:$0xff]
  %v78 = vld [vmem:[%s1 + $0x1c0] sm:$0xff]
  %v79 = vld [vmem:[%s1 + $0x1c8] sm:$0xff]
  %v80 = vld [vmem:[%s1 + $0x1d0] sm:$0xff]
  %v81 = vld [vmem:[%s1 + $0x1d8] sm:$0xff]
  %v82 = vld [vmem:[%s1 + $0x1e0] sm:$0xff]
  %v83 = vld [vmem:[%s1 + $0x1e8] sm:$0xff]
  %v84 = vld [vmem:[%s1 + $0x1f0] sm:$0xff]
  %v85 = vld [vmem:[%s1 + $0x1f8] sm:$0xff]
  %v86 = vld [vmem:[%s1 + $0x200] sm:$0xff]
  %v87 = vld [vmem:[%s1 + $0x208] sm:$0xff]
  %v88 = vld [vmem:[%s1 + $0x210] sm:$0xff]
  %v89 = vld [vmem:[%s1 + $0x218] sm:$0xff]
  %v90 = vld [vmem:[%s1 + $0x220] sm:$0xff]
  %v91 = vld [vmem:[%s1 + $0x228] sm:$0xff]
  %v92 = vld [vmem:[%s1 + $0x230] sm:$0xff]
  %v93 = vld [vmem:[%s1 + $0x238] sm:$0xff]
  %v94 = vld [vmem:[%s1 + $0x240] sm:$0xff]
  %v95 = vld [vmem:[%s1 + $0x248] sm:$0xff]
  %v96 = vld [vmem:[%s1 + $0x250] sm:$0xff]
  %v97 = vld [vmem:[%s1 + $0x258] sm:$0xff]
  %v98 = vld [vmem:[%s1 + $0x260] sm:$0xff]
  %v99 = vld [vmem:[%s1 + $0x268] sm:$0xff]
  %v100 = vld [vmem:[%s1 + $0x270] sm:$0xff]
  %v101 = vld [vmem:[%s1 + $0x278] sm:$0xff]
  %v102 = vld [vmem:[%s1 + $0x280] sm:$0xff]
  %v103 = vld [vmem:[%s1 + $0x288] sm:$0xff]
  %v104 = vld [vmem:[%s1 + $0x290] sm:$0xff]
  %v105 = vld [vmem:[%s1 + $0x298] sm:$0xff]
  %v106 = vld [vmem:[%s1 + $0x2a0] sm:$0xff]
  %v107 = vld [vmem:[%s1 + $0x2a8] sm:$0xff]
  %v108 = vld [vmem:[%s1 + $0x2b0] sm:$0xff]
  %v109 = vld [vmem:[%s1 + $0x2b8] sm:$0xff]
  %v110 = vld [vmem:[%s1 + $0x2c0] sm:$0xff]
  %v111 = vld [vmem:[%s1 + $0x2c8] sm:$0xff]
  %v112 = vld [vmem:[%s1 + $0x2d0] sm:$0xff]
  %v113 = vld [vmem:[%s1 + $0x2d8] sm:$0xff]
  %v114 = vld [vmem:[%s1 + $0x2e0] sm:$0xff]
  %v115 = vld [vmem:[%s1 + $0x2e8] sm:$0xff]
  %v116 = vld [vmem:[%s1 + $0x2f0] sm:$0xff]
  %v117 = vld [vmem:[%s1 + $0x2f8] sm:$0xff]
  %v118 = vld [vmem:[%s1 + $0x300] sm:$0xff]
  %v119 = vld [vmem:[%s1 + $0x308] sm:$0xff]
  %v120 = vld [vmem:[%s1 + $0x310] sm:$0xff]
  %v121 = vld [vmem:[%s1 + $0x318] sm:$0xff]
  %v122 = vld [vmem:[%s1 + $0x320] sm:$0xff]
  %v123 = vld [vmem:[%s1 + $0x328] sm:$0xff]
  %v124 = vld [vmem:[%s1 + $0x330] sm:$0xff]
  %v125 = vld [vmem:[%s1 + $0x338] sm:$0xff]
  %v126 = vld [vmem:[%s1 + $0x340] sm:$0xff]
  %v127 = vld [vmem:[%s1 + $0x348] sm:$0xff]
  %v128 = vld [vmem:[%s1 + $0x350] sm:$0xff]
  %v129 = vld [vmem:[%s1 + $0x358] sm:$0xff]
  %v130 = vld [vmem:[%s1 + $0x360] sm:$0xff]
  %v131 = vld [vmem:[%s1 + $0x368] sm:$0xff]
  %v132 = vld [vmem:[%s1 + $0x370] sm:$0xff]
  %v133 = vld [vmem:[%s1 + $0x378] sm:$0xff]
  %v134 = vld [vmem:[%s1 + $0x380] sm:$0xff]
  %v135 = vld [vmem:[%s1 + $0x388] sm:$0xff]
  %v136 = vld [vmem:[%s1 + $0x390] sm:$0xff]
  %v137 = vld [vmem:[%s1 + $0x398] sm:$0xff]
  %v138 = vld [vmem:[%s1 + $0x3a0] sm:$0xff]
  %v139 = vld [vmem:[%s1 + $0x3a8] sm:$0xff]
  %v140 = vld [vmem:[%s1 + $0x3b0] sm:$0xff]
  %v141 = vld [vmem:[%s1 + $0x3b8] sm:$0xff]
  %v142 = vld [vmem:[%s1 + $0x3c0] sm:$0xff]
  %v143 = vld [vmem:[%s1 + $0x3c8] sm:$0xff]
  %v144 = vld [vmem:[%s1 + $0x3d0] sm:$0xff]
  %v145 = vld [vmem:[%s1 + $0x3d8] sm:$0xff]
  %v146 = vld [vmem:[%s1 + $0x3e0] sm:$0xff]
  %v147 = vld [vmem:[%s1 + $0x3e8] sm:$0xff]
  %v148 = vld [vmem:[%s1 + $0x3f0] sm:$0xff]
  %v149 = vld [vmem:[%s1 + $0x3f8] sm:$0xff]
  %v150 = vld [vmem:[%s2] sm:$0xff]
  %152 = vset.pattern.permute.xlu0 0
  %153 = vperm.xlu0 %152, %v150
  %v154 = vpop.permute.xlu0 %153
  %v158 = vunpack.c.l.b16 %v20
  %v159 = vunpack.c.h.b16 %v20
  %v160 = vunpack.c.l.b16 %v21
  %v161 = vunpack.c.h.b16 %v21
  %v162 = vpack.c.b16 %v158, %v158
  %v163 = vpack.c.b16 %v159, %v159
  %v164 = vpack.c.b16 %v160, %v160
  %v165 = vpack.c.b16 %v161, %v161
  %v298 = vunpack.c.l.b16 %v22
  %v299 = vunpack.c.h.b16 %v22
  %v300 = vunpack.c.l.b16 %v23
  %v301 = vunpack.c.h.b16 %v23
  %v302 = vunpack.c.l.b16 %v24
  %v303 = vunpack.c.h.b16 %v24
  %v304 = vunpack.c.l.b16 %v25
  %v305 = vunpack.c.h.b16 %v25
  %v306 = vunpack.c.l.b16 %v26
  %v307 = vunpack.c.h.b16 %v26
  %v308 = vunpack.c.l.b16 %v27
  %v309 = vunpack.c.h.b16 %v27
  %v310 = vunpack.c.l.b16 %v28
  %v311 = vunpack.c.h.b16 %v28
  %v312 = vunpack.c.l.b16 %v29
  %v313 = vunpack.c.h.b16 %v29
  %v314 = vunpack.c.l.b16 %v30
  %v315 = vunpack.c.h.b16 %v30
  %v316 = vunpack.c.l.b16 %v31
  %v317 = vunpack.c.h.b16 %v31
  %v318 = vunpack.c.l.b16 %v32
  %v319 = vunpack.c.h.b16 %v32
  %v320 = vunpack.c.l.b16 %v33
  %v321 = vunpack.c.h.b16 %v33
  %v322 = vunpack.c.l.b16 %v34
  %v323 = vunpack.c.h.b16 %v34
  %v324 = vunpack.c.l.b16 %v35
  %v325 = vunpack.c.h.b16 %v35
  %v326 = vunpack.c.l.b16 %v36
  %v327 = vunpack.c.h.b16 %v36
  %v328 = vunpack.c.l.b16 %v37
  %v329 = vunpack.c.h.b16 %v37
  %v330 = vunpack.c.l.b16 %v38
  %v331 = vunpack.c.h.b16 %v38
  %v332 = vunpack.c.l.b16 %v39
  %v333 = vunpack.c.h.b16 %v39
  %v334 = vunpack.c.l.b16 %v40
  %v335 = vunpack.c.h.b16 %v40
  %v336 = vunpack.c.l.b16 %v41
  %v337 = vunpack.c.h.b16 %v41
  %v338 = vunpack.c.l.b16 %v42
  %v339 = vunpack.c.h.b16 %v42
  %v340 = vunpack.c.l.b16 %v43
  %v341 = vunpack.c.h.b16 %v43
  %v342 = vunpack.c.l.b16 %v44
  %v343 = vunpack.c.h.b16 %v44
  %v344 = vunpack.c.l.b16 %v45
  %v345 = vunpack.c.h.b16 %v45
  %v346 = vunpack.c.l.b16 %v46
  %v347 = vunpack.c.h.b16 %v46
  %v348 = vunpack.c.l.b16 %v47
  %v349 = vunpack.c.h.b16 %v47
  %v350 = vunpack.c.l.b16 %v48
  %v351 = vunpack.c.h.b16 %v48
  %v352 = vunpack.c.l.b16 %v49
  %v353 = vunpack.c.h.b16 %v49
  %v354 = vunpack.c.l.b16 %v50
  %v355 = vunpack.c.h.b16 %v50
  %v356 = vunpack.c.l.b16 %v51
  %v357 = vunpack.c.h.b16 %v51
  %v358 = vunpack.c.l.b16 %v52
  %v359 = vunpack.c.h.b16 %v52
  %v360 = vunpack.c.l.b16 %v53
  %v361 = vunpack.c.h.b16 %v53
  %v362 = vunpack.c.l.b16 %v54
  %v363 = vunpack.c.h.b16 %v54
  %v364 = vunpack.c.l.b16 %v55
  %v365 = vunpack.c.h.b16 %v55
  %v366 = vunpack.c.l.b16 %v56
  %v367 = vunpack.c.h.b16 %v56
  %v368 = vunpack.c.l.b16 %v57
  %v369 = vunpack.c.h.b16 %v57
  %v370 = vunpack.c.l.b16 %v58
  %v371 = vunpack.c.h.b16 %v58
  %v372 = vunpack.c.l.b16 %v59
  %v373 = vunpack.c.h.b16 %v59
  %v374 = vunpack.c.l.b16 %v60
  %v375 = vunpack.c.h.b16 %v60
  %v376 = vunpack.c.l.b16 %v61
  %v377 = vunpack.c.h.b16 %v61
  %v378 = vunpack.c.l.b16 %v62
  %v379 = vunpack.c.h.b16 %v62
  %v380 = vunpack.c.l.b16 %v63
  %v381 = vunpack.c.h.b16 %v63
  %v382 = vunpack.c.l.b16 %v64
  %v383 = vunpack.c.h.b16 %v64
  %v384 = vunpack.c.l.b16 %v65
  %v385 = vunpack.c.h.b16 %v65
  %v386 = vunpack.c.l.b16 %v66
  %v387 = vunpack.c.h.b16 %v66
  %v388 = vunpack.c.l.b16 %v67
  %v389 = vunpack.c.h.b16 %v67
  %v390 = vunpack.c.l.b16 %v68
  %v391 = vunpack.c.h.b16 %v68
  %v392 = vunpack.c.l.b16 %v69
  %v393 = vunpack.c.h.b16 %v69
  %v394 = vunpack.c.l.b16 %v70
  %v395 = vunpack.c.h.b16 %v70
  %v396 = vunpack.c.l.b16 %v71
  %v397 = vunpack.c.h.b16 %v71
  %v398 = vunpack.c.l.b16 %v72
  %v399 = vunpack.c.h.b16 %v72
  %v400 = vunpack.c.l.b16 %v73
  %v401 = vunpack.c.h.b16 %v73
  %v402 = vunpack.c.l.b16 %v74
  %v403 = vunpack.c.h.b16 %v74
  %v404 = vunpack.c.l.b16 %v75
  %v405 = vunpack.c.h.b16 %v75
  %v406 = vunpack.c.l.b16 %v76
  %v407 = vunpack.c.h.b16 %v76
  %v408 = vunpack.c.l.b16 %v77
  %v409 = vunpack.c.h.b16 %v77
  %v410 = vunpack.c.l.b16 %v78
  %v411 = vunpack.c.h.b16 %v78
  %v412 = vunpack.c.l.b16 %v79
  %v413 = vunpack.c.h.b16 %v79
  %v414 = vunpack.c.l.b16 %v80
  %v415 = vunpack.c.h.b16 %v80
  %v416 = vunpack.c.l.b16 %v81
  %v417 = vunpack.c.h.b16 %v81
  %v418 = vunpack.c.l.b16 %v82
  %v419 = vunpack.c.h.b16 %v82
  %v420 = vunpack.c.l.b16 %v83
  %v421 = vunpack.c.h.b16 %v83
  %v422 = vunpack.c.l.b16 %v84
  %v423 = vunpack.c.h.b16 %v84
  %v424 = vunpack.c.l.b16 %v85
  %v425 = vunpack.c.h.b16 %v85
  %v426 = vunpack.c.l.b16 %v86
  %v427 = vunpack.c.h.b16 %v86
  %v428 = vunpack.c.l.b16 %v87
  %v429 = vunpack.c.h.b16 %v87
  %v430 = vunpack.c.l.b16 %v88
  %v431 = vunpack.c.h.b16 %v88
  %v432 = vunpack.c.l.b16 %v89
  %v433 = vunpack.c.h.b16 %v89
  %v434 = vunpack.c.l.b16 %v90
  %v435 = vunpack.c.h.b16 %v90
  %v436 = vunpack.c.l.b16 %v91
  %v437 = vunpack.c.h.b16 %v91
  %v438 = vunpack.c.l.b16 %v92
  %v439 = vunpack.c.h.b16 %v92
  %v440 = vunpack.c.l.b16 %v93
  %v441 = vunpack.c.h.b16 %v93
  %v442 = vunpack.c.l.b16 %v94
  %v443 = vunpack.c.h.b16 %v94
  %v444 = vunpack.c.l.b16 %v95
  %v445 = vunpack.c.h.b16 %v95
  %v446 = vunpack.c.l.b16 %v96
  %v447 = vunpack.c.h.b16 %v96
  %v448 = vunpack.c.l.b16 %v97
  %v449 = vunpack.c.h.b16 %v97
  %v450 = vunpack.c.l.b16 %v98
  %v451 = vunpack.c.h.b16 %v98
  %v452 = vunpack.c.l.b16 %v99
  %v453 = vunpack.c.h.b16 %v99
  %v454 = vunpack.c.l.b16 %v100
  %v455 = vunpack.c.h.b16 %v100
  %v456 = vunpack.c.l.b16 %v101
  %v457 = vunpack.c.h.b16 %v101
  %v458 = vunpack.c.l.b16 %v102
  %v459 = vunpack.c.h.b16 %v102
  %v460 = vunpack.c.l.b16 %v103
  %v461 = vunpack.c.h.b16 %v103
  %v462 = vunpack.c.l.b16 %v104
  %v463 = vunpack.c.h.b16 %v104
  %v464 = vunpack.c.l.b16 %v105
  %v465 = vunpack.c.h.b16 %v105
  %v466 = vunpack.c.l.b16 %v106
  %v467 = vunpack.c.h.b16 %v106
  %v468 = vunpack.c.l.b16 %v107
  %v469 = vunpack.c.h.b16 %v107
  %v470 = vunpack.c.l.b16 %v108
  %v471 = vunpack.c.h.b16 %v108
  %v472 = vunpack.c.l.b16 %v109
  %v473 = vunpack.c.h.b16 %v109
  %v474 = vunpack.c.l.b16 %v110
  %v475 = vunpack.c.h.b16 %v110
  %v476 = vunpack.c.l.b16 %v111
  %v477 = vunpack.c.h.b16 %v111
  %v478 = vunpack.c.l.b16 %v112
  %v479 = vunpack.c.h.b16 %v112
  %v480 = vunpack.c.l.b16 %v113
  %v481 = vunpack.c.h.b16 %v113
  %v482 = vunpack.c.l.b16 %v114
  %v483 = vunpack.c.h.b16 %v114
  %v484 = vunpack.c.l.b16 %v115
  %v485 = vunpack.c.h.b16 %v115
  %v486 = vunpack.c.l.b16 %v116
  %v487 = vunpack.c.h.b16 %v116
  %v488 = vunpack.c.l.b16 %v117
  %v489 = vunpack.c.h.b16 %v117
  %v490 = vunpack.c.l.b16 %v118
  %v491 = vunpack.c.h.b16 %v118
  %v492 = vunpack.c.l.b16 %v119
  %v493 = vunpack.c.h.b16 %v119
  %v494 = vunpack.c.l.b16 %v120
  %v495 = vunpack.c.h.b16 %v120
  %v496 = vunpack.c.l.b16 %v121
  %v497 = vunpack.c.h.b16 %v121
  %v498 = vunpack.c.l.b16 %v122
  %v499 = vunpack.c.h.b16 %v122
  %v500 = vunpack.c.l.b16 %v123
  %v501 = vunpack.c.h.b16 %v123
  %v502 = vunpack.c.l.b16 %v124
  %v503 = vunpack.c.h.b16 %v124
  %v504 = vunpack.c.l.b16 %v125
  %v505 = vunpack.c.h.b16 %v125
  %v506 = vunpack.c.l.b16 %v126
  %v507 = vunpack.c.h.b16 %v126
  %v508 = vunpack.c.l.b16 %v127
  %v509 = vunpack.c.h.b16 %v127
  %v510 = vunpack.c.l.b16 %v128
  %v511 = vunpack.c.h.b16 %v128
  %v512 = vunpack.c.l.b16 %v129
  %v513 = vunpack.c.h.b16 %v129
  %v514 = vunpack.c.l.b16 %v130
  %v515 = vunpack.c.h.b16 %v130
  %v516 = vunpack.c.l.b16 %v131
  %v517 = vunpack.c.h.b16 %v131
  %v518 = vunpack.c.l.b16 %v132
  %v519 = vunpack.c.h.b16 %v132
  %v520 = vunpack.c.l.b16 %v133
  %v521 = vunpack.c.h.b16 %v133
  %v522 = vunpack.c.l.b16 %v134
  %v523 = vunpack.c.h.b16 %v134
  %v524 = vunpack.c.l.b16 %v135
  %v525 = vunpack.c.h.b16 %v135
  %v526 = vunpack.c.l.b16 %v136
  %v527 = vunpack.c.h.b16 %v136
  %v528 = vunpack.c.l.b16 %v137
  %v529 = vunpack.c.h.b16 %v137
  %v530 = vunpack.c.l.b16 %v138
  %v531 = vunpack.c.h.b16 %v138
  %v532 = vunpack.c.l.b16 %v139
  %v533 = vunpack.c.h.b16 %v139
  %v534 = vunpack.c.l.b16 %v140
  %v535 = vunpack.c.h.b16 %v140
  %v536 = vunpack.c.l.b16 %v141
  %v537 = vunpack.c.h.b16 %v141
  %v538 = vunpack.c.l.b16 %v142
  %v539 = vunpack.c.h.b16 %v142
  %v540 = vunpack.c.l.b16 %v143
  %v541 = vunpack.c.h.b16 %v143
  %v542 = vunpack.c.l.b16 %v144
  %v543 = vunpack.c.h.b16 %v144
  %v544 = vunpack.c.l.b16 %v145
  %v545 = vunpack.c.h.b16 %v145
  %v546 = vunpack.c.l.b16 %v146
  %v547 = vunpack.c.h.b16 %v146
  %v548 = vunpack.c.l.b16 %v147
  %v549 = vunpack.c.h.b16 %v147
  %v550 = vunpack.c.l.b16 %v148
  %v551 = vunpack.c.h.b16 %v148
  %v552 = vunpack.c.l.b16 %v149
  %v553 = vunpack.c.h.b16 %v149
  %v554 = vpack.c.b16 %v302, %v298
  %v555 = vpack.c.b16 %v303, %v299
  %v556 = vpack.c.b16 %v304, %v300
  %v557 = vpack.c.b16 %v305, %v301
  %v558 = vpack.c.b16 %v310, %v306
  %v559 = vpack.c.b16 %v311, %v307
  %v560 = vpack.c.b16 %v312, %v308
  %v561 = vpack.c.b16 %v313, %v309
  %v562 = vpack.c.b16 %v318, %v314
  %v563 = vpack.c.b16 %v319, %v315
  %v564 = vpack.c.b16 %v320, %v316
  %v565 = vpack.c.b16 %v321, %v317
  %v566 = vpack.c.b16 %v326, %v322
  %v567 = vpack.c.b16 %v327, %v323
  %v568 = vpack.c.b16 %v328, %v324
  %v569 = vpack.c.b16 %v329, %v325
  %v570 = vpack.c.b16 %v334, %v330
  %v571 = vpack.c.b16 %v335, %v331
  %v572 = vpack.c.b16 %v336, %v332
  %v573 = vpack.c.b16 %v337, %v333
  %v574 = vpack.c.b16 %v342, %v338
  %v575 = vpack.c.b16 %v343, %v339
  %v576 = vpack.c.b16 %v344, %v340
  %v577 = vpack.c.b16 %v345, %v341
  %v578 = vpack.c.b16 %v350, %v346
  %v579 = vpack.c.b16 %v351, %v347
  %v580 = vpack.c.b16 %v352, %v348
  %v581 = vpack.c.b16 %v353, %v349
  %v582 = vpack.c.b16 %v358, %v354
  %v583 = vpack.c.b16 %v359, %v355
  %v584 = vpack.c.b16 %v360, %v356
  %v585 = vpack.c.b16 %v361, %v357
  %v586 = vpack.c.b16 %v366, %v362
  %v587 = vpack.c.b16 %v367, %v363
  %v588 = vpack.c.b16 %v368, %v364
  %v589 = vpack.c.b16 %v369, %v365
  %v590 = vpack.c.b16 %v374, %v370
  %v591 = vpack.c.b16 %v375, %v371
  %v592 = vpack.c.b16 %v376, %v372
  %v593 = vpack.c.b16 %v377, %v373
  %v594 = vpack.c.b16 %v382, %v378
  %v595 = vpack.c.b16 %v383, %v379
  %v596 = vpack.c.b16 %v384, %v380
  %v597 = vpack.c.b16 %v385, %v381
  %v598 = vpack.c.b16 %v390, %v386
  %v599 = vpack.c.b16 %v391, %v387
  %v600 = vpack.c.b16 %v392, %v388
  %v601 = vpack.c.b16 %v393, %v389
  %v602 = vpack.c.b16 %v398, %v394
  %v603 = vpack.c.b16 %v399, %v395
  %v604 = vpack.c.b16 %v400, %v396
  %v605 = vpack.c.b16 %v401, %v397
  %v606 = vpack.c.b16 %v406, %v402
  %v607 = vpack.c.b16 %v407, %v403
  %v608 = vpack.c.b16 %v408, %v404
  %v609 = vpack.c.b16 %v409, %v405
  %v610 = vpack.c.b16 %v414, %v410
  %v611 = vpack.c.b16 %v415, %v411
  %v612 = vpack.c.b16 %v416, %v412
  %v613 = vpack.c.b16 %v417, %v413
  %v614 = vpack.c.b16 %v422, %v418
  %v615 = vpack.c.b16 %v423, %v419
  %v616 = vpack.c.b16 %v424, %v420
  %v617 = vpack.c.b16 %v425, %v421
  %v618 = vpack.c.b16 %v430, %v426
  %v619 = vpack.c.b16 %v431, %v427
  %v620 = vpack.c.b16 %v432, %v428
  %v621 = vpack.c.b16 %v433, %v429
  %v622 = vpack.c.b16 %v438, %v434
  %v623 = vpack.c.b16 %v439, %v435
  %v624 = vpack.c.b16 %v440, %v436
  %v625 = vpack.c.b16 %v441, %v437
  %v626 = vpack.c.b16 %v446, %v442
  %v627 = vpack.c.b16 %v447, %v443
  %v628 = vpack.c.b16 %v448, %v444
  %v629 = vpack.c.b16 %v449, %v445
  %v630 = vpack.c.b16 %v454, %v450
  %v631 = vpack.c.b16 %v455, %v451
  %v632 = vpack.c.b16 %v456, %v452
  %v633 = vpack.c.b16 %v457, %v453
  %v634 = vpack.c.b16 %v462, %v458
  %v635 = vpack.c.b16 %v463, %v459
  %v636 = vpack.c.b16 %v464, %v460
  %v637 = vpack.c.b16 %v465, %v461
  %v638 = vpack.c.b16 %v470, %v466
  %v639 = vpack.c.b16 %v471, %v467
  %v640 = vpack.c.b16 %v472, %v468
  %v641 = vpack.c.b16 %v473, %v469
  %v642 = vpack.c.b16 %v478, %v474
  %v643 = vpack.c.b16 %v479, %v475
  %v644 = vpack.c.b16 %v480, %v476
  %v645 = vpack.c.b16 %v481, %v477
  %v646 = vpack.c.b16 %v486, %v482
  %v647 = vpack.c.b16 %v487, %v483
  %v648 = vpack.c.b16 %v488, %v484
  %v649 = vpack.c.b16 %v489, %v485
  %v650 = vpack.c.b16 %v494, %v490
  %v651 = vpack.c.b16 %v495, %v491
  %v652 = vpack.c.b16 %v496, %v492
  %v653 = vpack.c.b16 %v497, %v493
  %v654 = vpack.c.b16 %v502, %v498
  %v655 = vpack.c.b16 %v503, %v499
  %v656 = vpack.c.b16 %v504, %v500
  %v657 = vpack.c.b16 %v505, %v501
  %v658 = vpack.c.b16 %v510, %v506
  %v659 = vpack.c.b16 %v511, %v507
  %v660 = vpack.c.b16 %v512, %v508
  %v661 = vpack.c.b16 %v513, %v509
  %v662 = vpack.c.b16 %v518, %v514
  %v663 = vpack.c.b16 %v519, %v515
  %v664 = vpack.c.b16 %v520, %v516
  %v665 = vpack.c.b16 %v521, %v517
  %v666 = vpack.c.b16 %v526, %v522
  %v667 = vpack.c.b16 %v527, %v523
  %v668 = vpack.c.b16 %v528, %v524
  %v669 = vpack.c.b16 %v529, %v525
  %v670 = vpack.c.b16 %v534, %v530
  %v671 = vpack.c.b16 %v535, %v531
  %v672 = vpack.c.b16 %v536, %v532
  %v673 = vpack.c.b16 %v537, %v533
  %v674 = vpack.c.b16 %v542, %v538
  %v675 = vpack.c.b16 %v543, %v539
  %v676 = vpack.c.b16 %v544, %v540
  %v677 = vpack.c.b16 %v545, %v541
  %v678 = vpack.c.b16 %v550, %v546
  %v679 = vpack.c.b16 %v551, %v547
  %v680 = vpack.c.b16 %v552, %v548
  %v681 = vpack.c.b16 %v553, %v549
  %810 = vmatprep.subr.bf16.mxu0 %v555
  %811 = vmatpush1.bf16.msra.mxu0 %v554
  %812 = vmatprep.subr.bf16.mxu0 %v559
  %813 = vmatpush1.bf16.msra.mxu0 %v558
  %814 = vmatprep.subr.bf16.mxu0 %v563
  %815 = vmatpush1.bf16.msra.mxu0 %v562
  %816 = vmatprep.subr.bf16.mxu0 %v567
  %817 = vmatpush1.bf16.msra.mxu0 %v566
  %818 = vmatprep.subr.bf16.mxu0 %v571
  %819 = vmatpush1.bf16.msra.mxu0 %v570
  %820 = vmatprep.subr.bf16.mxu0 %v575
  %821 = vmatpush1.bf16.msra.mxu0 %v574
  %822 = vmatprep.subr.bf16.mxu0 %v579
  %823 = vmatpush1.bf16.msra.mxu0 %v578
  %824 = vmatprep.subr.bf16.mxu0 %v583
  %825 = vmatpush1.bf16.msra.mxu0 %v582
  %826 = vmatprep.subr.bf16.mxu0 %v587
  %827 = vmatpush1.bf16.msra.mxu0 %v586
  %828 = vmatprep.subr.bf16.mxu0 %v591
  %829 = vmatpush1.bf16.msra.mxu0 %v590
  %830 = vmatprep.subr.bf16.mxu0 %v595
  %831 = vmatpush1.bf16.msra.mxu0 %v594
  %832 = vmatprep.subr.bf16.mxu0 %v599
  %833 = vmatpush1.bf16.msra.mxu0 %v598
  %834 = vmatprep.subr.bf16.mxu0 %v603
  %835 = vmatpush1.bf16.msra.mxu0 %v602
  %836 = vmatprep.subr.bf16.mxu0 %v607
  %837 = vmatpush1.bf16.msra.mxu0 %v606
  %838 = vmatprep.subr.bf16.mxu0 %v611
  %839 = vmatpush1.bf16.msra.mxu0 %v610
  %840 = vmatprep.subr.bf16.mxu0 %v615
  %841 = vmatpush1.bf16.msra.mxu0 %v614
  %842 = vmatprep.mubr.bf16.mxu0 %v163
  %843 = vmatmul.mubr.bf16.gmra.mrb[0].mxu0 %v162
  %v844 = vpop.f32.mrb[0].mxu0
  %v845 = vadd.f32 %v154, %v844
  %v846 = vpop.f32.mrb[0].mxu0
  %v847 = vadd.f32 %v154, %v846
  %v848 = vpop.f32.mrb[0].mxu0
  %v849 = vpop.f32.mrb[0].mxu0
  %850 = vdwg.mxu0
  %851 = vmatprep.subr.bf16.mxu0 %v619
  %852 = vmatpush1.bf16.msra.mxu0 %v618
  %853 = vmatprep.subr.bf16.mxu0 %v623
  %854 = vmatpush1.bf16.msra.mxu0 %v622
  %855 = vmatprep.subr.bf16.mxu0 %v627
  %856 = vmatpush1.bf16.msra.mxu0 %v626
  %857 = vmatprep.subr.bf16.mxu0 %v631
  %858 = vmatpush1.bf16.msra.mxu0 %v630
  %859 = vmatprep.subr.bf16.mxu0 %v635
  %860 = vmatpush1.bf16.msra.mxu0 %v634
  %861 = vmatprep.subr.bf16.mxu0 %v639
  %862 = vmatpush1.bf16.msra.mxu0 %v638
  %863 = vmatprep.subr.bf16.mxu0 %v643
  %864 = vmatpush1.bf16.msra.mxu0 %v642
  %865 = vmatprep.subr.bf16.mxu0 %v647
  %866 = vmatpush1.bf16.msra.mxu0 %v646
  %867 = vmatprep.subr.bf16.mxu0 %v651
  %868 = vmatpush1.bf16.msra.mxu0 %v650
  %869 = vmatprep.subr.bf16.mxu0 %v655
  %870 = vmatpush1.bf16.msra.mxu0 %v654
  %871 = vmatprep.subr.bf16.mxu0 %v659
  %872 = vmatpush1.bf16.msra.mxu0 %v658
  %873 = vmatprep.subr.bf16.mxu0 %v663
  %874 = vmatpush1.bf16.msra.mxu0 %v662
  %875 = vmatprep.subr.bf16.mxu0 %v667
  %876 = vmatpush1.bf16.msra.mxu0 %v666
  %877 = vmatprep.subr.bf16.mxu0 %v671
  %878 = vmatpush1.bf16.msra.mxu0 %v670
  %879 = vmatprep.subr.bf16.mxu0 %v675
  %880 = vmatpush1.bf16.msra.mxu0 %v674
  %881 = vmatprep.subr.bf16.mxu0 %v679
  %882 = vmatpush1.bf16.msra.mxu0 %v678
  %883 = vmatprep.mubr.bf16.mxu0 %v165
  %884 = vmatmul.mubr.bf16.gmra.mrb[0].mxu0 %v164
  %v885 = vpop.f32.mrb[0].mxu0
  %v886 = vadd.f32 %v845, %v885
  %v887 = vpop.f32.mrb[0].mxu0
  %v888 = vadd.f32 %v847, %v887
  %v889 = vpop.f32.mrb[0].mxu0
  %v890 = vpop.f32.mrb[0].mxu0
  %891 = vdwg.mxu0
  %892 = vmatprep.subr.bf16.mxu0 %v557
  %893 = vmatpush1.bf16.msra.mxu0 %v556
  %894 = vmatprep.subr.bf16.mxu0 %v561
  %895 = vmatpush1.bf16.msra.mxu0 %v560
  %896 = vmatprep.subr.bf16.mxu0 %v565
  %897 = vmatpush1.bf16.msra.mxu0 %v564
  %898 = vmatprep.subr.bf16.mxu0 %v569
  %899 = vmatpush1.bf16.msra.mxu0 %v568
  %900 = vmatprep.subr.bf16.mxu0 %v573
  %901 = vmatpush1.bf16.msra.mxu0 %v572
  %902 = vmatprep.subr.bf16.mxu0 %v577
  %903 = vmatpush1.bf16.msra.mxu0 %v576
  %904 = vmatprep.subr.bf16.mxu0 %v581
  %905 = vmatpush1.bf16.msra.mxu0 %v580
  %906 = vmatprep.subr.bf16.mxu0 %v585
  %907 = vmatpush1.bf16.msra.mxu0 %v584
  %908 = vmatprep.subr.bf16.mxu0 %v589
  %909 = vmatpush1.bf16.msra.mxu0 %v588
  %910 = vmatprep.subr.bf16.mxu0 %v593
  %911 = vmatpush1.bf16.msra.mxu0 %v592
  %912 = vmatprep.subr.bf16.mxu0 %v597
  %913 = vmatpush1.bf16.msra.mxu0 %v596
  %914 = vmatprep.subr.bf16.mxu0 %v601
  %915 = vmatpush1.bf16.msra.mxu0 %v600
  %916 = vmatprep.subr.bf16.mxu0 %v605
  %917 = vmatpush1.bf16.msra.mxu0 %v604
  %918 = vmatprep.subr.bf16.mxu0 %v609
  %919 = vmatpush1.bf16.msra.mxu0 %v608
  %920 = vmatprep.subr.bf16.mxu0 %v613
  %921 = vmatpush1.bf16.msra.mxu0 %v612
  %922 = vmatprep.subr.bf16.mxu0 %v617
  %923 = vmatpush1.bf16.msra.mxu0 %v616
  %924 = vmatprep.mubr.bf16.mxu0 %v163
  %925 = vmatmul.mubr.bf16.gmra.mrb[0].mxu0 %v162
  %v926 = vpop.f32.mrb[0].mxu0
  %v927 = vadd.f32 %v154, %v926
  %v928 = vpop.f32.mrb[0].mxu0
  %v929 = vadd.f32 %v154, %v928
  %v930 = vpop.f32.mrb[0].mxu0
  %v931 = vpop.f32.mrb[0].mxu0
  %932 = vdwg.mxu0
  %933 = vmatprep.subr.bf16.mxu0 %v621
  %934 = vmatpush1.bf16.msra.mxu0 %v620
  %935 = vmatprep.subr.bf16.mxu0 %v625
  %936 = vmatpush1.bf16.msra.mxu0 %v624
  %937 = vmatprep.subr.bf16.mxu0 %v629
  %938 = vmatpush1.bf16.msra.mxu0 %v628
  %939 = vmatprep.subr.bf16.mxu0 %v633
  %940 = vmatpush1.bf16.msra.mxu0 %v632
  %941 = vmatprep.subr.bf16.mxu0 %v637
  %942 = vmatpush1.bf16.msra.mxu0 %v636
  %943 = vmatprep.subr.bf16.mxu0 %v641
  %944 = vmatpush1.bf16.msra.mxu0 %v640
  %945 = vmatprep.subr.bf16.mxu0 %v645
  %946 = vmatpush1.bf16.msra.mxu0 %v644
  %947 = vmatprep.subr.bf16.mxu0 %v649
  %948 = vmatpush1.bf16.msra.mxu0 %v648
  %949 = vmatprep.subr.bf16.mxu0 %v653
  %950 = vmatpush1.bf16.msra.mxu0 %v652
  %951 = vmatprep.subr.bf16.mxu0 %v657
  %952 = vmatpush1.bf16.msra.mxu0 %v656
  %953 = vmatprep.subr.bf16.mxu0 %v661
  %954 = vmatpush1.bf16.msra.mxu0 %v660
  %955 = vmatprep.subr.bf16.mxu0 %v665
  %956 = vmatpush1.bf16.msra.mxu0 %v664
  %957 = vmatprep.subr.bf16.mxu0 %v669
  %958 = vmatpush1.bf16.msra.mxu0 %v668
  %959 = vmatprep.subr.bf16.mxu0 %v673
  %960 = vmatpush1.bf16.msra.mxu0 %v672
  %961 = vmatprep.subr.bf16.mxu0 %v677
  %962 = vmatpush1.bf16.msra.mxu0 %v676
  %963 = vmatprep.subr.bf16.mxu0 %v681
  %964 = vmatpush1.bf16.msra.mxu0 %v680
  %965 = vmatprep.mubr.bf16.mxu0 %v165
  %966 = vmatmul.mubr.bf16.gmra.mrb[0].mxu0 %v164
  %v967 = vpop.f32.mrb[0].mxu0
  %v968 = vadd.f32 %v927, %v967
  %v969 = vpop.f32.mrb[0].mxu0
  %v970 = vadd.f32 %v929, %v969
  %v971 = vpop.f32.mrb[0].mxu0
  %v972 = vpop.f32.mrb[0].mxu0
  %973 = vdwg.mxu0
  %v974 = vadd.f32 %v886, %v888
  %v975 = vadd.f32 %v974, %v968
  %v976 = vadd.f32 %v975, %v970
  %977 = vadd.xlane.f32.xlu0 %v976
  %v978 = vpop.xlane.xlu0 %977
  %v979 = vmul.f32 %v886, %v886
  %v980 = vmul.f32 %v888, %v888
  %v981 = vmul.f32 %v968, %v968
  %v982 = vmul.f32 %v970, %v970
  %v983 = vadd.f32 %v979, %v980
  %v984 = vadd.f32 %v983, %v981
  %v985 = vadd.f32 %v984, %v982
  %986 = vadd.xlane.f32.xlu0 %v985
  %v987 = vpop.xlane.xlu0 %986
  %v988 = vmul.f32 %v978, 0.001953125
  %v989 = vmul.f32 %v987, 0.001953125
  %v990 = vmul.f32 %v988, %v988
  %v991 = vsub.f32 %v989, %v990
  %v992 = vmax.f32 %v991, 0.0
  %v993 = vld [vmem:[%s3] sm:$0xff]
  %v994 = vadd.f32 %v992, 1e-05
  %v995 = vrsqrt.pop %v994
  %v996 = vmul.f32 %v993, %v995
  %v997 = vld [vmem:[%s4] sm:$0xff]
  %v998 = vmul.f32 %v988, %v996
  %v999 = vsub.f32 %v997, %v998
  %1001 = vset.pattern.permute.xlu0 0
  %1002 = vperm.xlu0 %1001, %v996
  %v1003 = vpop.permute.xlu0 %1002
  %v1005 = vmul.f32 %v886, %v1003
  %v1006 = vmul.f32 %v888, %v1003
  %v1007 = vmul.f32 %v968, %v1003
  %v1008 = vmul.f32 %v970, %v1003
  %1010 = vset.pattern.permute.xlu0 0
  %1011 = vperm.xlu0 %1010, %v999
  %v1012 = vpop.permute.xlu0 %1011
  %v1014 = vadd.f32 %v1005, %v1012
  %v1015 = vadd.f32 %v1006, %v1012
  %v1016 = vadd.f32 %v1007, %v1012
  %v1017 = vadd.f32 %v1008, %v1012
  %v1018 = vmax.f32 %v1014, 0.0
  %v1019 = vmax.f32 %v1015, 0.0
  %v1020 = vmax.f32 %v1016, 0.0
  %v1021 = vmax.f32 %v1017, 0.0
  %v1022 = vpack.c.bf16 %v1018, %v1018
  %v1023 = vpack.c.bf16 %v1019, %v1019
  %v1024 = vpack.c.bf16 %v1020, %v1020
  %v1025 = vpack.c.bf16 %v1021, %v1021
  %v1030 = vunpack.c.l.b16 %v1022
  %v1031 = vunpack.c.l.b16 %v1023
  %v1032 = vunpack.c.l.b16 %v1024
  %v1033 = vunpack.c.l.b16 %v1025
  %v1034 = vpack.c.b16 %v1031, %v1030
  %v1035 = vpack.c.b16 %v1033, %v1032
  %1038 = vst [vmem:[%s5] sm:$0xff] %v1034
  %1039 = vst [vmem:[%s5 + $0x8] sm:$0xff] %v1035
  // Predicated region
  $region22: #{local_enhancer_forward.17} parent=0 // pred_check
    _
  $region23: #{local_enhancer_forward.17} parent=0 // pred_check_branch
    %1041 = sbr.rel (0) target = $region25
  $region24: #{local_enhancer_forward.17} parent=0 // pred_region
    _
  $region25: #{local_enhancer_forward.17} parent=0 // pred_fallthru
    _
  // Predicated region
  $region26: #{local_enhancer_forward.17} parent=0 // pred_check
    _
  $region27: #{local_enhancer_forward.17} parent=0 // pred_check_branch
    %1043 = sbr.rel (0) target = $region29
  $region28: #{local_enhancer_forward.17} parent=0 // pred_region
    _
  $region29: #{local_enhancer_forward.17} parent=0 // pred_fallthru
    _

// kernel: local_enhancer_forward.18
$region0: #{local_enhancer_forward.18}
  #allocation0 [shape = 'u32[]', space=smem, size = 0x4, offset = 0x4, fixed_abs, tag = 'smem constant byte address 0x4 - core index']
  #allocation1 [shape = 'u32[144,128]{1,0:T(1,128)}', space=vmem, size = 0x12000, scoped, tag = 'internal scratch']
  %s0 = inlined_call_operand.vmem [shape: bf16[16,128], index: 0, kind: input, shape index: {}]
  %s1 = inlined_call_operand.vmem [shape: bf16[128,128], index: 1, kind: input, shape index: {}]
  %s2 = inlined_call_operand.vmem [shape: f32[16,1], index: 2, kind: input, shape index: {}]
  %s3 = inlined_call_operand.vmem [shape: f32[16,1], index: 3, kind: input, shape index: {}]
  %s4 = inlined_call_operand.vmem [shape: f32[16,1], index: 4, kind: input, shape index: {}]
  %s5 = inlined_call_operand.vmem [shape: bf16[16,128], index: 5, kind: output, shape index: {}]
  %s6 = sld [smem:[#allocation0]]
  $region30: #{local_enhancer_forward.18} parent=0
    _
  %s8 = ssub.s32 1, %s6
  %s9 = scalar_select 0, %s8, %s6
  // Predicated region
  $region2: #{local_enhancer_forward.18} parent=0 // pred_check
    _
  $region3: #{local_enhancer_forward.18} parent=0 // pred_check_branch
    %11 = sbr.rel (0) target = $region5
  $region4: #{local_enhancer_forward.18} parent=0 // pred_region
    _
  $region5: #{local_enhancer_forward.18} parent=0 // pred_fallthru
    _
  // Predicated region
  $region6: #{local_enhancer_forward.18} parent=0 // pred_check
    _
  $region7: #{local_enhancer_forward.18} parent=0 // pred_check_branch
    %13 = sbr.rel (0) target = $region9
  $region8: #{local_enhancer_forward.18} parent=0 // pred_region
    _
  $region9: #{local_enhancer_forward.18} parent=0 // pred_fallthru
    _
  // Predicated region
  $region10: #{local_enhancer_forward.18} parent=0 // pred_check
    _
  $region11: #{local_enhancer_forward.18} parent=0 // pred_check_branch
    %15 = sbr.rel (0) target = $region13
  $region12: #{local_enhancer_forward.18} parent=0 // pred_region
    _
  $region13: #{local_enhancer_forward.18} parent=0 // pred_fallthru
    _
  // Predicated region
  $region14: #{local_enhancer_forward.18} parent=0 // pred_check
    _
  $region15: #{local_enhancer_forward.18} parent=0 // pred_check_branch
    %17 = sbr.rel (0) target = $region17
  $region16: #{local_enhancer_forward.18} parent=0 // pred_region
    _
  $region17: #{local_enhancer_forward.18} parent=0 // pred_fallthru
    _
  // Predicated region
  $region18: #{local_enhancer_forward.18} parent=0 // pred_check
    _
  $region19: #{local_enhancer_forward.18} parent=0 // pred_check_branch
    %19 = sbr.rel (0) target = $region21
  $region20: #{local_enhancer_forward.18} parent=0 // pred_region
    _
  $region21: #{local_enhancer_forward.18} parent=0 // pred_fallthru
    _
  %v21 = vld [vmem:[%s0] sm:$0xf]
  %v22 = vld [vmem:[%s0 + $0x4] sm:$0xf]
  %v23 = vld [vmem:[%s1] sm:$0xf]
  %v24 = vld [vmem:[%s1 + $0x4] sm:$0xf]
  %v25 = vld [vmem:[%s1 + $0x8] sm:$0xf]
  %v26 = vld [vmem:[%s1 + $0xc] sm:$0xf]
  %v27 = vld [vmem:[%s1 + $0x10] sm:$0xf]
  %v28 = vld [vmem:[%s1 + $0x14] sm:$0xf]
  %v29 = vld [vmem:[%s1 + $0x18] sm:$0xf]
  %v30 = vld [vmem:[%s1 + $0x1c] sm:$0xf]
  %v31 = vld [vmem:[%s1 + $0x20] sm:$0xf]
  %v32 = vld [vmem:[%s1 + $0x24] sm:$0xf]
  %v33 = vld [vmem:[%s1 + $0x28] sm:$0xf]
  %v34 = vld [vmem:[%s1 + $0x2c] sm:$0xf]
  %v35 = vld [vmem:[%s1 + $0x30] sm:$0xf]
  %v36 = vld [vmem:[%s1 + $0x34] sm:$0xf]
  %v37 = vld [vmem:[%s1 + $0x38] sm:$0xf]
  %v38 = vld [vmem:[%s1 + $0x3c] sm:$0xf]
  %v39 = vld [vmem:[%s2] sm:$0xff]
  %v40 = vld [vmem:[%s2 + $0x8] sm:$0xff]
  %42 = vset.pattern.permute.xlu0 0
  %43 = vperm.xlu0 %42, %v39
  %v44 = vpop.permute.xlu0 %43
  %47 = vset.pattern.permute.xlu0 0
  %48 = vperm.xlu0 %47, %v40
  %v49 = vpop.permute.xlu0 %48
  %v53 = vunpack.c.l.b16 %v21
  %v54 = vunpack.c.l.b16 %v22
  %v55 = vpack.c.b16 %v54, %v53
  %v73 = vunpack.c.l.b16 %v23
  %v74 = vunpack.c.l.b16 %v24
  %v75 = vunpack.c.l.b16 %v25
  %v76 = vunpack.c.l.b16 %v26
  %v77 = vunpack.c.l.b16 %v27
  %v78 = vunpack.c.l.b16 %v28
  %v79 = vunpack.c.l.b16 %v29
  %v80 = vunpack.c.l.b16 %v30
  %v81 = vunpack.c.l.b16 %v31
  %v82 = vunpack.c.l.b16 %v32
  %v83 = vunpack.c.l.b16 %v33
  %v84 = vunpack.c.l.b16 %v34
  %v85 = vunpack.c.l.b16 %v35
  %v86 = vunpack.c.l.b16 %v36
  %v87 = vunpack.c.l.b16 %v37
  %v88 = vunpack.c.l.b16 %v38
  %v89 = vpack.c.b16 %v74, %v73
  %v90 = vpack.c.b16 %v76, %v75
  %v91 = vpack.c.b16 %v78, %v77
  %v92 = vpack.c.b16 %v80, %v79
  %v93 = vpack.c.b16 %v82, %v81
  %v94 = vpack.c.b16 %v84, %v83
  %v95 = vpack.c.b16 %v86, %v85
  %v96 = vpack.c.b16 %v88, %v87
  %105 = vmatprep.subr.bf16.mxu0 0
  %106 = vmatpush1.bf16.msra.mxu0 %v89
  %107 = vmatprep.subr.bf16.mxu0 0
  %108 = vmatpush1.bf16.msra.mxu0 %v90
  %109 = vmatprep.subr.bf16.mxu0 0
  %110 = vmatpush1.bf16.msra.mxu0 %v91
  %111 = vmatprep.subr.bf16.mxu0 0
  %112 = vmatpush1.bf16.msra.mxu0 %v92
  %113 = vmatprep.subr.bf16.mxu0 0
  %114 = vmatpush1.bf16.msra.mxu0 %v93
  %115 = vmatprep.subr.bf16.mxu0 0
  %116 = vmatpush1.bf16.msra.mxu0 %v94
  %117 = vmatprep.subr.bf16.mxu0 0
  %118 = vmatpush1.bf16.msra.mxu0 %v95
  %119 = vmatprep.subr.bf16.mxu0 0
  %120 = vmatpush1.bf16.msra.mxu0 %v96
  %121 = vmatprep.subr.bf16.mxu0 0
  %122 = vmatpush1.bf16.msra.mxu0 0
  %123 = vmatprep.subr.bf16.mxu0 0
  %124 = vmatpush1.bf16.msra.mxu0 0
  %125 = vmatprep.subr.bf16.mxu0 0
  %126 = vmatpush1.bf16.msra.mxu0 0
  %127 = vmatprep.subr.bf16.mxu0 0
  %128 = vmatpush1.bf16.msra.mxu0 0
  %129 = vmatprep.subr.bf16.mxu0 0
  %130 = vmatpush1.bf16.msra.mxu0 0
  %131 = vmatprep.subr.bf16.mxu0 0
  %132 = vmatpush1.bf16.msra.mxu0 0
  %133 = vmatprep.subr.bf16.mxu0 0
  %134 = vmatpush1.bf16.msra.mxu0 0
  %135 = vmatprep.subr.bf16.mxu0 0
  %136 = vmatpush1.bf16.msra.mxu0 0
  %137 = vmatprep.mubr.bf16.mxu0 0
  %138 = vmatmul.mubr.bf16.gmra.mrb[0].mxu0 %v55
  %v139 = vpop.f32.mrb[0].mxu0
  %v140 = vadd.f32 %v44, %v139
  %v141 = vpop.f32.mrb[0].mxu0
  %v142 = vpop.f32.mrb[0].mxu0
  %v143 = vadd.f32 %v49, %v142
  %v144 = vpop.f32.mrb[0].mxu0
  %145 = vdwg.mxu0
  %146 = vadd.xlane.f32.xlu0 %v140
  %v147 = vpop.xlane.xlu0 %146
  %148 = vadd.xlane.f32.xlu0 %v143
  %v149 = vpop.xlane.xlu0 %148
  %v150 = vmul.f32 %v140, %v140
  %v151 = vmul.f32 %v143, %v143
  %152 = vadd.xlane.f32.xlu0 %v150
  %v153 = vpop.xlane.xlu0 %152
  %154 = vadd.xlane.f32.xlu0 %v151
  %v155 = vpop.xlane.xlu0 %154
  %v156 = vmul.f32 %v147, 0.0078125
  %v157 = vmul.f32 %v149, 0.0078125
  %v158 = vmul.f32 %v153, 0.0078125
  %v159 = vmul.f32 %v155, 0.0078125
  %v160 = vmul.f32 %v156, %v156
  %v161 = vmul.f32 %v157, %v157
  %v162 = vsub.f32 %v158, %v160
  %v163 = vsub.f32 %v159, %v161
  %v164 = vmax.f32 %v162, 0.0
  %v165 = vmax.f32 %v163, 0.0
  %v166 = vld [vmem:[%s3] sm:$0xff]
  %v167 = vld [vmem:[%s3 + $0x8] sm:$0xff]
  %v168 = vadd.f32 %v164, 1e-05
  %v169 = vadd.f32 %v165, 1e-05
  %v170 = vrsqrt.pop %v168
  %v171 = vrsqrt.pop %v169
  %v172 = vmul.f32 %v166, %v170
  %v173 = vmul.f32 %v167, %v171
  %v174 = vld [vmem:[%s4] sm:$0xff]
  %v175 = vld [vmem:[%s4 + $0x8] sm:$0xff]
  %v176 = vmul.f32 %v156, %v172
  %v177 = vmul.f32 %v157, %v173
  %v178 = vsub.f32 %v174, %v176
  %v179 = vsub.f32 %v175, %v177
  %181 = vset.pattern.permute.xlu0 0
  %182 = vperm.xlu0 %181, %v172
  %v183 = vpop.permute.xlu0 %182
  %186 = vset.pattern.permute.xlu0 0
  %187 = vperm.xlu0 %186, %v173
  %v188 = vpop.permute.xlu0 %187
  %v190 = vmul.f32 %v140, %v183
  %v191 = vmul.f32 %v143, %v188
  %193 = vset.pattern.permute.xlu0 0
  %194 = vperm.xlu0 %193, %v178
  %v195 = vpop.permute.xlu0 %194
  %198 = vset.pattern.permute.xlu0 0
  %199 = vperm.xlu0 %198, %v179
  %v200 = vpop.permute.xlu0 %199
  %v202 = vadd.f32 %v190, %v195
  %v203 = vadd.f32 %v191, %v200
  %v204 = vmax.f32 %v202, 0.0
  %v205 = vmax.f32 %v203, 0.0
  %v206 = vpack.c.bf16 %v205, %v204
  %v208 = vunpack.c.l.b16 %v206
  %v209 = vunpack.c.h.b16 %v206
  %v210 = vpack.c.b16 %v208, %v208
  %v211 = vpack.c.b16 %v209, %v209
  %214 = vst [vmem:[%s5] sm:$0xf] %v210
  %215 = vst [vmem:[%s5 + $0x4] sm:$0xf] %v211
  // Predicated region
  $region22: #{local_enhancer_forward.18} parent=0 // pred_check
    _
  $region23: #{local_enhancer_forward.18} parent=0 // pred_check_branch
    %217 = sbr.rel (0) target = $region25
  $region24: #{local_enhancer_forward.18} parent=0 // pred_region
    _
  $region25: #{local_enhancer_forward.18} parent=0 // pred_fallthru
    _
  // Predicated region
  $region26: #{local_enhancer_forward.18} parent=0 // pred_check
    _
  $region27: #{local_enhancer_forward.18} parent=0 // pred_check_branch
    %219 = sbr.rel (0) target = $region29
  $region28: #{local_enhancer_forward.18} parent=0 // pred_region
    _
  $region29: #{local_enhancer_forward.18} parent=0 // pred_fallthru
    _

// kernel: local_enhancer_forward.19
$region0: #{local_enhancer_forward.19}
  #allocation0 [shape = 'u32[]', space=smem, size = 0x4, offset = 0x4, fixed_abs, tag = 'smem constant byte address 0x4 - core index']
  #allocation1 [shape = 'u32[144,128]{1,0:T(1,128)}', space=vmem, size = 0x12000, scoped, tag = 'internal scratch']
  %s0 = inlined_call_operand.vmem [shape: bf16[32,256], index: 0, kind: input, shape index: {}]
  %s1 = inlined_call_operand.vmem [shape: bf16[256,32], index: 1, kind: input, shape index: {}]
  %s2 = inlined_call_operand.vmem [shape: f32[32,1], index: 2, kind: input, shape index: {}]
  %s3 = inlined_call_operand.vmem [shape: f32[32,1], index: 3, kind: input, shape index: {}]
  %s4 = inlined_call_operand.vmem [shape: f32[32,1], index: 4, kind: input, shape index: {}]
  %s5 = inlined_call_operand.vmem [shape: bf16[32,32], index: 5, kind: output, shape index: {}]
  %s6 = sld [smem:[#allocation0]]
  $region30: #{local_enhancer_forward.19} parent=0
    _
  %s8 = ssub.s32 1, %s6
  %s9 = scalar_select 0, %s8, %s6
  // Predicated region
  $region2: #{local_enhancer_forward.19} parent=0 // pred_check
    _
  $region3: #{local_enhancer_forward.19} parent=0 // pred_check_branch
    %11 = sbr.rel (0) target = $region5
  $region4: #{local_enhancer_forward.19} parent=0 // pred_region
    _
  $region5: #{local_enhancer_forward.19} parent=0 // pred_fallthru
    _
  // Predicated region
  $region6: #{local_enhancer_forward.19} parent=0 // pred_check
    _
  $region7: #{local_enhancer_forward.19} parent=0 // pred_check_branch
    %13 = sbr.rel (0) target = $region9
  $region8: #{local_enhancer_forward.19} parent=0 // pred_region
    _
  $region9: #{local_enhancer_forward.19} parent=0 // pred_fallthru
    _
  // Predicated region
  $region10: #{local_enhancer_forward.19} parent=0 // pred_check
    _
  $region11: #{local_enhancer_forward.19} parent=0 // pred_check_branch
    %15 = sbr.rel (0) target = $region13
  $region12: #{local_enhancer_forward.19} parent=0 // pred_region
    _
  $region13: #{local_enhancer_forward.19} parent=0 // pred_fallthru
    _
  // Predicated region
  $region14: #{local_enhancer_forward.19} parent=0 // pred_check
    _
  $region15: #{local_enhancer_forward.19} parent=0 // pred_check_branch
    %17 = sbr.rel (0) target = $region17
  $region16: #{local_enhancer_forward.19} parent=0 // pred_region
    _
  $region17: #{local_enhancer_forward.19} parent=0 // pred_fallthru
    _
  // Predicated region
  $region18: #{local_enhancer_forward.19} parent=0 // pred_check
    _
  $region19: #{local_enhancer_forward.19} parent=0 // pred_check_branch
    %19 = sbr.rel (0) target = $region21
  $region20: #{local_enhancer_forward.19} parent=0 // pred_region
    _
  $region21: #{local_enhancer_forward.19} parent=0 // pred_fallthru
    _
  %v21 = vld [vmem:[%s0] sm:$0xff]
  %v22 = vld [vmem:[%s0 + $0x8] sm:$0xff]
  %v23 = vld [vmem:[%s0 + $0x10] sm:$0xff]
  %v24 = vld [vmem:[%s0 + $0x18] sm:$0xff]
  %v25 = vld [vmem:[%s1] sm:$0xf]
  %v26 = vld [vmem:[%s1 + $0x4] sm:$0xf]
  %v27 = vld [vmem:[%s1 + $0x8] sm:$0xf]
  %v28 = vld [vmem:[%s1 + $0xc] sm:$0xf]
  %v29 = vld [vmem:[%s1 + $0x10] sm:$0xf]
  %v30 = vld [vmem:[%s1 + $0x14] sm:$0xf]
  %v31 = vld [vmem:[%s1 + $0x18] sm:$0xf]
  %v32 = vld [vmem:[%s1 + $0x1c] sm:$0xf]
  %v33 = vld [vmem:[%s1 + $0x20] sm:$0xf]
  %v34 = vld [vmem:[%s1 + $0x24] sm:$0xf]
  %v35 = vld [vmem:[%s1 + $0x28] sm:$0xf]
  %v36 = vld [vmem:[%s1 + $0x2c] sm:$0xf]
  %v37 = vld [vmem:[%s1 + $0x30] sm:$0xf]
  %v38 = vld [vmem:[%s1 + $0x34] sm:$0xf]
  %v39 = vld [vmem:[%s1 + $0x38] sm:$0xf]
  %v40 = vld [vmem:[%s1 + $0x3c] sm:$0xf]
  %v41 = vld [vmem:[%s1 + $0x40] sm:$0xf]
  %v42 = vld [vmem:[%s1 + $0x44] sm:$0xf]
  %v43 = vld [vmem:[%s1 + $0x48] sm:$0xf]
  %v44 = vld [vmem:[%s1 + $0x4c] sm:$0xf]
  %v45 = vld [vmem:[%s1 + $0x50] sm:$0xf]
  %v46 = vld [vmem:[%s1 + $0x54] sm:$0xf]
  %v47 = vld [vmem:[%s1 + $0x58] sm:$0xf]
  %v48 = vld [vmem:[%s1 + $0x5c] sm:$0xf]
  %v49 = vld [vmem:[%s1 + $0x60] sm:$0xf]
  %v50 = vld [vmem:[%s1 + $0x64] sm:$0xf]
  %v51 = vld [vmem:[%s1 + $0x68] sm:$0xf]
  %v52 = vld [vmem:[%s1 + $0x6c] sm:$0xf]
  %v53 = vld [vmem:[%s1 + $0x70] sm:$0xf]
  %v54 = vld [vmem:[%s1 + $0x74] sm:$0xf]
  %v55 = vld [vmem:[%s1 + $0x78] sm:$0xf]
  %v56 = vld [vmem:[%s1 + $0x7c] sm:$0xf]
  %v57 = vld [vmem:[%s2] sm:$0xff]
  %v58 = vld [vmem:[%s2 + $0x8] sm:$0xff]
  %v59 = vld [vmem:[%s2 + $0x10] sm:$0xff]
  %v60 = vld [vmem:[%s2 + $0x18] sm:$0xff]
  %62 = vset.pattern.permute.xlu0 0
  %63 = vperm.xlu0 %62, %v57
  %v64 = vpop.permute.xlu0 %63
  %67 = vset.pattern.permute.xlu0 0
  %68 = vperm.xlu0 %67, %v58
  %v69 = vpop.permute.xlu0 %68
  %72 = vset.pattern.permute.xlu0 0
  %73 = vperm.xlu0 %72, %v59
  %v74 = vpop.permute.xlu0 %73
  %77 = vset.pattern.permute.xlu0 0
  %78 = vperm.xlu0 %77, %v60
  %v79 = vpop.permute.xlu0 %78
  %v85 = vunpack.c.l.b16 %v21
  %v86 = vunpack.c.h.b16 %v21
  %v87 = vunpack.c.l.b16 %v22
  %v88 = vunpack.c.h.b16 %v22
  %v89 = vunpack.c.l.b16 %v23
  %v90 = vunpack.c.h.b16 %v23
  %v91 = vunpack.c.l.b16 %v24
  %v92 = vunpack.c.h.b16 %v24
  %v93 = vpack.c.b16 %v87, %v85
  %v94 = vpack.c.b16 %v88, %v86
  %v95 = vpack.c.b16 %v91, %v89
  %v96 = vpack.c.b16 %v92, %v90
  %v133 = vunpack.c.l.b16 %v25
  %v134 = vunpack.c.l.b16 %v26
  %v135 = vunpack.c.l.b16 %v27
  %v136 = vunpack.c.l.b16 %v28
  %v137 = vunpack.c.l.b16 %v29
  %v138 = vunpack.c.l.b16 %v30
  %v139 = vunpack.c.l.b16 %v31
  %v140 = vunpack.c.l.b16 %v32
  %v141 = vunpack.c.l.b16 %v33
  %v142 = vunpack.c.l.b16 %v34
  %v143 = vunpack.c.l.b16 %v35
  %v144 = vunpack.c.l.b16 %v36
  %v145 = vunpack.c.l.b16 %v37
  %v146 = vunpack.c.l.b16 %v38
  %v147 = vunpack.c.l.b16 %v39
  %v148 = vunpack.c.l.b16 %v40
  %v149 = vunpack.c.l.b16 %v41
  %v150 = vunpack.c.l.b16 %v42
  %v151 = vunpack.c.l.b16 %v43
  %v152 = vunpack.c.l.b16 %v44
  %v153 = vunpack.c.l.b16 %v45
  %v154 = vunpack.c.l.b16 %v46
  %v155 = vunpack.c.l.b16 %v47
  %v156 = vunpack.c.l.b16 %v48
  %v157 = vunpack.c.l.b16 %v49
  %v158 = vunpack.c.l.b16 %v50
  %v159 = vunpack.c.l.b16 %v51
  %v160 = vunpack.c.l.b16 %v52
  %v161 = vunpack.c.l.b16 %v53
  %v162 = vunpack.c.l.b16 %v54
  %v163 = vunpack.c.l.b16 %v55
  %v164 = vunpack.c.l.b16 %v56
  %v165 = vpack.c.b16 %v134, %v133
  %v166 = vpack.c.b16 %v136, %v135
  %v167 = vpack.c.b16 %v138, %v137
  %v168 = vpack.c.b16 %v140, %v139
  %v169 = vpack.c.b16 %v142, %v141
  %v170 = vpack.c.b16 %v144, %v143
  %v171 = vpack.c.b16 %v146, %v145
  %v172 = vpack.c.b16 %v148, %v147
  %v173 = vpack.c.b16 %v150, %v149
  %v174 = vpack.c.b16 %v152, %v151
  %v175 = vpack.c.b16 %v154, %v153
  %v176 = vpack.c.b16 %v156, %v155
  %v177 = vpack.c.b16 %v158, %v157
  %v178 = vpack.c.b16 %v160, %v159
  %v179 = vpack.c.b16 %v162, %v161
  %v180 = vpack.c.b16 %v164, %v163
  %197 = vmatprep.subr.bf16.mxu0 0
  %198 = vmatpush1.bf16.msra.mxu0 %v165
  %199 = vmatprep.subr.bf16.mxu0 0
  %200 = vmatpush1.bf16.msra.mxu0 %v166
  %201 = vmatprep.subr.bf16.mxu0 0
  %202 = vmatpush1.bf16.msra.mxu0 %v167
  %203 = vmatprep.subr.bf16.mxu0 0
  %204 = vmatpush1.bf16.msra.mxu0 %v168
  %205 = vmatprep.subr.bf16.mxu0 0
  %206 = vmatpush1.bf16.msra.mxu0 %v169
  %207 = vmatprep.subr.bf16.mxu0 0
  %208 = vmatpush1.bf16.msra.mxu0 %v170
  %209 = vmatprep.subr.bf16.mxu0 0
  %210 = vmatpush1.bf16.msra.mxu0 %v171
  %211 = vmatprep.subr.bf16.mxu0 0
  %212 = vmatpush1.bf16.msra.mxu0 %v172
  %213 = vmatprep.subr.bf16.mxu0 0
  %214 = vmatpush1.bf16.msra.mxu0 %v173
  %215 = vmatprep.subr.bf16.mxu0 0
  %216 = vmatpush1.bf16.msra.mxu0 %v174
  %217 = vmatprep.subr.bf16.mxu0 0
  %218 = vmatpush1.bf16.msra.mxu0 %v175
  %219 = vmatprep.subr.bf16.mxu0 0
  %220 = vmatpush1.bf16.msra.mxu0 %v176
  %221 = vmatprep.subr.bf16.mxu0 0
  %222 = vmatpush1.bf16.msra.mxu0 %v177
  %223 = vmatprep.subr.bf16.mxu0 0
  %224 = vmatpush1.bf16.msra.mxu0 %v178
  %225 = vmatprep.subr.bf16.mxu0 0
  %226 = vmatpush1.bf16.msra.mxu0 %v179
  %227 = vmatprep.subr.bf16.mxu0 0
  %228 = vmatpush1.bf16.msra.mxu0 %v180
  %229 = vmatprep.mubr.bf16.mxu0 %v94
  %230 = vmatmul.mubr.bf16.gmra.mrb[0].mxu0 %v93
  %v231 = vpop.f32.mrb[0].mxu0
  %v232 = vadd.f32 %v64, %v231
  %v233 = vpop.f32.mrb[0].mxu0
  %v234 = vpop.f32.mrb[0].mxu0
  %v235 = vadd.f32 %v69, %v234
  %v236 = vpop.f32.mrb[0].mxu0
  %237 = vmatprep.mubr.bf16.mxu0 %v96
  %238 = vmatmul.mubr.bf16.gmra.mrb[0].mxu0 %v95
  %v239 = vpop.f32.mrb[0].mxu0
  %v240 = vadd.f32 %v74, %v239
  %v241 = vpop.f32.mrb[0].mxu0
  %v242 = vpop.f32.mrb[0].mxu0
  %v243 = vadd.f32 %v79, %v242
  %v244 = vpop.f32.mrb[0].mxu0
  %245 = vdwg.mxu0
  %vm246 = vcmask 261120
  %v247 = vsel %vm246, %v232, 0.0
  %248 = vadd.xlane.f32.xlu0 %v247
  %v249 = vpop.xlane.xlu0 %248
  %v250 = vsel %vm246, %v235, 0.0
  %251 = vadd.xlane.f32.xlu0 %v250
  %v252 = vpop.xlane.xlu0 %251
  %v253 = vsel %vm246, %v240, 0.0
  %254 = vadd.xlane.f32.xlu0 %v253
  %v255 = vpop.xlane.xlu0 %254
  %v256 = vsel %vm246, %v243, 0.0
  %257 = vadd.xlane.f32.xlu0 %v256
  %v258 = vpop.xlane.xlu0 %257
  %v259 = vmul.f32 %v232, %v232
  %v260 = vmul.f32 %v235, %v235
  %v261 = vmul.f32 %v240, %v240
  %v262 = vmul.f32 %v243, %v243
  %v263 = vsel %vm246, %v259, 0.0
  %264 = vadd.xlane.f32.xlu0 %v263
  %v265 = vpop.xlane.xlu0 %264
  %v266 = vsel %vm246, %v260, 0.0
  %267 = vadd.xlane.f32.xlu0 %v266
  %v268 = vpop.xlane.xlu0 %267
  %v269 = vsel %vm246, %v261, 0.0
  %270 = vadd.xlane.f32.xlu0 %v269
  %v271 = vpop.xlane.xlu0 %270
  %v272 = vsel %vm246, %v262, 0.0
  %273 = vadd.xlane.f32.xlu0 %v272
  %v274 = vpop.xlane.xlu0 %273
  %v275 = vmul.f32 %v249, 0.03125
  %v276 = vmul.f32 %v252, 0.03125
  %v277 = vmul.f32 %v255, 0.03125
  %v278 = vmul.f32 %v258, 0.03125
  %v279 = vmul.f32 %v265, 0.03125
  %v280 = vmul.f32 %v268, 0.03125
  %v281 = vmul.f32 %v271, 0.03125
  %v282 = vmul.f32 %v274, 0.03125
  %v283 = vmul.f32 %v275, %v275
  %v284 = vmul.f32 %v276, %v276
  %v285 = vmul.f32 %v277, %v277
  %v286 = vmul.f32 %v278, %v278
  %v287 = vsub.f32 %v279, %v283
  %v288 = vsub.f32 %v280, %v284
  %v289 = vsub.f32 %v281, %v285
  %v290 = vsub.f32 %v282, %v286
  %v291 = vmax.f32 %v287, 0.0
  %v292 = vmax.f32 %v288, 0.0
  %v293 = vmax.f32 %v289, 0.0
  %v294 = vmax.f32 %v290, 0.0
  %v295 = vld [vmem:[%s3] sm:$0xff]
  %v296 = vld [vmem:[%s3 + $0x8] sm:$0xff]
  %v297 = vld [vmem:[%s3 + $0x10] sm:$0xff]
  %v298 = vld [vmem:[%s3 + $0x18] sm:$0xff]
  %v299 = vadd.f32 %v291, 1e-05
  %v300 = vadd.f32 %v292, 1e-05
  %v301 = vadd.f32 %v293, 1e-05
  %v302 = vadd.f32 %v294, 1e-05
  %v303 = vrsqrt.pop %v299
  %v304 = vrsqrt.pop %v300
  %v305 = vrsqrt.pop %v301
  %v306 = vrsqrt.pop %v302
  %v307 = vmul.f32 %v295, %v303
  %v308 = vmul.f32 %v296, %v304
  %v309 = vmul.f32 %v297, %v305
  %v310 = vmul.f32 %v298, %v306
  %v311 = vld [vmem:[%s4] sm:$0xff]
  %v312 = vld [vmem:[%s4 + $0x8] sm:$0xff]
  %v313 = vld [vmem:[%s4 + $0x10] sm:$0xff]
  %v314 = vld [vmem:[%s4 + $0x18] sm:$0xff]
  %v315 = vmul.f32 %v275, %v307
  %v316 = vmul.f32 %v276, %v308
  %v317 = vmul.f32 %v277, %v309
  %v318 = vmul.f32 %v278, %v310
  %v319 = vsub.f32 %v311, %v315
  %v320 = vsub.f32 %v312, %v316
  %v321 = vsub.f32 %v313, %v317
  %v322 = vsub.f32 %v314, %v318
  %324 = vset.pattern.permute.xlu0 0
  %325 = vperm.xlu0 %324, %v307
  %v326 = vpop.permute.xlu0 %325
  %329 = vset.pattern.permute.xlu0 0
  %330 = vperm.xlu0 %329, %v308
  %v331 = vpop.permute.xlu0 %330
  %334 = vset.pattern.permute.xlu0 0
  %335 = vperm.xlu0 %334, %v309
  %v336 = vpop.permute.xlu0 %335
  %339 = vset.pattern.permute.xlu0 0
  %340 = vperm.xlu0 %339, %v310
  %v341 = vpop.permute.xlu0 %340
  %v343 = vmul.f32 %v232, %v326
  %v344 = vmul.f32 %v235, %v331
  %v345 = vmul.f32 %v240, %v336
  %v346 = vmul.f32 %v243, %v341
  %348 = vset.pattern.permute.xlu0 0
  %349 = vperm.xlu0 %348, %v319
  %v350 = vpop.permute.xlu0 %349
  %353 = vset.pattern.permute.xlu0 0
  %354 = vperm.xlu0 %353, %v320
  %v355 = vpop.permute.xlu0 %354
  %358 = vset.pattern.permute.xlu0 0
  %359 = vperm.xlu0 %358, %v321
  %v360 = vpop.permute.xlu0 %359
  %363 = vset.pattern.permute.xlu0 0
  %364 = vperm.xlu0 %363, %v322
  %v365 = vpop.permute.xlu0 %364
  %v367 = vadd.f32 %v343, %v350
  %v368 = vadd.f32 %v344, %v355
  %v369 = vadd.f32 %v345, %v360
  %v370 = vadd.f32 %v346, %v365
  %v371 = vmax.f32 %v367, 0.0
  %v372 = vmax.f32 %v368, 0.0
  %v373 = vmax.f32 %v369, 0.0
  %v374 = vmax.f32 %v370, 0.0
  %v375 = vpack.c.bf16 %v372, %v371
  %v376 = vpack.c.bf16 %v374, %v373
  %v379 = vunpack.c.l.b16 %v375
  %v380 = vunpack.c.h.b16 %v375
  %v381 = vunpack.c.l.b16 %v376
  %v382 = vunpack.c.h.b16 %v376
  %v383 = vpack.c.b16 %v379, %v379
  %v384 = vpack.c.b16 %v380, %v380
  %v385 = vpack.c.b16 %v381, %v381
  %v386 = vpack.c.b16 %v382, %v382
  %vm391 = vcmask 257024
  %392 = vst.msk [vmem:[%s5] sm:$0xf] %vm391, %v383
  %393 = vst.msk [vmem:[%s5 + $0x4] sm:$0xf] %vm391, %v384
  %394 = vst.msk [vmem:[%s5 + $0x8] sm:$0xf] %vm391, %v385
  %395 = vst.msk [vmem:[%s5 + $0xc] sm:$0xf] %vm391, %v386
  // Predicated region
  $region22: #{local_enhancer_forward.19} parent=0 // pred_check
    _
  $region23: #{local_enhancer_forward.19} parent=0 // pred_check_branch
    %397 = sbr.rel (0) target = $region25
  $region24: #{local_enhancer_forward.19} parent=0 // pred_region
    _
  $region25: #{local_enhancer_forward.19} parent=0 // pred_fallthru
    _
  // Predicated region
  $region26: #{local_enhancer_forward.19} parent=0 // pred_check
    _
  $region27: #{local_enhancer_forward.19} parent=0 // pred_check_branch
    %399 = sbr.rel (0) target = $region29
  $region28: #{local_enhancer_forward.19} parent=0 // pred_region
    _
  $region29: #{local_enhancer_forward.19} parent=0 // pred_fallthru
    _

// kernel: local_enhancer_forward.20
$region0: #{local_enhancer_forward.20}
  #allocation0 [shape = 'u32[]', space=smem, size = 0x4, offset = 0x4, fixed_abs, tag = 'smem constant byte address 0x4 - core index']
  #allocation1 [shape = 'u32[144,128]{1,0:T(1,128)}', space=vmem, size = 0x12000, scoped, tag = 'internal scratch']
  %s0 = inlined_call_operand.vmem [shape: bf16[32,384], index: 0, kind: input, shape index: {}]
  %s1 = inlined_call_operand.vmem [shape: bf16[384,32], index: 1, kind: input, shape index: {}]
  %s2 = inlined_call_operand.vmem [shape: f32[32,1], index: 2, kind: input, shape index: {}]
  %s3 = inlined_call_operand.vmem [shape: f32[32,1], index: 3, kind: input, shape index: {}]
  %s4 = inlined_call_operand.vmem [shape: f32[32,1], index: 4, kind: input, shape index: {}]
  %s5 = inlined_call_operand.vmem [shape: bf16[32,32], index: 5, kind: output, shape index: {}]
  %s6 = sld [smem:[#allocation0]]
  $region30: #{local_enhancer_forward.20} parent=0
    _
  %s8 = ssub.s32 1, %s6
  %s9 = scalar_select 0, %s8, %s6
  // Predicated region
  $region2: #{local_enhancer_forward.20} parent=0 // pred_check
    _
  $region3: #{local_enhancer_forward.20} parent=0 // pred_check_branch
    %11 = sbr.rel (0) target = $region5
  $region4: #{local_enhancer_forward.20} parent=0 // pred_region
    _
  $region5: #{local_enhancer_forward.20} parent=0 // pred_fallthru
    _
  // Predicated region
  $region6: #{local_enhancer_forward.20} parent=0 // pred_check
    _
  $region7: #{local_enhancer_forward.20} parent=0 // pred_check_branch
    %13 = sbr.rel (0) target = $region9
  $region8: #{local_enhancer_forward.20} parent=0 // pred_region
    _
  $region9: #{local_enhancer_forward.20} parent=0 // pred_fallthru
    _
  // Predicated region
  $region10: #{local_enhancer_forward.20} parent=0 // pred_check
    _
  $region11: #{local_enhancer_forward.20} parent=0 // pred_check_branch
    %15 = sbr.rel (0) target = $region13
  $region12: #{local_enhancer_forward.20} parent=0 // pred_region
    _
  $region13: #{local_enhancer_forward.20} parent=0 // pred_fallthru
    _
  // Predicated region
  $region14: #{local_enhancer_forward.20} parent=0 // pred_check
    _
  $region15: #{local_enhancer_forward.20} parent=0 // pred_check_branch
    %17 = sbr.rel (0) target = $region17
  $region16: #{local_enhancer_forward.20} parent=0 // pred_region
    _
  $region17: #{local_enhancer_forward.20} parent=0 // pred_fallthru
    _
  // Predicated region
  $region18: #{local_enhancer_forward.20} parent=0 // pred_check
    _
  $region19: #{local_enhancer_forward.20} parent=0 // pred_check_branch
    %19 = sbr.rel (0) target = $region21
  $region20: #{local_enhancer_forward.20} parent=0 // pred_region
    _
  $region21: #{local_enhancer_forward.20} parent=0 // pred_fallthru
    _
  %v21 = vld [vmem:[%s0] sm:$0xff]
  %v22 = vld [vmem:[%s0 + $0x8] sm:$0xf]
  %v23 = vld [vmem:[%s0 + $0xc] sm:$0xff]
  %v24 = vld [vmem:[%s0 + $0x14] sm:$0xf]
  %v25 = vld [vmem:[%s0 + $0x18] sm:$0xff]
  %v26 = vld [vmem:[%s0 + $0x20] sm:$0xf]
  %v27 = vld [vmem:[%s0 + $0x24] sm:$0xff]
  %v28 = vld [vmem:[%s0 + $0x2c] sm:$0xf]
  %v29 = vld [vmem:[%s1] sm:$0xf]
  %v30 = vld [vmem:[%s1 + $0x4] sm:$0xf]
  %v31 = vld [vmem:[%s1 + $0x8] sm:$0xf]
  %v32 = vld [vmem:[%s1 + $0xc] sm:$0xf]
  %v33 = vld [vmem:[%s1 + $0x10] sm:$0xf]
  %v34 = vld [vmem:[%s1 + $0x14] sm:$0xf]
  %v35 = vld [vmem:[%s1 + $0x18] sm:$0xf]
  %v36 = vld [vmem:[%s1 + $0x1c] sm:$0xf]
  %v37 = vld [vmem:[%s1 + $0x20] sm:$0xf]
  %v38 = vld [vmem:[%s1 + $0x24] sm:$0xf]
  %v39 = vld [vmem:[%s1 + $0x28] sm:$0xf]
  %v40 = vld [vmem:[%s1 + $0x2c] sm:$0xf]
  %v41 = vld [vmem:[%s1 + $0x30] sm:$0xf]
  %v42 = vld [vmem:[%s1 + $0x34] sm:$0xf]
  %v43 = vld [vmem:[%s1 + $0x38] sm:$0xf]
  %v44 = vld [vmem:[%s1 + $0x3c] sm:$0xf]
  %v45 = vld [vmem:[%s1 + $0x40] sm:$0xf]
  %v46 = vld [vmem:[%s1 + $0x44] sm:$0xf]
  %v47 = vld [vmem:[%s1 + $0x48] sm:$0xf]
  %v48 = vld [vmem:[%s1 + $0x4c] sm:$0xf]
  %v49 = vld [vmem:[%s1 + $0x50] sm:$0xf]
  %v50 = vld [vmem:[%s1 + $0x54] sm:$0xf]
  %v51 = vld [vmem:[%s1 + $0x58] sm:$0xf]
  %v52 = vld [vmem:[%s1 + $0x5c] sm:$0xf]
  %v53 = vld [vmem:[%s1 + $0x60] sm:$0xf]
  %v54 = vld [vmem:[%s1 + $0x64] sm:$0xf]
  %v55 = vld [vmem:[%s1 + $0x68] sm:$0xf]
  %v56 = vld [vmem:[%s1 + $0x6c] sm:$0xf]
  %v57 = vld [vmem:[%s1 + $0x70] sm:$0xf]
  %v58 = vld [vmem:[%s1 + $0x74] sm:$0xf]
  %v59 = vld [vmem:[%s1 + $0x78] sm:$0xf]
  %v60 = vld [vmem:[%s1 + $0x7c] sm:$0xf]
  %v61 = vld [vmem:[%s1 + $0x80] sm:$0xf]
  %v62 = vld [vmem:[%s1 + $0x84] sm:$0xf]
  %v63 = vld [vmem:[%s1 + $0x88] sm:$0xf]
  %v64 = vld [vmem:[%s1 + $0x8c] sm:$0xf]
  %v65 = vld [vmem:[%s1 + $0x90] sm:$0xf]
  %v66 = vld [vmem:[%s1 + $0x94] sm:$0xf]
  %v67 = vld [vmem:[%s1 + $0x98] sm:$0xf]
  %v68 = vld [vmem:[%s1 + $0x9c] sm:$0xf]
  %v69 = vld [vmem:[%s1 + $0xa0] sm:$0xf]
  %v70 = vld [vmem:[%s1 + $0xa4] sm:$0xf]
  %v71 = vld [vmem:[%s1 + $0xa8] sm:$0xf]
  %v72 = vld [vmem:[%s1 + $0xac] sm:$0xf]
  %v73 = vld [vmem:[%s1 + $0xb0] sm:$0xf]
  %v74 = vld [vmem:[%s1 + $0xb4] sm:$0xf]
  %v75 = vld [vmem:[%s1 + $0xb8] sm:$0xf]
  %v76 = vld [vmem:[%s1 + $0xbc] sm:$0xf]
  %v77 = vld [vmem:[%s2] sm:$0xff]
  %v78 = vld [vmem:[%s2 + $0x8] sm:$0xff]
  %v79 = vld [vmem:[%s2 + $0x10] sm:$0xff]
  %v80 = vld [vmem:[%s2 + $0x18] sm:$0xff]
  %82 = vset.pattern.permute.xlu0 0
  %83 = vperm.xlu0 %82, %v77
  %v84 = vpop.permute.xlu0 %83
  %87 = vset.pattern.permute.xlu0 0
  %88 = vperm.xlu0 %87, %v78
  %v89 = vpop.permute.xlu0 %88
  %92 = vset.pattern.permute.xlu0 0
  %93 = vperm.xlu0 %92, %v79
  %v94 = vpop.permute.xlu0 %93
  %97 = vset.pattern.permute.xlu0 0
  %98 = vperm.xlu0 %97, %v80
  %v99 = vpop.permute.xlu0 %98
  %v109 = vunpack.c.l.b16 %v21
  %v110 = vunpack.c.h.b16 %v21
  %v111 = vunpack.c.l.b16 %v22
  %v112 = vunpack.c.l.b16 %v23
  %v113 = vunpack.c.h.b16 %v23
  %v114 = vunpack.c.l.b16 %v24
  %v115 = vunpack.c.l.b16 %v25
  %v116 = vunpack.c.h.b16 %v25
  %v117 = vunpack.c.l.b16 %v26
  %v118 = vunpack.c.l.b16 %v27
  %v119 = vunpack.c.h.b16 %v27
  %v120 = vunpack.c.l.b16 %v28
  %v121 = vpack.c.b16 %v112, %v109
  %v122 = vpack.c.b16 %v113, %v110
  %v123 = vpack.c.b16 %v114, %v111
  %v124 = vpack.c.b16 %v118, %v115
  %v125 = vpack.c.b16 %v119, %v116
  %v126 = vpack.c.b16 %v120, %v117
  %v181 = vunpack.c.l.b16 %v29
  %v182 = vunpack.c.l.b16 %v30
  %v183 = vunpack.c.l.b16 %v31
  %v184 = vunpack.c.l.b16 %v32
  %v185 = vunpack.c.l.b16 %v33
  %v186 = vunpack.c.l.b16 %v34
  %v187 = vunpack.c.l.b16 %v35
  %v188 = vunpack.c.l.b16 %v36
  %v189 = vunpack.c.l.b16 %v37
  %v190 = vunpack.c.l.b16 %v38
  %v191 = vunpack.c.l.b16 %v39
  %v192 = vunpack.c.l.b16 %v40
  %v193 = vunpack.c.l.b16 %v41
  %v194 = vunpack.c.l.b16 %v42
  %v195 = vunpack.c.l.b16 %v43
  %v196 = vunpack.c.l.b16 %v44
  %v197 = vunpack.c.l.b16 %v45
  %v198 = vunpack.c.l.b16 %v46
  %v199 = vunpack.c.l.b16 %v47
  %v200 = vunpack.c.l.b16 %v48
  %v201 = vunpack.c.l.b16 %v49
  %v202 = vunpack.c.l.b16 %v50
  %v203 = vunpack.c.l.b16 %v51
  %v204 = vunpack.c.l.b16 %v52
  %v205 = vunpack.c.l.b16 %v53
  %v206 = vunpack.c.l.b16 %v54
  %v207 = vunpack.c.l.b16 %v55
  %v208 = vunpack.c.l.b16 %v56
  %v209 = vunpack.c.l.b16 %v57
  %v210 = vunpack.c.l.b16 %v58
  %v211 = vunpack.c.l.b16 %v59
  %v212 = vunpack.c.l.b16 %v60
  %v213 = vunpack.c.l.b16 %v61
  %v214 = vunpack.c.l.b16 %v62
  %v215 = vunpack.c.l.b16 %v63
  %v216 = vunpack.c.l.b16 %v64
  %v217 = vunpack.c.l.b16 %v65
  %v218 = vunpack.c.l.b16 %v66
  %v219 = vunpack.c.l.b16 %v67
  %v220 = vunpack.c.l.b16 %v68
  %v221 = vunpack.c.l.b16 %v69
  %v222 = vunpack.c.l.b16 %v70
  %v223 = vunpack.c.l.b16 %v71
  %v224 = vunpack.c.l.b16 %v72
  %v225 = vunpack.c.l.b16 %v73
  %v226 = vunpack.c.l.b16 %v74
  %v227 = vunpack.c.l.b16 %v75
  %v228 = vunpack.c.l.b16 %v76
  %v229 = vpack.c.b16 %v182, %v181
  %v230 = vpack.c.b16 %v184, %v183
  %v231 = vpack.c.b16 %v186, %v185
  %v232 = vpack.c.b16 %v188, %v187
  %v233 = vpack.c.b16 %v190, %v189
  %v234 = vpack.c.b16 %v192, %v191
  %v235 = vpack.c.b16 %v194, %v193
  %v236 = vpack.c.b16 %v196, %v195
  %v237 = vpack.c.b16 %v198, %v197
  %v238 = vpack.c.b16 %v200, %v199
  %v239 = vpack.c.b16 %v202, %v201
  %v240 = vpack.c.b16 %v204, %v203
  %v241 = vpack.c.b16 %v206, %v205
  %v242 = vpack.c.b16 %v208, %v207
  %v243 = vpack.c.b16 %v210, %v209
  %v244 = vpack.c.b16 %v212, %v211
  %v245 = vpack.c.b16 %v214, %v213
  %v246 = vpack.c.b16 %v216, %v215
  %v247 = vpack.c.b16 %v218, %v217
  %v248 = vpack.c.b16 %v220, %v219
  %v249 = vpack.c.b16 %v222, %v221
  %v250 = vpack.c.b16 %v224, %v223
  %v251 = vpack.c.b16 %v226, %v225
  %v252 = vpack.c.b16 %v228, %v227
  %277 = vmatprep.subr.bf16.mxu0 0
  %278 = vmatpush1.bf16.msra.mxu0 %v229
  %279 = vmatprep.subr.bf16.mxu0 0
  %280 = vmatpush1.bf16.msra.mxu0 %v230
  %281 = vmatprep.subr.bf16.mxu0 0
  %282 = vmatpush1.bf16.msra.mxu0 %v231
  %283 = vmatprep.subr.bf16.mxu0 0
  %284 = vmatpush1.bf16.msra.mxu0 %v232
  %285 = vmatprep.subr.bf16.mxu0 0
  %286 = vmatpush1.bf16.msra.mxu0 %v233
  %287 = vmatprep.subr.bf16.mxu0 0
  %288 = vmatpush1.bf16.msra.mxu0 %v234
  %289 = vmatprep.subr.bf16.mxu0 0
  %290 = vmatpush1.bf16.msra.mxu0 %v235
  %291 = vmatprep.subr.bf16.mxu0 0
  %292 = vmatpush1.bf16.msra.mxu0 %v236
  %293 = vmatprep.subr.bf16.mxu0 0
  %294 = vmatpush1.bf16.msra.mxu0 %v237
  %295 = vmatprep.subr.bf16.mxu0 0
  %296 = vmatpush1.bf16.msra.mxu0 %v238
  %297 = vmatprep.subr.bf16.mxu0 0
  %298 = vmatpush1.bf16.msra.mxu0 %v239
  %299 = vmatprep.subr.bf16.mxu0 0
  %300 = vmatpush1.bf16.msra.mxu0 %v240
  %301 = vmatprep.subr.bf16.mxu0 0
  %302 = vmatpush1.bf16.msra.mxu0 %v241
  %303 = vmatprep.subr.bf16.mxu0 0
  %304 = vmatpush1.bf16.msra.mxu0 %v242
  %305 = vmatprep.subr.bf16.mxu0 0
  %306 = vmatpush1.bf16.msra.mxu0 %v243
  %307 = vmatprep.subr.bf16.mxu0 0
  %308 = vmatpush1.bf16.msra.mxu0 %v244
  %309 = vmatprep.mubr.bf16.mxu0 %v122
  %310 = vmatmul.mubr.bf16.gmra.mrb[0].mxu0 %v121
  %v311 = vpop.f32.mrb[0].mxu0
  %v312 = vadd.f32 %v84, %v311
  %v313 = vpop.f32.mrb[0].mxu0
  %v314 = vpop.f32.mrb[0].mxu0
  %v315 = vadd.f32 %v89, %v314
  %v316 = vpop.f32.mrb[0].mxu0
  %317 = vmatprep.mubr.bf16.mxu0 %v125
  %318 = vmatmul.mubr.bf16.gmra.mrb[0].mxu0 %v124
  %v319 = vpop.f32.mrb[0].mxu0
  %v320 = vadd.f32 %v94, %v319
  %v321 = vpop.f32.mrb[0].mxu0
  %v322 = vpop.f32.mrb[0].mxu0
  %v323 = vadd.f32 %v99, %v322
  %v324 = vpop.f32.mrb[0].mxu0
  %325 = vdwg.mxu0
  %326 = vmatprep.subr.bf16.mxu0 0
  %327 = vmatpush1.bf16.msra.mxu0 %v245
  %328 = vmatprep.subr.bf16.mxu0 0
  %329 = vmatpush1.bf16.msra.mxu0 %v246
  %330 = vmatprep.subr.bf16.mxu0 0
  %331 = vmatpush1.bf16.msra.mxu0 %v247
  %332 = vmatprep.subr.bf16.mxu0 0
  %333 = vmatpush1.bf16.msra.mxu0 %v248
  %334 = vmatprep.subr.bf16.mxu0 0
  %335 = vmatpush1.bf16.msra.mxu0 %v249
  %336 = vmatprep.subr.bf16.mxu0 0
  %337 = vmatpush1.bf16.msra.mxu0 %v250
  %338 = vmatprep.subr.bf16.mxu0 0
  %339 = vmatpush1.bf16.msra.mxu0 %v251
  %340 = vmatprep.subr.bf16.mxu0 0
  %341 = vmatpush1.bf16.msra.mxu0 %v252
  %342 = vmatprep.subr.bf16.mxu0 0
  %343 = vmatpush1.bf16.msra.mxu0 0
  %344 = vmatprep.subr.bf16.mxu0 0
  %345 = vmatpush1.bf16.msra.mxu0 0
  %346 = vmatprep.subr.bf16.mxu0 0
  %347 = vmatpush1.bf16.msra.mxu0 0
  %348 = vmatprep.subr.bf16.mxu0 0
  %349 = vmatpush1.bf16.msra.mxu0 0
  %350 = vmatprep.subr.bf16.mxu0 0
  %351 = vmatpush1.bf16.msra.mxu0 0
  %352 = vmatprep.subr.bf16.mxu0 0
  %353 = vmatpush1.bf16.msra.mxu0 0
  %354 = vmatprep.subr.bf16.mxu0 0
  %355 = vmatpush1.bf16.msra.mxu0 0
  %356 = vmatprep.subr.bf16.mxu0 0
  %357 = vmatpush1.bf16.msra.mxu0 0
  %358 = vmatprep.mubr.bf16.mxu0 0
  %359 = vmatmul.mubr.bf16.gmra.mrb[0].mxu0 %v123
  %v360 = vpop.f32.mrb[0].mxu0
  %v361 = vadd.f32 %v312, %v360
  %v362 = vpop.f32.mrb[0].mxu0
  %v363 = vpop.f32.mrb[0].mxu0
  %v364 = vadd.f32 %v315, %v363
  %v365 = vpop.f32.mrb[0].mxu0
  %366 = vmatprep.mubr.bf16.mxu0 0
  %367 = vmatmul.mubr.bf16.gmra.mrb[0].mxu0 %v126
  %v368 = vpop.f32.mrb[0].mxu0
  %v369 = vadd.f32 %v320, %v368
  %v370 = vpop.f32.mrb[0].mxu0
  %v371 = vpop.f32.mrb[0].mxu0
  %v372 = vadd.f32 %v323, %v371
  %v373 = vpop.f32.mrb[0].mxu0
  %374 = vdwg.mxu0
  %vm375 = vcmask 261120
  %v376 = vsel %vm375, %v361, 0.0
  %377 = vadd.xlane.f32.xlu0 %v376
  %v378 = vpop.xlane.xlu0 %377
  %v379 = vsel %vm375, %v364, 0.0
  %380 = vadd.xlane.f32.xlu0 %v379
  %v381 = vpop.xlane.xlu0 %380
  %v382 = vsel %vm375, %v369, 0.0
  %383 = vadd.xlane.f32.xlu0 %v382
  %v384 = vpop.xlane.xlu0 %383
  %v385 = vsel %vm375, %v372, 0.0
  %386 = vadd.xlane.f32.xlu0 %v385
  %v387 = vpop.xlane.xlu0 %386
  %v388 = vmul.f32 %v361, %v361
  %v389 = vmul.f32 %v364, %v364
  %v390 = vmul.f32 %v369, %v369
  %v391 = vmul.f32 %v372, %v372
  %v392 = vsel %vm375, %v388, 0.0
  %393 = vadd.xlane.f32.xlu0 %v392
  %v394 = vpop.xlane.xlu0 %393
  %v395 = vsel %vm375, %v389, 0.0
  %396 = vadd.xlane.f32.xlu0 %v395
  %v397 = vpop.xlane.xlu0 %396
  %v398 = vsel %vm375, %v390, 0.0
  %399 = vadd.xlane.f32.xlu0 %v398
  %v400 = vpop.xlane.xlu0 %399
  %v401 = vsel %vm375, %v391, 0.0
  %402 = vadd.xlane.f32.xlu0 %v401
  %v403 = vpop.xlane.xlu0 %402
  %v404 = vmul.f32 %v378, 0.03125
  %v405 = vmul.f32 %v381, 0.03125
  %v406 = vmul.f32 %v384, 0.03125
  %v407 = vmul.f32 %v387, 0.03125
  %v408 = vmul.f32 %v394, 0.03125
  %v409 = vmul.f32 %v397, 0.03125
  %v410 = vmul.f32 %v400, 0.03125
  %v411 = vmul.f32 %v403, 0.03125
  %v412 = vmul.f32 %v404, %v404
  %v413 = vmul.f32 %v405, %v405
  %v414 = vmul.f32 %v406, %v406
  %v415 = vmul.f32 %v407, %v407
  %v416 = vsub.f32 %v408, %v412
  %v417 = vsub.f32 %v409, %v413
  %v418 = vsub.f32 %v410, %v414
  %v419 = vsub.f32 %v411, %v415
  %v420 = vmax.f32 %v416, 0.0
  %v421 = vmax.f32 %v417, 0.0
  %v422 = vmax.f32 %v418, 0.0
  %v423 = vmax.f32 %v419, 0.0
  %v424 = vld [vmem:[%s3] sm:$0xff]
  %v425 = vld [vmem:[%s3 + $0x8] sm:$0xff]
  %v426 = vld [vmem:[%s3 + $0x10] sm:$0xff]
  %v427 = vld [vmem:[%s3 + $0x18] sm:$0xff]
  %v428 = vadd.f32 %v420, 1e-05
  %v429 = vadd.f32 %v421, 1e-05
  %v430 = vadd.f32 %v422, 1e-05
  %v431 = vadd.f32 %v423, 1e-05
  %v432 = vrsqrt.pop %v428
  %v433 = vrsqrt.pop %v429
  %v434 = vrsqrt.pop %v430
  %v435 = vrsqrt.pop %v431
  %v436 = vmul.f32 %v424, %v432
  %v437 = vmul.f32 %v425, %v433
  %v438 = vmul.f32 %v426, %v434
  %v439 = vmul.f32 %v427, %v435
  %v440 = vld [vmem:[%s4] sm:$0xff]
  %v441 = vld [vmem:[%s4 + $0x8] sm:$0xff]
  %v442 = vld [vmem:[%s4 + $0x10] sm:$0xff]
  %v443 = vld [vmem:[%s4 + $0x18] sm:$0xff]
  %v444 = vmul.f32 %v404, %v436
  %v445 = vmul.f32 %v405, %v437
  %v446 = vmul.f32 %v406, %v438
  %v447 = vmul.f32 %v407, %v439
  %v448 = vsub.f32 %v440, %v444
  %v449 = vsub.f32 %v441, %v445
  %v450 = vsub.f32 %v442, %v446
  %v451 = vsub.f32 %v443, %v447
  %453 = vset.pattern.permute.xlu0 0
  %454 = vperm.xlu0 %453, %v436
  %v455 = vpop.permute.xlu0 %454
  %458 = vset.pattern.permute.xlu0 0
  %459 = vperm.xlu0 %458, %v437
  %v460 = vpop.permute.xlu0 %459
  %463 = vset.pattern.permute.xlu0 0
  %464 = vperm.xlu0 %463, %v438
  %v465 = vpop.permute.xlu0 %464
  %468 = vset.pattern.permute.xlu0 0
  %469 = vperm.xlu0 %468, %v439
  %v470 = vpop.permute.xlu0 %469
  %v472 = vmul.f32 %v361, %v455
  %v473 = vmul.f32 %v364, %v460
  %v474 = vmul.f32 %v369, %v465
  %v475 = vmul.f32 %v372, %v470
  %477 = vset.pattern.permute.xlu0 0
  %478 = vperm.xlu0 %477, %v448
  %v479 = vpop.permute.xlu0 %478
  %482 = vset.pattern.permute.xlu0 0
  %483 = vperm.xlu0 %482, %v449
  %v484 = vpop.permute.xlu0 %483
  %487 = vset.pattern.permute.xlu0 0
  %488 = vperm.xlu0 %487, %v450
  %v489 = vpop.permute.xlu0 %488
  %492 = vset.pattern.permute.xlu0 0
  %493 = vperm.xlu0 %492, %v451
  %v494 = vpop.permute.xlu0 %493
  %v496 = vadd.f32 %v472, %v479
  %v497 = vadd.f32 %v473, %v484
  %v498 = vadd.f32 %v474, %v489
  %v499 = vadd.f32 %v475, %v494
  %v500 = vmax.f32 %v496, 0.0
  %v501 = vmax.f32 %v497, 0.0
  %v502 = vmax.f32 %v498, 0.0
  %v503 = vmax.f32 %v499, 0.0
  %v504 = vpack.c.bf16 %v501, %v500
  %v505 = vpack.c.bf16 %v503, %v502
  %v508 = vunpack.c.l.b16 %v504
  %v509 = vunpack.c.h.b16 %v504
  %v510 = vunpack.c.l.b16 %v505
  %v511 = vunpack.c.h.b16 %v505
  %v512 = vpack.c.b16 %v508, %v508
  %v513 = vpack.c.b16 %v509, %v509
  %v514 = vpack.c.b16 %v510, %v510
  %v515 = vpack.c.b16 %v511, %v511
  %vm520 = vcmask 257024
  %521 = vst.msk [vmem:[%s5] sm:$0xf] %vm520, %v512
  %522 = vst.msk [vmem:[%s5 + $0x4] sm:$0xf] %vm520, %v513
  %523 = vst.msk [vmem:[%s5 + $0x8] sm:$0xf] %vm520, %v514
  %524 = vst.msk [vmem:[%s5 + $0xc] sm:$0xf] %vm520, %v515
  // Predicated region
  $region22: #{local_enhancer_forward.20} parent=0 // pred_check
    _
  $region23: #{local_enhancer_forward.20} parent=0 // pred_check_branch
    %526 = sbr.rel (0) target = $region25
  $region24: #{local_enhancer_forward.20} parent=0 // pred_region
    _
  $region25: #{local_enhancer_forward.20} parent=0 // pred_fallthru
    _
  // Predicated region
  $region26: #{local_enhancer_forward.20} parent=0 // pred_check
    _
  $region27: #{local_enhancer_forward.20} parent=0 // pred_check_branch
    %528 = sbr.rel (0) target = $region29
  $region28: #{local_enhancer_forward.20} parent=0 // pred_region
    _
  $region29: #{local_enhancer_forward.20} parent=0 // pred_fallthru
    _

// kernel: local_enhancer_forward.21
$region0: #{local_enhancer_forward.21}
  #allocation0 [shape = 'u32[]', space=smem, size = 0x4, offset = 0x4, fixed_abs, tag = 'smem constant byte address 0x4 - core index']
  #allocation1 [shape = 'u32[144,128]{1,0:T(1,128)}', space=vmem, size = 0x12000, scoped, tag = 'internal scratch']
  %s0 = inlined_call_operand.vmem [shape: bf16[32,384], index: 0, kind: input, shape index: {}]
  %s1 = inlined_call_operand.vmem [shape: bf16[384,32], index: 1, kind: input, shape index: {}]
  %s2 = inlined_call_operand.vmem [shape: f32[32,1], index: 2, kind: input, shape index: {}]
  %s3 = inlined_call_operand.vmem [shape: f32[32,1], index: 3, kind: input, shape index: {}]
  %s4 = inlined_call_operand.vmem [shape: f32[32,1], index: 4, kind: input, shape index: {}]
  %s5 = inlined_call_operand.vmem [shape: bf16[32,32], index: 5, kind: input, shape index: {}]
  %s6 = inlined_call_operand.vmem [shape: bf16[32,32], index: 6, kind: output, shape index: {}]
  %s7 = sld [smem:[#allocation0]]
  $region34: #{local_enhancer_forward.21} parent=0
    _
  %s9 = ssub.s32 1, %s7
  %s10 = scalar_select 0, %s9, %s7
  // Predicated region
  $region2: #{local_enhancer_forward.21} parent=0 // pred_check
    _
  $region3: #{local_enhancer_forward.21} parent=0 // pred_check_branch
    %12 = sbr.rel (0) target = $region5
  $region4: #{local_enhancer_forward.21} parent=0 // pred_region
    _
  $region5: #{local_enhancer_forward.21} parent=0 // pred_fallthru
    _
  // Predicated region
  $region6: #{local_enhancer_forward.21} parent=0 // pred_check
    _
  $region7: #{local_enhancer_forward.21} parent=0 // pred_check_branch
    %14 = sbr.rel (0) target = $region9
  $region8: #{local_enhancer_forward.21} parent=0 // pred_region
    _
  $region9: #{local_enhancer_forward.21} parent=0 // pred_fallthru
    _
  // Predicated region
  $region10: #{local_enhancer_forward.21} parent=0 // pred_check
    _
  $region11: #{local_enhancer_forward.21} parent=0 // pred_check_branch
    %16 = sbr.rel (0) target = $region13
  $region12: #{local_enhancer_forward.21} parent=0 // pred_region
    _
  $region13: #{local_enhancer_forward.21} parent=0 // pred_fallthru
    _
  // Predicated region
  $region14: #{local_enhancer_forward.21} parent=0 // pred_check
    _
  $region15: #{local_enhancer_forward.21} parent=0 // pred_check_branch
    %18 = sbr.rel (0) target = $region17
  $region16: #{local_enhancer_forward.21} parent=0 // pred_region
    _
  $region17: #{local_enhancer_forward.21} parent=0 // pred_fallthru
    _
  // Predicated region
  $region18: #{local_enhancer_forward.21} parent=0 // pred_check
    _
  $region19: #{local_enhancer_forward.21} parent=0 // pred_check_branch
    %20 = sbr.rel (0) target = $region21
  $region20: #{local_enhancer_forward.21} parent=0 // pred_region
    _
  $region21: #{local_enhancer_forward.21} parent=0 // pred_fallthru
    _
  // Predicated region
  $region22: #{local_enhancer_forward.21} parent=0 // pred_check
    _
  $region23: #{local_enhancer_forward.21} parent=0 // pred_check_branch
    %22 = sbr.rel (0) target = $region25
  $region24: #{local_enhancer_forward.21} parent=0 // pred_region
    _
  $region25: #{local_enhancer_forward.21} parent=0 // pred_fallthru
    _
  %v24 = vld [vmem:[%s0] sm:$0xff]
  %v25 = vld [vmem:[%s0 + $0x8] sm:$0xf]
  %v26 = vld [vmem:[%s0 + $0xc] sm:$0xff]
  %v27 = vld [vmem:[%s0 + $0x14] sm:$0xf]
  %v28 = vld [vmem:[%s0 + $0x18] sm:$0xff]
  %v29 = vld [vmem:[%s0 + $0x20] sm:$0xf]
  %v30 = vld [vmem:[%s0 + $0x24] sm:$0xff]
  %v31 = vld [vmem:[%s0 + $0x2c] sm:$0xf]
  %v32 = vld [vmem:[%s1] sm:$0xf]
  %v33 = vld [vmem:[%s1 + $0x4] sm:$0xf]
  %v34 = vld [vmem:[%s1 + $0x8] sm:$0xf]
  %v35 = vld [vmem:[%s1 + $0xc] sm:$0xf]
  %v36 = vld [vmem:[%s1 + $0x10] sm:$0xf]
  %v37 = vld [vmem:[%s1 + $0x14] sm:$0xf]
  %v38 = vld [vmem:[%s1 + $0x18] sm:$0xf]
  %v39 = vld [vmem:[%s1 + $0x1c] sm:$0xf]
  %v40 = vld [vmem:[%s1 + $0x20] sm:$0xf]
  %v41 = vld [vmem:[%s1 + $0x24] sm:$0xf]
  %v42 = vld [vmem:[%s1 + $0x28] sm:$0xf]
  %v43 = vld [vmem:[%s1 + $0x2c] sm:$0xf]
  %v44 = vld [vmem:[%s1 + $0x30] sm:$0xf]
  %v45 = vld [vmem:[%s1 + $0x34] sm:$0xf]
  %v46 = vld [vmem:[%s1 + $0x38] sm:$0xf]
  %v47 = vld [vmem:[%s1 + $0x3c] sm:$0xf]
  %v48 = vld [vmem:[%s1 + $0x40] sm:$0xf]
  %v49 = vld [vmem:[%s1 + $0x44] sm:$0xf]
  %v50 = vld [vmem:[%s1 + $0x48] sm:$0xf]
  %v51 = vld [vmem:[%s1 + $0x4c] sm:$0xf]
  %v52 = vld [vmem:[%s1 + $0x50] sm:$0xf]
  %v53 = vld [vmem:[%s1 + $0x54] sm:$0xf]
  %v54 = vld [vmem:[%s1 + $0x58] sm:$0xf]
  %v55 = vld [vmem:[%s1 + $0x5c] sm:$0xf]
  %v56 = vld [vmem:[%s1 + $0x60] sm:$0xf]
  %v57 = vld [vmem:[%s1 + $0x64] sm:$0xf]
  %v58 = vld [vmem:[%s1 + $0x68] sm:$0xf]
  %v59 = vld [vmem:[%s1 + $0x6c] sm:$0xf]
  %v60 = vld [vmem:[%s1 + $0x70] sm:$0xf]
  %v61 = vld [vmem:[%s1 + $0x74] sm:$0xf]
  %v62 = vld [vmem:[%s1 + $0x78] sm:$0xf]
  %v63 = vld [vmem:[%s1 + $0x7c] sm:$0xf]
  %v64 = vld [vmem:[%s1 + $0x80] sm:$0xf]
  %v65 = vld [vmem:[%s1 + $0x84] sm:$0xf]
  %v66 = vld [vmem:[%s1 + $0x88] sm:$0xf]
  %v67 = vld [vmem:[%s1 + $0x8c] sm:$0xf]
  %v68 = vld [vmem:[%s1 + $0x90] sm:$0xf]
  %v69 = vld [vmem:[%s1 + $0x94] sm:$0xf]
  %v70 = vld [vmem:[%s1 + $0x98] sm:$0xf]
  %v71 = vld [vmem:[%s1 + $0x9c] sm:$0xf]
  %v72 = vld [vmem:[%s1 + $0xa0] sm:$0xf]
  %v73 = vld [vmem:[%s1 + $0xa4] sm:$0xf]
  %v74 = vld [vmem:[%s1 + $0xa8] sm:$0xf]
  %v75 = vld [vmem:[%s1 + $0xac] sm:$0xf]
  %v76 = vld [vmem:[%s1 + $0xb0] sm:$0xf]
  %v77 = vld [vmem:[%s1 + $0xb4] sm:$0xf]
  %v78 = vld [vmem:[%s1 + $0xb8] sm:$0xf]
  %v79 = vld [vmem:[%s1 + $0xbc] sm:$0xf]
  %v80 = vld [vmem:[%s2] sm:$0xff]
  %v81 = vld [vmem:[%s2 + $0x8] sm:$0xff]
  %v82 = vld [vmem:[%s2 + $0x10] sm:$0xff]
  %v83 = vld [vmem:[%s2 + $0x18] sm:$0xff]
  %85 = vset.pattern.permute.xlu0 0
  %86 = vperm.xlu0 %85, %v80
  %v87 = vpop.permute.xlu0 %86
  %90 = vset.pattern.permute.xlu0 0
  %91 = vperm.xlu0 %90, %v81
  %v92 = vpop.permute.xlu0 %91
  %95 = vset.pattern.permute.xlu0 0
  %96 = vperm.xlu0 %95, %v82
  %v97 = vpop.permute.xlu0 %96
  %100 = vset.pattern.permute.xlu0 0
  %101 = vperm.xlu0 %100, %v83
  %v102 = vpop.permute.xlu0 %101
  %v112 = vunpack.c.l.b16 %v24
  %v113 = vunpack.c.h.b16 %v24
  %v114 = vunpack.c.l.b16 %v25
  %v115 = vunpack.c.l.b16 %v26
  %v116 = vunpack.c.h.b16 %v26
  %v117 = vunpack.c.l.b16 %v27
  %v118 = vunpack.c.l.b16 %v28
  %v119 = vunpack.c.h.b16 %v28
  %v120 = vunpack.c.l.b16 %v29
  %v121 = vunpack.c.l.b16 %v30
  %v122 = vunpack.c.h.b16 %v30
  %v123 = vunpack.c.l.b16 %v31
  %v124 = vpack.c.b16 %v115, %v112
  %v125 = vpack.c.b16 %v116, %v113
  %v126 = vpack.c.b16 %v117, %v114
  %v127 = vpack.c.b16 %v121, %v118
  %v128 = vpack.c.b16 %v122, %v119
  %v129 = vpack.c.b16 %v123, %v120
  %v184 = vunpack.c.l.b16 %v32
  %v185 = vunpack.c.l.b16 %v33
  %v186 = vunpack.c.l.b16 %v34
  %v187 = vunpack.c.l.b16 %v35
  %v188 = vunpack.c.l.b16 %v36
  %v189 = vunpack.c.l.b16 %v37
  %v190 = vunpack.c.l.b16 %v38
  %v191 = vunpack.c.l.b16 %v39
  %v192 = vunpack.c.l.b16 %v40
  %v193 = vunpack.c.l.b16 %v41
  %v194 = vunpack.c.l.b16 %v42
  %v195 = vunpack.c.l.b16 %v43
  %v196 = vunpack.c.l.b16 %v44
  %v197 = vunpack.c.l.b16 %v45
  %v198 = vunpack.c.l.b16 %v46
  %v199 = vunpack.c.l.b16 %v47
  %v200 = vunpack.c.l.b16 %v48
  %v201 = vunpack.c.l.b16 %v49
  %v202 = vunpack.c.l.b16 %v50
  %v203 = vunpack.c.l.b16 %v51
  %v204 = vunpack.c.l.b16 %v52
  %v205 = vunpack.c.l.b16 %v53
  %v206 = vunpack.c.l.b16 %v54
  %v207 = vunpack.c.l.b16 %v55
  %v208 = vunpack.c.l.b16 %v56
  %v209 = vunpack.c.l.b16 %v57
  %v210 = vunpack.c.l.b16 %v58
  %v211 = vunpack.c.l.b16 %v59
  %v212 = vunpack.c.l.b16 %v60
  %v213 = vunpack.c.l.b16 %v61
  %v214 = vunpack.c.l.b16 %v62
  %v215 = vunpack.c.l.b16 %v63
  %v216 = vunpack.c.l.b16 %v64
  %v217 = vunpack.c.l.b16 %v65
  %v218 = vunpack.c.l.b16 %v66
  %v219 = vunpack.c.l.b16 %v67
  %v220 = vunpack.c.l.b16 %v68
  %v221 = vunpack.c.l.b16 %v69
  %v222 = vunpack.c.l.b16 %v70
  %v223 = vunpack.c.l.b16 %v71
  %v224 = vunpack.c.l.b16 %v72
  %v225 = vunpack.c.l.b16 %v73
  %v226 = vunpack.c.l.b16 %v74
  %v227 = vunpack.c.l.b16 %v75
  %v228 = vunpack.c.l.b16 %v76
  %v229 = vunpack.c.l.b16 %v77
  %v230 = vunpack.c.l.b16 %v78
  %v231 = vunpack.c.l.b16 %v79
  %v232 = vpack.c.b16 %v185, %v184
  %v233 = vpack.c.b16 %v187, %v186
  %v234 = vpack.c.b16 %v189, %v188
  %v235 = vpack.c.b16 %v191, %v190
  %v236 = vpack.c.b16 %v193, %v192
  %v237 = vpack.c.b16 %v195, %v194
  %v238 = vpack.c.b16 %v197, %v196
  %v239 = vpack.c.b16 %v199, %v198
  %v240 = vpack.c.b16 %v201, %v200
  %v241 = vpack.c.b16 %v203, %v202
  %v242 = vpack.c.b16 %v205, %v204
  %v243 = vpack.c.b16 %v207, %v206
  %v244 = vpack.c.b16 %v209, %v208
  %v245 = vpack.c.b16 %v211, %v210
  %v246 = vpack.c.b16 %v213, %v212
  %v247 = vpack.c.b16 %v215, %v214
  %v248 = vpack.c.b16 %v217, %v216
  %v249 = vpack.c.b16 %v219, %v218
  %v250 = vpack.c.b16 %v221, %v220
  %v251 = vpack.c.b16 %v223, %v222
  %v252 = vpack.c.b16 %v225, %v224
  %v253 = vpack.c.b16 %v227, %v226
  %v254 = vpack.c.b16 %v229, %v228
  %v255 = vpack.c.b16 %v231, %v230
  %280 = vmatprep.subr.bf16.mxu0 0
  %281 = vmatpush1.bf16.msra.mxu0 %v232
  %282 = vmatprep.subr.bf16.mxu0 0
  %283 = vmatpush1.bf16.msra.mxu0 %v233
  %284 = vmatprep.subr.bf16.mxu0 0
  %285 = vmatpush1.bf16.msra.mxu0 %v234
  %286 = vmatprep.subr.bf16.mxu0 0
  %287 = vmatpush1.bf16.msra.mxu0 %v235
  %288 = vmatprep.subr.bf16.mxu0 0
  %289 = vmatpush1.bf16.msra.mxu0 %v236
  %290 = vmatprep.subr.bf16.mxu0 0
  %291 = vmatpush1.bf16.msra.mxu0 %v237
  %292 = vmatprep.subr.bf16.mxu0 0
  %293 = vmatpush1.bf16.msra.mxu0 %v238
  %294 = vmatprep.subr.bf16.mxu0 0
  %295 = vmatpush1.bf16.msra.mxu0 %v239
  %296 = vmatprep.subr.bf16.mxu0 0
  %297 = vmatpush1.bf16.msra.mxu0 %v240
  %298 = vmatprep.subr.bf16.mxu0 0
  %299 = vmatpush1.bf16.msra.mxu0 %v241
  %300 = vmatprep.subr.bf16.mxu0 0
  %301 = vmatpush1.bf16.msra.mxu0 %v242
  %302 = vmatprep.subr.bf16.mxu0 0
  %303 = vmatpush1.bf16.msra.mxu0 %v243
  %304 = vmatprep.subr.bf16.mxu0 0
  %305 = vmatpush1.bf16.msra.mxu0 %v244
  %306 = vmatprep.subr.bf16.mxu0 0
  %307 = vmatpush1.bf16.msra.mxu0 %v245
  %308 = vmatprep.subr.bf16.mxu0 0
  %309 = vmatpush1.bf16.msra.mxu0 %v246
  %310 = vmatprep.subr.bf16.mxu0 0
  %311 = vmatpush1.bf16.msra.mxu0 %v247
  %312 = vmatprep.mubr.bf16.mxu0 %v125
  %313 = vmatmul.mubr.bf16.gmra.mrb[0].mxu0 %v124
  %v314 = vpop.f32.mrb[0].mxu0
  %v315 = vadd.f32 %v87, %v314
  %v316 = vpop.f32.mrb[0].mxu0
  %v317 = vpop.f32.mrb[0].mxu0
  %v318 = vadd.f32 %v92, %v317
  %v319 = vpop.f32.mrb[0].mxu0
  %320 = vmatprep.mubr.bf16.mxu0 %v128
  %321 = vmatmul.mubr.bf16.gmra.mrb[0].mxu0 %v127
  %v322 = vpop.f32.mrb[0].mxu0
  %v323 = vadd.f32 %v97, %v322
  %v324 = vpop.f32.mrb[0].mxu0
  %v325 = vpop.f32.mrb[0].mxu0
  %v326 = vadd.f32 %v102, %v325
  %v327 = vpop.f32.mrb[0].mxu0
  %328 = vdwg.mxu0
  %329 = vmatprep.subr.bf16.mxu0 0
  %330 = vmatpush1.bf16.msra.mxu0 %v248
  %331 = vmatprep.subr.bf16.mxu0 0
  %332 = vmatpush1.bf16.msra.mxu0 %v249
  %333 = vmatprep.subr.bf16.mxu0 0
  %334 = vmatpush1.bf16.msra.mxu0 %v250
  %335 = vmatprep.subr.bf16.mxu0 0
  %336 = vmatpush1.bf16.msra.mxu0 %v251
  %337 = vmatprep.subr.bf16.mxu0 0
  %338 = vmatpush1.bf16.msra.mxu0 %v252
  %339 = vmatprep.subr.bf16.mxu0 0
  %340 = vmatpush1.bf16.msra.mxu0 %v253
  %341 = vmatprep.subr.bf16.mxu0 0
  %342 = vmatpush1.bf16.msra.mxu0 %v254
  %343 = vmatprep.subr.bf16.mxu0 0
  %344 = vmatpush1.bf16.msra.mxu0 %v255
  %345 = vmatprep.subr.bf16.mxu0 0
  %346 = vmatpush1.bf16.msra.mxu0 0
  %347 = vmatprep.subr.bf16.mxu0 0
  %348 = vmatpush1.bf16.msra.mxu0 0
  %349 = vmatprep.subr.bf16.mxu0 0
  %350 = vmatpush1.bf16.msra.mxu0 0
  %351 = vmatprep.subr.bf16.mxu0 0
  %352 = vmatpush1.bf16.msra.mxu0 0
  %353 = vmatprep.subr.bf16.mxu0 0
  %354 = vmatpush1.bf16.msra.mxu0 0
  %355 = vmatprep.subr.bf16.mxu0 0
  %356 = vmatpush1.bf16.msra.mxu0 0
  %357 = vmatprep.subr.bf16.mxu0 0
  %358 = vmatpush1.bf16.msra.mxu0 0
  %359 = vmatprep.subr.bf16.mxu0 0
  %360 = vmatpush1.bf16.msra.mxu0 0
  %361 = vmatprep.mubr.bf16.mxu0 0
  %362 = vmatmul.mubr.bf16.gmra.mrb[0].mxu0 %v126
  %v363 = vpop.f32.mrb[0].mxu0
  %v364 = vadd.f32 %v315, %v363
  %v365 = vpop.f32.mrb[0].mxu0
  %v366 = vpop.f32.mrb[0].mxu0
  %v367 = vadd.f32 %v318, %v366
  %v368 = vpop.f32.mrb[0].mxu0
  %369 = vmatprep.mubr.bf16.mxu0 0
  %370 = vmatmul.mubr.bf16.gmra.mrb[0].mxu0 %v129
  %v371 = vpop.f32.mrb[0].mxu0
  %v372 = vadd.f32 %v323, %v371
  %v373 = vpop.f32.mrb[0].mxu0
  %v374 = vpop.f32.mrb[0].mxu0
  %v375 = vadd.f32 %v326, %v374
  %v376 = vpop.f32.mrb[0].mxu0
  %377 = vdwg.mxu0
  %vm378 = vcmask 261120
  %v379 = vsel %vm378, %v364, 0.0
  %380 = vadd.xlane.f32.xlu0 %v379
  %v381 = vpop.xlane.xlu0 %380
  %v382 = vsel %vm378, %v367, 0.0
  %383 = vadd.xlane.f32.xlu0 %v382
  %v384 = vpop.xlane.xlu0 %383
  %v385 = vsel %vm378, %v372, 0.0
  %386 = vadd.xlane.f32.xlu0 %v385
  %v387 = vpop.xlane.xlu0 %386
  %v388 = vsel %vm378, %v375, 0.0
  %389 = vadd.xlane.f32.xlu0 %v388
  %v390 = vpop.xlane.xlu0 %389
  %v391 = vmul.f32 %v364, %v364
  %v392 = vmul.f32 %v367, %v367
  %v393 = vmul.f32 %v372, %v372
  %v394 = vmul.f32 %v375, %v375
  %v395 = vsel %vm378, %v391, 0.0
  %396 = vadd.xlane.f32.xlu0 %v395
  %v397 = vpop.xlane.xlu0 %396
  %v398 = vsel %vm378, %v392, 0.0
  %399 = vadd.xlane.f32.xlu0 %v398
  %v400 = vpop.xlane.xlu0 %399
  %v401 = vsel %vm378, %v393, 0.0
  %402 = vadd.xlane.f32.xlu0 %v401
  %v403 = vpop.xlane.xlu0 %402
  %v404 = vsel %vm378, %v394, 0.0
  %405 = vadd.xlane.f32.xlu0 %v404
  %v406 = vpop.xlane.xlu0 %405
  %v407 = vmul.f32 %v381, 0.03125
  %v408 = vmul.f32 %v384, 0.03125
  %v409 = vmul.f32 %v387, 0.03125
  %v410 = vmul.f32 %v390, 0.03125
  %v411 = vmul.f32 %v397, 0.03125
  %v412 = vmul.f32 %v400, 0.03125
  %v413 = vmul.f32 %v403, 0.03125
  %v414 = vmul.f32 %v406, 0.03125
  %v415 = vmul.f32 %v407, %v407
  %v416 = vmul.f32 %v408, %v408
  %v417 = vmul.f32 %v409, %v409
  %v418 = vmul.f32 %v410, %v410
  %v419 = vsub.f32 %v411, %v415
  %v420 = vsub.f32 %v412, %v416
  %v421 = vsub.f32 %v413, %v417
  %v422 = vsub.f32 %v414, %v418
  %v423 = vmax.f32 %v419, 0.0
  %v424 = vmax.f32 %v420, 0.0
  %v425 = vmax.f32 %v421, 0.0
  %v426 = vmax.f32 %v422, 0.0
  %v427 = vld [vmem:[%s3] sm:$0xff]
  %v428 = vld [vmem:[%s3 + $0x8] sm:$0xff]
  %v429 = vld [vmem:[%s3 + $0x10] sm:$0xff]
  %v430 = vld [vmem:[%s3 + $0x18] sm:$0xff]
  %v431 = vadd.f32 %v423, 1e-05
  %v432 = vadd.f32 %v424, 1e-05
  %v433 = vadd.f32 %v425, 1e-05
  %v434 = vadd.f32 %v426, 1e-05
  %v435 = vrsqrt.pop %v431
  %v436 = vrsqrt.pop %v432
  %v437 = vrsqrt.pop %v433
  %v438 = vrsqrt.pop %v434
  %v439 = vmul.f32 %v427, %v435
  %v440 = vmul.f32 %v428, %v436
  %v441 = vmul.f32 %v429, %v437
  %v442 = vmul.f32 %v430, %v438
  %v443 = vld [vmem:[%s4] sm:$0xff]
  %v444 = vld [vmem:[%s4 + $0x8] sm:$0xff]
  %v445 = vld [vmem:[%s4 + $0x10] sm:$0xff]
  %v446 = vld [vmem:[%s4 + $0x18] sm:$0xff]
  %v447 = vmul.f32 %v407, %v439
  %v448 = vmul.f32 %v408, %v440
  %v449 = vmul.f32 %v409, %v441
  %v450 = vmul.f32 %v410, %v442
  %v451 = vsub.f32 %v443, %v447
  %v452 = vsub.f32 %v444, %v448
  %v453 = vsub.f32 %v445, %v449
  %v454 = vsub.f32 %v446, %v450
  %456 = vset.pattern.permute.xlu0 0
  %457 = vperm.xlu0 %456, %v439
  %v458 = vpop.permute.xlu0 %457
  %461 = vset.pattern.permute.xlu0 0
  %462 = vperm.xlu0 %461, %v440
  %v463 = vpop.permute.xlu0 %462
  %466 = vset.pattern.permute.xlu0 0
  %467 = vperm.xlu0 %466, %v441
  %v468 = vpop.permute.xlu0 %467
  %471 = vset.pattern.permute.xlu0 0
  %472 = vperm.xlu0 %471, %v442
  %v473 = vpop.permute.xlu0 %472
  %v475 = vmul.f32 %v364, %v458
  %v476 = vmul.f32 %v367, %v463
  %v477 = vmul.f32 %v372, %v468
  %v478 = vmul.f32 %v375, %v473
  %480 = vset.pattern.permute.xlu0 0
  %481 = vperm.xlu0 %480, %v451
  %v482 = vpop.permute.xlu0 %481
  %485 = vset.pattern.permute.xlu0 0
  %486 = vperm.xlu0 %485, %v452
  %v487 = vpop.permute.xlu0 %486
  %490 = vset.pattern.permute.xlu0 0
  %491 = vperm.xlu0 %490, %v453
  %v492 = vpop.permute.xlu0 %491
  %495 = vset.pattern.permute.xlu0 0
  %496 = vperm.xlu0 %495, %v454
  %v497 = vpop.permute.xlu0 %496
  %v499 = vadd.f32 %v475, %v482
  %v500 = vadd.f32 %v476, %v487
  %v501 = vadd.f32 %v477, %v492
  %v502 = vadd.f32 %v478, %v497
  %v503 = vld [vmem:[%s5] sm:$0xf]
  %v504 = vld [vmem:[%s5 + $0x4] sm:$0xf]
  %v505 = vld [vmem:[%s5 + $0x8] sm:$0xf]
  %v506 = vld [vmem:[%s5 + $0xc] sm:$0xf]
  %v507 = vunpack.c.l.bf16 %v503
  %v508 = vunpack.c.l.bf16 %v504
  %v509 = vunpack.c.l.bf16 %v505
  %v510 = vunpack.c.l.bf16 %v506
  %v511 = vadd.f32 %v499, %v507
  %v512 = vadd.f32 %v500, %v508
  %v513 = vadd.f32 %v501, %v509
  %v514 = vadd.f32 %v502, %v510
  %v515 = vpack.c.bf16 %v512, %v511
  %v516 = vpack.c.bf16 %v514, %v513
  %v519 = vunpack.c.l.b16 %v515
  %v520 = vunpack.c.h.b16 %v515
  %v521 = vunpack.c.l.b16 %v516
  %v522 = vunpack.c.h.b16 %v516
  %v523 = vpack.c.b16 %v519, %v519
  %v524 = vpack.c.b16 %v520, %v520
  %v525 = vpack.c.b16 %v521, %v521
  %v526 = vpack.c.b16 %v522, %v522
  %vm531 = vcmask 257024
  %532 = vst.msk [vmem:[%s6] sm:$0xf] %vm531, %v523
  %533 = vst.msk [vmem:[%s6 + $0x4] sm:$0xf] %vm531, %v524
  %534 = vst.msk [vmem:[%s6 + $0x8] sm:$0xf] %vm531, %v525
  %535 = vst.msk [vmem:[%s6 + $0xc] sm:$0xf] %vm531, %v526
  // Predicated region
  $region26: #{local_enhancer_forward.21} parent=0 // pred_check
    _
  $region27: #{local_enhancer_forward.21} parent=0 // pred_check_branch
    %537 = sbr.rel (0) target = $region29
  $region28: #{local_enhancer_forward.21} parent=0 // pred_region
    _
  $region29: #{local_enhancer_forward.21} parent=0 // pred_fallthru
    _
  // Predicated region
  $region30: #{local_enhancer_forward.21} parent=0 // pred_check
    _
  $region31: #{local_enhancer_forward.21} parent=0 // pred_check_branch
    %539 = sbr.rel (0) target = $region33
  $region32: #{local_enhancer_forward.21} parent=0 // pred_region
    _
  $region33: #{local_enhancer_forward.21} parent=0 // pred_fallthru
    _

// kernel: local_enhancer_forward.24
$region0: #{local_enhancer_forward.24}
  #allocation0 [shape = 'u32[]', space=smem, size = 0x4, offset = 0x4, fixed_abs, tag = 'smem constant byte address 0x4 - core index']
  #allocation1 [shape = 'u32[144,128]{1,0:T(1,128)}', space=vmem, size = 0x12000, scoped, tag = 'internal scratch']
  %s0 = inlined_call_operand.vmem [shape: bf16[64,128], index: 0, kind: input, shape index: {}]
  %s1 = inlined_call_operand.vmem [shape: bf16[128,32], index: 1, kind: input, shape index: {}]
  %s2 = inlined_call_operand.vmem [shape: f32[64,1], index: 2, kind: input, shape index: {}]
  %s3 = inlined_call_operand.vmem [shape: f32[16,1], index: 3, kind: input, shape index: {}]
  %s4 = inlined_call_operand.vmem [shape: f32[16,1], index: 4, kind: input, shape index: {}]
  %s5 = inlined_call_operand.vmem [shape: bf16[64,32], index: 5, kind: output, shape index: {}]
  %s6 = sld [smem:[#allocation0]]
  $region30: #{local_enhancer_forward.24} parent=0
    _
  %s8 = ssub.s32 1, %s6
  %s9 = scalar_select 0, %s8, %s6
  // Predicated region
  $region2: #{local_enhancer_forward.24} parent=0 // pred_check
    _
  $region3: #{local_enhancer_forward.24} parent=0 // pred_check_branch
    %11 = sbr.rel (0) target = $region5
  $region4: #{local_enhancer_forward.24} parent=0 // pred_region
    _
  $region5: #{local_enhancer_forward.24} parent=0 // pred_fallthru
    _
  // Predicated region
  $region6: #{local_enhancer_forward.24} parent=0 // pred_check
    _
  $region7: #{local_enhancer_forward.24} parent=0 // pred_check_branch
    %13 = sbr.rel (0) target = $region9
  $region8: #{local_enhancer_forward.24} parent=0 // pred_region
    _
  $region9: #{local_enhancer_forward.24} parent=0 // pred_fallthru
    _
  // Predicated region
  $region10: #{local_enhancer_forward.24} parent=0 // pred_check
    _
  $region11: #{local_enhancer_forward.24} parent=0 // pred_check_branch
    %15 = sbr.rel (0) target = $region13
  $region12: #{local_enhancer_forward.24} parent=0 // pred_region
    _
  $region13: #{local_enhancer_forward.24} parent=0 // pred_fallthru
    _
  // Predicated region
  $region14: #{local_enhancer_forward.24} parent=0 // pred_check
    _
  $region15: #{local_enhancer_forward.24} parent=0 // pred_check_branch
    %17 = sbr.rel (0) target = $region17
  $region16: #{local_enhancer_forward.24} parent=0 // pred_region
    _
  $region17: #{local_enhancer_forward.24} parent=0 // pred_fallthru
    _
  // Predicated region
  $region18: #{local_enhancer_forward.24} parent=0 // pred_check
    _
  $region19: #{local_enhancer_forward.24} parent=0 // pred_check_branch
    %19 = sbr.rel (0) target = $region21
  $region20: #{local_enhancer_forward.24} parent=0 // pred_region
    _
  $region21: #{local_enhancer_forward.24} parent=0 // pred_fallthru
    _
  %v21 = vld [vmem:[%s0] sm:$0xf]
  %v22 = vld [vmem:[%s0 + $0x4] sm:$0xf]
  %v23 = vld [vmem:[%s0 + $0x8] sm:$0xf]
  %v24 = vld [vmem:[%s0 + $0xc] sm:$0xf]
  %v25 = vld [vmem:[%s0 + $0x10] sm:$0xf]
  %v26 = vld [vmem:[%s0 + $0x14] sm:$0xf]
  %v27 = vld [vmem:[%s0 + $0x18] sm:$0xf]
  %v28 = vld [vmem:[%s0 + $0x1c] sm:$0xf]
  %v29 = vld [vmem:[%s1] sm:$0xf]
  %v30 = vld [vmem:[%s1 + $0x4] sm:$0xf]
  %v31 = vld [vmem:[%s1 + $0x8] sm:$0xf]
  %v32 = vld [vmem:[%s1 + $0xc] sm:$0xf]
  %v33 = vld [vmem:[%s1 + $0x10] sm:$0xf]
  %v34 = vld [vmem:[%s1 + $0x14] sm:$0xf]
  %v35 = vld [vmem:[%s1 + $0x18] sm:$0xf]
  %v36 = vld [vmem:[%s1 + $0x1c] sm:$0xf]
  %v37 = vld [vmem:[%s1 + $0x20] sm:$0xf]
  %v38 = vld [vmem:[%s1 + $0x24] sm:$0xf]
  %v39 = vld [vmem:[%s1 + $0x28] sm:$0xf]
  %v40 = vld [vmem:[%s1 + $0x2c] sm:$0xf]
  %v41 = vld [vmem:[%s1 + $0x30] sm:$0xf]
  %v42 = vld [vmem:[%s1 + $0x34] sm:$0xf]
  %v43 = vld [vmem:[%s1 + $0x38] sm:$0xf]
  %v44 = vld [vmem:[%s1 + $0x3c] sm:$0xf]
  %v45 = vld [vmem:[%s2] sm:$0xff]
  %v46 = vld [vmem:[%s2 + $0x8] sm:$0xff]
  %v47 = vld [vmem:[%s2 + $0x10] sm:$0xff]
  %v48 = vld [vmem:[%s2 + $0x18] sm:$0xff]
  %v49 = vld [vmem:[%s2 + $0x20] sm:$0xff]
  %v50 = vld [vmem:[%s2 + $0x28] sm:$0xff]
  %v51 = vld [vmem:[%s2 + $0x30] sm:$0xff]
  %v52 = vld [vmem:[%s2 + $0x38] sm:$0xff]
  %54 = vset.pattern.permute.xlu0 0
  %55 = vperm.xlu0 %54, %v45
  %v56 = vpop.permute.xlu0 %55
  %59 = vset.pattern.permute.xlu0 0
  %60 = vperm.xlu0 %59, %v46
  %v61 = vpop.permute.xlu0 %60
  %64 = vset.pattern.permute.xlu0 0
  %65 = vperm.xlu0 %64, %v47
  %v66 = vpop.permute.xlu0 %65
  %69 = vset.pattern.permute.xlu0 0
  %70 = vperm.xlu0 %69, %v48
  %v71 = vpop.permute.xlu0 %70
  %74 = vset.pattern.permute.xlu0 0
  %75 = vperm.xlu0 %74, %v49
  %v76 = vpop.permute.xlu0 %75
  %79 = vset.pattern.permute.xlu0 0
  %80 = vperm.xlu0 %79, %v50
  %v81 = vpop.permute.xlu0 %80
  %84 = vset.pattern.permute.xlu0 0
  %85 = vperm.xlu0 %84, %v51
  %v86 = vpop.permute.xlu0 %85
  %89 = vset.pattern.permute.xlu0 0
  %90 = vperm.xlu0 %89, %v52
  %v91 = vpop.permute.xlu0 %90
  %v101 = vunpack.c.l.b16 %v21
  %v102 = vunpack.c.l.b16 %v22
  %v103 = vunpack.c.l.b16 %v23
  %v104 = vunpack.c.l.b16 %v24
  %v105 = vunpack.c.l.b16 %v25
  %v106 = vunpack.c.l.b16 %v26
  %v107 = vunpack.c.l.b16 %v27
  %v108 = vunpack.c.l.b16 %v28
  %v109 = vpack.c.b16 %v102, %v101
  %v110 = vpack.c.b16 %v104, %v103
  %v111 = vpack.c.b16 %v106, %v105
  %v112 = vpack.c.b16 %v108, %v107
  %v133 = vunpack.c.l.b16 %v29
  %v134 = vunpack.c.l.b16 %v30
  %v135 = vunpack.c.l.b16 %v31
  %v136 = vunpack.c.l.b16 %v32
  %v137 = vunpack.c.l.b16 %v33
  %v138 = vunpack.c.l.b16 %v34
  %v139 = vunpack.c.l.b16 %v35
  %v140 = vunpack.c.l.b16 %v36
  %v141 = vunpack.c.l.b16 %v37
  %v142 = vunpack.c.l.b16 %v38
  %v143 = vunpack.c.l.b16 %v39
  %v144 = vunpack.c.l.b16 %v40
  %v145 = vunpack.c.l.b16 %v41
  %v146 = vunpack.c.l.b16 %v42
  %v147 = vunpack.c.l.b16 %v43
  %v148 = vunpack.c.l.b16 %v44
  %v149 = vpack.c.b16 %v134, %v133
  %v150 = vpack.c.b16 %v136, %v135
  %v151 = vpack.c.b16 %v138, %v137
  %v152 = vpack.c.b16 %v140, %v139
  %v153 = vpack.c.b16 %v142, %v141
  %v154 = vpack.c.b16 %v144, %v143
  %v155 = vpack.c.b16 %v146, %v145
  %v156 = vpack.c.b16 %v148, %v147
  %165 = vmatprep.subr.bf16.mxu0 0
  %166 = vmatpush1.bf16.msra.mxu0 %v149
  %167 = vmatprep.subr.bf16.mxu0 0
  %168 = vmatpush1.bf16.msra.mxu0 %v150
  %169 = vmatprep.subr.bf16.mxu0 0
  %170 = vmatpush1.bf16.msra.mxu0 %v151
  %171 = vmatprep.subr.bf16.mxu0 0
  %172 = vmatpush1.bf16.msra.mxu0 %v152
  %173 = vmatprep.subr.bf16.mxu0 0
  %174 = vmatpush1.bf16.msra.mxu0 %v153
  %175 = vmatprep.subr.bf16.mxu0 0
  %176 = vmatpush1.bf16.msra.mxu0 %v154
  %177 = vmatprep.subr.bf16.mxu0 0
  %178 = vmatpush1.bf16.msra.mxu0 %v155
  %179 = vmatprep.subr.bf16.mxu0 0
  %180 = vmatpush1.bf16.msra.mxu0 %v156
  %181 = vmatprep.subr.bf16.mxu0 0
  %182 = vmatpush1.bf16.msra.mxu0 0
  %183 = vmatprep.subr.bf16.mxu0 0
  %184 = vmatpush1.bf16.msra.mxu0 0
  %185 = vmatprep.subr.bf16.mxu0 0
  %186 = vmatpush1.bf16.msra.mxu0 0
  %187 = vmatprep.subr.bf16.mxu0 0
  %188 = vmatpush1.bf16.msra.mxu0 0
  %189 = vmatprep.subr.bf16.mxu0 0
  %190 = vmatpush1.bf16.msra.mxu0 0
  %191 = vmatprep.subr.bf16.mxu0 0
  %192 = vmatpush1.bf16.msra.mxu0 0
  %193 = vmatprep.subr.bf16.mxu0 0
  %194 = vmatpush1.bf16.msra.mxu0 0
  %195 = vmatprep.subr.bf16.mxu0 0
  %196 = vmatpush1.bf16.msra.mxu0 0
  %197 = vmatprep.mubr.bf16.mxu0 0
  %198 = vmatmul.mubr.bf16.gmra.mrb[0].mxu0 %v109
  %v199 = vpop.f32.mrb[0].mxu0
  %v200 = vadd.f32 %v56, %v199
  %v201 = vpop.f32.mrb[0].mxu0
  %v202 = vpop.f32.mrb[0].mxu0
  %v203 = vadd.f32 %v61, %v202
  %v204 = vpop.f32.mrb[0].mxu0
  %205 = vmatprep.mubr.bf16.mxu0 0
  %206 = vmatmul.mubr.bf16.gmra.mrb[0].mxu0 %v110
  %v207 = vpop.f32.mrb[0].mxu0
  %v208 = vadd.f32 %v66, %v207
  %v209 = vpop.f32.mrb[0].mxu0
  %v210 = vpop.f32.mrb[0].mxu0
  %v211 = vadd.f32 %v71, %v210
  %v212 = vpop.f32.mrb[0].mxu0
  %213 = vmatprep.mubr.bf16.mxu0 0
  %214 = vmatmul.mubr.bf16.gmra.mrb[0].mxu0 %v111
  %v215 = vpop.f32.mrb[0].mxu0
  %v216 = vadd.f32 %v76, %v215
  %v217 = vpop.f32.mrb[0].mxu0
  %v218 = vpop.f32.mrb[0].mxu0
  %v219 = vadd.f32 %v81, %v218
  %v220 = vpop.f32.mrb[0].mxu0
  %221 = vmatprep.mubr.bf16.mxu0 0
  %222 = vmatmul.mubr.bf16.gmra.mrb[0].mxu0 %v112
  %v223 = vpop.f32.mrb[0].mxu0
  %v224 = vadd.f32 %v86, %v223
  %v225 = vpop.f32.mrb[0].mxu0
  %v226 = vpop.f32.mrb[0].mxu0
  %v227 = vadd.f32 %v91, %v226
  %v228 = vpop.f32.mrb[0].mxu0
  %229 = vdwg.mxu0
  %vm230 = vcmask 261120
  %v231 = vsel %vm230, %v200, 0.0
  %232 = vadd.xlane.f32.xlu0 %v231
  %v233 = vpop.xlane.xlu0 %232
  %v234 = vsel %vm230, %v203, 0.0
  %235 = vadd.xlane.f32.xlu0 %v234
  %v236 = vpop.xlane.xlu0 %235
  %v237 = vsel %vm230, %v208, 0.0
  %238 = vadd.xlane.f32.xlu0 %v237
  %v239 = vpop.xlane.xlu0 %238
  %v240 = vsel %vm230, %v211, 0.0
  %241 = vadd.xlane.f32.xlu0 %v240
  %v242 = vpop.xlane.xlu0 %241
  %v243 = vsel %vm230, %v216, 0.0
  %244 = vadd.xlane.f32.xlu0 %v243
  %v245 = vpop.xlane.xlu0 %244
  %v246 = vsel %vm230, %v219, 0.0
  %247 = vadd.xlane.f32.xlu0 %v246
  %v248 = vpop.xlane.xlu0 %247
  %v249 = vsel %vm230, %v224, 0.0
  %250 = vadd.xlane.f32.xlu0 %v249
  %v251 = vpop.xlane.xlu0 %250
  %v252 = vsel %vm230, %v227, 0.0
  %253 = vadd.xlane.f32.xlu0 %v252
  %v254 = vpop.xlane.xlu0 %253
  %v255 = vmul.f32 %v200, %v200
  %v256 = vmul.f32 %v203, %v203
  %v257 = vmul.f32 %v208, %v208
  %v258 = vmul.f32 %v211, %v211
  %v259 = vmul.f32 %v216, %v216
  %v260 = vmul.f32 %v219, %v219
  %v261 = vmul.f32 %v224, %v224
  %v262 = vmul.f32 %v227, %v227
  %v263 = vsel %vm230, %v255, 0.0
  %264 = vadd.xlane.f32.xlu0 %v263
  %v265 = vpop.xlane.xlu0 %264
  %v266 = vsel %vm230, %v256, 0.0
  %267 = vadd.xlane.f32.xlu0 %v266
  %v268 = vpop.xlane.xlu0 %267
  %v269 = vsel %vm230, %v257, 0.0
  %270 = vadd.xlane.f32.xlu0 %v269
  %v271 = vpop.xlane.xlu0 %270
  %v272 = vsel %vm230, %v258, 0.0
  %273 = vadd.xlane.f32.xlu0 %v272
  %v274 = vpop.xlane.xlu0 %273
  %v275 = vsel %vm230, %v259, 0.0
  %276 = vadd.xlane.f32.xlu0 %v275
  %v277 = vpop.xlane.xlu0 %276
  %v278 = vsel %vm230, %v260, 0.0
  %279 = vadd.xlane.f32.xlu0 %v278
  %v280 = vpop.xlane.xlu0 %279
  %v281 = vsel %vm230, %v261, 0.0
  %282 = vadd.xlane.f32.xlu0 %v281
  %v283 = vpop.xlane.xlu0 %282
  %v284 = vsel %vm230, %v262, 0.0
  %285 = vadd.xlane.f32.xlu0 %v284
  %v286 = vpop.xlane.xlu0 %285
  %v287 = vadd.f32 %v233, 0.0
  %v288 = vadd.f32 %v236, 0.0
  %v289 = vadd.f32 %v287, %v239
  %v290 = vadd.f32 %v288, %v242
  %v291 = vadd.f32 %v289, %v245
  %v292 = vadd.f32 %v290, %v248
  %v293 = vadd.f32 %v291, %v251
  %v294 = vadd.f32 %v292, %v254
  %v295 = vadd.f32 %v265, 0.0
  %v296 = vadd.f32 %v268, 0.0
  %v297 = vadd.f32 %v295, %v271
  %v298 = vadd.f32 %v296, %v274
  %v299 = vadd.f32 %v297, %v277
  %v300 = vadd.f32 %v298, %v280
  %v301 = vadd.f32 %v299, %v283
  %v302 = vadd.f32 %v300, %v286
  %v303 = vmul.f32 %v293, 0.0078125
  %v304 = vmul.f32 %v294, 0.0078125
  %v305 = vmul.f32 %v301, 0.0078125
  %v306 = vmul.f32 %v302, 0.0078125
  %v307 = vmul.f32 %v303, %v303
  %v308 = vmul.f32 %v304, %v304
  %v309 = vsub.f32 %v305, %v307
  %v310 = vsub.f32 %v306, %v308
  %v311 = vmax.f32 %v309, 0.0
  %v312 = vmax.f32 %v310, 0.0
  %v313 = vld [vmem:[%s3] sm:$0xff]
  %v314 = vld [vmem:[%s3 + $0x8] sm:$0xff]
  %v315 = vadd.f32 %v311, 1e-05
  %v316 = vadd.f32 %v312, 1e-05
  %v317 = vrsqrt.pop %v315
  %v318 = vrsqrt.pop %v316
  %v319 = vmul.f32 %v313, %v317
  %v320 = vmul.f32 %v314, %v318
  %v321 = vld [vmem:[%s4] sm:$0xff]
  %v322 = vld [vmem:[%s4 + $0x8] sm:$0xff]
  %v323 = vmul.f32 %v303, %v319
  %v324 = vmul.f32 %v304, %v320
  %v325 = vsub.f32 %v321, %v323
  %v326 = vsub.f32 %v322, %v324
  %328 = vset.pattern.permute.xlu0 0
  %329 = vperm.xlu0 %328, %v319
  %v330 = vpop.permute.xlu0 %329
  %333 = vset.pattern.permute.xlu0 0
  %334 = vperm.xlu0 %333, %v320
  %v335 = vpop.permute.xlu0 %334
  %v337 = vmul.f32 %v200, %v330
  %v338 = vmul.f32 %v203, %v335
  %v339 = vmul.f32 %v208, %v330
  %v340 = vmul.f32 %v211, %v335
  %v341 = vmul.f32 %v216, %v330
  %v342 = vmul.f32 %v219, %v335
  %v343 = vmul.f32 %v224, %v330
  %v344 = vmul.f32 %v227, %v335
  %346 = vset.pattern.permute.xlu0 0
  %347 = vperm.xlu0 %346, %v325
  %v348 = vpop.permute.xlu0 %347
  %351 = vset.pattern.permute.xlu0 0
  %352 = vperm.xlu0 %351, %v326
  %v353 = vpop.permute.xlu0 %352
  %v355 = vadd.f32 %v337, %v348
  %v356 = vadd.f32 %v338, %v353
  %v357 = vadd.f32 %v339, %v348
  %v358 = vadd.f32 %v340, %v353
  %v359 = vadd.f32 %v341, %v348
  %v360 = vadd.f32 %v342, %v353
  %v361 = vadd.f32 %v343, %v348
  %v362 = vadd.f32 %v344, %v353
  %v363 = vmax.f32 %v355, 0.0
  %v364 = vmax.f32 %v356, 0.0
  %v365 = vmax.f32 %v357, 0.0
  %v366 = vmax.f32 %v358, 0.0
  %v367 = vmax.f32 %v359, 0.0
  %v368 = vmax.f32 %v360, 0.0
  %v369 = vmax.f32 %v361, 0.0
  %v370 = vmax.f32 %v362, 0.0
  %v371 = vpack.c.bf16 %v364, %v363
  %v372 = vpack.c.bf16 %v366, %v365
  %v373 = vpack.c.bf16 %v368, %v367
  %v374 = vpack.c.bf16 %v370, %v369
  %v379 = vunpack.c.l.b16 %v371
  %v380 = vunpack.c.h.b16 %v371
  %v381 = vunpack.c.l.b16 %v372
  %v382 = vunpack.c.h.b16 %v372
  %v383 = vunpack.c.l.b16 %v373
  %v384 = vunpack.c.h.b16 %v373
  %v385 = vunpack.c.l.b16 %v374
  %v386 = vunpack.c.h.b16 %v374
  %v387 = vpack.c.b16 %v379, %v379
  %v388 = vpack.c.b16 %v380, %v380
  %v389 = vpack.c.b16 %v381, %v381
  %v390 = vpack.c.b16 %v382, %v382
  %v391 = vpack.c.b16 %v383, %v383
  %v392 = vpack.c.b16 %v384, %v384
  %v393 = vpack.c.b16 %v385, %v385
  %v394 = vpack.c.b16 %v386, %v386
  %vm403 = vcmask 257024
  %404 = vst.msk [vmem:[%s5] sm:$0xf] %vm403, %v387
  %405 = vst.msk [vmem:[%s5 + $0x4] sm:$0xf] %vm403, %v388
  %406 = vst.msk [vmem:[%s5 + $0x8] sm:$0xf] %vm403, %v389
  %407 = vst.msk [vmem:[%s5 + $0xc] sm:$0xf] %vm403, %v390
  %408 = vst.msk [vmem:[%s5 + $0x10] sm:$0xf] %vm403, %v391
  %409 = vst.msk [vmem:[%s5 + $0x14] sm:$0xf] %vm403, %v392
  %410 = vst.msk [vmem:[%s5 + $0x18] sm:$0xf] %vm403, %v393
  %411 = vst.msk [vmem:[%s5 + $0x1c] sm:$0xf] %vm403, %v394
  // Predicated region
  $region22: #{local_enhancer_forward.24} parent=0 // pred_check
    _
  $region23: #{local_enhancer_forward.24} parent=0 // pred_check_branch
    %413 = sbr.rel (0) target = $region25
  $region24: #{local_enhancer_forward.24} parent=0 // pred_region
    _
  $region25: #{local_enhancer_forward.24} parent=0 // pred_fallthru
    _
  // Predicated region
  $region26: #{local_enhancer_forward.24} parent=0 // pred_check
    _
  $region27: #{local_enhancer_forward.24} parent=0 // pred_check_branch
    %415 = sbr.rel (0) target = $region29
  $region28: #{local_enhancer_forward.24} parent=0 // pred_region
    _
  $region29: #{local_enhancer_forward.24} parent=0 // pred_fallthru
    _

// kernel: local_enhancer_forward.25
$region0: #{local_enhancer_forward.25}
  #allocation0 [shape = 'u32[]', space=smem, size = 0x4, offset = 0x4, fixed_abs, tag = 'smem constant byte address 0x4 - core index']
  #allocation1 [shape = 'u32[144,128]{1,0:T(1,128)}', space=vmem, size = 0x12000, scoped, tag = 'internal scratch']
  %s0 = inlined_call_operand.vmem [shape: bf16[32,128], index: 0, kind: input, shape index: {}]
  %s1 = inlined_call_operand.vmem [shape: bf16[128,128], index: 1, kind: input, shape index: {}]
  %s2 = inlined_call_operand.vmem [shape: f32[32,1], index: 2, kind: input, shape index: {}]
  %s3 = inlined_call_operand.vmem [shape: f32[8,1], index: 3, kind: input, shape index: {}]
  %s4 = inlined_call_operand.vmem [shape: f32[8,1], index: 4, kind: input, shape index: {}]
  %s5 = inlined_call_operand.vmem [shape: bf16[32,128], index: 5, kind: output, shape index: {}]
  %s6 = sld [smem:[#allocation0]]
  $region30: #{local_enhancer_forward.25} parent=0
    _
  %s8 = ssub.s32 1, %s6
  %s9 = scalar_select 0, %s8, %s6
  // Predicated region
  $region2: #{local_enhancer_forward.25} parent=0 // pred_check
    _
  $region3: #{local_enhancer_forward.25} parent=0 // pred_check_branch
    %11 = sbr.rel (0) target = $region5
  $region4: #{local_enhancer_forward.25} parent=0 // pred_region
    _
  $region5: #{local_enhancer_forward.25} parent=0 // pred_fallthru
    _
  // Predicated region
  $region6: #{local_enhancer_forward.25} parent=0 // pred_check
    _
  $region7: #{local_enhancer_forward.25} parent=0 // pred_check_branch
    %13 = sbr.rel (0) target = $region9
  $region8: #{local_enhancer_forward.25} parent=0 // pred_region
    _
  $region9: #{local_enhancer_forward.25} parent=0 // pred_fallthru
    _
  // Predicated region
  $region10: #{local_enhancer_forward.25} parent=0 // pred_check
    _
  $region11: #{local_enhancer_forward.25} parent=0 // pred_check_branch
    %15 = sbr.rel (0) target = $region13
  $region12: #{local_enhancer_forward.25} parent=0 // pred_region
    _
  $region13: #{local_enhancer_forward.25} parent=0 // pred_fallthru
    _
  // Predicated region
  $region14: #{local_enhancer_forward.25} parent=0 // pred_check
    _
  $region15: #{local_enhancer_forward.25} parent=0 // pred_check_branch
    %17 = sbr.rel (0) target = $region17
  $region16: #{local_enhancer_forward.25} parent=0 // pred_region
    _
  $region17: #{local_enhancer_forward.25} parent=0 // pred_fallthru
    _
  // Predicated region
  $region18: #{local_enhancer_forward.25} parent=0 // pred_check
    _
  $region19: #{local_enhancer_forward.25} parent=0 // pred_check_branch
    %19 = sbr.rel (0) target = $region21
  $region20: #{local_enhancer_forward.25} parent=0 // pred_region
    _
  $region21: #{local_enhancer_forward.25} parent=0 // pred_fallthru
    _
  %v21 = vld [vmem:[%s0] sm:$0xf]
  %v22 = vld [vmem:[%s0 + $0x4] sm:$0xf]
  %v23 = vld [vmem:[%s0 + $0x8] sm:$0xf]
  %v24 = vld [vmem:[%s0 + $0xc] sm:$0xf]
  %v25 = vld [vmem:[%s1] sm:$0xf]
  %v26 = vld [vmem:[%s1 + $0x4] sm:$0xf]
  %v27 = vld [vmem:[%s1 + $0x8] sm:$0xf]
  %v28 = vld [vmem:[%s1 + $0xc] sm:$0xf]
  %v29 = vld [vmem:[%s1 + $0x10] sm:$0xf]
  %v30 = vld [vmem:[%s1 + $0x14] sm:$0xf]
  %v31 = vld [vmem:[%s1 + $0x18] sm:$0xf]
  %v32 = vld [vmem:[%s1 + $0x1c] sm:$0xf]
  %v33 = vld [vmem:[%s1 + $0x20] sm:$0xf]
  %v34 = vld [vmem:[%s1 + $0x24] sm:$0xf]
  %v35 = vld [vmem:[%s1 + $0x28] sm:$0xf]
  %v36 = vld [vmem:[%s1 + $0x2c] sm:$0xf]
  %v37 = vld [vmem:[%s1 + $0x30] sm:$0xf]
  %v38 = vld [vmem:[%s1 + $0x34] sm:$0xf]
  %v39 = vld [vmem:[%s1 + $0x38] sm:$0xf]
  %v40 = vld [vmem:[%s1 + $0x3c] sm:$0xf]
  %v41 = vld [vmem:[%s2] sm:$0xff]
  %v42 = vld [vmem:[%s2 + $0x8] sm:$0xff]
  %v43 = vld [vmem:[%s2 + $0x10] sm:$0xff]
  %v44 = vld [vmem:[%s2 + $0x18] sm:$0xff]
  %46 = vset.pattern.permute.xlu0 0
  %47 = vperm.xlu0 %46, %v41
  %v48 = vpop.permute.xlu0 %47
  %51 = vset.pattern.permute.xlu0 0
  %52 = vperm.xlu0 %51, %v42
  %v53 = vpop.permute.xlu0 %52
  %56 = vset.pattern.permute.xlu0 0
  %57 = vperm.xlu0 %56, %v43
  %v58 = vpop.permute.xlu0 %57
  %61 = vset.pattern.permute.xlu0 0
  %62 = vperm.xlu0 %61, %v44
  %v63 = vpop.permute.xlu0 %62
  %v69 = vunpack.c.l.b16 %v21
  %v70 = vunpack.c.l.b16 %v22
  %v71 = vunpack.c.l.b16 %v23
  %v72 = vunpack.c.l.b16 %v24
  %v73 = vpack.c.b16 %v70, %v69
  %v74 = vpack.c.b16 %v72, %v71
  %v93 = vunpack.c.l.b16 %v25
  %v94 = vunpack.c.l.b16 %v26
  %v95 = vunpack.c.l.b16 %v27
  %v96 = vunpack.c.l.b16 %v28
  %v97 = vunpack.c.l.b16 %v29
  %v98 = vunpack.c.l.b16 %v30
  %v99 = vunpack.c.l.b16 %v31
  %v100 = vunpack.c.l.b16 %v32
  %v101 = vunpack.c.l.b16 %v33
  %v102 = vunpack.c.l.b16 %v34
  %v103 = vunpack.c.l.b16 %v35
  %v104 = vunpack.c.l.b16 %v36
  %v105 = vunpack.c.l.b16 %v37
  %v106 = vunpack.c.l.b16 %v38
  %v107 = vunpack.c.l.b16 %v39
  %v108 = vunpack.c.l.b16 %v40
  %v109 = vpack.c.b16 %v94, %v93
  %v110 = vpack.c.b16 %v96, %v95
  %v111 = vpack.c.b16 %v98, %v97
  %v112 = vpack.c.b16 %v100, %v99
  %v113 = vpack.c.b16 %v102, %v101
  %v114 = vpack.c.b16 %v104, %v103
  %v115 = vpack.c.b16 %v106, %v105
  %v116 = vpack.c.b16 %v108, %v107
  %125 = vmatprep.subr.bf16.mxu0 0
  %126 = vmatpush1.bf16.msra.mxu0 %v109
  %127 = vmatprep.subr.bf16.mxu0 0
  %128 = vmatpush1.bf16.msra.mxu0 %v110
  %129 = vmatprep.subr.bf16.mxu0 0
  %130 = vmatpush1.bf16.msra.mxu0 %v111
  %131 = vmatprep.subr.bf16.mxu0 0
  %132 = vmatpush1.bf16.msra.mxu0 %v112
  %133 = vmatprep.subr.bf16.mxu0 0
  %134 = vmatpush1.bf16.msra.mxu0 %v113
  %135 = vmatprep.subr.bf16.mxu0 0
  %136 = vmatpush1.bf16.msra.mxu0 %v114
  %137 = vmatprep.subr.bf16.mxu0 0
  %138 = vmatpush1.bf16.msra.mxu0 %v115
  %139 = vmatprep.subr.bf16.mxu0 0
  %140 = vmatpush1.bf16.msra.mxu0 %v116
  %141 = vmatprep.subr.bf16.mxu0 0
  %142 = vmatpush1.bf16.msra.mxu0 0
  %143 = vmatprep.subr.bf16.mxu0 0
  %144 = vmatpush1.bf16.msra.mxu0 0
  %145 = vmatprep.subr.bf16.mxu0 0
  %146 = vmatpush1.bf16.msra.mxu0 0
  %147 = vmatprep.subr.bf16.mxu0 0
  %148 = vmatpush1.bf16.msra.mxu0 0
  %149 = vmatprep.subr.bf16.mxu0 0
  %150 = vmatpush1.bf16.msra.mxu0 0
  %151 = vmatprep.subr.bf16.mxu0 0
  %152 = vmatpush1.bf16.msra.mxu0 0
  %153 = vmatprep.subr.bf16.mxu0 0
  %154 = vmatpush1.bf16.msra.mxu0 0
  %155 = vmatprep.subr.bf16.mxu0 0
  %156 = vmatpush1.bf16.msra.mxu0 0
  %157 = vmatprep.mubr.bf16.mxu0 0
  %158 = vmatmul.mubr.bf16.gmra.mrb[0].mxu0 %v73
  %v159 = vpop.f32.mrb[0].mxu0
  %v160 = vadd.f32 %v48, %v159
  %v161 = vpop.f32.mrb[0].mxu0
  %v162 = vpop.f32.mrb[0].mxu0
  %v163 = vadd.f32 %v53, %v162
  %v164 = vpop.f32.mrb[0].mxu0
  %165 = vmatprep.mubr.bf16.mxu0 0
  %166 = vmatmul.mubr.bf16.gmra.mrb[0].mxu0 %v74
  %v167 = vpop.f32.mrb[0].mxu0
  %v168 = vadd.f32 %v58, %v167
  %v169 = vpop.f32.mrb[0].mxu0
  %v170 = vpop.f32.mrb[0].mxu0
  %v171 = vadd.f32 %v63, %v170
  %v172 = vpop.f32.mrb[0].mxu0
  %173 = vdwg.mxu0
  %174 = vadd.xlane.f32.xlu0 %v160
  %v175 = vpop.xlane.xlu0 %174
  %176 = vadd.xlane.f32.xlu0 %v163
  %v177 = vpop.xlane.xlu0 %176
  %178 = vadd.xlane.f32.xlu0 %v168
  %v179 = vpop.xlane.xlu0 %178
  %180 = vadd.xlane.f32.xlu0 %v171
  %v181 = vpop.xlane.xlu0 %180
  %v182 = vmul.f32 %v160, %v160
  %v183 = vmul.f32 %v163, %v163
  %v184 = vmul.f32 %v168, %v168
  %v185 = vmul.f32 %v171, %v171
  %186 = vadd.xlane.f32.xlu0 %v182
  %v187 = vpop.xlane.xlu0 %186
  %188 = vadd.xlane.f32.xlu0 %v183
  %v189 = vpop.xlane.xlu0 %188
  %190 = vadd.xlane.f32.xlu0 %v184
  %v191 = vpop.xlane.xlu0 %190
  %192 = vadd.xlane.f32.xlu0 %v185
  %v193 = vpop.xlane.xlu0 %192
  %v194 = vadd.f32 %v175, 0.0
  %v195 = vadd.f32 %v194, %v177
  %v196 = vadd.f32 %v195, %v179
  %v197 = vadd.f32 %v196, %v181
  %v198 = vadd.f32 %v187, 0.0
  %v199 = vadd.f32 %v198, %v189
  %v200 = vadd.f32 %v199, %v191
  %v201 = vadd.f32 %v200, %v193
  %v202 = vmul.f32 %v197, 0.001953125
  %v203 = vmul.f32 %v201, 0.001953125
  %v204 = vmul.f32 %v202, %v202
  %v205 = vsub.f32 %v203, %v204
  %v206 = vmax.f32 %v205, 0.0
  %v207 = vld [vmem:[%s3] sm:$0xff]
  %v208 = vadd.f32 %v206, 1e-05
  %v209 = vrsqrt.pop %v208
  %v210 = vmul.f32 %v207, %v209
  %v211 = vld [vmem:[%s4] sm:$0xff]
  %v212 = vmul.f32 %v202, %v210
  %v213 = vsub.f32 %v211, %v212
  %215 = vset.pattern.permute.xlu0 0
  %216 = vperm.xlu0 %215, %v210
  %v217 = vpop.permute.xlu0 %216
  %v219 = vmul.f32 %v160, %v217
  %v220 = vmul.f32 %v163, %v217
  %v221 = vmul.f32 %v168, %v217
  %v222 = vmul.f32 %v171, %v217
  %224 = vset.pattern.permute.xlu0 0
  %225 = vperm.xlu0 %224, %v213
  %v226 = vpop.permute.xlu0 %225
  %v228 = vadd.f32 %v219, %v226
  %v229 = vadd.f32 %v220, %v226
  %v230 = vadd.f32 %v221, %v226
  %v231 = vadd.f32 %v222, %v226
  %v232 = vmax.f32 %v228, 0.0
  %v233 = vmax.f32 %v229, 0.0
  %v234 = vmax.f32 %v230, 0.0
  %v235 = vmax.f32 %v231, 0.0
  %v236 = vpack.c.bf16 %v233, %v232
  %v237 = vpack.c.bf16 %v235, %v234
  %v240 = vunpack.c.l.b16 %v236
  %v241 = vunpack.c.h.b16 %v236
  %v242 = vunpack.c.l.b16 %v237
  %v243 = vunpack.c.h.b16 %v237
  %v244 = vpack.c.b16 %v240, %v240
  %v245 = vpack.c.b16 %v241, %v241
  %v246 = vpack.c.b16 %v242, %v242
  %v247 = vpack.c.b16 %v243, %v243
  %252 = vst [vmem:[%s5] sm:$0xf] %v244
  %253 = vst [vmem:[%s5 + $0x4] sm:$0xf] %v245
  %254 = vst [vmem:[%s5 + $0x8] sm:$0xf] %v246
  %255 = vst [vmem:[%s5 + $0xc] sm:$0xf] %v247
  // Predicated region
  $region22: #{local_enhancer_forward.25} parent=0 // pred_check
    _
  $region23: #{local_enhancer_forward.25} parent=0 // pred_check_branch
    %257 = sbr.rel (0) target = $region25
  $region24: #{local_enhancer_forward.25} parent=0 // pred_region
    _
  $region25: #{local_enhancer_forward.25} parent=0 // pred_fallthru
    _
  // Predicated region
  $region26: #{local_enhancer_forward.25} parent=0 // pred_check
    _
  $region27: #{local_enhancer_forward.25} parent=0 // pred_check_branch
    %259 = sbr.rel (0) target = $region29
  $region28: #{local_enhancer_forward.25} parent=0 // pred_region
    _
  $region29: #{local_enhancer_forward.25} parent=0 // pred_fallthru
    _

// kernel: local_enhancer_forward.26
$region0: #{local_enhancer_forward.26}
  #allocation0 [shape = 'u32[]', space=smem, size = 0x4, offset = 0x4, fixed_abs, tag = 'smem constant byte address 0x4 - core index']
  #allocation1 [shape = 'u32[144,128]{1,0:T(1,128)}', space=vmem, size = 0x12000, scoped, tag = 'internal scratch']
  %s0 = inlined_call_operand.vmem [shape: bf16[8,512], index: 0, kind: input, shape index: {}]
  %s1 = inlined_call_operand.vmem [shape: bf16[512,2048], index: 1, kind: input, shape index: {}]
  %s2 = inlined_call_operand.vmem [shape: f32[8,1], index: 2, kind: input, shape index: {}]
  %s3 = inlined_call_operand.vmem [shape: f32[8,1], index: 3, kind: input, shape index: {}]
  %s4 = inlined_call_operand.vmem [shape: f32[8,1], index: 4, kind: input, shape index: {}]
  %s5 = inlined_call_operand.vmem [shape: bf16[8,2048], index: 5, kind: output, shape index: {}]
  %s6 = sld [smem:[#allocation0]]
  $region30: #{local_enhancer_forward.26} parent=0
    _
  %s8 = ssub.s32 1, %s6
  %s9 = scalar_select 0, %s8, %s6
  // Predicated region
  $region2: #{local_enhancer_forward.26} parent=0 // pred_check
    _
  $region3: #{local_enhancer_forward.26} parent=0 // pred_check_branch
    %11 = sbr.rel (0) target = $region5
  $region4: #{local_enhancer_forward.26} parent=0 // pred_region
    _
  $region5: #{local_enhancer_forward.26} parent=0 // pred_fallthru
    _
  // Predicated region
  $region6: #{local_enhancer_forward.26} parent=0 // pred_check
    _
  $region7: #{local_enhancer_forward.26} parent=0 // pred_check_branch
    %13 = sbr.rel (0) target = $region9
  $region8: #{local_enhancer_forward.26} parent=0 // pred_region
    _
  $region9: #{local_enhancer_forward.26} parent=0 // pred_fallthru
    _
  // Predicated region
  $region10: #{local_enhancer_forward.26} parent=0 // pred_check
    _
  $region11: #{local_enhancer_forward.26} parent=0 // pred_check_branch
    %15 = sbr.rel (0) target = $region13
  $region12: #{local_enhancer_forward.26} parent=0 // pred_region
    _
  $region13: #{local_enhancer_forward.26} parent=0 // pred_fallthru
    _
  // Predicated region
  $region14: #{local_enhancer_forward.26} parent=0 // pred_check
    _
  $region15: #{local_enhancer_forward.26} parent=0 // pred_check_branch
    %17 = sbr.rel (0) target = $region17
  $region16: #{local_enhancer_forward.26} parent=0 // pred_region
    _
  $region17: #{local_enhancer_forward.26} parent=0 // pred_fallthru
    _
  // Predicated region
  $region18: #{local_enhancer_forward.26} parent=0 // pred_check
    _
  $region19: #{local_enhancer_forward.26} parent=0 // pred_check_branch
    %19 = sbr.rel (0) target = $region21
  $region20: #{local_enhancer_forward.26} parent=0 // pred_region
    _
  $region21: #{local_enhancer_forward.26} parent=0 // pred_fallthru
    _
  %v20 = vld [vmem:[%s0] sm:$0xff]
  %v21 = vld [vmem:[%s0 + $0x8] sm:$0xff]
  %v22 = vld [vmem:[%s1] sm:$0xff]
  %v23 = vld [vmem:[%s1 + $0x8] sm:$0xff]
  %v24 = vld [vmem:[%s1 + $0x10] sm:$0xff]
  %v25 = vld [vmem:[%s1 + $0x18] sm:$0xff]
  %v26 = vld [vmem:[%s1 + $0x20] sm:$0xff]
  %v27 = vld [vmem:[%s1 + $0x28] sm:$0xff]
  %v28 = vld [vmem:[%s1 + $0x30] sm:$0xff]
  %v29 = vld [vmem:[%s1 + $0x38] sm:$0xff]
  %v30 = vld [vmem:[%s1 + $0x40] sm:$0xff]
  %v31 = vld [vmem:[%s1 + $0x48] sm:$0xff]
  %v32 = vld [vmem:[%s1 + $0x50] sm:$0xff]
  %v33 = vld [vmem:[%s1 + $0x58] sm:$0xff]
  %v34 = vld [vmem:[%s1 + $0x60] sm:$0xff]
  %v35 = vld [vmem:[%s1 + $0x68] sm:$0xff]
  %v36 = vld [vmem:[%s1 + $0x70] sm:$0xff]
  %v37 = vld [vmem:[%s1 + $0x78] sm:$0xff]
  %v38 = vld [vmem:[%s1 + $0x80] sm:$0xff]
  %v39 = vld [vmem:[%s1 + $0x88] sm:$0xff]
  %v40 = vld [vmem:[%s1 + $0x90] sm:$0xff]
  %v41 = vld [vmem:[%s1 + $0x98] sm:$0xff]
  %v42 = vld [vmem:[%s1 + $0xa0] sm:$0xff]
  %v43 = vld [vmem:[%s1 + $0xa8] sm:$0xff]
  %v44 = vld [vmem:[%s1 + $0xb0] sm:$0xff]
  %v45 = vld [vmem:[%s1 + $0xb8] sm:$0xff]
  %v46 = vld [vmem:[%s1 + $0xc0] sm:$0xff]
  %v47 = vld [vmem:[%s1 + $0xc8] sm:$0xff]
  %v48 = vld [vmem:[%s1 + $0xd0] sm:$0xff]
  %v49 = vld [vmem:[%s1 + $0xd8] sm:$0xff]
  %v50 = vld [vmem:[%s1 + $0xe0] sm:$0xff]
  %v51 = vld [vmem:[%s1 + $0xe8] sm:$0xff]
  %v52 = vld [vmem:[%s1 + $0xf0] sm:$0xff]
  %v53 = vld [vmem:[%s1 + $0xf8] sm:$0xff]
  %v54 = vld [vmem:[%s1 + $0x100] sm:$0xff]
  %v55 = vld [vmem:[%s1 + $0x108] sm:$0xff]
  %v56 = vld [vmem:[%s1 + $0x110] sm:$0xff]
  %v57 = vld [vmem:[%s1 + $0x118] sm:$0xff]
  %v58 = vld [vmem:[%s1 + $0x120] sm:$0xff]
  %v59 = vld [vmem:[%s1 + $0x128] sm:$0xff]
  %v60 = vld [vmem:[%s1 + $0x130] sm:$0xff]
  %v61 = vld [vmem:[%s1 + $0x138] sm:$0xff]
  %v62 = vld [vmem:[%s1 + $0x140] sm:$0xff]
  %v63 = vld [vmem:[%s1 + $0x148] sm:$0xff]
  %v64 = vld [vmem:[%s1 + $0x150] sm:$0xff]
  %v65 = vld [vmem:[%s1 + $0x158] sm:$0xff]
  %v66 = vld [vmem:[%s1 + $0x160] sm:$0xff]
  %v67 = vld [vmem:[%s1 + $0x168] sm:$0xff]
  %v68 = vld [vmem:[%s1 + $0x170] sm:$0xff]
  %v69 = vld [vmem:[%s1 + $0x178] sm:$0xff]
  %v70 = vld [vmem:[%s1 + $0x180] sm:$0xff]
  %v71 = vld [vmem:[%s1 + $0x188] sm:$0xff]
  %v72 = vld [vmem:[%s1 + $0x190] sm:$0xff]
  %v73 = vld [vmem:[%s1 + $0x198] sm:$0xff]
  %v74 = vld [vmem:[%s1 + $0x1a0] sm:$0xff]
  %v75 = vld [vmem:[%s1 + $0x1a8] sm:$0xff]
  %v76 = vld [vmem:[%s1 + $0x1b0] sm:$0xff]
  %v77 = vld [vmem:[%s1 + $0x1b8] sm:$0xff]
  %v78 = vld [vmem:[%s1 + $0x1c0] sm:$0xff]
  %v79 = vld [vmem:[%s1 + $0x1c8] sm:$0xff]
  %v80 = vld [vmem:[%s1 + $0x1d0] sm:$0xff]
  %v81 = vld [vmem:[%s1 + $0x1d8] sm:$0xff]
  %v82 = vld [vmem:[%s1 + $0x1e0] sm:$0xff]
  %v83 = vld [vmem:[%s1 + $0x1e8] sm:$0xff]
  %v84 = vld [vmem:[%s1 + $0x1f0] sm:$0xff]
  %v85 = vld [vmem:[%s1 + $0x1f8] sm:$0xff]
  %v86 = vld [vmem:[%s1 + $0x200] sm:$0xff]
  %v87 = vld [vmem:[%s1 + $0x208] sm:$0xff]
  %v88 = vld [vmem:[%s1 + $0x210] sm:$0xff]
  %v89 = vld [vmem:[%s1 + $0x218] sm:$0xff]
  %v90 = vld [vmem:[%s1 + $0x220] sm:$0xff]
  %v91 = vld [vmem:[%s1 + $0x228] sm:$0xff]
  %v92 = vld [vmem:[%s1 + $0x230] sm:$0xff]
  %v93 = vld [vmem:[%s1 + $0x238] sm:$0xff]
  %v94 = vld [vmem:[%s1 + $0x240] sm:$0xff]
  %v95 = vld [vmem:[%s1 + $0x248] sm:$0xff]
  %v96 = vld [vmem:[%s1 + $0x250] sm:$0xff]
  %v97 = vld [vmem:[%s1 + $0x258] sm:$0xff]
  %v98 = vld [vmem:[%s1 + $0x260] sm:$0xff]
  %v99 = vld [vmem:[%s1 + $0x268] sm:$0xff]
  %v100 = vld [vmem:[%s1 + $0x270] sm:$0xff]
  %v101 = vld [vmem:[%s1 + $0x278] sm:$0xff]
  %v102 = vld [vmem:[%s1 + $0x280] sm:$0xff]
  %v103 = vld [vmem:[%s1 + $0x288] sm:$0xff]
  %v104 = vld [vmem:[%s1 + $0x290] sm:$0xff]
  %v105 = vld [vmem:[%s1 + $0x298] sm:$0xff]
  %v106 = vld [vmem:[%s1 + $0x2a0] sm:$0xff]
  %v107 = vld [vmem:[%s1 + $0x2a8] sm:$0xff]
  %v108 = vld [vmem:[%s1 + $0x2b0] sm:$0xff]
  %v109 = vld [vmem:[%s1 + $0x2b8] sm:$0xff]
  %v110 = vld [vmem:[%s1 + $0x2c0] sm:$0xff]
  %v111 = vld [vmem:[%s1 + $0x2c8] sm:$0xff]
  %v112 = vld [vmem:[%s1 + $0x2d0] sm:$0xff]
  %v113 = vld [vmem:[%s1 + $0x2d8] sm:$0xff]
  %v114 = vld [vmem:[%s1 + $0x2e0] sm:$0xff]
  %v115 = vld [vmem:[%s1 + $0x2e8] sm:$0xff]
  %v116 = vld [vmem:[%s1 + $0x2f0] sm:$0xff]
  %v117 = vld [vmem:[%s1 + $0x2f8] sm:$0xff]
  %v118 = vld [vmem:[%s1 + $0x300] sm:$0xff]
  %v119 = vld [vmem:[%s1 + $0x308] sm:$0xff]
  %v120 = vld [vmem:[%s1 + $0x310] sm:$0xff]
  %v121 = vld [vmem:[%s1 + $0x318] sm:$0xff]
  %v122 = vld [vmem:[%s1 + $0x320] sm:$0xff]
  %v123 = vld [vmem:[%s1 + $0x328] sm:$0xff]
  %v124 = vld [vmem:[%s1 + $0x330] sm:$0xff]
  %v125 = vld [vmem:[%s1 + $0x338] sm:$0xff]
  %v126 = vld [vmem:[%s1 + $0x340] sm:$0xff]
  %v127 = vld [vmem:[%s1 + $0x348] sm:$0xff]
  %v128 = vld [vmem:[%s1 + $0x350] sm:$0xff]
  %v129 = vld [vmem:[%s1 + $0x358] sm:$0xff]
  %v130 = vld [vmem:[%s1 + $0x360] sm:$0xff]
  %v131 = vld [vmem:[%s1 + $0x368] sm:$0xff]
  %v132 = vld [vmem:[%s1 + $0x370] sm:$0xff]
  %v133 = vld [vmem:[%s1 + $0x378] sm:$0xff]
  %v134 = vld [vmem:[%s1 + $0x380] sm:$0xff]
  %v135 = vld [vmem:[%s1 + $0x388] sm:$0xff]
  %v136 = vld [vmem:[%s1 + $0x390] sm:$0xff]
  %v137 = vld [vmem:[%s1 + $0x398] sm:$0xff]
  %v138 = vld [vmem:[%s1 + $0x3a0] sm:$0xff]
  %v139 = vld [vmem:[%s1 + $0x3a8] sm:$0xff]
  %v140 = vld [vmem:[%s1 + $0x3b0] sm:$0xff]
  %v141 = vld [vmem:[%s1 + $0x3b8] sm:$0xff]
  %v142 = vld [vmem:[%s1 + $0x3c0] sm:$0xff]
  %v143 = vld [vmem:[%s1 + $0x3c8] sm:$0xff]
  %v144 = vld [vmem:[%s1 + $0x3d0] sm:$0xff]
  %v145 = vld [vmem:[%s1 + $0x3d8] sm:$0xff]
  %v146 = vld [vmem:[%s1 + $0x3e0] sm:$0xff]
  %v147 = vld [vmem:[%s1 + $0x3e8] sm:$0xff]
  %v148 = vld [vmem:[%s1 + $0x3f0] sm:$0xff]
  %v149 = vld [vmem:[%s1 + $0x3f8] sm:$0xff]
  %v150 = vld [vmem:[%s1 + $0x400] sm:$0xff]
  %v151 = vld [vmem:[%s1 + $0x408] sm:$0xff]
  %v152 = vld [vmem:[%s1 + $0x410] sm:$0xff]
  %v153 = vld [vmem:[%s1 + $0x418] sm:$0xff]
  %v154 = vld [vmem:[%s1 + $0x420] sm:$0xff]
  %v155 = vld [vmem:[%s1 + $0x428] sm:$0xff]
  %v156 = vld [vmem:[%s1 + $0x430] sm:$0xff]
  %v157 = vld [vmem:[%s1 + $0x438] sm:$0xff]
  %v158 = vld [vmem:[%s1 + $0x440] sm:$0xff]
  %v159 = vld [vmem:[%s1 + $0x448] sm:$0xff]
  %v160 = vld [vmem:[%s1 + $0x450] sm:$0xff]
  %v161 = vld [vmem:[%s1 + $0x458] sm:$0xff]
  %v162 = vld [vmem:[%s1 + $0x460] sm:$0xff]
  %v163 = vld [vmem:[%s1 + $0x468] sm:$0xff]
  %v164 = vld [vmem:[%s1 + $0x470] sm:$0xff]
  %v165 = vld [vmem:[%s1 + $0x478] sm:$0xff]
  %v166 = vld [vmem:[%s1 + $0x480] sm:$0xff]
  %v167 = vld [vmem:[%s1 + $0x488] sm:$0xff]
  %v168 = vld [vmem:[%s1 + $0x490] sm:$0xff]
  %v169 = vld [vmem:[%s1 + $0x498] sm:$0xff]
  %v170 = vld [vmem:[%s1 + $0x4a0] sm:$0xff]
  %v171 = vld [vmem:[%s1 + $0x4a8] sm:$0xff]
  %v172 = vld [vmem:[%s1 + $0x4b0] sm:$0xff]
  %v173 = vld [vmem:[%s1 + $0x4b8] sm:$0xff]
  %v174 = vld [vmem:[%s1 + $0x4c0] sm:$0xff]
  %v175 = vld [vmem:[%s1 + $0x4c8] sm:$0xff]
  %v176 = vld [vmem:[%s1 + $0x4d0] sm:$0xff]
  %v177 = vld [vmem:[%s1 + $0x4d8] sm:$0xff]
  %v178 = vld [vmem:[%s1 + $0x4e0] sm:$0xff]
  %v179 = vld [vmem:[%s1 + $0x4e8] sm:$0xff]
  %v180 = vld [vmem:[%s1 + $0x4f0] sm:$0xff]
  %v181 = vld [vmem:[%s1 + $0x4f8] sm:$0xff]
  %v182 = vld [vmem:[%s1 + $0x500] sm:$0xff]
  %v183 = vld [vmem:[%s1 + $0x508] sm:$0xff]
  %v184 = vld [vmem:[%s1 + $0x510] sm:$0xff]
  %v185 = vld [vmem:[%s1 + $0x518] sm:$0xff]
  %v186 = vld [vmem:[%s1 + $0x520] sm:$0xff]
  %v187 = vld [vmem:[%s1 + $0x528] sm:$0xff]
  %v188 = vld [vmem:[%s1 + $0x530] sm:$0xff]
  %v189 = vld [vmem:[%s1 + $0x538] sm:$0xff]
  %v190 = vld [vmem:[%s1 + $0x540] sm:$0xff]
  %v191 = vld [vmem:[%s1 + $0x548] sm:$0xff]
  %v192 = vld [vmem:[%s1 + $0x550] sm:$0xff]
  %v193 = vld [vmem:[%s1 + $0x558] sm:$0xff]
  %v194 = vld [vmem:[%s1 + $0x560] sm:$0xff]
  %v195 = vld [vmem:[%s1 + $0x568] sm:$0xff]
  %v196 = vld [vmem:[%s1 + $0x570] sm:$0xff]
  %v197 = vld [vmem:[%s1 + $0x578] sm:$0xff]
  %v198 = vld [vmem:[%s1 + $0x580] sm:$0xff]
  %v199 = vld [vmem:[%s1 + $0x588] sm:$0xff]
  %v200 = vld [vmem:[%s1 + $0x590] sm:$0xff]
  %v201 = vld [vmem:[%s1 + $0x598] sm:$0xff]
  %v202 = vld [vmem:[%s1 + $0x5a0] sm:$0xff]
  %v203 = vld [vmem:[%s1 + $0x5a8] sm:$0xff]
  %v204 = vld [vmem:[%s1 + $0x5b0] sm:$0xff]
  %v205 = vld [vmem:[%s1 + $0x5b8] sm:$0xff]
  %v206 = vld [vmem:[%s1 + $0x5c0] sm:$0xff]
  %v207 = vld [vmem:[%s1 + $0x5c8] sm:$0xff]
  %v208 = vld [vmem:[%s1 + $0x5d0] sm:$0xff]
  %v209 = vld [vmem:[%s1 + $0x5d8] sm:$0xff]
  %v210 = vld [vmem:[%s1 + $0x5e0] sm:$0xff]
  %v211 = vld [vmem:[%s1 + $0x5e8] sm:$0xff]
  %v212 = vld [vmem:[%s1 + $0x5f0] sm:$0xff]
  %v213 = vld [vmem:[%s1 + $0x5f8] sm:$0xff]
  %v214 = vld [vmem:[%s1 + $0x600] sm:$0xff]
  %v215 = vld [vmem:[%s1 + $0x608] sm:$0xff]
  %v216 = vld [vmem:[%s1 + $0x610] sm:$0xff]
  %v217 = vld [vmem:[%s1 + $0x618] sm:$0xff]
  %v218 = vld [vmem:[%s1 + $0x620] sm:$0xff]
  %v219 = vld [vmem:[%s1 + $0x628] sm:$0xff]
  %v220 = vld [vmem:[%s1 + $0x630] sm:$0xff]
  %v221 = vld [vmem:[%s1 + $0x638] sm:$0xff]
  %v222 = vld [vmem:[%s1 + $0x640] sm:$0xff]
  %v223 = vld [vmem:[%s1 + $0x648] sm:$0xff]
  %v224 = vld [vmem:[%s1 + $0x650] sm:$0xff]
  %v225 = vld [vmem:[%s1 + $0x658] sm:$0xff]
  %v226 = vld [vmem:[%s1 + $0x660] sm:$0xff]
  %v227 = vld [vmem:[%s1 + $0x668] sm:$0xff]
  %v228 = vld [vmem:[%s1 + $0x670] sm:$0xff]
  %v229 = vld [vmem:[%s1 + $0x678] sm:$0xff]
  %v230 = vld [vmem:[%s1 + $0x680] sm:$0xff]
  %v231 = vld [vmem:[%s1 + $0x688] sm:$0xff]
  %v232 = vld [vmem:[%s1 + $0x690] sm:$0xff]
  %v233 = vld [vmem:[%s1 + $0x698] sm:$0xff]
  %v234 = vld [vmem:[%s1 + $0x6a0] sm:$0xff]
  %v235 = vld [vmem:[%s1 + $0x6a8] sm:$0xff]
  %v236 = vld [vmem:[%s1 + $0x6b0] sm:$0xff]
  %v237 = vld [vmem:[%s1 + $0x6b8] sm:$0xff]
  %v238 = vld [vmem:[%s1 + $0x6c0] sm:$0xff]
  %v239 = vld [vmem:[%s1 + $0x6c8] sm:$0xff]
  %v240 = vld [vmem:[%s1 + $0x6d0] sm:$0xff]
  %v241 = vld [vmem:[%s1 + $0x6d8] sm:$0xff]
  %v242 = vld [vmem:[%s1 + $0x6e0] sm:$0xff]
  %v243 = vld [vmem:[%s1 + $0x6e8] sm:$0xff]
  %v244 = vld [vmem:[%s1 + $0x6f0] sm:$0xff]
  %v245 = vld [vmem:[%s1 + $0x6f8] sm:$0xff]
  %v246 = vld [vmem:[%s1 + $0x700] sm:$0xff]
  %v247 = vld [vmem:[%s1 + $0x708] sm:$0xff]
  %v248 = vld [vmem:[%s1 + $0x710] sm:$0xff]
  %v249 = vld [vmem:[%s1 + $0x718] sm:$0xff]
  %v250 = vld [vmem:[%s1 + $0x720] sm:$0xff]
  %v251 = vld [vmem:[%s1 + $0x728] sm:$0xff]
  %v252 = vld [vmem:[%s1 + $0x730] sm:$0xff]
  %v253 = vld [vmem:[%s1 + $0x738] sm:$0xff]
  %v254 = vld [vmem:[%s1 + $0x740] sm:$0xff]
  %v255 = vld [vmem:[%s1 + $0x748] sm:$0xff]
  %v256 = vld [vmem:[%s1 + $0x750] sm:$0xff]
  %v257 = vld [vmem:[%s1 + $0x758] sm:$0xff]
  %v258 = vld [vmem:[%s1 + $0x760] sm:$0xff]
  %v259 = vld [vmem:[%s1 + $0x768] sm:$0xff]
  %v260 = vld [vmem:[%s1 + $0x770] sm:$0xff]
  %v261 = vld [vmem:[%s1 + $0x778] sm:$0xff]
  %v262 = vld [vmem:[%s1 + $0x780] sm:$0xff]
  %v263 = vld [vmem:[%s1 + $0x788] sm:$0xff]
  %v264 = vld [vmem:[%s1 + $0x790] sm:$0xff]
  %v265 = vld [vmem:[%s1 + $0x798] sm:$0xff]
  %v266 = vld [vmem:[%s1 + $0x7a0] sm:$0xff]
  %v267 = vld [vmem:[%s1 + $0x7a8] sm:$0xff]
  %v268 = vld [vmem:[%s1 + $0x7b0] sm:$0xff]
  %v269 = vld [vmem:[%s1 + $0x7b8] sm:$0xff]
  %v270 = vld [vmem:[%s1 + $0x7c0] sm:$0xff]
  %v271 = vld [vmem:[%s1 + $0x7c8] sm:$0xff]
  %v272 = vld [vmem:[%s1 + $0x7d0] sm:$0xff]
  %v273 = vld [vmem:[%s1 + $0x7d8] sm:$0xff]
  %v274 = vld [vmem:[%s1 + $0x7e0] sm:$0xff]
  %v275 = vld [vmem:[%s1 + $0x7e8] sm:$0xff]
  %v276 = vld [vmem:[%s1 + $0x7f0] sm:$0xff]
  %v277 = vld [vmem:[%s1 + $0x7f8] sm:$0xff]
  %v278 = vld [vmem:[%s1 + $0x800] sm:$0xff]
  %v279 = vld [vmem:[%s1 + $0x808] sm:$0xff]
  %v280 = vld [vmem:[%s1 + $0x810] sm:$0xff]
  %v281 = vld [vmem:[%s1 + $0x818] sm:$0xff]
  %v282 = vld [vmem:[%s1 + $0x820] sm:$0xff]
  %v283 = vld [vmem:[%s1 + $0x828] sm:$0xff]
  %v284 = vld [vmem:[%s1 + $0x830] sm:$0xff]
  %v285 = vld [vmem:[%s1 + $0x838] sm:$0xff]
  %v286 = vld [vmem:[%s1 + $0x840] sm:$0xff]
  %v287 = vld [vmem:[%s1 + $0x848] sm:$0xff]
  %v288 = vld [vmem:[%s1 + $0x850] sm:$0xff]
  %v289 = vld [vmem:[%s1 + $0x858] sm:$0xff]
  %v290 = vld [vmem:[%s1 + $0x860] sm:$0xff]
  %v291 = vld [vmem:[%s1 + $0x868] sm:$0xff]
  %v292 = vld [vmem:[%s1 + $0x870] sm:$0xff]
  %v293 = vld [vmem:[%s1 + $0x878] sm:$0xff]
  %v294 = vld [vmem:[%s1 + $0x880] sm:$0xff]
  %v295 = vld [vmem:[%s1 + $0x888] sm:$0xff]
  %v296 = vld [vmem:[%s1 + $0x890] sm:$0xff]
  %v297 = vld [vmem:[%s1 + $0x898] sm:$0xff]
  %v298 = vld [vmem:[%s1 + $0x8a0] sm:$0xff]
  %v299 = vld [vmem:[%s1 + $0x8a8] sm:$0xff]
  %v300 = vld [vmem:[%s1 + $0x8b0] sm:$0xff]
  %v301 = vld [vmem:[%s1 + $0x8b8] sm:$0xff]
  %v302 = vld [vmem:[%s1 + $0x8c0] sm:$0xff]
  %v303 = vld [vmem:[%s1 + $0x8c8] sm:$0xff]
  %v304 = vld [vmem:[%s1 + $0x8d0] sm:$0xff]
  %v305 = vld [vmem:[%s1 + $0x8d8] sm:$0xff]
  %v306 = vld [vmem:[%s1 + $0x8e0] sm:$0xff]
  %v307 = vld [vmem:[%s1 + $0x8e8] sm:$0xff]
  %v308 = vld [vmem:[%s1 + $0x8f0] sm:$0xff]
  %v309 = vld [vmem:[%s1 + $0x8f8] sm:$0xff]
  %v310 = vld [vmem:[%s1 + $0x900] sm:$0xff]
  %v311 = vld [vmem:[%s1 + $0x908] sm:$0xff]
  %v312 = vld [vmem:[%s1 + $0x910] sm:$0xff]
  %v313 = vld [vmem:[%s1 + $0x918] sm:$0xff]
  %v314 = vld [vmem:[%s1 + $0x920] sm:$0xff]
  %v315 = vld [vmem:[%s1 + $0x928] sm:$0xff]
  %v316 = vld [vmem:[%s1 + $0x930] sm:$0xff]
  %v317 = vld [vmem:[%s1 + $0x938] sm:$0xff]
  %v318 = vld [vmem:[%s1 + $0x940] sm:$0xff]
  %v319 = vld [vmem:[%s1 + $0x948] sm:$0xff]
  %v320 = vld [vmem:[%s1 + $0x950] sm:$0xff]
  %v321 = vld [vmem:[%s1 + $0x958] sm:$0xff]
  %v322 = vld [vmem:[%s1 + $0x960] sm:$0xff]
  %v323 = vld [vmem:[%s1 + $0x968] sm:$0xff]
  %v324 = vld [vmem:[%s1 + $0x970] sm:$0xff]
  %v325 = vld [vmem:[%s1 + $0x978] sm:$0xff]
  %v326 = vld [vmem:[%s1 + $0x980] sm:$0xff]
  %v327 = vld [vmem:[%s1 + $0x988] sm:$0xff]
  %v328 = vld [vmem:[%s1 + $0x990] sm:$0xff]
  %v329 = vld [vmem:[%s1 + $0x998] sm:$0xff]
  %v330 = vld [vmem:[%s1 + $0x9a0] sm:$0xff]
  %v331 = vld [vmem:[%s1 + $0x9a8] sm:$0xff]
  %v332 = vld [vmem:[%s1 + $0x9b0] sm:$0xff]
  %v333 = vld [vmem:[%s1 + $0x9b8] sm:$0xff]
  %v334 = vld [vmem:[%s1 + $0x9c0] sm:$0xff]
  %v335 = vld [vmem:[%s1 + $0x9c8] sm:$0xff]
  %v336 = vld [vmem:[%s1 + $0x9d0] sm:$0xff]
  %v337 = vld [vmem:[%s1 + $0x9d8] sm:$0xff]
  %v338 = vld [vmem:[%s1 + $0x9e0] sm:$0xff]
  %v339 = vld [vmem:[%s1 + $0x9e8] sm:$0xff]
  %v340 = vld [vmem:[%s1 + $0x9f0] sm:$0xff]
  %v341 = vld [vmem:[%s1 + $0x9f8] sm:$0xff]
  %v342 = vld [vmem:[%s1 + $0xa00] sm:$0xff]
  %v343 = vld [vmem:[%s1 + $0xa08] sm:$0xff]
  %v344 = vld [vmem:[%s1 + $0xa10] sm:$0xff]
  %v345 = vld [vmem:[%s1 + $0xa18] sm:$0xff]
  %v346 = vld [vmem:[%s1 + $0xa20] sm:$0xff]
  %v347 = vld [vmem:[%s1 + $0xa28] sm:$0xff]
  %v348 = vld [vmem:[%s1 + $0xa30] sm:$0xff]
  %v349 = vld [vmem:[%s1 + $0xa38] sm:$0xff]
  %v350 = vld [vmem:[%s1 + $0xa40] sm:$0xff]
  %v351 = vld [vmem:[%s1 + $0xa48] sm:$0xff]
  %v352 = vld [vmem:[%s1 + $0xa50] sm:$0xff]
  %v353 = vld [vmem:[%s1 + $0xa58] sm:$0xff]
  %v354 = vld [vmem:[%s1 + $0xa60] sm:$0xff]
  %v355 = vld [vmem:[%s1 + $0xa68] sm:$0xff]
  %v356 = vld [vmem:[%s1 + $0xa70] sm:$0xff]
  %v357 = vld [vmem:[%s1 + $0xa78] sm:$0xff]
  %v358 = vld [vmem:[%s1 + $0xa80] sm:$0xff]
  %v359 = vld [vmem:[%s1 + $0xa88] sm:$0xff]
  %v360 = vld [vmem:[%s1 + $0xa90] sm:$0xff]
  %v361 = vld [vmem:[%s1 + $0xa98] sm:$0xff]
  %v362 = vld [vmem:[%s1 + $0xaa0] sm:$0xff]
  %v363 = vld [vmem:[%s1 + $0xaa8] sm:$0xff]
  %v364 = vld [vmem:[%s1 + $0xab0] sm:$0xff]
  %v365 = vld [vmem:[%s1 + $0xab8] sm:$0xff]
  %v366 = vld [vmem:[%s1 + $0xac0] sm:$0xff]
  %v367 = vld [vmem:[%s1 + $0xac8] sm:$0xff]
  %v368 = vld [vmem:[%s1 + $0xad0] sm:$0xff]
  %v369 = vld [vmem:[%s1 + $0xad8] sm:$0xff]
  %v370 = vld [vmem:[%s1 + $0xae0] sm:$0xff]
  %v371 = vld [vmem:[%s1 + $0xae8] sm:$0xff]
  %v372 = vld [vmem:[%s1 + $0xaf0] sm:$0xff]
  %v373 = vld [vmem:[%s1 + $0xaf8] sm:$0xff]
  %v374 = vld [vmem:[%s1 + $0xb00] sm:$0xff]
  %v375 = vld [vmem:[%s1 + $0xb08] sm:$0xff]
  %v376 = vld [vmem:[%s1 + $0xb10] sm:$0xff]
  %v377 = vld [vmem:[%s1 + $0xb18] sm:$0xff]
  %v378 = vld [vmem:[%s1 + $0xb20] sm:$0xff]
  %v379 = vld [vmem:[%s1 + $0xb28] sm:$0xff]
  %v380 = vld [vmem:[%s1 + $0xb30] sm:$0xff]
  %v381 = vld [vmem:[%s1 + $0xb38] sm:$0xff]
  %v382 = vld [vmem:[%s1 + $0xb40] sm:$0xff]
  %v383 = vld [vmem:[%s1 + $0xb48] sm:$0xff]
  %v384 = vld [vmem:[%s1 + $0xb50] sm:$0xff]
  %v385 = vld [vmem:[%s1 + $0xb58] sm:$0xff]
  %v386 = vld [vmem:[%s1 + $0xb60] sm:$0xff]
  %v387 = vld [vmem:[%s1 + $0xb68] sm:$0xff]
  %v388 = vld [vmem:[%s1 + $0xb70] sm:$0xff]
  %v389 = vld [vmem:[%s1 + $0xb78] sm:$0xff]
  %v390 = vld [vmem:[%s1 + $0xb80] sm:$0xff]
  %v391 = vld [vmem:[%s1 + $0xb88] sm:$0xff]
  %v392 = vld [vmem:[%s1 + $0xb90] sm:$0xff]
  %v393 = vld [vmem:[%s1 + $0xb98] sm:$0xff]
  %v394 = vld [vmem:[%s1 + $0xba0] sm:$0xff]
  %v395 = vld [vmem:[%s1 + $0xba8] sm:$0xff]
  %v396 = vld [vmem:[%s1 + $0xbb0] sm:$0xff]
  %v397 = vld [vmem:[%s1 + $0xbb8] sm:$0xff]
  %v398 = vld [vmem:[%s1 + $0xbc0] sm:$0xff]
  %v399 = vld [vmem:[%s1 + $0xbc8] sm:$0xff]
  %v400 = vld [vmem:[%s1 + $0xbd0] sm:$0xff]
  %v401 = vld [vmem:[%s1 + $0xbd8] sm:$0xff]
  %v402 = vld [vmem:[%s1 + $0xbe0] sm:$0xff]
  %v403 = vld [vmem:[%s1 + $0xbe8] sm:$0xff]
  %v404 = vld [vmem:[%s1 + $0xbf0] sm:$0xff]
  %v405 = vld [vmem:[%s1 + $0xbf8] sm:$0xff]
  %v406 = vld [vmem:[%s1 + $0xc00] sm:$0xff]
  %v407 = vld [vmem:[%s1 + $0xc08] sm:$0xff]
  %v408 = vld [vmem:[%s1 + $0xc10] sm:$0xff]
  %v409 = vld [vmem:[%s1 + $0xc18] sm:$0xff]
  %v410 = vld [vmem:[%s1 + $0xc20] sm:$0xff]
  %v411 = vld [vmem:[%s1 + $0xc28] sm:$0xff]
  %v412 = vld [vmem:[%s1 + $0xc30] sm:$0xff]
  %v413 = vld [vmem:[%s1 + $0xc38] sm:$0xff]
  %v414 = vld [vmem:[%s1 + $0xc40] sm:$0xff]
  %v415 = vld [vmem:[%s1 + $0xc48] sm:$0xff]
  %v416 = vld [vmem:[%s1 + $0xc50] sm:$0xff]
  %v417 = vld [vmem:[%s1 + $0xc58] sm:$0xff]
  %v418 = vld [vmem:[%s1 + $0xc60] sm:$0xff]
  %v419 = vld [vmem:[%s1 + $0xc68] sm:$0xff]
  %v420 = vld [vmem:[%s1 + $0xc70] sm:$0xff]
  %v421 = vld [vmem:[%s1 + $0xc78] sm:$0xff]
  %v422 = vld [vmem:[%s1 + $0xc80] sm:$0xff]
  %v423 = vld [vmem:[%s1 + $0xc88] sm:$0xff]
  %v424 = vld [vmem:[%s1 + $0xc90] sm:$0xff]
  %v425 = vld [vmem:[%s1 + $0xc98] sm:$0xff]
  %v426 = vld [vmem:[%s1 + $0xca0] sm:$0xff]
  %v427 = vld [vmem:[%s1 + $0xca8] sm:$0xff]
  %v428 = vld [vmem:[%s1 + $0xcb0] sm:$0xff]
  %v429 = vld [vmem:[%s1 + $0xcb8] sm:$0xff]
  %v430 = vld [vmem:[%s1 + $0xcc0] sm:$0xff]
  %v431 = vld [vmem:[%s1 + $0xcc8] sm:$0xff]
  %v432 = vld [vmem:[%s1 + $0xcd0] sm:$0xff]
  %v433 = vld [vmem:[%s1 + $0xcd8] sm:$0xff]
  %v434 = vld [vmem:[%s1 + $0xce0] sm:$0xff]
  %v435 = vld [vmem:[%s1 + $0xce8] sm:$0xff]
  %v436 = vld [vmem:[%s1 + $0xcf0] sm:$0xff]
  %v437 = vld [vmem:[%s1 + $0xcf8] sm:$0xff]
  %v438 = vld [vmem:[%s1 + $0xd00] sm:$0xff]
  %v439 = vld [vmem:[%s1 + $0xd08] sm:$0xff]
  %v440 = vld [vmem:[%s1 + $0xd10] sm:$0xff]
  %v441 = vld [vmem:[%s1 + $0xd18] sm:$0xff]
  %v442 = vld [vmem:[%s1 + $0xd20] sm:$0xff]
  %v443 = vld [vmem:[%s1 + $0xd28] sm:$0xff]
  %v444 = vld [vmem:[%s1 + $0xd30] sm:$0xff]
  %v445 = vld [vmem:[%s1 + $0xd38] sm:$0xff]
  %v446 = vld [vmem:[%s1 + $0xd40] sm:$0xff]
  %v447 = vld [vmem:[%s1 + $0xd48] sm:$0xff]
  %v448 = vld [vmem:[%s1 + $0xd50] sm:$0xff]
  %v449 = vld [vmem:[%s1 + $0xd58] sm:$0xff]
  %v450 = vld [vmem:[%s1 + $0xd60] sm:$0xff]
  %v451 = vld [vmem:[%s1 + $0xd68] sm:$0xff]
  %v452 = vld [vmem:[%s1 + $0xd70] sm:$0xff]
  %v453 = vld [vmem:[%s1 + $0xd78] sm:$0xff]
  %v454 = vld [vmem:[%s1 + $0xd80] sm:$0xff]
  %v455 = vld [vmem:[%s1 + $0xd88] sm:$0xff]
  %v456 = vld [vmem:[%s1 + $0xd90] sm:$0xff]
  %v457 = vld [vmem:[%s1 + $0xd98] sm:$0xff]
  %v458 = vld [vmem:[%s1 + $0xda0] sm:$0xff]
  %v459 = vld [vmem:[%s1 + $0xda8] sm:$0xff]
  %v460 = vld [vmem:[%s1 + $0xdb0] sm:$0xff]
  %v461 = vld [vmem:[%s1 + $0xdb8] sm:$0xff]
  %v462 = vld [vmem:[%s1 + $0xdc0] sm:$0xff]
  %v463 = vld [vmem:[%s1 + $0xdc8] sm:$0xff]
  %v464 = vld [vmem:[%s1 + $0xdd0] sm:$0xff]
  %v465 = vld [vmem:[%s1 + $0xdd8] sm:$0xff]
  %v466 = vld [vmem:[%s1 + $0xde0] sm:$0xff]
  %v467 = vld [vmem:[%s1 + $0xde8] sm:$0xff]
  %v468 = vld [vmem:[%s1 + $0xdf0] sm:$0xff]
  %v469 = vld [vmem:[%s1 + $0xdf8] sm:$0xff]
  %v470 = vld [vmem:[%s1 + $0xe00] sm:$0xff]
  %v471 = vld [vmem:[%s1 + $0xe08] sm:$0xff]
  %v472 = vld [vmem:[%s1 + $0xe10] sm:$0xff]
  %v473 = vld [vmem:[%s1 + $0xe18] sm:$0xff]
  %v474 = vld [vmem:[%s1 + $0xe20] sm:$0xff]
  %v475 = vld [vmem:[%s1 + $0xe28] sm:$0xff]
  %v476 = vld [vmem:[%s1 + $0xe30] sm:$0xff]
  %v477 = vld [vmem:[%s1 + $0xe38] sm:$0xff]
  %v478 = vld [vmem:[%s1 + $0xe40] sm:$0xff]
  %v479 = vld [vmem:[%s1 + $0xe48] sm:$0xff]
  %v480 = vld [vmem:[%s1 + $0xe50] sm:$0xff]
  %v481 = vld [vmem:[%s1 + $0xe58] sm:$0xff]
  %v482 = vld [vmem:[%s1 + $0xe60] sm:$0xff]
  %v483 = vld [vmem:[%s1 + $0xe68] sm:$0xff]
  %v484 = vld [vmem:[%s1 + $0xe70] sm:$0xff]
  %v485 = vld [vmem:[%s1 + $0xe78] sm:$0xff]
  %v486 = vld [vmem:[%s1 + $0xe80] sm:$0xff]
  %v487 = vld [vmem:[%s1 + $0xe88] sm:$0xff]
  %v488 = vld [vmem:[%s1 + $0xe90] sm:$0xff]
  %v489 = vld [vmem:[%s1 + $0xe98] sm:$0xff]
  %v490 = vld [vmem:[%s1 + $0xea0] sm:$0xff]
  %v491 = vld [vmem:[%s1 + $0xea8] sm:$0xff]
  %v492 = vld [vmem:[%s1 + $0xeb0] sm:$0xff]
  %v493 = vld [vmem:[%s1 + $0xeb8] sm:$0xff]
  %v494 = vld [vmem:[%s1 + $0xec0] sm:$0xff]
  %v495 = vld [vmem:[%s1 + $0xec8] sm:$0xff]
  %v496 = vld [vmem:[%s1 + $0xed0] sm:$0xff]
  %v497 = vld [vmem:[%s1 + $0xed8] sm:$0xff]
  %v498 = vld [vmem:[%s1 + $0xee0] sm:$0xff]
  %v499 = vld [vmem:[%s1 + $0xee8] sm:$0xff]
  %v500 = vld [vmem:[%s1 + $0xef0] sm:$0xff]
  %v501 = vld [vmem:[%s1 + $0xef8] sm:$0xff]
  %v502 = vld [vmem:[%s1 + $0xf00] sm:$0xff]
  %v503 = vld [vmem:[%s1 + $0xf08] sm:$0xff]
  %v504 = vld [vmem:[%s1 + $0xf10] sm:$0xff]
  %v505 = vld [vmem:[%s1 + $0xf18] sm:$0xff]
  %v506 = vld [vmem:[%s1 + $0xf20] sm:$0xff]
  %v507 = vld [vmem:[%s1 + $0xf28] sm:$0xff]
  %v508 = vld [vmem:[%s1 + $0xf30] sm:$0xff]
  %v509 = vld [vmem:[%s1 + $0xf38] sm:$0xff]
  %v510 = vld [vmem:[%s1 + $0xf40] sm:$0xff]
  %v511 = vld [vmem:[%s1 + $0xf48] sm:$0xff]
  %v512 = vld [vmem:[%s1 + $0xf50] sm:$0xff]
  %v513 = vld [vmem:[%s1 + $0xf58] sm:$0xff]
  %v514 = vld [vmem:[%s1 + $0xf60] sm:$0xff]
  %v515 = vld [vmem:[%s1 + $0xf68] sm:$0xff]
  %v516 = vld [vmem:[%s1 + $0xf70] sm:$0xff]
  %v517 = vld [vmem:[%s1 + $0xf78] sm:$0xff]
  %v518 = vld [vmem:[%s1 + $0xf80] sm:$0xff]
  %v519 = vld [vmem:[%s1 + $0xf88] sm:$0xff]
  %v520 = vld [vmem:[%s1 + $0xf90] sm:$0xff]
  %v521 = vld [vmem:[%s1 + $0xf98] sm:$0xff]
  %v522 = vld [vmem:[%s1 + $0xfa0] sm:$0xff]
  %v523 = vld [vmem:[%s1 + $0xfa8] sm:$0xff]
  %v524 = vld [vmem:[%s1 + $0xfb0] sm:$0xff]
  %v525 = vld [vmem:[%s1 + $0xfb8] sm:$0xff]
  %v526 = vld [vmem:[%s1 + $0xfc0] sm:$0xff]
  %v527 = vld [vmem:[%s1 + $0xfc8] sm:$0xff]
  %v528 = vld [vmem:[%s1 + $0xfd0] sm:$0xff]
  %v529 = vld [vmem:[%s1 + $0xfd8] sm:$0xff]
  %v530 = vld [vmem:[%s1 + $0xfe0] sm:$0xff]
  %v531 = vld [vmem:[%s1 + $0xfe8] sm:$0xff]
  %v532 = vld [vmem:[%s1 + $0xff0] sm:$0xff]
  %v533 = vld [vmem:[%s1 + $0xff8] sm:$0xff]
  %v534 = vld [vmem:[%s2] sm:$0xff]
  %536 = vset.pattern.permute.xlu0 0
  %537 = vperm.xlu0 %536, %v534
  %v538 = vpop.permute.xlu0 %537
  %v542 = vunpack.c.l.b16 %v20
  %v543 = vunpack.c.h.b16 %v20
  %v544 = vunpack.c.l.b16 %v21
  %v545 = vunpack.c.h.b16 %v21
  %v546 = vpack.c.b16 %v542, %v542
  %v547 = vpack.c.b16 %v543, %v543
  %v548 = vpack.c.b16 %v544, %v544
  %v549 = vpack.c.b16 %v545, %v545
  %v1066 = vunpack.c.l.b16 %v22
  %v1067 = vunpack.c.h.b16 %v22
  %v1068 = vunpack.c.l.b16 %v23
  %v1069 = vunpack.c.h.b16 %v23
  %v1070 = vunpack.c.l.b16 %v24
  %v1071 = vunpack.c.h.b16 %v24
  %v1072 = vunpack.c.l.b16 %v25
  %v1073 = vunpack.c.h.b16 %v25
  %v1074 = vunpack.c.l.b16 %v26
  %v1075 = vunpack.c.h.b16 %v26
  %v1076 = vunpack.c.l.b16 %v27
  %v1077 = vunpack.c.h.b16 %v27
  %v1078 = vunpack.c.l.b16 %v28
  %v1079 = vunpack.c.h.b16 %v28
  %v1080 = vunpack.c.l.b16 %v29
  %v1081 = vunpack.c.h.b16 %v29
  %v1082 = vunpack.c.l.b16 %v30
  %v1083 = vunpack.c.h.b16 %v30
  %v1084 = vunpack.c.l.b16 %v31
  %v1085 = vunpack.c.h.b16 %v31
  %v1086 = vunpack.c.l.b16 %v32
  %v1087 = vunpack.c.h.b16 %v32
  %v1088 = vunpack.c.l.b16 %v33
  %v1089 = vunpack.c.h.b16 %v33
  %v1090 = vunpack.c.l.b16 %v34
  %v1091 = vunpack.c.h.b16 %v34
  %v1092 = vunpack.c.l.b16 %v35
  %v1093 = vunpack.c.h.b16 %v35
  %v1094 = vunpack.c.l.b16 %v36
  %v1095 = vunpack.c.h.b16 %v36
  %v1096 = vunpack.c.l.b16 %v37
  %v1097 = vunpack.c.h.b16 %v37
  %v1098 = vunpack.c.l.b16 %v38
  %v1099 = vunpack.c.h.b16 %v38
  %v1100 = vunpack.c.l.b16 %v39
  %v1101 = vunpack.c.h.b16 %v39
  %v1102 = vunpack.c.l.b16 %v40
  %v1103 = vunpack.c.h.b16 %v40
  %v1104 = vunpack.c.l.b16 %v41
  %v1105 = vunpack.c.h.b16 %v41
  %v1106 = vunpack.c.l.b16 %v42
  %v1107 = vunpack.c.h.b16 %v42
  %v1108 = vunpack.c.l.b16 %v43
  %v1109 = vunpack.c.h.b16 %v43
  %v1110 = vunpack.c.l.b16 %v44
  %v1111 = vunpack.c.h.b16 %v44
  %v1112 = vunpack.c.l.b16 %v45
  %v1113 = vunpack.c.h.b16 %v45
  %v1114 = vunpack.c.l.b16 %v46
  %v1115 = vunpack.c.h.b16 %v46
  %v1116 = vunpack.c.l.b16 %v47
  %v1117 = vunpack.c.h.b16 %v47
  %v1118 = vunpack.c.l.b16 %v48
  %v1119 = vunpack.c.h.b16 %v48
  %v1120 = vunpack.c.l.b16 %v49
  %v1121 = vunpack.c.h.b16 %v49
  %v1122 = vunpack.c.l.b16 %v50
  %v1123 = vunpack.c.h.b16 %v50
  %v1124 = vunpack.c.l.b16 %v51
  %v1125 = vunpack.c.h.b16 %v51
  %v1126 = vunpack.c.l.b16 %v52
  %v1127 = vunpack.c.h.b16 %v52
  %v1128 = vunpack.c.l.b16 %v53
  %v1129 = vunpack.c.h.b16 %v53
  %v1130 = vunpack.c.l.b16 %v54
  %v1131 = vunpack.c.h.b16 %v54
  %v1132 = vunpack.c.l.b16 %v55
  %v1133 = vunpack.c.h.b16 %v55
  %v1134 = vunpack.c.l.b16 %v56
  %v1135 = vunpack.c.h.b16 %v56
  %v1136 = vunpack.c.l.b16 %v57
  %v1137 = vunpack.c.h.b16 %v57
  %v1138 = vunpack.c.l.b16 %v58
  %v1139 = vunpack.c.h.b16 %v58
  %v1140 = vunpack.c.l.b16 %v59
  %v1141 = vunpack.c.h.b16 %v59
  %v1142 = vunpack.c.l.b16 %v60
  %v1143 = vunpack.c.h.b16 %v60
  %v1144 = vunpack.c.l.b16 %v61
  %v1145 = vunpack.c.h.b16 %v61
  %v1146 = vunpack.c.l.b16 %v62
  %v1147 = vunpack.c.h.b16 %v62
  %v1148 = vunpack.c.l.b16 %v63
  %v1149 = vunpack.c.h.b16 %v63
  %v1150 = vunpack.c.l.b16 %v64
  %v1151 = vunpack.c.h.b16 %v64
  %v1152 = vunpack.c.l.b16 %v65
  %v1153 = vunpack.c.h.b16 %v65
  %v1154 = vunpack.c.l.b16 %v66
  %v1155 = vunpack.c.h.b16 %v66
  %v1156 = vunpack.c.l.b16 %v67
  %v1157 = vunpack.c.h.b16 %v67
  %v1158 = vunpack.c.l.b16 %v68
  %v1159 = vunpack.c.h.b16 %v68
  %v1160 = vunpack.c.l.b16 %v69
  %v1161 = vunpack.c.h.b16 %v69
  %v1162 = vunpack.c.l.b16 %v70
  %v1163 = vunpack.c.h.b16 %v70
  %v1164 = vunpack.c.l.b16 %v71
  %v1165 = vunpack.c.h.b16 %v71
  %v1166 = vunpack.c.l.b16 %v72
  %v1167 = vunpack.c.h.b16 %v72
  %v1168 = vunpack.c.l.b16 %v73
  %v1169 = vunpack.c.h.b16 %v73
  %v1170 = vunpack.c.l.b16 %v74
  %v1171 = vunpack.c.h.b16 %v74
  %v1172 = vunpack.c.l.b16 %v75
  %v1173 = vunpack.c.h.b16 %v75
  %v1174 = vunpack.c.l.b16 %v76
  %v1175 = vunpack.c.h.b16 %v76
  %v1176 = vunpack.c.l.b16 %v77
  %v1177 = vunpack.c.h.b16 %v77
  %v1178 = vunpack.c.l.b16 %v78
  %v1179 = vunpack.c.h.b16 %v78
  %v1180 = vunpack.c.l.b16 %v79
  %v1181 = vunpack.c.h.b16 %v79
  %v1182 = vunpack.c.l.b16 %v80
  %v1183 = vunpack.c.h.b16 %v80
  %v1184 = vunpack.c.l.b16 %v81
  %v1185 = vunpack.c.h.b16 %v81
  %v1186 = vunpack.c.l.b16 %v82
  %v1187 = vunpack.c.h.b16 %v82
  %v1188 = vunpack.c.l.b16 %v83
  %v1189 = vunpack.c.h.b16 %v83
  %v1190 = vunpack.c.l.b16 %v84
  %v1191 = vunpack.c.h.b16 %v84
  %v1192 = vunpack.c.l.b16 %v85
  %v1193 = vunpack.c.h.b16 %v85
  %v1194 = vunpack.c.l.b16 %v86
  %v1195 = vunpack.c.h.b16 %v86
  %v1196 = vunpack.c.l.b16 %v87
  %v1197 = vunpack.c.h.b16 %v87
  %v1198 = vunpack.c.l.b16 %v88
  %v1199 = vunpack.c.h.b16 %v88
  %v1200 = vunpack.c.l.b16 %v89
  %v1201 = vunpack.c.h.b16 %v89
  %v1202 = vunpack.c.l.b16 %v90
  %v1203 = vunpack.c.h.b16 %v90
  %v1204 = vunpack.c.l.b16 %v91
  %v1205 = vunpack.c.h.b16 %v91
  %v1206 = vunpack.c.l.b16 %v92
  %v1207 = vunpack.c.h.b16 %v92
  %v1208 = vunpack.c.l.b16 %v93
  %v1209 = vunpack.c.h.b16 %v93
  %v1210 = vunpack.c.l.b16 %v94
  %v1211 = vunpack.c.h.b16 %v94
  %v1212 = vunpack.c.l.b16 %v95
  %v1213 = vunpack.c.h.b16 %v95
  %v1214 = vunpack.c.l.b16 %v96
  %v1215 = vunpack.c.h.b16 %v96
  %v1216 = vunpack.c.l.b16 %v97
  %v1217 = vunpack.c.h.b16 %v97
  %v1218 = vunpack.c.l.b16 %v98
  %v1219 = vunpack.c.h.b16 %v98
  %v1220 = vunpack.c.l.b16 %v99
  %v1221 = vunpack.c.h.b16 %v99
  %v1222 = vunpack.c.l.b16 %v100
  %v1223 = vunpack.c.h.b16 %v100
  %v1224 = vunpack.c.l.b16 %v101
  %v1225 = vunpack.c.h.b16 %v101
  %v1226 = vunpack.c.l.b16 %v102
  %v1227 = vunpack.c.h.b16 %v102
  %v1228 = vunpack.c.l.b16 %v103
  %v1229 = vunpack.c.h.b16 %v103
  %v1230 = vunpack.c.l.b16 %v104
  %v1231 = vunpack.c.h.b16 %v104
  %v1232 = vunpack.c.l.b16 %v105
  %v1233 = vunpack.c.h.b16 %v105
  %v1234 = vunpack.c.l.b16 %v106
  %v1235 = vunpack.c.h.b16 %v106
  %v1236 = vunpack.c.l.b16 %v107
  %v1237 = vunpack.c.h.b16 %v107
  %v1238 = vunpack.c.l.b16 %v108
  %v1239 = vunpack.c.h.b16 %v108
  %v1240 = vunpack.c.l.b16 %v109
  %v1241 = vunpack.c.h.b16 %v109
  %v1242 = vunpack.c.l.b16 %v110
  %v1243 = vunpack.c.h.b16 %v110
  %v1244 = vunpack.c.l.b16 %v111
  %v1245 = vunpack.c.h.b16 %v111
  %v1246 = vunpack.c.l.b16 %v112
  %v1247 = vunpack.c.h.b16 %v112
  %v1248 = vunpack.c.l.b16 %v113
  %v1249 = vunpack.c.h.b16 %v113
  %v1250 = vunpack.c.l.b16 %v114
  %v1251 = vunpack.c.h.b16 %v114
  %v1252 = vunpack.c.l.b16 %v115
  %v1253 = vunpack.c.h.b16 %v115
  %v1254 = vunpack.c.l.b16 %v116
  %v1255 = vunpack.c.h.b16 %v116
  %v1256 = vunpack.c.l.b16 %v117
  %v1257 = vunpack.c.h.b16 %v117
  %v1258 = vunpack.c.l.b16 %v118
  %v1259 = vunpack.c.h.b16 %v118
  %v1260 = vunpack.c.l.b16 %v119
  %v1261 = vunpack.c.h.b16 %v119
  %v1262 = vunpack.c.l.b16 %v120
  %v1263 = vunpack.c.h.b16 %v120
  %v1264 = vunpack.c.l.b16 %v121
  %v1265 = vunpack.c.h.b16 %v121
  %v1266 = vunpack.c.l.b16 %v122
  %v1267 = vunpack.c.h.b16 %v122
  %v1268 = vunpack.c.l.b16 %v123
  %v1269 = vunpack.c.h.b16 %v123
  %v1270 = vunpack.c.l.b16 %v124
  %v1271 = vunpack.c.h.b16 %v124
  %v1272 = vunpack.c.l.b16 %v125
  %v1273 = vunpack.c.h.b16 %v125
  %v1274 = vunpack.c.l.b16 %v126
  %v1275 = vunpack.c.h.b16 %v126
  %v1276 = vunpack.c.l.b16 %v127
  %v1277 = vunpack.c.h.b16 %v127
  %v1278 = vunpack.c.l.b16 %v128
  %v1279 = vunpack.c.h.b16 %v128
  %v1280 = vunpack.c.l.b16 %v129
  %v1281 = vunpack.c.h.b16 %v129
  %v1282 = vunpack.c.l.b16 %v130
  %v1283 = vunpack.c.h.b16 %v130
  %v1284 = vunpack.c.l.b16 %v131
  %v1285 = vunpack.c.h.b16 %v131
  %v1286 = vunpack.c.l.b16 %v132
  %v1287 = vunpack.c.h.b16 %v132
  %v1288 = vunpack.c.l.b16 %v133
  %v1289 = vunpack.c.h.b16 %v133
  %v1290 = vunpack.c.l.b16 %v134
  %v1291 = vunpack.c.h.b16 %v134
  %v1292 = vunpack.c.l.b16 %v135
  %v1293 = vunpack.c.h.b16 %v135
  %v1294 = vunpack.c.l.b16 %v136
  %v1295 = vunpack.c.h.b16 %v136
  %v1296 = vunpack.c.l.b16 %v137
  %v1297 = vunpack.c.h.b16 %v137
  %v1298 = vunpack.c.l.b16 %v138
  %v1299 = vunpack.c.h.b16 %v138
  %v1300 = vunpack.c.l.b16 %v139
  %v1301 = vunpack.c.h.b16 %v139
  %v1302 = vunpack.c.l.b16 %v140
  %v1303 = vunpack.c.h.b16 %v140
  %v1304 = vunpack.c.l.b16 %v141
  %v1305 = vunpack.c.h.b16 %v141
  %v1306 = vunpack.c.l.b16 %v142
  %v1307 = vunpack.c.h.b16 %v142
  %v1308 = vunpack.c.l.b16 %v143
  %v1309 = vunpack.c.h.b16 %v143
  %v1310 = vunpack.c.l.b16 %v144
  %v1311 = vunpack.c.h.b16 %v144
  %v1312 = vunpack.c.l.b16 %v145
  %v1313 = vunpack.c.h.b16 %v145
  %v1314 = vunpack.c.l.b16 %v146
  %v1315 = vunpack.c.h.b16 %v146
  %v1316 = vunpack.c.l.b16 %v147
  %v1317 = vunpack.c.h.b16 %v147
  %v1318 = vunpack.c.l.b16 %v148
  %v1319 = vunpack.c.h.b16 %v148
  %v1320 = vunpack.c.l.b16 %v149
  %v1321 = vunpack.c.h.b16 %v149
  %v1322 = vunpack.c.l.b16 %v150
  %v1323 = vunpack.c.h.b16 %v150
  %v1324 = vunpack.c.l.b16 %v151
  %v1325 = vunpack.c.h.b16 %v151
  %v1326 = vunpack.c.l.b16 %v152
  %v1327 = vunpack.c.h.b16 %v152
  %v1328 = vunpack.c.l.b16 %v153
  %v1329 = vunpack.c.h.b16 %v153
  %v1330 = vunpack.c.l.b16 %v154
  %v1331 = vunpack.c.h.b16 %v154
  %v1332 = vunpack.c.l.b16 %v155
  %v1333 = vunpack.c.h.b16 %v155
  %v1334 = vunpack.c.l.b16 %v156
  %v1335 = vunpack.c.h.b16 %v156
  %v1336 = vunpack.c.l.b16 %v157
  %v1337 = vunpack.c.h.b16 %v157
  %v1338 = vunpack.c.l.b16 %v158
  %v1339 = vunpack.c.h.b16 %v158
  %v1340 = vunpack.c.l.b16 %v159
  %v1341 = vunpack.c.h.b16 %v159
  %v1342 = vunpack.c.l.b16 %v160
  %v1343 = vunpack.c.h.b16 %v160
  %v1344 = vunpack.c.l.b16 %v161
  %v1345 = vunpack.c.h.b16 %v161
  %v1346 = vunpack.c.l.b16 %v162
  %v1347 = vunpack.c.h.b16 %v162
  %v1348 = vunpack.c.l.b16 %v163
  %v1349 = vunpack.c.h.b16 %v163
  %v1350 = vunpack.c.l.b16 %v164
  %v1351 = vunpack.c.h.b16 %v164
  %v1352 = vunpack.c.l.b16 %v165
  %v1353 = vunpack.c.h.b16 %v165
  %v1354 = vunpack.c.l.b16 %v166
  %v1355 = vunpack.c.h.b16 %v166
  %v1356 = vunpack.c.l.b16 %v167
  %v1357 = vunpack.c.h.b16 %v167
  %v1358 = vunpack.c.l.b16 %v168
  %v1359 = vunpack.c.h.b16 %v168
  %v1360 = vunpack.c.l.b16 %v169
  %v1361 = vunpack.c.h.b16 %v169
  %v1362 = vunpack.c.l.b16 %v170
  %v1363 = vunpack.c.h.b16 %v170
  %v1364 = vunpack.c.l.b16 %v171
  %v1365 = vunpack.c.h.b16 %v171
  %v1366 = vunpack.c.l.b16 %v172
  %v1367 = vunpack.c.h.b16 %v172
  %v1368 = vunpack.c.l.b16 %v173
  %v1369 = vunpack.c.h.b16 %v173
  %v1370 = vunpack.c.l.b16 %v174
  %v1371 = vunpack.c.h.b16 %v174
  %v1372 = vunpack.c.l.b16 %v175
  %v1373 = vunpack.c.h.b16 %v175
  %v1374 = vunpack.c.l.b16 %v176
  %v1375 = vunpack.c.h.b16 %v176
  %v1376 = vunpack.c.l.b16 %v177
  %v1377 = vunpack.c.h.b16 %v177
  %v1378 = vunpack.c.l.b16 %v178
  %v1379 = vunpack.c.h.b16 %v178
  %v1380 = vunpack.c.l.b16 %v179
  %v1381 = vunpack.c.h.b16 %v179
  %v1382 = vunpack.c.l.b16 %v180
  %v1383 = vunpack.c.h.b16 %v180
  %v1384 = vunpack.c.l.b16 %v181
  %v1385 = vunpack.c.h.b16 %v181
  %v1386 = vunpack.c.l.b16 %v182
  %v1387 = vunpack.c.h.b16 %v182
  %v1388 = vunpack.c.l.b16 %v183
  %v1389 = vunpack.c.h.b16 %v183
  %v1390 = vunpack.c.l.b16 %v184
  %v1391 = vunpack.c.h.b16 %v184
  %v1392 = vunpack.c.l.b16 %v185
  %v1393 = vunpack.c.h.b16 %v185
  %v1394 = vunpack.c.l.b16 %v186
  %v1395 = vunpack.c.h.b16 %v186
  %v1396 = vunpack.c.l.b16 %v187
  %v1397 = vunpack.c.h.b16 %v187
  %v1398 = vunpack.c.l.b16 %v188
  %v1399 = vunpack.c.h.b16 %v188
  %v1400 = vunpack.c.l.b16 %v189
  %v1401 = vunpack.c.h.b16 %v189
  %v1402 = vunpack.c.l.b16 %v190
  %v1403 = vunpack.c.h.b16 %v190
  %v1404 = vunpack.c.l.b16 %v191
  %v1405 = vunpack.c.h.b16 %v191
  %v1406 = vunpack.c.l.b16 %v192
  %v1407 = vunpack.c.h.b16 %v192
  %v1408 = vunpack.c.l.b16 %v193
  %v1409 = vunpack.c.h.b16 %v193
  %v1410 = vunpack.c.l.b16 %v194
  %v1411 = vunpack.c.h.b16 %v194
  %v1412 = vunpack.c.l.b16 %v195
  %v1413 = vunpack.c.h.b16 %v195
  %v1414 = vunpack.c.l.b16 %v196
  %v1415 = vunpack.c.h.b16 %v196
  %v1416 = vunpack.c.l.b16 %v197
  %v1417 = vunpack.c.h.b16 %v197
  %v1418 = vunpack.c.l.b16 %v198
  %v1419 = vunpack.c.h.b16 %v198
  %v1420 = vunpack.c.l.b16 %v199
  %v1421 = vunpack.c.h.b16 %v199
  %v1422 = vunpack.c.l.b16 %v200
  %v1423 = vunpack.c.h.b16 %v200
  %v1424 = vunpack.c.l.b16 %v201
  %v1425 = vunpack.c.h.b16 %v201
  %v1426 = vunpack.c.l.b16 %v202
  %v1427 = vunpack.c.h.b16 %v202
  %v1428 = vunpack.c.l.b16 %v203
  %v1429 = vunpack.c.h.b16 %v203
  %v1430 = vunpack.c.l.b16 %v204
  %v1431 = vunpack.c.h.b16 %v204
  %v1432 = vunpack.c.l.b16 %v205
  %v1433 = vunpack.c.h.b16 %v205
  %v1434 = vunpack.c.l.b16 %v206
  %v1435 = vunpack.c.h.b16 %v206
  %v1436 = vunpack.c.l.b16 %v207
  %v1437 = vunpack.c.h.b16 %v207
  %v1438 = vunpack.c.l.b16 %v208
  %v1439 = vunpack.c.h.b16 %v208
  %v1440 = vunpack.c.l.b16 %v209
  %v1441 = vunpack.c.h.b16 %v209
  %v1442 = vunpack.c.l.b16 %v210
  %v1443 = vunpack.c.h.b16 %v210
  %v1444 = vunpack.c.l.b16 %v211
  %v1445 = vunpack.c.h.b16 %v211
  %v1446 = vunpack.c.l.b16 %v212
  %v1447 = vunpack.c.h.b16 %v212
  %v1448 = vunpack.c.l.b16 %v213
  %v1449 = vunpack.c.h.b16 %v213
  %v1450 = vunpack.c.l.b16 %v214
  %v1451 = vunpack.c.h.b16 %v214
  %v1452 = vunpack.c.l.b16 %v215
  %v1453 = vunpack.c.h.b16 %v215
  %v1454 = vunpack.c.l.b16 %v216
  %v1455 = vunpack.c.h.b16 %v216
  %v1456 = vunpack.c.l.b16 %v217
  %v1457 = vunpack.c.h.b16 %v217
  %v1458 = vunpack.c.l.b16 %v218
  %v1459 = vunpack.c.h.b16 %v218
  %v1460 = vunpack.c.l.b16 %v219
  %v1461 = vunpack.c.h.b16 %v219
  %v1462 = vunpack.c.l.b16 %v220
  %v1463 = vunpack.c.h.b16 %v220
  %v1464 = vunpack.c.l.b16 %v221
  %v1465 = vunpack.c.h.b16 %v221
  %v1466 = vunpack.c.l.b16 %v222
  %v1467 = vunpack.c.h.b16 %v222
  %v1468 = vunpack.c.l.b16 %v223
  %v1469 = vunpack.c.h.b16 %v223
  %v1470 = vunpack.c.l.b16 %v224
  %v1471 = vunpack.c.h.b16 %v224
  %v1472 = vunpack.c.l.b16 %v225
  %v1473 = vunpack.c.h.b16 %v225
  %v1474 = vunpack.c.l.b16 %v226
  %v1475 = vunpack.c.h.b16 %v226
  %v1476 = vunpack.c.l.b16 %v227
  %v1477 = vunpack.c.h.b16 %v227
  %v1478 = vunpack.c.l.b16 %v228
  %v1479 = vunpack.c.h.b16 %v228
  %v1480 = vunpack.c.l.b16 %v229
  %v1481 = vunpack.c.h.b16 %v229
  %v1482 = vunpack.c.l.b16 %v230
  %v1483 = vunpack.c.h.b16 %v230
  %v1484 = vunpack.c.l.b16 %v231
  %v1485 = vunpack.c.h.b16 %v231
  %v1486 = vunpack.c.l.b16 %v232
  %v1487 = vunpack.c.h.b16 %v232
  %v1488 = vunpack.c.l.b16 %v233
  %v1489 = vunpack.c.h.b16 %v233
  %v1490 = vunpack.c.l.b16 %v234
  %v1491 = vunpack.c.h.b16 %v234
  %v1492 = vunpack.c.l.b16 %v235
  %v1493 = vunpack.c.h.b16 %v235
  %v1494 = vunpack.c.l.b16 %v236
  %v1495 = vunpack.c.h.b16 %v236
  %v1496 = vunpack.c.l.b16 %v237
  %v1497 = vunpack.c.h.b16 %v237
  %v1498 = vunpack.c.l.b16 %v238
  %v1499 = vunpack.c.h.b16 %v238
  %v1500 = vunpack.c.l.b16 %v239
  %v1501 = vunpack.c.h.b16 %v239
  %v1502 = vunpack.c.l.b16 %v240
  %v1503 = vunpack.c.h.b16 %v240
  %v1504 = vunpack.c.l.b16 %v241
  %v1505 = vunpack.c.h.b16 %v241
  %v1506 = vunpack.c.l.b16 %v242
  %v1507 = vunpack.c.h.b16 %v242
  %v1508 = vunpack.c.l.b16 %v243
  %v1509 = vunpack.c.h.b16 %v243
  %v1510 = vunpack.c.l.b16 %v244
  %v1511 = vunpack.c.h.b16 %v244
  %v1512 = vunpack.c.l.b16 %v245
  %v1513 = vunpack.c.h.b16 %v245
  %v1514 = vunpack.c.l.b16 %v246
  %v1515 = vunpack.c.h.b16 %v246
  %v1516 = vunpack.c.l.b16 %v247
  %v1517 = vunpack.c.h.b16 %v247
  %v1518 = vunpack.c.l.b16 %v248
  %v1519 = vunpack.c.h.b16 %v248
  %v1520 = vunpack.c.l.b16 %v249
  %v1521 = vunpack.c.h.b16 %v249
  %v1522 = vunpack.c.l.b16 %v250
  %v1523 = vunpack.c.h.b16 %v250
  %v1524 = vunpack.c.l.b16 %v251
  %v1525 = vunpack.c.h.b16 %v251
  %v1526 = vunpack.c.l.b16 %v252
  %v1527 = vunpack.c.h.b16 %v252
  %v1528 = vunpack.c.l.b16 %v253
  %v1529 = vunpack.c.h.b16 %v253
  %v1530 = vunpack.c.l.b16 %v254
  %v1531 = vunpack.c.h.b16 %v254
  %v1532 = vunpack.c.l.b16 %v255
  %v1533 = vunpack.c.h.b16 %v255
  %v1534 = vunpack.c.l.b16 %v256
  %v1535 = vunpack.c.h.b16 %v256
  %v1536 = vunpack.c.l.b16 %v257
  %v1537 = vunpack.c.h.b16 %v257
  %v1538 = vunpack.c.l.b16 %v258
  %v1539 = vunpack.c.h.b16 %v258
  %v1540 = vunpack.c.l.b16 %v259
  %v1541 = vunpack.c.h.b16 %v259
  %v1542 = vunpack.c.l.b16 %v260
  %v1543 = vunpack.c.h.b16 %v260
  %v1544 = vunpack.c.l.b16 %v261
  %v1545 = vunpack.c.h.b16 %v261
  %v1546 = vunpack.c.l.b16 %v262
  %v1547 = vunpack.c.h.b16 %v262
  %v1548 = vunpack.c.l.b16 %v263
  %v1549 = vunpack.c.h.b16 %v263
  %v1550 = vunpack.c.l.b16 %v264
  %v1551 = vunpack.c.h.b16 %v264
  %v1552 = vunpack.c.l.b16 %v265
  %v1553 = vunpack.c.h.b16 %v265
  %v1554 = vunpack.c.l.b16 %v266
  %v1555 = vunpack.c.h.b16 %v266
  %v1556 = vunpack.c.l.b16 %v267
  %v1557 = vunpack.c.h.b16 %v267
  %v1558 = vunpack.c.l.b16 %v268
  %v1559 = vunpack.c.h.b16 %v268
  %v1560 = vunpack.c.l.b16 %v269
  %v1561 = vunpack.c.h.b16 %v269
  %v1562 = vunpack.c.l.b16 %v270
  %v1563 = vunpack.c.h.b16 %v270
  %v1564 = vunpack.c.l.b16 %v271
  %v1565 = vunpack.c.h.b16 %v271
  %v1566 = vunpack.c.l.b16 %v272
  %v1567 = vunpack.c.h.b16 %v272
  %v1568 = vunpack.c.l.b16 %v273
  %v1569 = vunpack.c.h.b16 %v273
  %v1570 = vunpack.c.l.b16 %v274
  %v1571 = vunpack.c.h.b16 %v274
  %v1572 = vunpack.c.l.b16 %v275
  %v1573 = vunpack.c.h.b16 %v275
  %v1574 = vunpack.c.l.b16 %v276
  %v1575 = vunpack.c.h.b16 %v276
  %v1576 = vunpack.c.l.b16 %v277
  %v1577 = vunpack.c.h.b16 %v277
  %v1578 = vunpack.c.l.b16 %v278
  %v1579 = vunpack.c.h.b16 %v278
  %v1580 = vunpack.c.l.b16 %v279
  %v1581 = vunpack.c.h.b16 %v279
  %v1582 = vunpack.c.l.b16 %v280
  %v1583 = vunpack.c.h.b16 %v280
  %v1584 = vunpack.c.l.b16 %v281
  %v1585 = vunpack.c.h.b16 %v281
  %v1586 = vunpack.c.l.b16 %v282
  %v1587 = vunpack.c.h.b16 %v282
  %v1588 = vunpack.c.l.b16 %v283
  %v1589 = vunpack.c.h.b16 %v283
  %v1590 = vunpack.c.l.b16 %v284
  %v1591 = vunpack.c.h.b16 %v284
  %v1592 = vunpack.c.l.b16 %v285
  %v1593 = vunpack.c.h.b16 %v285
  %v1594 = vunpack.c.l.b16 %v286
  %v1595 = vunpack.c.h.b16 %v286
  %v1596 = vunpack.c.l.b16 %v287
  %v1597 = vunpack.c.h.b16 %v287
  %v1598 = vunpack.c.l.b16 %v288
  %v1599 = vunpack.c.h.b16 %v288
  %v1600 = vunpack.c.l.b16 %v289
  %v1601 = vunpack.c.h.b16 %v289
  %v1602 = vunpack.c.l.b16 %v290
  %v1603 = vunpack.c.h.b16 %v290
  %v1604 = vunpack.c.l.b16 %v291
  %v1605 = vunpack.c.h.b16 %v291
  %v1606 = vunpack.c.l.b16 %v292
  %v1607 = vunpack.c.h.b16 %v292
  %v1608 = vunpack.c.l.b16 %v293
  %v1609 = vunpack.c.h.b16 %v293
  %v1610 = vunpack.c.l.b16 %v294
  %v1611 = vunpack.c.h.b16 %v294
  %v1612 = vunpack.c.l.b16 %v295
  %v1613 = vunpack.c.h.b16 %v295
  %v1614 = vunpack.c.l.b16 %v296
  %v1615 = vunpack.c.h.b16 %v296
  %v1616 = vunpack.c.l.b16 %v297
  %v1617 = vunpack.c.h.b16 %v297
  %v1618 = vunpack.c.l.b16 %v298
  %v1619 = vunpack.c.h.b16 %v298
  %v1620 = vunpack.c.l.b16 %v299
  %v1621 = vunpack.c.h.b16 %v299
  %v1622 = vunpack.c.l.b16 %v300
  %v1623 = vunpack.c.h.b16 %v300
  %v1624 = vunpack.c.l.b16 %v301
  %v1625 = vunpack.c.h.b16 %v301
  %v1626 = vunpack.c.l.b16 %v302
  %v1627 = vunpack.c.h.b16 %v302
  %v1628 = vunpack.c.l.b16 %v303
  %v1629 = vunpack.c.h.b16 %v303
  %v1630 = vunpack.c.l.b16 %v304
  %v1631 = vunpack.c.h.b16 %v304
  %v1632 = vunpack.c.l.b16 %v305
  %v1633 = vunpack.c.h.b16 %v305
  %v1634 = vunpack.c.l.b16 %v306
  %v1635 = vunpack.c.h.b16 %v306
  %v1636 = vunpack.c.l.b16 %v307
  %v1637 = vunpack.c.h.b16 %v307
  %v1638 = vunpack.c.l.b16 %v308
  %v1639 = vunpack.c.h.b16 %v308
  %v1640 = vunpack.c.l.b16 %v309
  %v1641 = vunpack.c.h.b16 %v309
  %v1642 = vunpack.c.l.b16 %v310
  %v1643 = vunpack.c.h.b16 %v310
  %v1644 = vunpack.c.l.b16 %v311
  %v1645 = vunpack.c.h.b16 %v311
  %v1646 = vunpack.c.l.b16 %v312
  %v1647 = vunpack.c.h.b16 %v312
  %v1648 = vunpack.c.l.b16 %v313
  %v1649 = vunpack.c.h.b16 %v313
  %v1650 = vunpack.c.l.b16 %v314
  %v1651 = vunpack.c.h.b16 %v314
  %v1652 = vunpack.c.l.b16 %v315
  %v1653 = vunpack.c.h.b16 %v315
  %v1654 = vunpack.c.l.b16 %v316
  %v1655 = vunpack.c.h.b16 %v316
  %v1656 = vunpack.c.l.b16 %v317
  %v1657 = vunpack.c.h.b16 %v317
  %v1658 = vunpack.c.l.b16 %v318
  %v1659 = vunpack.c.h.b16 %v318
  %v1660 = vunpack.c.l.b16 %v319
  %v1661 = vunpack.c.h.b16 %v319
  %v1662 = vunpack.c.l.b16 %v320
  %v1663 = vunpack.c.h.b16 %v320
  %v1664 = vunpack.c.l.b16 %v321
  %v1665 = vunpack.c.h.b16 %v321
  %v1666 = vunpack.c.l.b16 %v322
  %v1667 = vunpack.c.h.b16 %v322
  %v1668 = vunpack.c.l.b16 %v323
  %v1669 = vunpack.c.h.b16 %v323
  %v1670 = vunpack.c.l.b16 %v324
  %v1671 = vunpack.c.h.b16 %v324
  %v1672 = vunpack.c.l.b16 %v325
  %v1673 = vunpack.c.h.b16 %v325
  %v1674 = vunpack.c.l.b16 %v326
  %v1675 = vunpack.c.h.b16 %v326
  %v1676 = vunpack.c.l.b16 %v327
  %v1677 = vunpack.c.h.b16 %v327
  %v1678 = vunpack.c.l.b16 %v328
  %v1679 = vunpack.c.h.b16 %v328
  %v1680 = vunpack.c.l.b16 %v329
  %v1681 = vunpack.c.h.b16 %v329
  %v1682 = vunpack.c.l.b16 %v330
  %v1683 = vunpack.c.h.b16 %v330
  %v1684 = vunpack.c.l.b16 %v331
  %v1685 = vunpack.c.h.b16 %v331
  %v1686 = vunpack.c.l.b16 %v332
  %v1687 = vunpack.c.h.b16 %v332
  %v1688 = vunpack.c.l.b16 %v333
  %v1689 = vunpack.c.h.b16 %v333
  %v1690 = vunpack.c.l.b16 %v334
  %v1691 = vunpack.c.h.b16 %v334
  %v1692 = vunpack.c.l.b16 %v335
  %v1693 = vunpack.c.h.b16 %v335
  %v1694 = vunpack.c.l.b16 %v336
  %v1695 = vunpack.c.h.b16 %v336
  %v1696 = vunpack.c.l.b16 %v337
  %v1697 = vunpack.c.h.b16 %v337
  %v1698 = vunpack.c.l.b16 %v338
  %v1699 = vunpack.c.h.b16 %v338
  %v1700 = vunpack.c.l.b16 %v339
  %v1701 = vunpack.c.h.b16 %v339
  %v1702 = vunpack.c.l.b16 %v340
  %v1703 = vunpack.c.h.b16 %v340
  %v1704 = vunpack.c.l.b16 %v341
  %v1705 = vunpack.c.h.b16 %v341
  %v1706 = vunpack.c.l.b16 %v342
  %v1707 = vunpack.c.h.b16 %v342
  %v1708 = vunpack.c.l.b16 %v343
  %v1709 = vunpack.c.h.b16 %v343
  %v1710 = vunpack.c.l.b16 %v344
  %v1711 = vunpack.c.h.b16 %v344
  %v1712 = vunpack.c.l.b16 %v345
  %v1713 = vunpack.c.h.b16 %v345
  %v1714 = vunpack.c.l.b16 %v346
  %v1715 = vunpack.c.h.b16 %v346
  %v1716 = vunpack.c.l.b16 %v347
  %v1717 = vunpack.c.h.b16 %v347
  %v1718 = vunpack.c.l.b16 %v348
  %v1719 = vunpack.c.h.b16 %v348
  %v1720 = vunpack.c.l.b16 %v349
  %v1721 = vunpack.c.h.b16 %v349
  %v1722 = vunpack.c.l.b16 %v350
  %v1723 = vunpack.c.h.b16 %v350
  %v1724 = vunpack.c.l.b16 %v351
  %v1725 = vunpack.c.h.b16 %v351
  %v1726 = vunpack.c.l.b16 %v352
  %v1727 = vunpack.c.h.b16 %v352
  %v1728 = vunpack.c.l.b16 %v353
  %v1729 = vunpack.c.h.b16 %v353
  %v1730 = vunpack.c.l.b16 %v354
  %v1731 = vunpack.c.h.b16 %v354
  %v1732 = vunpack.c.l.b16 %v355
  %v1733 = vunpack.c.h.b16 %v355
  %v1734 = vunpack.c.l.b16 %v356
  %v1735 = vunpack.c.h.b16 %v356
  %v1736 = vunpack.c.l.b16 %v357
  %v1737 = vunpack.c.h.b16 %v357
  %v1738 = vunpack.c.l.b16 %v358
  %v1739 = vunpack.c.h.b16 %v358
  %v1740 = vunpack.c.l.b16 %v359
  %v1741 = vunpack.c.h.b16 %v359
  %v1742 = vunpack.c.l.b16 %v360
  %v1743 = vunpack.c.h.b16 %v360
  %v1744 = vunpack.c.l.b16 %v361
  %v1745 = vunpack.c.h.b16 %v361
  %v1746 = vunpack.c.l.b16 %v362
  %v1747 = vunpack.c.h.b16 %v362
  %v1748 = vunpack.c.l.b16 %v363
  %v1749 = vunpack.c.h.b16 %v363
  %v1750 = vunpack.c.l.b16 %v364
  %v1751 = vunpack.c.h.b16 %v364
  %v1752 = vunpack.c.l.b16 %v365
  %v1753 = vunpack.c.h.b16 %v365
  %v1754 = vunpack.c.l.b16 %v366
  %v1755 = vunpack.c.h.b16 %v366
  %v1756 = vunpack.c.l.b16 %v367
  %v1757 = vunpack.c.h.b16 %v367
  %v1758 = vunpack.c.l.b16 %v368
  %v1759 = vunpack.c.h.b16 %v368
  %v1760 = vunpack.c.l.b16 %v369
  %v1761 = vunpack.c.h.b16 %v369
  %v1762 = vunpack.c.l.b16 %v370
  %v1763 = vunpack.c.h.b16 %v370
  %v1764 = vunpack.c.l.b16 %v371
  %v1765 = vunpack.c.h.b16 %v371
  %v1766 = vunpack.c.l.b16 %v372
  %v1767 = vunpack.c.h.b16 %v372
  %v1768 = vunpack.c.l.b16 %v373
  %v1769 = vunpack.c.h.b16 %v373
  %v1770 = vunpack.c.l.b16 %v374
  %v1771 = vunpack.c.h.b16 %v374
  %v1772 = vunpack.c.l.b16 %v375
  %v1773 = vunpack.c.h.b16 %v375
  %v1774 = vunpack.c.l.b16 %v376
  %v1775 = vunpack.c.h.b16 %v376
  %v1776 = vunpack.c.l.b16 %v377
  %v1777 = vunpack.c.h.b16 %v377
  %v1778 = vunpack.c.l.b16 %v378
  %v1779 = vunpack.c.h.b16 %v378
  %v1780 = vunpack.c.l.b16 %v379
  %v1781 = vunpack.c.h.b16 %v379
  %v1782 = vunpack.c.l.b16 %v380
  %v1783 = vunpack.c.h.b16 %v380
  %v1784 = vunpack.c.l.b16 %v381
  %v1785 = vunpack.c.h.b16 %v381
  %v1786 = vunpack.c.l.b16 %v382
  %v1787 = vunpack.c.h.b16 %v382
  %v1788 = vunpack.c.l.b16 %v383
  %v1789 = vunpack.c.h.b16 %v383
  %v1790 = vunpack.c.l.b16 %v384
  %v1791 = vunpack.c.h.b16 %v384
  %v1792 = vunpack.c.l.b16 %v385
  %v1793 = vunpack.c.h.b16 %v385
  %v1794 = vunpack.c.l.b16 %v386
  %v1795 = vunpack.c.h.b16 %v386
  %v1796 = vunpack.c.l.b16 %v387
  %v1797 = vunpack.c.h.b16 %v387
  %v1798 = vunpack.c.l.b16 %v388
  %v1799 = vunpack.c.h.b16 %v388
  %v1800 = vunpack.c.l.b16 %v389
  %v1801 = vunpack.c.h.b16 %v389
  %v1802 = vunpack.c.l.b16 %v390
  %v1803 = vunpack.c.h.b16 %v390
  %v1804 = vunpack.c.l.b16 %v391
  %v1805 = vunpack.c.h.b16 %v391
  %v1806 = vunpack.c.l.b16 %v392
  %v1807 = vunpack.c.h.b16 %v392
  %v1808 = vunpack.c.l.b16 %v393
  %v1809 = vunpack.c.h.b16 %v393
  %v1810 = vunpack.c.l.b16 %v394
  %v1811 = vunpack.c.h.b16 %v394
  %v1812 = vunpack.c.l.b16 %v395
  %v1813 = vunpack.c.h.b16 %v395
  %v1814 = vunpack.c.l.b16 %v396
  %v1815 = vunpack.c.h.b16 %v396
  %v1816 = vunpack.c.l.b16 %v397
  %v1817 = vunpack.c.h.b16 %v397
  %v1818 = vunpack.c.l.b16 %v398
  %v1819 = vunpack.c.h.b16 %v398
  %v1820 = vunpack.c.l.b16 %v399
  %v1821 = vunpack.c.h.b16 %v399
  %v1822 = vunpack.c.l.b16 %v400
  %v1823 = vunpack.c.h.b16 %v400
  %v1824 = vunpack.c.l.b16 %v401
  %v1825 = vunpack.c.h.b16 %v401
  %v1826 = vunpack.c.l.b16 %v402
  %v1827 = vunpack.c.h.b16 %v402
  %v1828 = vunpack.c.l.b16 %v403
  %v1829 = vunpack.c.h.b16 %v403
  %v1830 = vunpack.c.l.b16 %v404
  %v1831 = vunpack.c.h.b16 %v404
  %v1832 = vunpack.c.l.b16 %v405
  %v1833 = vunpack.c.h.b16 %v405
  %v1834 = vunpack.c.l.b16 %v406
  %v1835 = vunpack.c.h.b16 %v406
  %v1836 = vunpack.c.l.b16 %v407
  %v1837 = vunpack.c.h.b16 %v407
  %v1838 = vunpack.c.l.b16 %v408
  %v1839 = vunpack.c.h.b16 %v408
  %v1840 = vunpack.c.l.b16 %v409
  %v1841 = vunpack.c.h.b16 %v409
  %v1842 = vunpack.c.l.b16 %v410
  %v1843 = vunpack.c.h.b16 %v410
  %v1844 = vunpack.c.l.b16 %v411
  %v1845 = vunpack.c.h.b16 %v411
  %v1846 = vunpack.c.l.b16 %v412
  %v1847 = vunpack.c.h.b16 %v412
  %v1848 = vunpack.c.l.b16 %v413
  %v1849 = vunpack.c.h.b16 %v413
  %v1850 = vunpack.c.l.b16 %v414
  %v1851 = vunpack.c.h.b16 %v414
  %v1852 = vunpack.c.l.b16 %v415
  %v1853 = vunpack.c.h.b16 %v415
  %v1854 = vunpack.c.l.b16 %v416
  %v1855 = vunpack.c.h.b16 %v416
  %v1856 = vunpack.c.l.b16 %v417
  %v1857 = vunpack.c.h.b16 %v417
  %v1858 = vunpack.c.l.b16 %v418
  %v1859 = vunpack.c.h.b16 %v418
  %v1860 = vunpack.c.l.b16 %v419
  %v1861 = vunpack.c.h.b16 %v419
  %v1862 = vunpack.c.l.b16 %v420
  %v1863 = vunpack.c.h.b16 %v420
  %v1864 = vunpack.c.l.b16 %v421
  %v1865 = vunpack.c.h.b16 %v421
  %v1866 = vunpack.c.l.b16 %v422
  %v1867 = vunpack.c.h.b16 %v422
  %v1868 = vunpack.c.l.b16 %v423
  %v1869 = vunpack.c.h.b16 %v423
  %v1870 = vunpack.c.l.b16 %v424
  %v1871 = vunpack.c.h.b16 %v424
  %v1872 = vunpack.c.l.b16 %v425
  %v1873 = vunpack.c.h.b16 %v425
  %v1874 = vunpack.c.l.b16 %v426
  %v1875 = vunpack.c.h.b16 %v426
  %v1876 = vunpack.c.l.b16 %v427
  %v1877 = vunpack.c.h.b16 %v427
  %v1878 = vunpack.c.l.b16 %v428
  %v1879 = vunpack.c.h.b16 %v428
  %v1880 = vunpack.c.l.b16 %v429
  %v1881 = vunpack.c.h.b16 %v429
  %v1882 = vunpack.c.l.b16 %v430
  %v1883 = vunpack.c.h.b16 %v430
  %v1884 = vunpack.c.l.b16 %v431
  %v1885 = vunpack.c.h.b16 %v431
  %v1886 = vunpack.c.l.b16 %v432
  %v1887 = vunpack.c.h.b16 %v432
  %v1888 = vunpack.c.l.b16 %v433
  %v1889 = vunpack.c.h.b16 %v433
  %v1890 = vunpack.c.l.b16 %v434
  %v1891 = vunpack.c.h.b16 %v434
  %v1892 = vunpack.c.l.b16 %v435
  %v1893 = vunpack.c.h.b16 %v435
  %v1894 = vunpack.c.l.b16 %v436
  %v1895 = vunpack.c.h.b16 %v436
  %v1896 = vunpack.c.l.b16 %v437
  %v1897 = vunpack.c.h.b16 %v437
  %v1898 = vunpack.c.l.b16 %v438
  %v1899 = vunpack.c.h.b16 %v438
  %v1900 = vunpack.c.l.b16 %v439
  %v1901 = vunpack.c.h.b16 %v439
  %v1902 = vunpack.c.l.b16 %v440
  %v1903 = vunpack.c.h.b16 %v440
  %v1904 = vunpack.c.l.b16 %v441
  %v1905 = vunpack.c.h.b16 %v441
  %v1906 = vunpack.c.l.b16 %v442
  %v1907 = vunpack.c.h.b16 %v442
  %v1908 = vunpack.c.l.b16 %v443
  %v1909 = vunpack.c.h.b16 %v443
  %v1910 = vunpack.c.l.b16 %v444
  %v1911 = vunpack.c.h.b16 %v444
  %v1912 = vunpack.c.l.b16 %v445
  %v1913 = vunpack.c.h.b16 %v445
  %v1914 = vunpack.c.l.b16 %v446
  %v1915 = vunpack.c.h.b16 %v446
  %v1916 = vunpack.c.l.b16 %v447
  %v1917 = vunpack.c.h.b16 %v447
  %v1918 = vunpack.c.l.b16 %v448
  %v1919 = vunpack.c.h.b16 %v448
  %v1920 = vunpack.c.l.b16 %v449
  %v1921 = vunpack.c.h.b16 %v449
  %v1922 = vunpack.c.l.b16 %v450
  %v1923 = vunpack.c.h.b16 %v450
  %v1924 = vunpack.c.l.b16 %v451
  %v1925 = vunpack.c.h.b16 %v451
  %v1926 = vunpack.c.l.b16 %v452
  %v1927 = vunpack.c.h.b16 %v452
  %v1928 = vunpack.c.l.b16 %v453
  %v1929 = vunpack.c.h.b16 %v453
  %v1930 = vunpack.c.l.b16 %v454
  %v1931 = vunpack.c.h.b16 %v454
  %v1932 = vunpack.c.l.b16 %v455
  %v1933 = vunpack.c.h.b16 %v455
  %v1934 = vunpack.c.l.b16 %v456
  %v1935 = vunpack.c.h.b16 %v456
  %v1936 = vunpack.c.l.b16 %v457
  %v1937 = vunpack.c.h.b16 %v457
  %v1938 = vunpack.c.l.b16 %v458
  %v1939 = vunpack.c.h.b16 %v458
  %v1940 = vunpack.c.l.b16 %v459
  %v1941 = vunpack.c.h.b16 %v459
  %v1942 = vunpack.c.l.b16 %v460
  %v1943 = vunpack.c.h.b16 %v460
  %v1944 = vunpack.c.l.b16 %v461
  %v1945 = vunpack.c.h.b16 %v461
  %v1946 = vunpack.c.l.b16 %v462
  %v1947 = vunpack.c.h.b16 %v462
  %v1948 = vunpack.c.l.b16 %v463
  %v1949 = vunpack.c.h.b16 %v463
  %v1950 = vunpack.c.l.b16 %v464
  %v1951 = vunpack.c.h.b16 %v464
  %v1952 = vunpack.c.l.b16 %v465
  %v1953 = vunpack.c.h.b16 %v465
  %v1954 = vunpack.c.l.b16 %v466
  %v1955 = vunpack.c.h.b16 %v466
  %v1956 = vunpack.c.l.b16 %v467
  %v1957 = vunpack.c.h.b16 %v467
  %v1958 = vunpack.c.l.b16 %v468
  %v1959 = vunpack.c.h.b16 %v468
  %v1960 = vunpack.c.l.b16 %v469
  %v1961 = vunpack.c.h.b16 %v469
  %v1962 = vunpack.c.l.b16 %v470
  %v1963 = vunpack.c.h.b16 %v470
  %v1964 = vunpack.c.l.b16 %v471
  %v1965 = vunpack.c.h.b16 %v471
  %v1966 = vunpack.c.l.b16 %v472
  %v1967 = vunpack.c.h.b16 %v472
  %v1968 = vunpack.c.l.b16 %v473
  %v1969 = vunpack.c.h.b16 %v473
  %v1970 = vunpack.c.l.b16 %v474
  %v1971 = vunpack.c.h.b16 %v474
  %v1972 = vunpack.c.l.b16 %v475
  %v1973 = vunpack.c.h.b16 %v475
  %v1974 = vunpack.c.l.b16 %v476
  %v1975 = vunpack.c.h.b16 %v476
  %v1976 = vunpack.c.l.b16 %v477
  %v1977 = vunpack.c.h.b16 %v477
  %v1978 = vunpack.c.l.b16 %v478
  %v1979 = vunpack.c.h.b16 %v478
  %v1980 = vunpack.c.l.b16 %v479
  %v1981 = vunpack.c.h.b16 %v479
  %v1982 = vunpack.c.l.b16 %v480
  %v1983 = vunpack.c.h.b16 %v480
  %v1984 = vunpack.c.l.b16 %v481
  %v1985 = vunpack.c.h.b16 %v481
  %v1986 = vunpack.c.l.b16 %v482
  %v1987 = vunpack.c.h.b16 %v482
  %v1988 = vunpack.c.l.b16 %v483
  %v1989 = vunpack.c.h.b16 %v483
  %v1990 = vunpack.c.l.b16 %v484
  %v1991 = vunpack.c.h.b16 %v484
  %v1992 = vunpack.c.l.b16 %v485
  %v1993 = vunpack.c.h.b16 %v485
  %v1994 = vunpack.c.l.b16 %v486
  %v1995 = vunpack.c.h.b16 %v486
  %v1996 = vunpack.c.l.b16 %v487
  %v1997 = vunpack.c.h.b16 %v487
  %v1998 = vunpack.c.l.b16 %v488
  %v1999 = vunpack.c.h.b16 %v488
  %v2000 = vunpack.c.l.b16 %v489
  %v2001 = vunpack.c.h.b16 %v489
  %v2002 = vunpack.c.l.b16 %v490
  %v2003 = vunpack.c.h.b16 %v490
  %v2004 = vunpack.c.l.b16 %v491
  %v2005 = vunpack.c.h.b16 %v491
  %v2006 = vunpack.c.l.b16 %v492
  %v2007 = vunpack.c.h.b16 %v492
  %v2008 = vunpack.c.l.b16 %v493
  %v2009 = vunpack.c.h.b16 %v493
  %v2010 = vunpack.c.l.b16 %v494
  %v2011 = vunpack.c.h.b16 %v494
  %v2012 = vunpack.c.l.b16 %v495
  %v2013 = vunpack.c.h.b16 %v495
  %v2014 = vunpack.c.l.b16 %v496
  %v2015 = vunpack.c.h.b16 %v496
  %v2016 = vunpack.c.l.b16 %v497
  %v2017 = vunpack.c.h.b16 %v497
  %v2018 = vunpack.c.l.b16 %v498
  %v2019 = vunpack.c.h.b16 %v498
  %v2020 = vunpack.c.l.b16 %v499
  %v2021 = vunpack.c.h.b16 %v499
  %v2022 = vunpack.c.l.b16 %v500
  %v2023 = vunpack.c.h.b16 %v500
  %v2024 = vunpack.c.l.b16 %v501
  %v2025 = vunpack.c.h.b16 %v501
  %v2026 = vunpack.c.l.b16 %v502
  %v2027 = vunpack.c.h.b16 %v502
  %v2028 = vunpack.c.l.b16 %v503
  %v2029 = vunpack.c.h.b16 %v503
  %v2030 = vunpack.c.l.b16 %v504
  %v2031 = vunpack.c.h.b16 %v504
  %v2032 = vunpack.c.l.b16 %v505
  %v2033 = vunpack.c.h.b16 %v505
  %v2034 = vunpack.c.l.b16 %v506
  %v2035 = vunpack.c.h.b16 %v506
  %v2036 = vunpack.c.l.b16 %v507
  %v2037 = vunpack.c.h.b16 %v507
  %v2038 = vunpack.c.l.b16 %v508
  %v2039 = vunpack.c.h.b16 %v508
  %v2040 = vunpack.c.l.b16 %v509
  %v2041 = vunpack.c.h.b16 %v509
  %v2042 = vunpack.c.l.b16 %v510
  %v2043 = vunpack.c.h.b16 %v510
  %v2044 = vunpack.c.l.b16 %v511
  %v2045 = vunpack.c.h.b16 %v511
  %v2046 = vunpack.c.l.b16 %v512
  %v2047 = vunpack.c.h.b16 %v512
  %v2048 = vunpack.c.l.b16 %v513
  %v2049 = vunpack.c.h.b16 %v513
  %v2050 = vunpack.c.l.b16 %v514
  %v2051 = vunpack.c.h.b16 %v514
  %v2052 = vunpack.c.l.b16 %v515
  %v2053 = vunpack.c.h.b16 %v515
  %v2054 = vunpack.c.l.b16 %v516
  %v2055 = vunpack.c.h.b16 %v516
  %v2056 = vunpack.c.l.b16 %v517
  %v2057 = vunpack.c.h.b16 %v517
  %v2058 = vunpack.c.l.b16 %v518
  %v2059 = vunpack.c.h.b16 %v518
  %v2060 = vunpack.c.l.b16 %v519
  %v2061 = vunpack.c.h.b16 %v519
  %v2062 = vunpack.c.l.b16 %v520
  %v2063 = vunpack.c.h.b16 %v520
  %v2064 = vunpack.c.l.b16 %v521
  %v2065 = vunpack.c.h.b16 %v521
  %v2066 = vunpack.c.l.b16 %v522
  %v2067 = vunpack.c.h.b16 %v522
  %v2068 = vunpack.c.l.b16 %v523
  %v2069 = vunpack.c.h.b16 %v523
  %v2070 = vunpack.c.l.b16 %v524
  %v2071 = vunpack.c.h.b16 %v524
  %v2072 = vunpack.c.l.b16 %v525
  %v2073 = vunpack.c.h.b16 %v525
  %v2074 = vunpack.c.l.b16 %v526
  %v2075 = vunpack.c.h.b16 %v526
  %v2076 = vunpack.c.l.b16 %v527
  %v2077 = vunpack.c.h.b16 %v527
  %v2078 = vunpack.c.l.b16 %v528
  %v2079 = vunpack.c.h.b16 %v528
  %v2080 = vunpack.c.l.b16 %v529
  %v2081 = vunpack.c.h.b16 %v529
  %v2082 = vunpack.c.l.b16 %v530
  %v2083 = vunpack.c.h.b16 %v530
  %v2084 = vunpack.c.l.b16 %v531
  %v2085 = vunpack.c.h.b16 %v531
  %v2086 = vunpack.c.l.b16 %v532
  %v2087 = vunpack.c.h.b16 %v532
  %v2088 = vunpack.c.l.b16 %v533
  %v2089 = vunpack.c.h.b16 %v533
  %v2090 = vpack.c.b16 %v1082, %v1066
  %v2091 = vpack.c.b16 %v1083, %v1067
  %v2092 = vpack.c.b16 %v1084, %v1068
  %v2093 = vpack.c.b16 %v1085, %v1069
  %v2094 = vpack.c.b16 %v1086, %v1070
  %v2095 = vpack.c.b16 %v1087, %v1071
  %v2096 = vpack.c.b16 %v1088, %v1072
  %v2097 = vpack.c.b16 %v1089, %v1073
  %v2098 = vpack.c.b16 %v1090, %v1074
  %v2099 = vpack.c.b16 %v1091, %v1075
  %v2100 = vpack.c.b16 %v1092, %v1076
  %v2101 = vpack.c.b16 %v1093, %v1077
  %v2102 = vpack.c.b16 %v1094, %v1078
  %v2103 = vpack.c.b16 %v1095, %v1079
  %v2104 = vpack.c.b16 %v1096, %v1080
  %v2105 = vpack.c.b16 %v1097, %v1081
  %v2106 = vpack.c.b16 %v1114, %v1098
  %v2107 = vpack.c.b16 %v1115, %v1099
  %v2108 = vpack.c.b16 %v1116, %v1100
  %v2109 = vpack.c.b16 %v1117, %v1101
  %v2110 = vpack.c.b16 %v1118, %v1102
  %v2111 = vpack.c.b16 %v1119, %v1103
  %v2112 = vpack.c.b16 %v1120, %v1104
  %v2113 = vpack.c.b16 %v1121, %v1105
  %v2114 = vpack.c.b16 %v1122, %v1106
  %v2115 = vpack.c.b16 %v1123, %v1107
  %v2116 = vpack.c.b16 %v1124, %v1108
  %v2117 = vpack.c.b16 %v1125, %v1109
  %v2118 = vpack.c.b16 %v1126, %v1110
  %v2119 = vpack.c.b16 %v1127, %v1111
  %v2120 = vpack.c.b16 %v1128, %v1112
  %v2121 = vpack.c.b16 %v1129, %v1113
  %v2122 = vpack.c.b16 %v1146, %v1130
  %v2123 = vpack.c.b16 %v1147, %v1131
  %v2124 = vpack.c.b16 %v1148, %v1132
  %v2125 = vpack.c.b16 %v1149, %v1133
  %v2126 = vpack.c.b16 %v1150, %v1134
  %v2127 = vpack.c.b16 %v1151, %v1135
  %v2128 = vpack.c.b16 %v1152, %v1136
  %v2129 = vpack.c.b16 %v1153, %v1137
  %v2130 = vpack.c.b16 %v1154, %v1138
  %v2131 = vpack.c.b16 %v1155, %v1139
  %v2132 = vpack.c.b16 %v1156, %v1140
  %v2133 = vpack.c.b16 %v1157, %v1141
  %v2134 = vpack.c.b16 %v1158, %v1142
  %v2135 = vpack.c.b16 %v1159, %v1143
  %v2136 = vpack.c.b16 %v1160, %v1144
  %v2137 = vpack.c.b16 %v1161, %v1145
  %v2138 = vpack.c.b16 %v1178, %v1162
  %v2139 = vpack.c.b16 %v1179, %v1163
  %v2140 = vpack.c.b16 %v1180, %v1164
  %v2141 = vpack.c.b16 %v1181, %v1165
  %v2142 = vpack.c.b16 %v1182, %v1166
  %v2143 = vpack.c.b16 %v1183, %v1167
  %v2144 = vpack.c.b16 %v1184, %v1168
  %v2145 = vpack.c.b16 %v1185, %v1169
  %v2146 = vpack.c.b16 %v1186, %v1170
  %v2147 = vpack.c.b16 %v1187, %v1171
  %v2148 = vpack.c.b16 %v1188, %v1172
  %v2149 = vpack.c.b16 %v1189, %v1173
  %v2150 = vpack.c.b16 %v1190, %v1174
  %v2151 = vpack.c.b16 %v1191, %v1175
  %v2152 = vpack.c.b16 %v1192, %v1176
  %v2153 = vpack.c.b16 %v1193, %v1177
  %v2154 = vpack.c.b16 %v1210, %v1194
  %v2155 = vpack.c.b16 %v1211, %v1195
  %v2156 = vpack.c.b16 %v1212, %v1196
  %v2157 = vpack.c.b16 %v1213, %v1197
  %v2158 = vpack.c.b16 %v1214, %v1198
  %v2159 = vpack.c.b16 %v1215, %v1199
  %v2160 = vpack.c.b16 %v1216, %v1200
  %v2161 = vpack.c.b16 %v1217, %v1201
  %v2162 = vpack.c.b16 %v1218, %v1202
  %v2163 = vpack.c.b16 %v1219, %v1203
  %v2164 = vpack.c.b16 %v1220, %v1204
  %v2165 = vpack.c.b16 %v1221, %v1205
  %v2166 = vpack.c.b16 %v1222, %v1206
  %v2167 = vpack.c.b16 %v1223, %v1207
  %v2168 = vpack.c.b16 %v1224, %v1208
  %v2169 = vpack.c.b16 %v1225, %v1209
  %v2170 = vpack.c.b16 %v1242, %v1226
  %v2171 = vpack.c.b16 %v1243, %v1227
  %v2172 = vpack.c.b16 %v1244, %v1228
  %v2173 = vpack.c.b16 %v1245, %v1229
  %v2174 = vpack.c.b16 %v1246, %v1230
  %v2175 = vpack.c.b16 %v1247, %v1231
  %v2176 = vpack.c.b16 %v1248, %v1232
  %v2177 = vpack.c.b16 %v1249, %v1233
  %v2178 = vpack.c.b16 %v1250, %v1234
  %v2179 = vpack.c.b16 %v1251, %v1235
  %v2180 = vpack.c.b16 %v1252, %v1236
  %v2181 = vpack.c.b16 %v1253, %v1237
  %v2182 = vpack.c.b16 %v1254, %v1238
  %v2183 = vpack.c.b16 %v1255, %v1239
  %v2184 = vpack.c.b16 %v1256, %v1240
  %v2185 = vpack.c.b16 %v1257, %v1241
  %v2186 = vpack.c.b16 %v1274, %v1258
  %v2187 = vpack.c.b16 %v1275, %v1259
  %v2188 = vpack.c.b16 %v1276, %v1260
  %v2189 = vpack.c.b16 %v1277, %v1261
  %v2190 = vpack.c.b16 %v1278, %v1262
  %v2191 = vpack.c.b16 %v1279, %v1263
  %v2192 = vpack.c.b16 %v1280, %v1264
  %v2193 = vpack.c.b16 %v1281, %v1265
  %v2194 = vpack.c.b16 %v1282, %v1266
  %v2195 = vpack.c.b16 %v1283, %v1267
  %v2196 = vpack.c.b16 %v1284, %v1268
  %v2197 = vpack.c.b16 %v1285, %v1269
  %v2198 = vpack.c.b16 %v1286, %v1270
  %v2199 = vpack.c.b16 %v1287, %v1271
  %v2200 = vpack.c.b16 %v1288, %v1272
  %v2201 = vpack.c.b16 %v1289, %v1273
  %v2202 = vpack.c.b16 %v1306, %v1290
  %v2203 = vpack.c.b16 %v1307, %v1291
  %v2204 = vpack.c.b16 %v1308, %v1292
  %v2205 = vpack.c.b16 %v1309, %v1293
  %v2206 = vpack.c.b16 %v1310, %v1294
  %v2207 = vpack.c.b16 %v1311, %v1295
  %v2208 = vpack.c.b16 %v1312, %v1296
  %v2209 = vpack.c.b16 %v1313, %v1297
  %v2210 = vpack.c.b16 %v1314, %v1298
  %v2211 = vpack.c.b16 %v1315, %v1299
  %v2212 = vpack.c.b16 %v1316, %v1300
  %v2213 = vpack.c.b16 %v1317, %v1301
  %v2214 = vpack.c.b16 %v1318, %v1302
  %v2215 = vpack.c.b16 %v1319, %v1303
  %v2216 = vpack.c.b16 %v1320, %v1304
  %v2217 = vpack.c.b16 %v1321, %v1305
  %v2218 = vpack.c.b16 %v1338, %v1322
  %v2219 = vpack.c.b16 %v1339, %v1323
  %v2220 = vpack.c.b16 %v1340, %v1324
  %v2221 = vpack.c.b16 %v1341, %v1325
  %v2222 = vpack.c.b16 %v1342, %v1326
  %v2223 = vpack.c.b16 %v1343, %v1327
  %v2224 = vpack.c.b16 %v1344, %v1328
  %v2225 = vpack.c.b16 %v1345, %v1329
  %v2226 = vpack.c.b16 %v1346, %v1330
  %v2227 = vpack.c.b16 %v1347, %v1331
  %v2228 = vpack.c.b16 %v1348, %v1332
  %v2229 = vpack.c.b16 %v1349, %v1333
  %v2230 = vpack.c.b16 %v1350, %v1334
  %v2231 = vpack.c.b16 %v1351, %v1335
  %v2232 = vpack.c.b16 %v1352, %v1336
  %v2233 = vpack.c.b16 %v1353, %v1337
  %v2234 = vpack.c.b16 %v1370, %v1354
  %v2235 = vpack.c.b16 %v1371, %v1355
  %v2236 = vpack.c.b16 %v1372, %v1356
  %v2237 = vpack.c.b16 %v1373, %v1357
  %v2238 = vpack.c.b16 %v1374, %v1358
  %v2239 = vpack.c.b16 %v1375, %v1359
  %v2240 = vpack.c.b16 %v1376, %v1360
  %v2241 = vpack.c.b16 %v1377, %v1361
  %v2242 = vpack.c.b16 %v1378, %v1362
  %v2243 = vpack.c.b16 %v1379, %v1363
  %v2244 = vpack.c.b16 %v1380, %v1364
  %v2245 = vpack.c.b16 %v1381, %v1365
  %v2246 = vpack.c.b16 %v1382, %v1366
  %v2247 = vpack.c.b16 %v1383, %v1367
  %v2248 = vpack.c.b16 %v1384, %v1368
  %v2249 = vpack.c.b16 %v1385, %v1369
  %v2250 = vpack.c.b16 %v1402, %v1386
  %v2251 = vpack.c.b16 %v1403, %v1387
  %v2252 = vpack.c.b16 %v1404, %v1388
  %v2253 = vpack.c.b16 %v1405, %v1389
  %v2254 = vpack.c.b16 %v1406, %v1390
  %v2255 = vpack.c.b16 %v1407, %v1391
  %v2256 = vpack.c.b16 %v1408, %v1392
  %v2257 = vpack.c.b16 %v1409, %v1393
  %v2258 = vpack.c.b16 %v1410, %v1394
  %v2259 = vpack.c.b16 %v1411, %v1395
  %v2260 = vpack.c.b16 %v1412, %v1396
  %v2261 = vpack.c.b16 %v1413, %v1397
  %v2262 = vpack.c.b16 %v1414, %v1398
  %v2263 = vpack.c.b16 %v1415, %v1399
  %v2264 = vpack.c.b16 %v1416, %v1400
  %v2265 = vpack.c.b16 %v1417, %v1401
  %v2266 = vpack.c.b16 %v1434, %v1418
  %v2267 = vpack.c.b16 %v1435, %v1419
  %v2268 = vpack.c.b16 %v1436, %v1420
  %v2269 = vpack.c.b16 %v1437, %v1421
  %v2270 = vpack.c.b16 %v1438, %v1422
  %v2271 = vpack.c.b16 %v1439, %v1423
  %v2272 = vpack.c.b16 %v1440, %v1424
  %v2273 = vpack.c.b16 %v1441, %v1425
  %v2274 = vpack.c.b16 %v1442, %v1426
  %v2275 = vpack.c.b16 %v1443, %v1427
  %v2276 = vpack.c.b16 %v1444, %v1428
  %v2277 = vpack.c.b16 %v1445, %v1429
  %v2278 = vpack.c.b16 %v1446, %v1430
  %v2279 = vpack.c.b16 %v1447, %v1431
  %v2280 = vpack.c.b16 %v1448, %v1432
  %v2281 = vpack.c.b16 %v1449, %v1433
  %v2282 = vpack.c.b16 %v1466, %v1450
  %v2283 = vpack.c.b16 %v1467, %v1451
  %v2284 = vpack.c.b16 %v1468, %v1452
  %v2285 = vpack.c.b16 %v1469, %v1453
  %v2286 = vpack.c.b16 %v1470, %v1454
  %v2287 = vpack.c.b16 %v1471, %v1455
  %v2288 = vpack.c.b16 %v1472, %v1456
  %v2289 = vpack.c.b16 %v1473, %v1457
  %v2290 = vpack.c.b16 %v1474, %v1458
  %v2291 = vpack.c.b16 %v1475, %v1459
  %v2292 = vpack.c.b16 %v1476, %v1460
  %v2293 = vpack.c.b16 %v1477, %v1461
  %v2294 = vpack.c.b16 %v1478, %v1462
  %v2295 = vpack.c.b16 %v1479, %v1463
  %v2296 = vpack.c.b16 %v1480, %v1464
  %v2297 = vpack.c.b16 %v1481, %v1465
  %v2298 = vpack.c.b16 %v1498, %v1482
  %v2299 = vpack.c.b16 %v1499, %v1483
  %v2300 = vpack.c.b16 %v1500, %v1484
  %v2301 = vpack.c.b16 %v1501, %v1485
  %v2302 = vpack.c.b16 %v1502, %v1486
  %v2303 = vpack.c.b16 %v1503, %v1487
  %v2304 = vpack.c.b16 %v1504, %v1488
  %v2305 = vpack.c.b16 %v1505, %v1489
  %v2306 = vpack.c.b16 %v1506, %v1490
  %v2307 = vpack.c.b16 %v1507, %v1491
  %v2308 = vpack.c.b16 %v1508, %v1492
  %v2309 = vpack.c.b16 %v1509, %v1493
  %v2310 = vpack.c.b16 %v1510, %v1494
  %v2311 = vpack.c.b16 %v1511, %v1495
  %v2312 = vpack.c.b16 %v1512, %v1496
  %v2313 = vpack.c.b16 %v1513, %v1497
  %v2314 = vpack.c.b16 %v1530, %v1514
  %v2315 = vpack.c.b16 %v1531, %v1515
  %v2316 = vpack.c.b16 %v1532, %v1516
  %v2317 = vpack.c.b16 %v1533, %v1517
  %v2318 = vpack.c.b16 %v1534, %v1518
  %v2319 = vpack.c.b16 %v1535, %v1519
  %v2320 = vpack.c.b16 %v1536, %v1520
  %v2321 = vpack.c.b16 %v1537, %v1521
  %v2322 = vpack.c.b16 %v1538, %v1522
  %v2323 = vpack.c.b16 %v1539, %v1523
  %v2324 = vpack.c.b16 %v1540, %v1524
  %v2325 = vpack.c.b16 %v1541, %v1525
  %v2326 = vpack.c.b16 %v1542, %v1526
  %v2327 = vpack.c.b16 %v1543, %v1527
  %v2328 = vpack.c.b16 %v1544, %v1528
  %v2329 = vpack.c.b16 %v1545, %v1529
  %v2330 = vpack.c.b16 %v1562, %v1546
  %v2331 = vpack.c.b16 %v1563, %v1547
  %v2332 = vpack.c.b16 %v1564, %v1548
  %v2333 = vpack.c.b16 %v1565, %v1549
  %v2334 = vpack.c.b16 %v1566, %v1550
  %v2335 = vpack.c.b16 %v1567, %v1551
  %v2336 = vpack.c.b16 %v1568, %v1552
  %v2337 = vpack.c.b16 %v1569, %v1553
  %v2338 = vpack.c.b16 %v1570, %v1554
  %v2339 = vpack.c.b16 %v1571, %v1555
  %v2340 = vpack.c.b16 %v1572, %v1556
  %v2341 = vpack.c.b16 %v1573, %v1557
  %v2342 = vpack.c.b16 %v1574, %v1558
  %v2343 = vpack.c.b16 %v1575, %v1559
  %v2344 = vpack.c.b16 %v1576, %v1560
  %v2345 = vpack.c.b16 %v1577, %v1561
  %v2346 = vpack.c.b16 %v1594, %v1578
  %v2347 = vpack.c.b16 %v1595, %v1579
  %v2348 = vpack.c.b16 %v1596, %v1580
  %v2349 = vpack.c.b16 %v1597, %v1581
  %v2350 = vpack.c.b16 %v1598, %v1582
  %v2351 = vpack.c.b16 %v1599, %v1583
  %v2352 = vpack.c.b16 %v1600, %v1584
  %v2353 = vpack.c.b16 %v1601, %v1585
  %v2354 = vpack.c.b16 %v1602, %v1586
  %v2355 = vpack.c.b16 %v1603, %v1587
  %v2356 = vpack.c.b16 %v1604, %v1588
  %v2357 = vpack.c.b16 %v1605, %v1589
  %v2358 = vpack.c.b16 %v1606, %v1590
  %v2359 = vpack.c.b16 %v1607, %v1591
  %v2360 = vpack.c.b16 %v1608, %v1592
  %v2361 = vpack.c.b16 %v1609, %v1593
  %v2362 = vpack.c.b16 %v1626, %v1610
  %v2363 = vpack.c.b16 %v1627, %v1611
  %v2364 = vpack.c.b16 %v1628, %v1612
  %v2365 = vpack.c.b16 %v1629, %v1613
  %v2366 = vpack.c.b16 %v1630, %v1614
  %v2367 = vpack.c.b16 %v1631, %v1615
  %v2368 = vpack.c.b16 %v1632, %v1616
  %v2369 = vpack.c.b16 %v1633, %v1617
  %v2370 = vpack.c.b16 %v1634, %v1618
  %v2371 = vpack.c.b16 %v1635, %v1619
  %v2372 = vpack.c.b16 %v1636, %v1620
  %v2373 = vpack.c.b16 %v1637, %v1621
  %v2374 = vpack.c.b16 %v1638, %v1622
  %v2375 = vpack.c.b16 %v1639, %v1623
  %v2376 = vpack.c.b16 %v1640, %v1624
  %v2377 = vpack.c.b16 %v1641, %v1625
  %v2378 = vpack.c.b16 %v1658, %v1642
  %v2379 = vpack.c.b16 %v1659, %v1643
  %v2380 = vpack.c.b16 %v1660, %v1644
  %v2381 = vpack.c.b16 %v1661, %v1645
  %v2382 = vpack.c.b16 %v1662, %v1646
  %v2383 = vpack.c.b16 %v1663, %v1647
  %v2384 = vpack.c.b16 %v1664, %v1648
  %v2385 = vpack.c.b16 %v1665, %v1649
  %v2386 = vpack.c.b16 %v1666, %v1650
  %v2387 = vpack.c.b16 %v1667, %v1651
  %v2388 = vpack.c.b16 %v1668, %v1652
  %v2389 = vpack.c.b16 %v1669, %v1653
  %v2390 = vpack.c.b16 %v1670, %v1654
  %v2391 = vpack.c.b16 %v1671, %v1655
  %v2392 = vpack.c.b16 %v1672, %v1656
  %v2393 = vpack.c.b16 %v1673, %v1657
  %v2394 = vpack.c.b16 %v1690, %v1674
  %v2395 = vpack.c.b16 %v1691, %v1675
  %v2396 = vpack.c.b16 %v1692, %v1676
  %v2397 = vpack.c.b16 %v1693, %v1677
  %v2398 = vpack.c.b16 %v1694, %v1678
  %v2399 = vpack.c.b16 %v1695, %v1679
  %v2400 = vpack.c.b16 %v1696, %v1680
  %v2401 = vpack.c.b16 %v1697, %v1681
  %v2402 = vpack.c.b16 %v1698, %v1682
  %v2403 = vpack.c.b16 %v1699, %v1683
  %v2404 = vpack.c.b16 %v1700, %v1684
  %v2405 = vpack.c.b16 %v1701, %v1685
  %v2406 = vpack.c.b16 %v1702, %v1686
  %v2407 = vpack.c.b16 %v1703, %v1687
  %v2408 = vpack.c.b16 %v1704, %v1688
  %v2409 = vpack.c.b16 %v1705, %v1689
  %v2410 = vpack.c.b16 %v1722, %v1706
  %v2411 = vpack.c.b16 %v1723, %v1707
  %v2412 = vpack.c.b16 %v1724, %v1708
  %v2413 = vpack.c.b16 %v1725, %v1709
  %v2414 = vpack.c.b16 %v1726, %v1710
  %v2415 = vpack.c.b16 %v1727, %v1711
  %v2416 = vpack.c.b16 %v1728, %v1712
  %v2417 = vpack.c.b16 %v1729, %v1713
  %v2418 = vpack.c.b16 %v1730, %v1714
  %v2419 = vpack.c.b16 %v1731, %v1715
  %v2420 = vpack.c.b16 %v1732, %v1716
  %v2421 = vpack.c.b16 %v1733, %v1717
  %v2422 = vpack.c.b16 %v1734, %v1718
  %v2423 = vpack.c.b16 %v1735, %v1719
  %v2424 = vpack.c.b16 %v1736, %v1720
  %v2425 = vpack.c.b16 %v1737, %v1721
  %v2426 = vpack.c.b16 %v1754, %v1738
  %v2427 = vpack.c.b16 %v1755, %v1739
  %v2428 = vpack.c.b16 %v1756, %v1740
  %v2429 = vpack.c.b16 %v1757, %v1741
  %v2430 = vpack.c.b16 %v1758, %v1742
  %v2431 = vpack.c.b16 %v1759, %v1743
  %v2432 = vpack.c.b16 %v1760, %v1744
  %v2433 = vpack.c.b16 %v1761, %v1745
  %v2434 = vpack.c.b16 %v1762, %v1746
  %v2435 = vpack.c.b16 %v1763, %v1747
  %v2436 = vpack.c.b16 %v1764, %v1748
  %v2437 = vpack.c.b16 %v1765, %v1749
  %v2438 = vpack.c.b16 %v1766, %v1750
  %v2439 = vpack.c.b16 %v1767, %v1751
  %v2440 = vpack.c.b16 %v1768, %v1752
  %v2441 = vpack.c.b16 %v1769, %v1753
  %v2442 = vpack.c.b16 %v1786, %v1770
  %v2443 = vpack.c.b16 %v1787, %v1771
  %v2444 = vpack.c.b16 %v1788, %v1772
  %v2445 = vpack.c.b16 %v1789, %v1773
  %v2446 = vpack.c.b16 %v1790, %v1774
  %v2447 = vpack.c.b16 %v1791, %v1775
  %v2448 = vpack.c.b16 %v1792, %v1776
  %v2449 = vpack.c.b16 %v1793, %v1777
  %v2450 = vpack.c.b16 %v1794, %v1778
  %v2451 = vpack.c.b16 %v1795, %v1779
  %v2452 = vpack.c.b16 %v1796, %v1780
  %v2453 = vpack.c.b16 %v1797, %v1781
  %v2454 = vpack.c.b16 %v1798, %v1782
  %v2455 = vpack.c.b16 %v1799, %v1783
  %v2456 = vpack.c.b16 %v1800, %v1784
  %v2457 = vpack.c.b16 %v1801, %v1785
  %v2458 = vpack.c.b16 %v1818, %v1802
  %v2459 = vpack.c.b16 %v1819, %v1803
  %v2460 = vpack.c.b16 %v1820, %v1804
  %v2461 = vpack.c.b16 %v1821, %v1805
  %v2462 = vpack.c.b16 %v1822, %v1806
  %v2463 = vpack.c.b16 %v1823, %v1807
  %v2464 = vpack.c.b16 %v1824, %v1808
  %v2465 = vpack.c.b16 %v1825, %v1809
  %v2466 = vpack.c.b16 %v1826, %v1810
  %v2467 = vpack.c.b16 %v1827, %v1811
  %v2468 = vpack.c.b16 %v1828, %v1812
  %v2469 = vpack.c.b16 %v1829, %v1813
  %v2470 = vpack.c.b16 %v1830, %v1814
  %v2471 = vpack.c.b16 %v1831, %v1815
  %v2472 = vpack.c.b16 %v1832, %v1816
  %v2473 = vpack.c.b16 %v1833, %v1817
  %v2474 = vpack.c.b16 %v1850, %v1834
  %v2475 = vpack.c.b16 %v1851, %v1835
  %v2476 = vpack.c.b16 %v1852, %v1836
  %v2477 = vpack.c.b16 %v1853, %v1837
  %v2478 = vpack.c.b16 %v1854, %v1838
  %v2479 = vpack.c.b16 %v1855, %v1839
  %v2480 = vpack.c.b16 %v1856, %v1840
  %v2481 = vpack.c.b16 %v1857, %v1841
  %v2482 = vpack.c.b16 %v1858, %v1842
  %v2483 = vpack.c.b16 %v1859, %v1843
  %v2484 = vpack.c.b16 %v1860, %v1844
  %v2485 = vpack.c.b16 %v1861, %v1845
  %v2486 = vpack.c.b16 %v1862, %v1846
  %v2487 = vpack.c.b16 %v1863, %v1847
  %v2488 = vpack.c.b16 %v1864, %v1848
  %v2489 = vpack.c.b16 %v1865, %v1849
  %v2490 = vpack.c.b16 %v1882, %v1866
  %v2491 = vpack.c.b16 %v1883, %v1867
  %v2492 = vpack.c.b16 %v1884, %v1868
  %v2493 = vpack.c.b16 %v1885, %v1869
  %v2494 = vpack.c.b16 %v1886, %v1870
  %v2495 = vpack.c.b16 %v1887, %v1871
  %v2496 = vpack.c.b16 %v1888, %v1872
  %v2497 = vpack.c.b16 %v1889, %v1873
  %v2498 = vpack.c.b16 %v1890, %v1874
  %v2499 = vpack.c.b16 %v1891, %v1875
  %v2500 = vpack.c.b16 %v1892, %v1876
  %v2501 = vpack.c.b16 %v1893, %v1877
  %v2502 = vpack.c.b16 %v1894, %v1878
  %v2503 = vpack.c.b16 %v1895, %v1879
  %v2504 = vpack.c.b16 %v1896, %v1880
  %v2505 = vpack.c.b16 %v1897, %v1881
  %v2506 = vpack.c.b16 %v1914, %v1898
  %v2507 = vpack.c.b16 %v1915, %v1899
  %v2508 = vpack.c.b16 %v1916, %v1900
  %v2509 = vpack.c.b16 %v1917, %v1901
  %v2510 = vpack.c.b16 %v1918, %v1902
  %v2511 = vpack.c.b16 %v1919, %v1903
  %v2512 = vpack.c.b16 %v1920, %v1904
  %v2513 = vpack.c.b16 %v1921, %v1905
  %v2514 = vpack.c.b16 %v1922, %v1906
  %v2515 = vpack.c.b16 %v1923, %v1907
  %v2516 = vpack.c.b16 %v1924, %v1908
  %v2517 = vpack.c.b16 %v1925, %v1909
  %v2518 = vpack.c.b16 %v1926, %v1910
  %v2519 = vpack.c.b16 %v1927, %v1911
  %v2520 = vpack.c.b16 %v1928, %v1912
  %v2521 = vpack.c.b16 %v1929, %v1913
  %v2522 = vpack.c.b16 %v1946, %v1930
  %v2523 = vpack.c.b16 %v1947, %v1931
  %v2524 = vpack.c.b16 %v1948, %v1932
  %v2525 = vpack.c.b16 %v1949, %v1933
  %v2526 = vpack.c.b16 %v1950, %v1934
  %v2527 = vpack.c.b16 %v1951, %v1935
  %v2528 = vpack.c.b16 %v1952, %v1936
  %v2529 = vpack.c.b16 %v1953, %v1937
  %v2530 = vpack.c.b16 %v1954, %v1938
  %v2531 = vpack.c.b16 %v1955, %v1939
  %v2532 = vpack.c.b16 %v1956, %v1940
  %v2533 = vpack.c.b16 %v1957, %v1941
  %v2534 = vpack.c.b16 %v1958, %v1942
  %v2535 = vpack.c.b16 %v1959, %v1943
  %v2536 = vpack.c.b16 %v1960, %v1944
  %v2537 = vpack.c.b16 %v1961, %v1945
  %v2538 = vpack.c.b16 %v1978, %v1962
  %v2539 = vpack.c.b16 %v1979, %v1963
  %v2540 = vpack.c.b16 %v1980, %v1964
  %v2541 = vpack.c.b16 %v1981, %v1965
  %v2542 = vpack.c.b16 %v1982, %v1966
  %v2543 = vpack.c.b16 %v1983, %v1967
  %v2544 = vpack.c.b16 %v1984, %v1968
  %v2545 = vpack.c.b16 %v1985, %v1969
  %v2546 = vpack.c.b16 %v1986, %v1970
  %v2547 = vpack.c.b16 %v1987, %v1971
  %v2548 = vpack.c.b16 %v1988, %v1972
  %v2549 = vpack.c.b16 %v1989, %v1973
  %v2550 = vpack.c.b16 %v1990, %v1974
  %v2551 = vpack.c.b16 %v1991, %v1975
  %v2552 = vpack.c.b16 %v1992, %v1976
  %v2553 = vpack.c.b16 %v1993, %v1977
  %v2554 = vpack.c.b16 %v2010, %v1994
  %v2555 = vpack.c.b16 %v2011, %v1995
  %v2556 = vpack.c.b16 %v2012, %v1996
  %v2557 = vpack.c.b16 %v2013, %v1997
  %v2558 = vpack.c.b16 %v2014, %v1998
  %v2559 = vpack.c.b16 %v2015, %v1999
  %v2560 = vpack.c.b16 %v2016, %v2000
  %v2561 = vpack.c.b16 %v2017, %v2001
  %v2562 = vpack.c.b16 %v2018, %v2002
  %v2563 = vpack.c.b16 %v2019, %v2003
  %v2564 = vpack.c.b16 %v2020, %v2004
  %v2565 = vpack.c.b16 %v2021, %v2005
  %v2566 = vpack.c.b16 %v2022, %v2006
  %v2567 = vpack.c.b16 %v2023, %v2007
  %v2568 = vpack.c.b16 %v2024, %v2008
  %v2569 = vpack.c.b16 %v2025, %v2009
  %v2570 = vpack.c.b16 %v2042, %v2026
  %v2571 = vpack.c.b16 %v2043, %v2027
  %v2572 = vpack.c.b16 %v2044, %v2028
  %v2573 = vpack.c.b16 %v2045, %v2029
  %v2574 = vpack.c.b16 %v2046, %v2030
  %v2575 = vpack.c.b16 %v2047, %v2031
  %v2576 = vpack.c.b16 %v2048, %v2032
  %v2577 = vpack.c.b16 %v2049, %v2033
  %v2578 = vpack.c.b16 %v2050, %v2034
  %v2579 = vpack.c.b16 %v2051, %v2035
  %v2580 = vpack.c.b16 %v2052, %v2036
  %v2581 = vpack.c.b16 %v2053, %v2037
  %v2582 = vpack.c.b16 %v2054, %v2038
  %v2583 = vpack.c.b16 %v2055, %v2039
  %v2584 = vpack.c.b16 %v2056, %v2040
  %v2585 = vpack.c.b16 %v2057, %v2041
  %v2586 = vpack.c.b16 %v2074, %v2058
  %v2587 = vpack.c.b16 %v2075, %v2059
  %v2588 = vpack.c.b16 %v2076, %v2060
  %v2589 = vpack.c.b16 %v2077, %v2061
  %v2590 = vpack.c.b16 %v2078, %v2062
  %v2591 = vpack.c.b16 %v2079, %v2063
  %v2592 = vpack.c.b16 %v2080, %v2064
  %v2593 = vpack.c.b16 %v2081, %v2065
  %v2594 = vpack.c.b16 %v2082, %v2066
  %v2595 = vpack.c.b16 %v2083, %v2067
  %v2596 = vpack.c.b16 %v2084, %v2068
  %v2597 = vpack.c.b16 %v2085, %v2069
  %v2598 = vpack.c.b16 %v2086, %v2070
  %v2599 = vpack.c.b16 %v2087, %v2071
  %v2600 = vpack.c.b16 %v2088, %v2072
  %v2601 = vpack.c.b16 %v2089, %v2073
  %3114 = vmatprep.subr.bf16.mxu0 %v2091
  %3115 = vmatpush1.bf16.msra.mxu0 %v2090
  %3116 = vmatprep.subr.bf16.mxu0 %v2107
  %3117 = vmatpush1.bf16.msra.mxu0 %v2106
  %3118 = vmatprep.subr.bf16.mxu0 %v2123
  %3119 = vmatpush1.bf16.msra.mxu0 %v2122
  %3120 = vmatprep.subr.bf16.mxu0 %v2139
  %3121 = vmatpush1.bf16.msra.mxu0 %v2138
  %3122 = vmatprep.subr.bf16.mxu0 %v2155
  %3123 = vmatpush1.bf16.msra.mxu0 %v2154
  %3124 = vmatprep.subr.bf16.mxu0 %v2171
  %3125 = vmatpush1.bf16.msra.mxu0 %v2170
  %3126 = vmatprep.subr.bf16.mxu0 %v2187
  %3127 = vmatpush1.bf16.msra.mxu0 %v2186
  %3128 = vmatprep.subr.bf16.mxu0 %v2203
  %3129 = vmatpush1.bf16.msra.mxu0 %v2202
  %3130 = vmatprep.subr.bf16.mxu0 %v2219
  %3131 = vmatpush1.bf16.msra.mxu0 %v2218
  %3132 = vmatprep.subr.bf16.mxu0 %v2235
  %3133 = vmatpush1.bf16.msra.mxu0 %v2234
  %3134 = vmatprep.subr.bf16.mxu0 %v2251
  %3135 = vmatpush1.bf16.msra.mxu0 %v2250
  %3136 = vmatprep.subr.bf16.mxu0 %v2267
  %3137 = vmatpush1.bf16.msra.mxu0 %v2266
  %3138 = vmatprep.subr.bf16.mxu0 %v2283
  %3139 = vmatpush1.bf16.msra.mxu0 %v2282
  %3140 = vmatprep.subr.bf16.mxu0 %v2299
  %3141 = vmatpush1.bf16.msra.mxu0 %v2298
  %3142 = vmatprep.subr.bf16.mxu0 %v2315
  %3143 = vmatpush1.bf16.msra.mxu0 %v2314
  %3144 = vmatprep.subr.bf16.mxu0 %v2331
  %3145 = vmatpush1.bf16.msra.mxu0 %v2330
  %3146 = vmatprep.mubr.bf16.mxu0 %v547
  %3147 = vmatmul.mubr.bf16.gmra.mrb[0].mxu0 %v546
  %v3148 = vpop.f32.mrb[0].mxu0
  %v3149 = vadd.f32 %v538, %v3148
  %v3150 = vpop.f32.mrb[0].mxu0
  %v3151 = vadd.f32 %v538, %v3150
  %v3152 = vpop.f32.mrb[0].mxu0
  %v3153 = vpop.f32.mrb[0].mxu0
  %3154 = vdwg.mxu0
  %3155 = vmatprep.subr.bf16.mxu0 %v2347
  %3156 = vmatpush1.bf16.msra.mxu0 %v2346
  %3157 = vmatprep.subr.bf16.mxu0 %v2363
  %3158 = vmatpush1.bf16.msra.mxu0 %v2362
  %3159 = vmatprep.subr.bf16.mxu0 %v2379
  %3160 = vmatpush1.bf16.msra.mxu0 %v2378
  %3161 = vmatprep.subr.bf16.mxu0 %v2395
  %3162 = vmatpush1.bf16.msra.mxu0 %v2394
  %3163 = vmatprep.subr.bf16.mxu0 %v2411
  %3164 = vmatpush1.bf16.msra.mxu0 %v2410
  %3165 = vmatprep.subr.bf16.mxu0 %v2427
  %3166 = vmatpush1.bf16.msra.mxu0 %v2426
  %3167 = vmatprep.subr.bf16.mxu0 %v2443
  %3168 = vmatpush1.bf16.msra.mxu0 %v2442
  %3169 = vmatprep.subr.bf16.mxu0 %v2459
  %3170 = vmatpush1.bf16.msra.mxu0 %v2458
  %3171 = vmatprep.subr.bf16.mxu0 %v2475
  %3172 = vmatpush1.bf16.msra.mxu0 %v2474
  %3173 = vmatprep.subr.bf16.mxu0 %v2491
  %3174 = vmatpush1.bf16.msra.mxu0 %v2490
  %3175 = vmatprep.subr.bf16.mxu0 %v2507
  %3176 = vmatpush1.bf16.msra.mxu0 %v2506
  %3177 = vmatprep.subr.bf16.mxu0 %v2523
  %3178 = vmatpush1.bf16.msra.mxu0 %v2522
  %3179 = vmatprep.subr.bf16.mxu0 %v2539
  %3180 = vmatpush1.bf16.msra.mxu0 %v2538
  %3181 = vmatprep.subr.bf16.mxu0 %v2555
  %3182 = vmatpush1.bf16.msra.mxu0 %v2554
  %3183 = vmatprep.subr.bf16.mxu0 %v2571
  %3184 = vmatpush1.bf16.msra.mxu0 %v2570
  %3185 = vmatprep.subr.bf16.mxu0 %v2587
  %3186 = vmatpush1.bf16.msra.mxu0 %v2586
  %3187 = vmatprep.mubr.bf16.mxu0 %v549
  %3188 = vmatmul.mubr.bf16.gmra.mrb[0].mxu0 %v548
  %v3189 = vpop.f32.mrb[0].mxu0
  %v3190 = vadd.f32 %v3149, %v3189
  %v3191 = vpop.f32.mrb[0].mxu0
  %v3192 = vadd.f32 %v3151, %v3191
  %v3193 = vpop.f32.mrb[0].mxu0
  %v3194 = vpop.f32.mrb[0].mxu0
  %3195 = vdwg.mxu0
  %3196 = vmatprep.subr.bf16.mxu0 %v2093
  %3197 = vmatpush1.bf16.msra.mxu0 %v2092
  %3198 = vmatprep.subr.bf16.mxu0 %v2109
  %3199 = vmatpush1.bf16.msra.mxu0 %v2108
  %3200 = vmatprep.subr.bf16.mxu0 %v2125
  %3201 = vmatpush1.bf16.msra.mxu0 %v2124
  %3202 = vmatprep.subr.bf16.mxu0 %v2141
  %3203 = vmatpush1.bf16.msra.mxu0 %v2140
  %3204 = vmatprep.subr.bf16.mxu0 %v2157
  %3205 = vmatpush1.bf16.msra.mxu0 %v2156
  %3206 = vmatprep.subr.bf16.mxu0 %v2173
  %3207 = vmatpush1.bf16.msra.mxu0 %v2172
  %3208 = vmatprep.subr.bf16.mxu0 %v2189
  %3209 = vmatpush1.bf16.msra.mxu0 %v2188
  %3210 = vmatprep.subr.bf16.mxu0 %v2205
  %3211 = vmatpush1.bf16.msra.mxu0 %v2204
  %3212 = vmatprep.subr.bf16.mxu0 %v2221
  %3213 = vmatpush1.bf16.msra.mxu0 %v2220
  %3214 = vmatprep.subr.bf16.mxu0 %v2237
  %3215 = vmatpush1.bf16.msra.mxu0 %v2236
  %3216 = vmatprep.subr.bf16.mxu0 %v2253
  %3217 = vmatpush1.bf16.msra.mxu0 %v2252
  %3218 = vmatprep.subr.bf16.mxu0 %v2269
  %3219 = vmatpush1.bf16.msra.mxu0 %v2268
  %3220 = vmatprep.subr.bf16.mxu0 %v2285
  %3221 = vmatpush1.bf16.msra.mxu0 %v2284
  %3222 = vmatprep.subr.bf16.mxu0 %v2301
  %3223 = vmatpush1.bf16.msra.mxu0 %v2300
  %3224 = vmatprep.subr.bf16.mxu0 %v2317
  %3225 = vmatpush1.bf16.msra.mxu0 %v2316
  %3226 = vmatprep.subr.bf16.mxu0 %v2333
  %3227 = vmatpush1.bf16.msra.mxu0 %v2332
  %3228 = vmatprep.mubr.bf16.mxu0 %v547
  %3229 = vmatmul.mubr.bf16.gmra.mrb[0].mxu0 %v546
  %v3230 = vpop.f32.mrb[0].mxu0
  %v3231 = vadd.f32 %v538, %v3230
  %v3232 = vpop.f32.mrb[0].mxu0
  %v3233 = vadd.f32 %v538, %v3232
  %v3234 = vpop.f32.mrb[0].mxu0
  %v3235 = vpop.f32.mrb[0].mxu0
  %3236 = vdwg.mxu0
  %3237 = vmatprep.subr.bf16.mxu0 %v2349
  %3238 = vmatpush1.bf16.msra.mxu0 %v2348
  %3239 = vmatprep.subr.bf16.mxu0 %v2365
  %3240 = vmatpush1.bf16.msra.mxu0 %v2364
  %3241 = vmatprep.subr.bf16.mxu0 %v2381
  %3242 = vmatpush1.bf16.msra.mxu0 %v2380
  %3243 = vmatprep.subr.bf16.mxu0 %v2397
  %3244 = vmatpush1.bf16.msra.mxu0 %v2396
  %3245 = vmatprep.subr.bf16.mxu0 %v2413
  %3246 = vmatpush1.bf16.msra.mxu0 %v2412
  %3247 = vmatprep.subr.bf16.mxu0 %v2429
  %3248 = vmatpush1.bf16.msra.mxu0 %v2428
  %3249 = vmatprep.subr.bf16.mxu0 %v2445
  %3250 = vmatpush1.bf16.msra.mxu0 %v2444
  %3251 = vmatprep.subr.bf16.mxu0 %v2461
  %3252 = vmatpush1.bf16.msra.mxu0 %v2460
  %3253 = vmatprep.subr.bf16.mxu0 %v2477
  %3254 = vmatpush1.bf16.msra.mxu0 %v2476
  %3255 = vmatprep.subr.bf16.mxu0 %v2493
  %3256 = vmatpush1.bf16.msra.mxu0 %v2492
  %3257 = vmatprep.subr.bf16.mxu0 %v2509
  %3258 = vmatpush1.bf16.msra.mxu0 %v2508
  %3259 = vmatprep.subr.bf16.mxu0 %v2525
  %3260 = vmatpush1.bf16.msra.mxu0 %v2524
  %3261 = vmatprep.subr.bf16.mxu0 %v2541
  %3262 = vmatpush1.bf16.msra.mxu0 %v2540
  %3263 = vmatprep.subr.bf16.mxu0 %v2557
  %3264 = vmatpush1.bf16.msra.mxu0 %v2556
  %3265 = vmatprep.subr.bf16.mxu0 %v2573
  %3266 = vmatpush1.bf16.msra.mxu0 %v2572
  %3267 = vmatprep.subr.bf16.mxu0 %v2589
  %3268 = vmatpush1.bf16.msra.mxu0 %v2588
  %3269 = vmatprep.mubr.bf16.mxu0 %v549
  %3270 = vmatmul.mubr.bf16.gmra.mrb[0].mxu0 %v548
  %v3271 = vpop.f32.mrb[0].mxu0
  %v3272 = vadd.f32 %v3231, %v3271
  %v3273 = vpop.f32.mrb[0].mxu0
  %v3274 = vadd.f32 %v3233, %v3273
  %v3275 = vpop.f32.mrb[0].mxu0
  %v3276 = vpop.f32.mrb[0].mxu0
  %3277 = vdwg.mxu0
  %3278 = vmatprep.subr.bf16.mxu0 %v2095
  %3279 = vmatpush1.bf16.msra.mxu0 %v2094
  %3280 = vmatprep.subr.bf16.mxu0 %v2111
  %3281 = vmatpush1.bf16.msra.mxu0 %v2110
  %3282 = vmatprep.subr.bf16.mxu0 %v2127
  %3283 = vmatpush1.bf16.msra.mxu0 %v2126
  %3284 = vmatprep.subr.bf16.mxu0 %v2143
  %3285 = vmatpush1.bf16.msra.mxu0 %v2142
  %3286 = vmatprep.subr.bf16.mxu0 %v2159
  %3287 = vmatpush1.bf16.msra.mxu0 %v2158
  %3288 = vmatprep.subr.bf16.mxu0 %v2175
  %3289 = vmatpush1.bf16.msra.mxu0 %v2174
  %3290 = vmatprep.subr.bf16.mxu0 %v2191
  %3291 = vmatpush1.bf16.msra.mxu0 %v2190
  %3292 = vmatprep.subr.bf16.mxu0 %v2207
  %3293 = vmatpush1.bf16.msra.mxu0 %v2206
  %3294 = vmatprep.subr.bf16.mxu0 %v2223
  %3295 = vmatpush1.bf16.msra.mxu0 %v2222
  %3296 = vmatprep.subr.bf16.mxu0 %v2239
  %3297 = vmatpush1.bf16.msra.mxu0 %v2238
  %3298 = vmatprep.subr.bf16.mxu0 %v2255
  %3299 = vmatpush1.bf16.msra.mxu0 %v2254
  %3300 = vmatprep.subr.bf16.mxu0 %v2271
  %3301 = vmatpush1.bf16.msra.mxu0 %v2270
  %3302 = vmatprep.subr.bf16.mxu0 %v2287
  %3303 = vmatpush1.bf16.msra.mxu0 %v2286
  %3304 = vmatprep.subr.bf16.mxu0 %v2303
  %3305 = vmatpush1.bf16.msra.mxu0 %v2302
  %3306 = vmatprep.subr.bf16.mxu0 %v2319
  %3307 = vmatpush1.bf16.msra.mxu0 %v2318
  %3308 = vmatprep.subr.bf16.mxu0 %v2335
  %3309 = vmatpush1.bf16.msra.mxu0 %v2334
  %3310 = vmatprep.mubr.bf16.mxu0 %v547
  %3311 = vmatmul.mubr.bf16.gmra.mrb[0].mxu0 %v546
  %v3312 = vpop.f32.mrb[0].mxu0
  %v3313 = vadd.f32 %v538, %v3312
  %v3314 = vpop.f32.mrb[0].mxu0
  %v3315 = vadd.f32 %v538, %v3314
  %v3316 = vpop.f32.mrb[0].mxu0
  %v3317 = vpop.f32.mrb[0].mxu0
  %3318 = vdwg.mxu0
  %3319 = vmatprep.subr.bf16.mxu0 %v2351
  %3320 = vmatpush1.bf16.msra.mxu0 %v2350
  %3321 = vmatprep.subr.bf16.mxu0 %v2367
  %3322 = vmatpush1.bf16.msra.mxu0 %v2366
  %3323 = vmatprep.subr.bf16.mxu0 %v2383
  %3324 = vmatpush1.bf16.msra.mxu0 %v2382
  %3325 = vmatprep.subr.bf16.mxu0 %v2399
  %3326 = vmatpush1.bf16.msra.mxu0 %v2398
  %3327 = vmatprep.subr.bf16.mxu0 %v2415
  %3328 = vmatpush1.bf16.msra.mxu0 %v2414
  %3329 = vmatprep.subr.bf16.mxu0 %v2431
  %3330 = vmatpush1.bf16.msra.mxu0 %v2430
  %3331 = vmatprep.subr.bf16.mxu0 %v2447
  %3332 = vmatpush1.bf16.msra.mxu0 %v2446
  %3333 = vmatprep.subr.bf16.mxu0 %v2463
  %3334 = vmatpush1.bf16.msra.mxu0 %v2462
  %3335 = vmatprep.subr.bf16.mxu0 %v2479
  %3336 = vmatpush1.bf16.msra.mxu0 %v2478
  %3337 = vmatprep.subr.bf16.mxu0 %v2495
  %3338 = vmatpush1.bf16.msra.mxu0 %v2494
  %3339 = vmatprep.subr.bf16.mxu0 %v2511
  %3340 = vmatpush1.bf16.msra.mxu0 %v2510
  %3341 = vmatprep.subr.bf16.mxu0 %v2527
  %3342 = vmatpush1.bf16.msra.mxu0 %v2526
  %3343 = vmatprep.subr.bf16.mxu0 %v2543
  %3344 = vmatpush1.bf16.msra.mxu0 %v2542
  %3345 = vmatprep.subr.bf16.mxu0 %v2559
  %3346 = vmatpush1.bf16.msra.mxu0 %v2558
  %3347 = vmatprep.subr.bf16.mxu0 %v2575
  %3348 = vmatpush1.bf16.msra.mxu0 %v2574
  %3349 = vmatprep.subr.bf16.mxu0 %v2591
  %3350 = vmatpush1.bf16.msra.mxu0 %v2590
  %3351 = vmatprep.mubr.bf16.mxu0 %v549
  %3352 = vmatmul.mubr.bf16.gmra.mrb[0].mxu0 %v548
  %v3353 = vpop.f32.mrb[0].mxu0
  %v3354 = vadd.f32 %v3313, %v3353
  %v3355 = vpop.f32.mrb[0].mxu0
  %v3356 = vadd.f32 %v3315, %v3355
  %v3357 = vpop.f32.mrb[0].mxu0
  %v3358 = vpop.f32.mrb[0].mxu0
  %3359 = vdwg.mxu0
  %3360 = vmatprep.subr.bf16.mxu0 %v2097
  %3361 = vmatpush1.bf16.msra.mxu0 %v2096
  %3362 = vmatprep.subr.bf16.mxu0 %v2113
  %3363 = vmatpush1.bf16.msra.mxu0 %v2112
  %3364 = vmatprep.subr.bf16.mxu0 %v2129
  %3365 = vmatpush1.bf16.msra.mxu0 %v2128
  %3366 = vmatprep.subr.bf16.mxu0 %v2145
  %3367 = vmatpush1.bf16.msra.mxu0 %v2144
  %3368 = vmatprep.subr.bf16.mxu0 %v2161
  %3369 = vmatpush1.bf16.msra.mxu0 %v2160
  %3370 = vmatprep.subr.bf16.mxu0 %v2177
  %3371 = vmatpush1.bf16.msra.mxu0 %v2176
  %3372 = vmatprep.subr.bf16.mxu0 %v2193
  %3373 = vmatpush1.bf16.msra.mxu0 %v2192
  %3374 = vmatprep.subr.bf16.mxu0 %v2209
  %3375 = vmatpush1.bf16.msra.mxu0 %v2208
  %3376 = vmatprep.subr.bf16.mxu0 %v2225
  %3377 = vmatpush1.bf16.msra.mxu0 %v2224
  %3378 = vmatprep.subr.bf16.mxu0 %v2241
  %3379 = vmatpush1.bf16.msra.mxu0 %v2240
  %3380 = vmatprep.subr.bf16.mxu0 %v2257
  %3381 = vmatpush1.bf16.msra.mxu0 %v2256
  %3382 = vmatprep.subr.bf16.mxu0 %v2273
  %3383 = vmatpush1.bf16.msra.mxu0 %v2272
  %3384 = vmatprep.subr.bf16.mxu0 %v2289
  %3385 = vmatpush1.bf16.msra.mxu0 %v2288
  %3386 = vmatprep.subr.bf16.mxu0 %v2305
  %3387 = vmatpush1.bf16.msra.mxu0 %v2304
  %3388 = vmatprep.subr.bf16.mxu0 %v2321
  %3389 = vmatpush1.bf16.msra.mxu0 %v2320
  %3390 = vmatprep.subr.bf16.mxu0 %v2337
  %3391 = vmatpush1.bf16.msra.mxu0 %v2336
  %3392 = vmatprep.mubr.bf16.mxu0 %v547
  %3393 = vmatmul.mubr.bf16.gmra.mrb[0].mxu0 %v546
  %v3394 = vpop.f32.mrb[0].mxu0
  %v3395 = vadd.f32 %v538, %v3394
  %v3396 = vpop.f32.mrb[0].mxu0
  %v3397 = vadd.f32 %v538, %v3396
  %v3398 = vpop.f32.mrb[0].mxu0
  %v3399 = vpop.f32.mrb[0].mxu0
  %3400 = vdwg.mxu0
  %3401 = vmatprep.subr.bf16.mxu0 %v2353
  %3402 = vmatpush1.bf16.msra.mxu0 %v2352
  %3403 = vmatprep.subr.bf16.mxu0 %v2369
  %3404 = vmatpush1.bf16.msra.mxu0 %v2368
  %3405 = vmatprep.subr.bf16.mxu0 %v2385
  %3406 = vmatpush1.bf16.msra.mxu0 %v2384
  %3407 = vmatprep.subr.bf16.mxu0 %v2401
  %3408 = vmatpush1.bf16.msra.mxu0 %v2400
  %3409 = vmatprep.subr.bf16.mxu0 %v2417
  %3410 = vmatpush1.bf16.msra.mxu0 %v2416
  %3411 = vmatprep.subr.bf16.mxu0 %v2433
  %3412 = vmatpush1.bf16.msra.mxu0 %v2432
  %3413 = vmatprep.subr.bf16.mxu0 %v2449
  %3414 = vmatpush1.bf16.msra.mxu0 %v2448
  %3415 = vmatprep.subr.bf16.mxu0 %v2465
  %3416 = vmatpush1.bf16.msra.mxu0 %v2464
  %3417 = vmatprep.subr.bf16.mxu0 %v2481
  %3418 = vmatpush1.bf16.msra.mxu0 %v2480
  %3419 = vmatprep.subr.bf16.mxu0 %v2497
  %3420 = vmatpush1.bf16.msra.mxu0 %v2496
  %3421 = vmatprep.subr.bf16.mxu0 %v2513
  %3422 = vmatpush1.bf16.msra.mxu0 %v2512
  %3423 = vmatprep.subr.bf16.mxu0 %v2529
  %3424 = vmatpush1.bf16.msra.mxu0 %v2528
  %3425 = vmatprep.subr.bf16.mxu0 %v2545
  %3426 = vmatpush1.bf16.msra.mxu0 %v2544
  %3427 = vmatprep.subr.bf16.mxu0 %v2561
  %3428 = vmatpush1.bf16.msra.mxu0 %v2560
  %3429 = vmatprep.subr.bf16.mxu0 %v2577
  %3430 = vmatpush1.bf16.msra.mxu0 %v2576
  %3431 = vmatprep.subr.bf16.mxu0 %v2593
  %3432 = vmatpush1.bf16.msra.mxu0 %v2592
  %3433 = vmatprep.mubr.bf16.mxu0 %v549
  %3434 = vmatmul.mubr.bf16.gmra.mrb[0].mxu0 %v548
  %v3435 = vpop.f32.mrb[0].mxu0
  %v3436 = vadd.f32 %v3395, %v3435
  %v3437 = vpop.f32.mrb[0].mxu0
  %v3438 = vadd.f32 %v3397, %v3437
  %v3439 = vpop.f32.mrb[0].mxu0
  %v3440 = vpop.f32.mrb[0].mxu0
  %3441 = vdwg.mxu0
  %3442 = vmatprep.subr.bf16.mxu0 %v2099
  %3443 = vmatpush1.bf16.msra.mxu0 %v2098
  %3444 = vmatprep.subr.bf16.mxu0 %v2115
  %3445 = vmatpush1.bf16.msra.mxu0 %v2114
  %3446 = vmatprep.subr.bf16.mxu0 %v2131
  %3447 = vmatpush1.bf16.msra.mxu0 %v2130
  %3448 = vmatprep.subr.bf16.mxu0 %v2147
  %3449 = vmatpush1.bf16.msra.mxu0 %v2146
  %3450 = vmatprep.subr.bf16.mxu0 %v2163
  %3451 = vmatpush1.bf16.msra.mxu0 %v2162
  %3452 = vmatprep.subr.bf16.mxu0 %v2179
  %3453 = vmatpush1.bf16.msra.mxu0 %v2178
  %3454 = vmatprep.subr.bf16.mxu0 %v2195
  %3455 = vmatpush1.bf16.msra.mxu0 %v2194
  %3456 = vmatprep.subr.bf16.mxu0 %v2211
  %3457 = vmatpush1.bf16.msra.mxu0 %v2210
  %3458 = vmatprep.subr.bf16.mxu0 %v2227
  %3459 = vmatpush1.bf16.msra.mxu0 %v2226
  %3460 = vmatprep.subr.bf16.mxu0 %v2243
  %3461 = vmatpush1.bf16.msra.mxu0 %v2242
  %3462 = vmatprep.subr.bf16.mxu0 %v2259
  %3463 = vmatpush1.bf16.msra.mxu0 %v2258
  %3464 = vmatprep.subr.bf16.mxu0 %v2275
  %3465 = vmatpush1.bf16.msra.mxu0 %v2274
  %3466 = vmatprep.subr.bf16.mxu0 %v2291
  %3467 = vmatpush1.bf16.msra.mxu0 %v2290
  %3468 = vmatprep.subr.bf16.mxu0 %v2307
  %3469 = vmatpush1.bf16.msra.mxu0 %v2306
  %3470 = vmatprep.subr.bf16.mxu0 %v2323
  %3471 = vmatpush1.bf16.msra.mxu0 %v2322
  %3472 = vmatprep.subr.bf16.mxu0 %v2339
  %3473 = vmatpush1.bf16.msra.mxu0 %v2338
  %3474 = vmatprep.mubr.bf16.mxu0 %v547
  %3475 = vmatmul.mubr.bf16.gmra.mrb[0].mxu0 %v546
  %v3476 = vpop.f32.mrb[0].mxu0
  %v3477 = vadd.f32 %v538, %v3476
  %v3478 = vpop.f32.mrb[0].mxu0
  %v3479 = vadd.f32 %v538, %v3478
  %v3480 = vpop.f32.mrb[0].mxu0
  %v3481 = vpop.f32.mrb[0].mxu0
  %3482 = vdwg.mxu0
  %3483 = vmatprep.subr.bf16.mxu0 %v2355
  %3484 = vmatpush1.bf16.msra.mxu0 %v2354
  %3485 = vmatprep.subr.bf16.mxu0 %v2371
  %3486 = vmatpush1.bf16.msra.mxu0 %v2370
  %3487 = vmatprep.subr.bf16.mxu0 %v2387
  %3488 = vmatpush1.bf16.msra.mxu0 %v2386
  %3489 = vmatprep.subr.bf16.mxu0 %v2403
  %3490 = vmatpush1.bf16.msra.mxu0 %v2402
  %3491 = vmatprep.subr.bf16.mxu0 %v2419
  %3492 = vmatpush1.bf16.msra.mxu0 %v2418
  %3493 = vmatprep.subr.bf16.mxu0 %v2435
  %3494 = vmatpush1.bf16.msra.mxu0 %v2434
  %3495 = vmatprep.subr.bf16.mxu0 %v2451
  %3496 = vmatpush1.bf16.msra.mxu0 %v2450
  %3497 = vmatprep.subr.bf16.mxu0 %v2467
  %3498 = vmatpush1.bf16.msra.mxu0 %v2466
  %3499 = vmatprep.subr.bf16.mxu0 %v2483
  %3500 = vmatpush1.bf16.msra.mxu0 %v2482
  %3501 = vmatprep.subr.bf16.mxu0 %v2499
  %3502 = vmatpush1.bf16.msra.mxu0 %v2498
  %3503 = vmatprep.subr.bf16.mxu0 %v2515
  %3504 = vmatpush1.bf16.msra.mxu0 %v2514
  %3505 = vmatprep.subr.bf16.mxu0 %v2531
  %3506 = vmatpush1.bf16.msra.mxu0 %v2530
  %3507 = vmatprep.subr.bf16.mxu0 %v2547
  %3508 = vmatpush1.bf16.msra.mxu0 %v2546
  %3509 = vmatprep.subr.bf16.mxu0 %v2563
  %3510 = vmatpush1.bf16.msra.mxu0 %v2562
  %3511 = vmatprep.subr.bf16.mxu0 %v2579
  %3512 = vmatpush1.bf16.msra.mxu0 %v2578
  %3513 = vmatprep.subr.bf16.mxu0 %v2595
  %3514 = vmatpush1.bf16.msra.mxu0 %v2594
  %3515 = vmatprep.mubr.bf16.mxu0 %v549
  %3516 = vmatmul.mubr.bf16.gmra.mrb[0].mxu0 %v548
  %v3517 = vpop.f32.mrb[0].mxu0
  %v3518 = vadd.f32 %v3477, %v3517
  %v3519 = vpop.f32.mrb[0].mxu0
  %v3520 = vadd.f32 %v3479, %v3519
  %v3521 = vpop.f32.mrb[0].mxu0
  %v3522 = vpop.f32.mrb[0].mxu0
  %3523 = vdwg.mxu0
  %3524 = vmatprep.subr.bf16.mxu0 %v2101
  %3525 = vmatpush1.bf16.msra.mxu0 %v2100
  %3526 = vmatprep.subr.bf16.mxu0 %v2117
  %3527 = vmatpush1.bf16.msra.mxu0 %v2116
  %3528 = vmatprep.subr.bf16.mxu0 %v2133
  %3529 = vmatpush1.bf16.msra.mxu0 %v2132
  %3530 = vmatprep.subr.bf16.mxu0 %v2149
  %3531 = vmatpush1.bf16.msra.mxu0 %v2148
  %3532 = vmatprep.subr.bf16.mxu0 %v2165
  %3533 = vmatpush1.bf16.msra.mxu0 %v2164
  %3534 = vmatprep.subr.bf16.mxu0 %v2181
  %3535 = vmatpush1.bf16.msra.mxu0 %v2180
  %3536 = vmatprep.subr.bf16.mxu0 %v2197
  %3537 = vmatpush1.bf16.msra.mxu0 %v2196
  %3538 = vmatprep.subr.bf16.mxu0 %v2213
  %3539 = vmatpush1.bf16.msra.mxu0 %v2212
  %3540 = vmatprep.subr.bf16.mxu0 %v2229
  %3541 = vmatpush1.bf16.msra.mxu0 %v2228
  %3542 = vmatprep.subr.bf16.mxu0 %v2245
  %3543 = vmatpush1.bf16.msra.mxu0 %v2244
  %3544 = vmatprep.subr.bf16.mxu0 %v2261
  %3545 = vmatpush1.bf16.msra.mxu0 %v2260
  %3546 = vmatprep.subr.bf16.mxu0 %v2277
  %3547 = vmatpush1.bf16.msra.mxu0 %v2276
  %3548 = vmatprep.subr.bf16.mxu0 %v2293
  %3549 = vmatpush1.bf16.msra.mxu0 %v2292
  %3550 = vmatprep.subr.bf16.mxu0 %v2309
  %3551 = vmatpush1.bf16.msra.mxu0 %v2308
  %3552 = vmatprep.subr.bf16.mxu0 %v2325
  %3553 = vmatpush1.bf16.msra.mxu0 %v2324
  %3554 = vmatprep.subr.bf16.mxu0 %v2341
  %3555 = vmatpush1.bf16.msra.mxu0 %v2340
  %3556 = vmatprep.mubr.bf16.mxu0 %v547
  %3557 = vmatmul.mubr.bf16.gmra.mrb[0].mxu0 %v546
  %v3558 = vpop.f32.mrb[0].mxu0
  %v3559 = vadd.f32 %v538, %v3558
  %v3560 = vpop.f32.mrb[0].mxu0
  %v3561 = vadd.f32 %v538, %v3560
  %v3562 = vpop.f32.mrb[0].mxu0
  %v3563 = vpop.f32.mrb[0].mxu0
  %3564 = vdwg.mxu0
  %3565 = vmatprep.subr.bf16.mxu0 %v2357
  %3566 = vmatpush1.bf16.msra.mxu0 %v2356
  %3567 = vmatprep.subr.bf16.mxu0 %v2373
  %3568 = vmatpush1.bf16.msra.mxu0 %v2372
  %3569 = vmatprep.subr.bf16.mxu0 %v2389
  %3570 = vmatpush1.bf16.msra.mxu0 %v2388
  %3571 = vmatprep.subr.bf16.mxu0 %v2405
  %3572 = vmatpush1.bf16.msra.mxu0 %v2404
  %3573 = vmatprep.subr.bf16.mxu0 %v2421
  %3574 = vmatpush1.bf16.msra.mxu0 %v2420
  %3575 = vmatprep.subr.bf16.mxu0 %v2437
  %3576 = vmatpush1.bf16.msra.mxu0 %v2436
  %3577 = vmatprep.subr.bf16.mxu0 %v2453
  %3578 = vmatpush1.bf16.msra.mxu0 %v2452
  %3579 = vmatprep.subr.bf16.mxu0 %v2469
  %3580 = vmatpush1.bf16.msra.mxu0 %v2468
  %3581 = vmatprep.subr.bf16.mxu0 %v2485
  %3582 = vmatpush1.bf16.msra.mxu0 %v2484
  %3583 = vmatprep.subr.bf16.mxu0 %v2501
  %3584 = vmatpush1.bf16.msra.mxu0 %v2500
  %3585 = vmatprep.subr.bf16.mxu0 %v2517
  %3586 = vmatpush1.bf16.msra.mxu0 %v2516
  %3587 = vmatprep.subr.bf16.mxu0 %v2533
  %3588 = vmatpush1.bf16.msra.mxu0 %v2532
  %3589 = vmatprep.subr.bf16.mxu0 %v2549
  %3590 = vmatpush1.bf16.msra.mxu0 %v2548
  %3591 = vmatprep.subr.bf16.mxu0 %v2565
  %3592 = vmatpush1.bf16.msra.mxu0 %v2564
  %3593 = vmatprep.subr.bf16.mxu0 %v2581
  %3594 = vmatpush1.bf16.msra.mxu0 %v2580
  %3595 = vmatprep.subr.bf16.mxu0 %v2597
  %3596 = vmatpush1.bf16.msra.mxu0 %v2596
  %3597 = vmatprep.mubr.bf16.mxu0 %v549
  %3598 = vmatmul.mubr.bf16.gmra.mrb[0].mxu0 %v548
  %v3599 = vpop.f32.mrb[0].mxu0
  %v3600 = vadd.f32 %v3559, %v3599
  %v3601 = vpop.f32.mrb[0].mxu0
  %v3602 = vadd.f32 %v3561, %v3601
  %v3603 = vpop.f32.mrb[0].mxu0
  %v3604 = vpop.f32.mrb[0].mxu0
  %3605 = vdwg.mxu0
  %3606 = vmatprep.subr.bf16.mxu0 %v2103
  %3607 = vmatpush1.bf16.msra.mxu0 %v2102
  %3608 = vmatprep.subr.bf16.mxu0 %v2119
  %3609 = vmatpush1.bf16.msra.mxu0 %v2118
  %3610 = vmatprep.subr.bf16.mxu0 %v2135
  %3611 = vmatpush1.bf16.msra.mxu0 %v2134
  %3612 = vmatprep.subr.bf16.mxu0 %v2151
  %3613 = vmatpush1.bf16.msra.mxu0 %v2150
  %3614 = vmatprep.subr.bf16.mxu0 %v2167
  %3615 = vmatpush1.bf16.msra.mxu0 %v2166
  %3616 = vmatprep.subr.bf16.mxu0 %v2183
  %3617 = vmatpush1.bf16.msra.mxu0 %v2182
  %3618 = vmatprep.subr.bf16.mxu0 %v2199
  %3619 = vmatpush1.bf16.msra.mxu0 %v2198
  %3620 = vmatprep.subr.bf16.mxu0 %v2215
  %3621 = vmatpush1.bf16.msra.mxu0 %v2214
  %3622 = vmatprep.subr.bf16.mxu0 %v2231
  %3623 = vmatpush1.bf16.msra.mxu0 %v2230
  %3624 = vmatprep.subr.bf16.mxu0 %v2247
  %3625 = vmatpush1.bf16.msra.mxu0 %v2246
  %3626 = vmatprep.subr.bf16.mxu0 %v2263
  %3627 = vmatpush1.bf16.msra.mxu0 %v2262
  %3628 = vmatprep.subr.bf16.mxu0 %v2279
  %3629 = vmatpush1.bf16.msra.mxu0 %v2278
  %3630 = vmatprep.subr.bf16.mxu0 %v2295
  %3631 = vmatpush1.bf16.msra.mxu0 %v2294
  %3632 = vmatprep.subr.bf16.mxu0 %v2311
  %3633 = vmatpush1.bf16.msra.mxu0 %v2310
  %3634 = vmatprep.subr.bf16.mxu0 %v2327
  %3635 = vmatpush1.bf16.msra.mxu0 %v2326
  %3636 = vmatprep.subr.bf16.mxu0 %v2343
  %3637 = vmatpush1.bf16.msra.mxu0 %v2342
  %3638 = vmatprep.mubr.bf16.mxu0 %v547
  %3639 = vmatmul.mubr.bf16.gmra.mrb[0].mxu0 %v546
  %v3640 = vpop.f32.mrb[0].mxu0
  %v3641 = vadd.f32 %v538, %v3640
  %v3642 = vpop.f32.mrb[0].mxu0
  %v3643 = vadd.f32 %v538, %v3642
  %v3644 = vpop.f32.mrb[0].mxu0
  %v3645 = vpop.f32.mrb[0].mxu0
  %3646 = vdwg.mxu0
  %3647 = vmatprep.subr.bf16.mxu0 %v2359
  %3648 = vmatpush1.bf16.msra.mxu0 %v2358
  %3649 = vmatprep.subr.bf16.mxu0 %v2375
  %3650 = vmatpush1.bf16.msra.mxu0 %v2374
  %3651 = vmatprep.subr.bf16.mxu0 %v2391
  %3652 = vmatpush1.bf16.msra.mxu0 %v2390
  %3653 = vmatprep.subr.bf16.mxu0 %v2407
  %3654 = vmatpush1.bf16.msra.mxu0 %v2406
  %3655 = vmatprep.subr.bf16.mxu0 %v2423
  %3656 = vmatpush1.bf16.msra.mxu0 %v2422
  %3657 = vmatprep.subr.bf16.mxu0 %v2439
  %3658 = vmatpush1.bf16.msra.mxu0 %v2438
  %3659 = vmatprep.subr.bf16.mxu0 %v2455
  %3660 = vmatpush1.bf16.msra.mxu0 %v2454
  %3661 = vmatprep.subr.bf16.mxu0 %v2471
  %3662 = vmatpush1.bf16.msra.mxu0 %v2470
  %3663 = vmatprep.subr.bf16.mxu0 %v2487
  %3664 = vmatpush1.bf16.msra.mxu0 %v2486
  %3665 = vmatprep.subr.bf16.mxu0 %v2503
  %3666 = vmatpush1.bf16.msra.mxu0 %v2502
  %3667 = vmatprep.subr.bf16.mxu0 %v2519
  %3668 = vmatpush1.bf16.msra.mxu0 %v2518
  %3669 = vmatprep.subr.bf16.mxu0 %v2535
  %3670 = vmatpush1.bf16.msra.mxu0 %v2534
  %3671 = vmatprep.subr.bf16.mxu0 %v2551
  %3672 = vmatpush1.bf16.msra.mxu0 %v2550
  %3673 = vmatprep.subr.bf16.mxu0 %v2567
  %3674 = vmatpush1.bf16.msra.mxu0 %v2566
  %3675 = vmatprep.subr.bf16.mxu0 %v2583
  %3676 = vmatpush1.bf16.msra.mxu0 %v2582
  %3677 = vmatprep.subr.bf16.mxu0 %v2599
  %3678 = vmatpush1.bf16.msra.mxu0 %v2598
  %3679 = vmatprep.mubr.bf16.mxu0 %v549
  %3680 = vmatmul.mubr.bf16.gmra.mrb[0].mxu0 %v548
  %v3681 = vpop.f32.mrb[0].mxu0
  %v3682 = vadd.f32 %v3641, %v3681
  %v3683 = vpop.f32.mrb[0].mxu0
  %v3684 = vadd.f32 %v3643, %v3683
  %v3685 = vpop.f32.mrb[0].mxu0
  %v3686 = vpop.f32.mrb[0].mxu0
  %3687 = vdwg.mxu0
  %3688 = vmatprep.subr.bf16.mxu0 %v2105
  %3689 = vmatpush1.bf16.msra.mxu0 %v2104
  %3690 = vmatprep.subr.bf16.mxu0 %v2121
  %3691 = vmatpush1.bf16.msra.mxu0 %v2120
  %3692 = vmatprep.subr.bf16.mxu0 %v2137
  %3693 = vmatpush1.bf16.msra.mxu0 %v2136
  %3694 = vmatprep.subr.bf16.mxu0 %v2153
  %3695 = vmatpush1.bf16.msra.mxu0 %v2152
  %3696 = vmatprep.subr.bf16.mxu0 %v2169
  %3697 = vmatpush1.bf16.msra.mxu0 %v2168
  %3698 = vmatprep.subr.bf16.mxu0 %v2185
  %3699 = vmatpush1.bf16.msra.mxu0 %v2184
  %3700 = vmatprep.subr.bf16.mxu0 %v2201
  %3701 = vmatpush1.bf16.msra.mxu0 %v2200
  %3702 = vmatprep.subr.bf16.mxu0 %v2217
  %3703 = vmatpush1.bf16.msra.mxu0 %v2216
  %3704 = vmatprep.subr.bf16.mxu0 %v2233
  %3705 = vmatpush1.bf16.msra.mxu0 %v2232
  %3706 = vmatprep.subr.bf16.mxu0 %v2249
  %3707 = vmatpush1.bf16.msra.mxu0 %v2248
  %3708 = vmatprep.subr.bf16.mxu0 %v2265
  %3709 = vmatpush1.bf16.msra.mxu0 %v2264
  %3710 = vmatprep.subr.bf16.mxu0 %v2281
  %3711 = vmatpush1.bf16.msra.mxu0 %v2280
  %3712 = vmatprep.subr.bf16.mxu0 %v2297
  %3713 = vmatpush1.bf16.msra.mxu0 %v2296
  %3714 = vmatprep.subr.bf16.mxu0 %v2313
  %3715 = vmatpush1.bf16.msra.mxu0 %v2312
  %3716 = vmatprep.subr.bf16.mxu0 %v2329
  %3717 = vmatpush1.bf16.msra.mxu0 %v2328
  %3718 = vmatprep.subr.bf16.mxu0 %v2345
  %3719 = vmatpush1.bf16.msra.mxu0 %v2344
  %3720 = vmatprep.mubr.bf16.mxu0 %v547
  %3721 = vmatmul.mubr.bf16.gmra.mrb[0].mxu0 %v546
  %v3722 = vpop.f32.mrb[0].mxu0
  %v3723 = vadd.f32 %v538, %v3722
  %v3724 = vpop.f32.mrb[0].mxu0
  %v3725 = vadd.f32 %v538, %v3724
  %v3726 = vpop.f32.mrb[0].mxu0
  %v3727 = vpop.f32.mrb[0].mxu0
  %3728 = vdwg.mxu0
  %3729 = vmatprep.subr.bf16.mxu0 %v2361
  %3730 = vmatpush1.bf16.msra.mxu0 %v2360
  %3731 = vmatprep.subr.bf16.mxu0 %v2377
  %3732 = vmatpush1.bf16.msra.mxu0 %v2376
  %3733 = vmatprep.subr.bf16.mxu0 %v2393
  %3734 = vmatpush1.bf16.msra.mxu0 %v2392
  %3735 = vmatprep.subr.bf16.mxu0 %v2409
  %3736 = vmatpush1.bf16.msra.mxu0 %v2408
  %3737 = vmatprep.subr.bf16.mxu0 %v2425
  %3738 = vmatpush1.bf16.msra.mxu0 %v2424
  %3739 = vmatprep.subr.bf16.mxu0 %v2441
  %3740 = vmatpush1.bf16.msra.mxu0 %v2440
  %3741 = vmatprep.subr.bf16.mxu0 %v2457
  %3742 = vmatpush1.bf16.msra.mxu0 %v2456
  %3743 = vmatprep.subr.bf16.mxu0 %v2473
  %3744 = vmatpush1.bf16.msra.mxu0 %v2472
  %3745 = vmatprep.subr.bf16.mxu0 %v2489
  %3746 = vmatpush1.bf16.msra.mxu0 %v2488
  %3747 = vmatprep.subr.bf16.mxu0 %v2505
  %3748 = vmatpush1.bf16.msra.mxu0 %v2504
  %3749 = vmatprep.subr.bf16.mxu0 %v2521
  %3750 = vmatpush1.bf16.msra.mxu0 %v2520
  %3751 = vmatprep.subr.bf16.mxu0 %v2537
  %3752 = vmatpush1.bf16.msra.mxu0 %v2536
  %3753 = vmatprep.subr.bf16.mxu0 %v2553
  %3754 = vmatpush1.bf16.msra.mxu0 %v2552
  %3755 = vmatprep.subr.bf16.mxu0 %v2569
  %3756 = vmatpush1.bf16.msra.mxu0 %v2568
  %3757 = vmatprep.subr.bf16.mxu0 %v2585
  %3758 = vmatpush1.bf16.msra.mxu0 %v2584
  %3759 = vmatprep.subr.bf16.mxu0 %v2601
  %3760 = vmatpush1.bf16.msra.mxu0 %v2600
  %3761 = vmatprep.mubr.bf16.mxu0 %v549
  %3762 = vmatmul.mubr.bf16.gmra.mrb[0].mxu0 %v548
  %v3763 = vpop.f32.mrb[0].mxu0
  %v3764 = vadd.f32 %v3723, %v3763
  %v3765 = vpop.f32.mrb[0].mxu0
  %v3766 = vadd.f32 %v3725, %v3765
  %v3767 = vpop.f32.mrb[0].mxu0
  %v3768 = vpop.f32.mrb[0].mxu0
  %3769 = vdwg.mxu0
  %v3770 = vadd.f32 %v3190, %v3192
  %v3771 = vadd.f32 %v3770, %v3272
  %v3772 = vadd.f32 %v3771, %v3274
  %v3773 = vadd.f32 %v3772, %v3354
  %v3774 = vadd.f32 %v3773, %v3356
  %v3775 = vadd.f32 %v3774, %v3436
  %v3776 = vadd.f32 %v3775, %v3438
  %v3777 = vadd.f32 %v3776, %v3518
  %v3778 = vadd.f32 %v3777, %v3520
  %v3779 = vadd.f32 %v3778, %v3600
  %v3780 = vadd.f32 %v3779, %v3602
  %v3781 = vadd.f32 %v3780, %v3682
  %v3782 = vadd.f32 %v3781, %v3684
  %v3783 = vadd.f32 %v3782, %v3764
  %v3784 = vadd.f32 %v3783, %v3766
  %3785 = vadd.xlane.f32.xlu0 %v3784
  %v3786 = vpop.xlane.xlu0 %3785
  %v3787 = vmul.f32 %v3190, %v3190
  %v3788 = vmul.f32 %v3192, %v3192
  %v3789 = vmul.f32 %v3272, %v3272
  %v3790 = vmul.f32 %v3274, %v3274
  %v3791 = vmul.f32 %v3354, %v3354
  %v3792 = vmul.f32 %v3356, %v3356
  %v3793 = vmul.f32 %v3436, %v3436
  %v3794 = vmul.f32 %v3438, %v3438
  %v3795 = vmul.f32 %v3518, %v3518
  %v3796 = vmul.f32 %v3520, %v3520
  %v3797 = vmul.f32 %v3600, %v3600
  %v3798 = vmul.f32 %v3602, %v3602
  %v3799 = vmul.f32 %v3682, %v3682
  %v3800 = vmul.f32 %v3684, %v3684
  %v3801 = vmul.f32 %v3764, %v3764
  %v3802 = vmul.f32 %v3766, %v3766
  %v3803 = vadd.f32 %v3787, %v3788
  %v3804 = vadd.f32 %v3803, %v3789
  %v3805 = vadd.f32 %v3804, %v3790
  %v3806 = vadd.f32 %v3805, %v3791
  %v3807 = vadd.f32 %v3806, %v3792
  %v3808 = vadd.f32 %v3807, %v3793
  %v3809 = vadd.f32 %v3808, %v3794
  %v3810 = vadd.f32 %v3809, %v3795
  %v3811 = vadd.f32 %v3810, %v3796
  %v3812 = vadd.f32 %v3811, %v3797
  %v3813 = vadd.f32 %v3812, %v3798
  %v3814 = vadd.f32 %v3813, %v3799
  %v3815 = vadd.f32 %v3814, %v3800
  %v3816 = vadd.f32 %v3815, %v3801
  %v3817 = vadd.f32 %v3816, %v3802
  %3818 = vadd.xlane.f32.xlu0 %v3817
  %v3819 = vpop.xlane.xlu0 %3818
  %v3820 = vmul.f32 %v3786, 0.00048828125
  %v3821 = vmul.f32 %v3819, 0.00048828125
  %v3822 = vmul.f32 %v3820, %v3820
  %v3823 = vsub.f32 %v3821, %v3822
  %v3824 = vmax.f32 %v3823, 0.0
  %v3825 = vld [vmem:[%s3] sm:$0xff]
  %v3826 = vadd.f32 %v3824, 1e-05
  %v3827 = vrsqrt.pop %v3826
  %v3828 = vmul.f32 %v3825, %v3827
  %v3829 = vld [vmem:[%s4] sm:$0xff]
  %v3830 = vmul.f32 %v3820, %v3828
  %v3831 = vsub.f32 %v3829, %v3830
  %3833 = vset.pattern.permute.xlu0 0
  %3834 = vperm.xlu0 %3833, %v3828
  %v3835 = vpop.permute.xlu0 %3834
  %v3837 = vmul.f32 %v3190, %v3835
  %v3838 = vmul.f32 %v3192, %v3835
  %v3839 = vmul.f32 %v3272, %v3835
  %v3840 = vmul.f32 %v3274, %v3835
  %v3841 = vmul.f32 %v3354, %v3835
  %v3842 = vmul.f32 %v3356, %v3835
  %v3843 = vmul.f32 %v3436, %v3835
  %v3844 = vmul.f32 %v3438, %v3835
  %v3845 = vmul.f32 %v3518, %v3835
  %v3846 = vmul.f32 %v3520, %v3835
  %v3847 = vmul.f32 %v3600, %v3835
  %v3848 = vmul.f32 %v3602, %v3835
  %v3849 = vmul.f32 %v3682, %v3835
  %v3850 = vmul.f32 %v3684, %v3835
  %v3851 = vmul.f32 %v3764, %v3835
  %v3852 = vmul.f32 %v3766, %v3835
  %3854 = vset.pattern.permute.xlu0 0
  %3855 = vperm.xlu0 %3854, %v3831
  %v3856 = vpop.permute.xlu0 %3855
  %v3858 = vadd.f32 %v3837, %v3856
  %v3859 = vadd.f32 %v3838, %v3856
  %v3860 = vadd.f32 %v3839, %v3856
  %v3861 = vadd.f32 %v3840, %v3856
  %v3862 = vadd.f32 %v3841, %v3856
  %v3863 = vadd.f32 %v3842, %v3856
  %v3864 = vadd.f32 %v3843, %v3856
  %v3865 = vadd.f32 %v3844, %v3856
  %v3866 = vadd.f32 %v3845, %v3856
  %v3867 = vadd.f32 %v3846, %v3856
  %v3868 = vadd.f32 %v3847, %v3856
  %v3869 = vadd.f32 %v3848, %v3856
  %v3870 = vadd.f32 %v3849, %v3856
  %v3871 = vadd.f32 %v3850, %v3856
  %v3872 = vadd.f32 %v3851, %v3856
  %v3873 = vadd.f32 %v3852, %v3856
  %v3874 = vmax.f32 %v3858, 0.0
  %v3875 = vmax.f32 %v3859, 0.0
  %v3876 = vmax.f32 %v3860, 0.0
  %v3877 = vmax.f32 %v3861, 0.0
  %v3878 = vmax.f32 %v3862, 0.0
  %v3879 = vmax.f32 %v3863, 0.0
  %v3880 = vmax.f32 %v3864, 0.0
  %v3881 = vmax.f32 %v3865, 0.0
  %v3882 = vmax.f32 %v3866, 0.0
  %v3883 = vmax.f32 %v3867, 0.0
  %v3884 = vmax.f32 %v3868, 0.0
  %v3885 = vmax.f32 %v3869, 0.0
  %v3886 = vmax.f32 %v3870, 0.0
  %v3887 = vmax.f32 %v3871, 0.0
  %v3888 = vmax.f32 %v3872, 0.0
  %v3889 = vmax.f32 %v3873, 0.0
  %v3890 = vpack.c.bf16 %v3874, %v3874
  %v3891 = vpack.c.bf16 %v3875, %v3875
  %v3892 = vpack.c.bf16 %v3876, %v3876
  %v3893 = vpack.c.bf16 %v3877, %v3877
  %v3894 = vpack.c.bf16 %v3878, %v3878
  %v3895 = vpack.c.bf16 %v3879, %v3879
  %v3896 = vpack.c.bf16 %v3880, %v3880
  %v3897 = vpack.c.bf16 %v3881, %v3881
  %v3898 = vpack.c.bf16 %v3882, %v3882
  %v3899 = vpack.c.bf16 %v3883, %v3883
  %v3900 = vpack.c.bf16 %v3884, %v3884
  %v3901 = vpack.c.bf16 %v3885, %v3885
  %v3902 = vpack.c.bf16 %v3886, %v3886
  %v3903 = vpack.c.bf16 %v3887, %v3887
  %v3904 = vpack.c.bf16 %v3888, %v3888
  %v3905 = vpack.c.bf16 %v3889, %v3889
  %v3922 = vunpack.c.l.b16 %v3890
  %v3923 = vunpack.c.l.b16 %v3891
  %v3924 = vunpack.c.l.b16 %v3892
  %v3925 = vunpack.c.l.b16 %v3893
  %v3926 = vunpack.c.l.b16 %v3894
  %v3927 = vunpack.c.l.b16 %v3895
  %v3928 = vunpack.c.l.b16 %v3896
  %v3929 = vunpack.c.l.b16 %v3897
  %v3930 = vunpack.c.l.b16 %v3898
  %v3931 = vunpack.c.l.b16 %v3899
  %v3932 = vunpack.c.l.b16 %v3900
  %v3933 = vunpack.c.l.b16 %v3901
  %v3934 = vunpack.c.l.b16 %v3902
  %v3935 = vunpack.c.l.b16 %v3903
  %v3936 = vunpack.c.l.b16 %v3904
  %v3937 = vunpack.c.l.b16 %v3905
  %v3938 = vpack.c.b16 %v3923, %v3922
  %v3939 = vpack.c.b16 %v3925, %v3924
  %v3940 = vpack.c.b16 %v3927, %v3926
  %v3941 = vpack.c.b16 %v3929, %v3928
  %v3942 = vpack.c.b16 %v3931, %v3930
  %v3943 = vpack.c.b16 %v3933, %v3932
  %v3944 = vpack.c.b16 %v3935, %v3934
  %v3945 = vpack.c.b16 %v3937, %v3936
  %3954 = vst [vmem:[%s5] sm:$0xff] %v3938
  %3955 = vst [vmem:[%s5 + $0x8] sm:$0xff] %v3939
  %3956 = vst [vmem:[%s5 + $0x10] sm:$0xff] %v3940
  %3957 = vst [vmem:[%s5 + $0x18] sm:$0xff] %v3941
  %3958 = vst [vmem:[%s5 + $0x20] sm:$0xff] %v3942
  %3959 = vst [vmem:[%s5 + $0x28] sm:$0xff] %v3943
  %3960 = vst [vmem:[%s5 + $0x30] sm:$0xff] %v3944
  %3961 = vst [vmem:[%s5 + $0x38] sm:$0xff] %v3945
  // Predicated region
  $region22: #{local_enhancer_forward.26} parent=0 // pred_check
    _
  $region23: #{local_enhancer_forward.26} parent=0 // pred_check_branch
    %3963 = sbr.rel (0) target = $region25
  $region24: #{local_enhancer_forward.26} parent=0 // pred_region
    _
  $region25: #{local_enhancer_forward.26} parent=0 // pred_fallthru
    _
  // Predicated region
  $region26: #{local_enhancer_forward.26} parent=0 // pred_check
    _
  $region27: #{local_enhancer_forward.26} parent=0 // pred_check_branch
    %3965 = sbr.rel (0) target = $region29
  $region28: #{local_enhancer_forward.26} parent=0 // pred_region
    _
  $region29: #{local_enhancer_forward.26} parent=0 // pred_fallthru
    _

// kernel: local_enhancer_forward.27
$region0: #{local_enhancer_forward.27}
  #allocation0 [shape = 'u32[]', space=smem, size = 0x4, offset = 0x4, fixed_abs, tag = 'smem constant byte address 0x4 - core index']
  #allocation1 [shape = 'u32[144,128]{1,0:T(1,128)}', space=vmem, size = 0x12000, scoped, tag = 'internal scratch']
  %s0 = inlined_call_operand.vmem [shape: bf16[8,128], index: 0, kind: input, shape index: {}]
  %s1 = inlined_call_operand.vmem [shape: bf16[128,512], index: 1, kind: input, shape index: {}]
  %s2 = inlined_call_operand.vmem [shape: f32[8,1], index: 2, kind: input, shape index: {}]
  %s3 = inlined_call_operand.vmem [shape: f32[8,1], index: 3, kind: input, shape index: {}]
  %s4 = inlined_call_operand.vmem [shape: f32[8,1], index: 4, kind: input, shape index: {}]
  %s5 = inlined_call_operand.vmem [shape: bf16[8,512], index: 5, kind: input, shape index: {}]
  %s6 = inlined_call_operand.vmem [shape: bf16[8,512], index: 6, kind: output, shape index: {}]
  %s7 = sld [smem:[#allocation0]]
  $region34: #{local_enhancer_forward.27} parent=0
    _
  %s9 = ssub.s32 1, %s7
  %s10 = scalar_select 0, %s9, %s7
  // Predicated region
  $region2: #{local_enhancer_forward.27} parent=0 // pred_check
    _
  $region3: #{local_enhancer_forward.27} parent=0 // pred_check_branch
    %12 = sbr.rel (0) target = $region5
  $region4: #{local_enhancer_forward.27} parent=0 // pred_region
    _
  $region5: #{local_enhancer_forward.27} parent=0 // pred_fallthru
    _
  // Predicated region
  $region6: #{local_enhancer_forward.27} parent=0 // pred_check
    _
  $region7: #{local_enhancer_forward.27} parent=0 // pred_check_branch
    %14 = sbr.rel (0) target = $region9
  $region8: #{local_enhancer_forward.27} parent=0 // pred_region
    _
  $region9: #{local_enhancer_forward.27} parent=0 // pred_fallthru
    _
  // Predicated region
  $region10: #{local_enhancer_forward.27} parent=0 // pred_check
    _
  $region11: #{local_enhancer_forward.27} parent=0 // pred_check_branch
    %16 = sbr.rel (0) target = $region13
  $region12: #{local_enhancer_forward.27} parent=0 // pred_region
    _
  $region13: #{local_enhancer_forward.27} parent=0 // pred_fallthru
    _
  // Predicated region
  $region14: #{local_enhancer_forward.27} parent=0 // pred_check
    _
  $region15: #{local_enhancer_forward.27} parent=0 // pred_check_branch
    %18 = sbr.rel (0) target = $region17
  $region16: #{local_enhancer_forward.27} parent=0 // pred_region
    _
  $region17: #{local_enhancer_forward.27} parent=0 // pred_fallthru
    _
  // Predicated region
  $region18: #{local_enhancer_forward.27} parent=0 // pred_check
    _
  $region19: #{local_enhancer_forward.27} parent=0 // pred_check_branch
    %20 = sbr.rel (0) target = $region21
  $region20: #{local_enhancer_forward.27} parent=0 // pred_region
    _
  $region21: #{local_enhancer_forward.27} parent=0 // pred_fallthru
    _
  // Predicated region
  $region22: #{local_enhancer_forward.27} parent=0 // pred_check
    _
  $region23: #{local_enhancer_forward.27} parent=0 // pred_check_branch
    %22 = sbr.rel (0) target = $region25
  $region24: #{local_enhancer_forward.27} parent=0 // pred_region
    _
  $region25: #{local_enhancer_forward.27} parent=0 // pred_fallthru
    _
  %v24 = vld [vmem:[%s0] sm:$0xf]
  %v25 = vld [vmem:[%s1] sm:$0xff]
  %v26 = vld [vmem:[%s1 + $0x8] sm:$0xff]
  %v27 = vld [vmem:[%s1 + $0x10] sm:$0xff]
  %v28 = vld [vmem:[%s1 + $0x18] sm:$0xff]
  %v29 = vld [vmem:[%s1 + $0x20] sm:$0xff]
  %v30 = vld [vmem:[%s1 + $0x28] sm:$0xff]
  %v31 = vld [vmem:[%s1 + $0x30] sm:$0xff]
  %v32 = vld [vmem:[%s1 + $0x38] sm:$0xff]
  %v33 = vld [vmem:[%s1 + $0x40] sm:$0xff]
  %v34 = vld [vmem:[%s1 + $0x48] sm:$0xff]
  %v35 = vld [vmem:[%s1 + $0x50] sm:$0xff]
  %v36 = vld [vmem:[%s1 + $0x58] sm:$0xff]
  %v37 = vld [vmem:[%s1 + $0x60] sm:$0xff]
  %v38 = vld [vmem:[%s1 + $0x68] sm:$0xff]
  %v39 = vld [vmem:[%s1 + $0x70] sm:$0xff]
  %v40 = vld [vmem:[%s1 + $0x78] sm:$0xff]
  %v41 = vld [vmem:[%s1 + $0x80] sm:$0xff]
  %v42 = vld [vmem:[%s1 + $0x88] sm:$0xff]
  %v43 = vld [vmem:[%s1 + $0x90] sm:$0xff]
  %v44 = vld [vmem:[%s1 + $0x98] sm:$0xff]
  %v45 = vld [vmem:[%s1 + $0xa0] sm:$0xff]
  %v46 = vld [vmem:[%s1 + $0xa8] sm:$0xff]
  %v47 = vld [vmem:[%s1 + $0xb0] sm:$0xff]
  %v48 = vld [vmem:[%s1 + $0xb8] sm:$0xff]
  %v49 = vld [vmem:[%s1 + $0xc0] sm:$0xff]
  %v50 = vld [vmem:[%s1 + $0xc8] sm:$0xff]
  %v51 = vld [vmem:[%s1 + $0xd0] sm:$0xff]
  %v52 = vld [vmem:[%s1 + $0xd8] sm:$0xff]
  %v53 = vld [vmem:[%s1 + $0xe0] sm:$0xff]
  %v54 = vld [vmem:[%s1 + $0xe8] sm:$0xff]
  %v55 = vld [vmem:[%s1 + $0xf0] sm:$0xff]
  %v56 = vld [vmem:[%s1 + $0xf8] sm:$0xff]
  %v57 = vld [vmem:[%s2] sm:$0xff]
  %59 = vset.pattern.permute.xlu0 0
  %60 = vperm.xlu0 %59, %v57
  %v61 = vpop.permute.xlu0 %60
  %v95 = vunpack.c.l.b16 %v25
  %v96 = vunpack.c.h.b16 %v25
  %v97 = vunpack.c.l.b16 %v26
  %v98 = vunpack.c.h.b16 %v26
  %v99 = vunpack.c.l.b16 %v27
  %v100 = vunpack.c.h.b16 %v27
  %v101 = vunpack.c.l.b16 %v28
  %v102 = vunpack.c.h.b16 %v28
  %v103 = vunpack.c.l.b16 %v29
  %v104 = vunpack.c.h.b16 %v29
  %v105 = vunpack.c.l.b16 %v30
  %v106 = vunpack.c.h.b16 %v30
  %v107 = vunpack.c.l.b16 %v31
  %v108 = vunpack.c.h.b16 %v31
  %v109 = vunpack.c.l.b16 %v32
  %v110 = vunpack.c.h.b16 %v32
  %v111 = vunpack.c.l.b16 %v33
  %v112 = vunpack.c.h.b16 %v33
  %v113 = vunpack.c.l.b16 %v34
  %v114 = vunpack.c.h.b16 %v34
  %v115 = vunpack.c.l.b16 %v35
  %v116 = vunpack.c.h.b16 %v35
  %v117 = vunpack.c.l.b16 %v36
  %v118 = vunpack.c.h.b16 %v36
  %v119 = vunpack.c.l.b16 %v37
  %v120 = vunpack.c.h.b16 %v37
  %v121 = vunpack.c.l.b16 %v38
  %v122 = vunpack.c.h.b16 %v38
  %v123 = vunpack.c.l.b16 %v39
  %v124 = vunpack.c.h.b16 %v39
  %v125 = vunpack.c.l.b16 %v40
  %v126 = vunpack.c.h.b16 %v40
  %v127 = vunpack.c.l.b16 %v41
  %v128 = vunpack.c.h.b16 %v41
  %v129 = vunpack.c.l.b16 %v42
  %v130 = vunpack.c.h.b16 %v42
  %v131 = vunpack.c.l.b16 %v43
  %v132 = vunpack.c.h.b16 %v43
  %v133 = vunpack.c.l.b16 %v44
  %v134 = vunpack.c.h.b16 %v44
  %v135 = vunpack.c.l.b16 %v45
  %v136 = vunpack.c.h.b16 %v45
  %v137 = vunpack.c.l.b16 %v46
  %v138 = vunpack.c.h.b16 %v46
  %v139 = vunpack.c.l.b16 %v47
  %v140 = vunpack.c.h.b16 %v47
  %v141 = vunpack.c.l.b16 %v48
  %v142 = vunpack.c.h.b16 %v48
  %v143 = vunpack.c.l.b16 %v49
  %v144 = vunpack.c.h.b16 %v49
  %v145 = vunpack.c.l.b16 %v50
  %v146 = vunpack.c.h.b16 %v50
  %v147 = vunpack.c.l.b16 %v51
  %v148 = vunpack.c.h.b16 %v51
  %v149 = vunpack.c.l.b16 %v52
  %v150 = vunpack.c.h.b16 %v52
  %v151 = vunpack.c.l.b16 %v53
  %v152 = vunpack.c.h.b16 %v53
  %v153 = vunpack.c.l.b16 %v54
  %v154 = vunpack.c.h.b16 %v54
  %v155 = vunpack.c.l.b16 %v55
  %v156 = vunpack.c.h.b16 %v55
  %v157 = vunpack.c.l.b16 %v56
  %v158 = vunpack.c.h.b16 %v56
  %v159 = vpack.c.b16 %v99, %v95
  %v160 = vpack.c.b16 %v100, %v96
  %v161 = vpack.c.b16 %v101, %v97
  %v162 = vpack.c.b16 %v102, %v98
  %v163 = vpack.c.b16 %v107, %v103
  %v164 = vpack.c.b16 %v108, %v104
  %v165 = vpack.c.b16 %v109, %v105
  %v166 = vpack.c.b16 %v110, %v106
  %v167 = vpack.c.b16 %v115, %v111
  %v168 = vpack.c.b16 %v116, %v112
  %v169 = vpack.c.b16 %v117, %v113
  %v170 = vpack.c.b16 %v118, %v114
  %v171 = vpack.c.b16 %v123, %v119
  %v172 = vpack.c.b16 %v124, %v120
  %v173 = vpack.c.b16 %v125, %v121
  %v174 = vpack.c.b16 %v126, %v122
  %v175 = vpack.c.b16 %v131, %v127
  %v176 = vpack.c.b16 %v132, %v128
  %v177 = vpack.c.b16 %v133, %v129
  %v178 = vpack.c.b16 %v134, %v130
  %v179 = vpack.c.b16 %v139, %v135
  %v180 = vpack.c.b16 %v140, %v136
  %v181 = vpack.c.b16 %v141, %v137
  %v182 = vpack.c.b16 %v142, %v138
  %v183 = vpack.c.b16 %v147, %v143
  %v184 = vpack.c.b16 %v148, %v144
  %v185 = vpack.c.b16 %v149, %v145
  %v186 = vpack.c.b16 %v150, %v146
  %v187 = vpack.c.b16 %v155, %v151
  %v188 = vpack.c.b16 %v156, %v152
  %v189 = vpack.c.b16 %v157, %v153
  %v190 = vpack.c.b16 %v158, %v154
  %223 = vmatprep.subr.bf16.mxu0 %v160
  %224 = vmatpush1.bf16.msra.mxu0 %v159
  %225 = vmatprep.subr.bf16.mxu0 %v164
  %226 = vmatpush1.bf16.msra.mxu0 %v163
  %227 = vmatprep.subr.bf16.mxu0 %v168
  %228 = vmatpush1.bf16.msra.mxu0 %v167
  %229 = vmatprep.subr.bf16.mxu0 %v172
  %230 = vmatpush1.bf16.msra.mxu0 %v171
  %231 = vmatprep.subr.bf16.mxu0 %v176
  %232 = vmatpush1.bf16.msra.mxu0 %v175
  %233 = vmatprep.subr.bf16.mxu0 %v180
  %234 = vmatpush1.bf16.msra.mxu0 %v179
  %235 = vmatprep.subr.bf16.mxu0 %v184
  %236 = vmatpush1.bf16.msra.mxu0 %v183
  %237 = vmatprep.subr.bf16.mxu0 %v188
  %238 = vmatpush1.bf16.msra.mxu0 %v187
  %239 = vmatprep.subr.bf16.mxu0 0
  %240 = vmatpush1.bf16.msra.mxu0 0
  %241 = vmatprep.subr.bf16.mxu0 0
  %242 = vmatpush1.bf16.msra.mxu0 0
  %243 = vmatprep.subr.bf16.mxu0 0
  %244 = vmatpush1.bf16.msra.mxu0 0
  %245 = vmatprep.subr.bf16.mxu0 0
  %246 = vmatpush1.bf16.msra.mxu0 0
  %247 = vmatprep.subr.bf16.mxu0 0
  %248 = vmatpush1.bf16.msra.mxu0 0
  %249 = vmatprep.subr.bf16.mxu0 0
  %250 = vmatpush1.bf16.msra.mxu0 0
  %251 = vmatprep.subr.bf16.mxu0 0
  %252 = vmatpush1.bf16.msra.mxu0 0
  %253 = vmatprep.subr.bf16.mxu0 0
  %254 = vmatpush1.bf16.msra.mxu0 0
  %255 = vmatprep.mubr.bf16.mxu0 0
  %256 = vmatmul.mubr.bf16.gmra.mrb[0].mxu0 %v24
  %v257 = vpop.f32.mrb[0].mxu0
  %v258 = vadd.f32 %v61, %v257
  %v259 = vpop.f32.mrb[0].mxu0
  %v260 = vadd.f32 %v61, %v259
  %v261 = vpop.f32.mrb[0].mxu0
  %v262 = vpop.f32.mrb[0].mxu0
  %263 = vdwg.mxu0
  %264 = vmatprep.subr.bf16.mxu0 %v162
  %265 = vmatpush1.bf16.msra.mxu0 %v161
  %266 = vmatprep.subr.bf16.mxu0 %v166
  %267 = vmatpush1.bf16.msra.mxu0 %v165
  %268 = vmatprep.subr.bf16.mxu0 %v170
  %269 = vmatpush1.bf16.msra.mxu0 %v169
  %270 = vmatprep.subr.bf16.mxu0 %v174
  %271 = vmatpush1.bf16.msra.mxu0 %v173
  %272 = vmatprep.subr.bf16.mxu0 %v178
  %273 = vmatpush1.bf16.msra.mxu0 %v177
  %274 = vmatprep.subr.bf16.mxu0 %v182
  %275 = vmatpush1.bf16.msra.mxu0 %v181
  %276 = vmatprep.subr.bf16.mxu0 %v186
  %277 = vmatpush1.bf16.msra.mxu0 %v185
  %278 = vmatprep.subr.bf16.mxu0 %v190
  %279 = vmatpush1.bf16.msra.mxu0 %v189
  %280 = vmatprep.subr.bf16.mxu0 0
  %281 = vmatpush1.bf16.msra.mxu0 0
  %282 = vmatprep.subr.bf16.mxu0 0
  %283 = vmatpush1.bf16.msra.mxu0 0
  %284 = vmatprep.subr.bf16.mxu0 0
  %285 = vmatpush1.bf16.msra.mxu0 0
  %286 = vmatprep.subr.bf16.mxu0 0
  %287 = vmatpush1.bf16.msra.mxu0 0
  %288 = vmatprep.subr.bf16.mxu0 0
  %289 = vmatpush1.bf16.msra.mxu0 0
  %290 = vmatprep.subr.bf16.mxu0 0
  %291 = vmatpush1.bf16.msra.mxu0 0
  %292 = vmatprep.subr.bf16.mxu0 0
  %293 = vmatpush1.bf16.msra.mxu0 0
  %294 = vmatprep.subr.bf16.mxu0 0
  %295 = vmatpush1.bf16.msra.mxu0 0
  %296 = vmatprep.mubr.bf16.mxu0 0
  %297 = vmatmul.mubr.bf16.gmra.mrb[0].mxu0 %v24
  %v298 = vpop.f32.mrb[0].mxu0
  %v299 = vadd.f32 %v61, %v298
  %v300 = vpop.f32.mrb[0].mxu0
  %v301 = vadd.f32 %v61, %v300
  %v302 = vpop.f32.mrb[0].mxu0
  %v303 = vpop.f32.mrb[0].mxu0
  %304 = vdwg.mxu0
  %v305 = vadd.f32 %v258, %v260
  %v306 = vadd.f32 %v305, %v299
  %v307 = vadd.f32 %v306, %v301
  %308 = vadd.xlane.f32.xlu0 %v307
  %v309 = vpop.xlane.xlu0 %308
  %v310 = vmul.f32 %v258, %v258
  %v311 = vmul.f32 %v260, %v260
  %v312 = vmul.f32 %v299, %v299
  %v313 = vmul.f32 %v301, %v301
  %v314 = vadd.f32 %v310, %v311
  %v315 = vadd.f32 %v314, %v312
  %v316 = vadd.f32 %v315, %v313
  %317 = vadd.xlane.f32.xlu0 %v316
  %v318 = vpop.xlane.xlu0 %317
  %v319 = vmul.f32 %v309, 0.001953125
  %v320 = vmul.f32 %v318, 0.001953125
  %v321 = vmul.f32 %v319, %v319
  %v322 = vsub.f32 %v320, %v321
  %v323 = vmax.f32 %v322, 0.0
  %v324 = vld [vmem:[%s3] sm:$0xff]
  %v325 = vadd.f32 %v323, 1e-05
  %v326 = vrsqrt.pop %v325
  %v327 = vmul.f32 %v324, %v326
  %v328 = vld [vmem:[%s4] sm:$0xff]
  %v329 = vmul.f32 %v319, %v327
  %v330 = vsub.f32 %v328, %v329
  %332 = vset.pattern.permute.xlu0 0
  %333 = vperm.xlu0 %332, %v327
  %v334 = vpop.permute.xlu0 %333
  %v336 = vmul.f32 %v258, %v334
  %v337 = vmul.f32 %v260, %v334
  %v338 = vmul.f32 %v299, %v334
  %v339 = vmul.f32 %v301, %v334
  %341 = vset.pattern.permute.xlu0 0
  %342 = vperm.xlu0 %341, %v330
  %v343 = vpop.permute.xlu0 %342
  %v345 = vadd.f32 %v336, %v343
  %v346 = vadd.f32 %v337, %v343
  %v347 = vadd.f32 %v338, %v343
  %v348 = vadd.f32 %v339, %v343
  %v349 = vmax.f32 %v345, 0.0
  %v350 = vmax.f32 %v346, 0.0
  %v351 = vmax.f32 %v347, 0.0
  %v352 = vmax.f32 %v348, 0.0
  %v353 = vld [vmem:[%s5] sm:$0xff]
  %v354 = vld [vmem:[%s5 + $0x8] sm:$0xff]
  %v355 = vunpack.c.l.bf16 %v353
  %v356 = vunpack.c.h.bf16 %v353
  %v357 = vunpack.c.l.bf16 %v354
  %v358 = vunpack.c.h.bf16 %v354
  %v359 = vadd.f32 %v349, %v355
  %v360 = vadd.f32 %v350, %v356
  %v361 = vadd.f32 %v351, %v357
  %v362 = vadd.f32 %v352, %v358
  %v363 = vpack.c.bf16 %v359, %v359
  %v364 = vpack.c.bf16 %v360, %v360
  %v365 = vpack.c.bf16 %v361, %v361
  %v366 = vpack.c.bf16 %v362, %v362
  %v371 = vunpack.c.l.b16 %v363
  %v372 = vunpack.c.l.b16 %v364
  %v373 = vunpack.c.l.b16 %v365
  %v374 = vunpack.c.l.b16 %v366
  %v375 = vpack.c.b16 %v372, %v371
  %v376 = vpack.c.b16 %v374, %v373
  %379 = vst [vmem:[%s6] sm:$0xff] %v375
  %380 = vst [vmem:[%s6 + $0x8] sm:$0xff] %v376
  // Predicated region
  $region26: #{local_enhancer_forward.27} parent=0 // pred_check
    _
  $region27: #{local_enhancer_forward.27} parent=0 // pred_check_branch
    %382 = sbr.rel (0) target = $region29
  $region28: #{local_enhancer_forward.27} parent=0 // pred_region
    _
  $region29: #{local_enhancer_forward.27} parent=0 // pred_fallthru
    _
  // Predicated region
  $region30: #{local_enhancer_forward.27} parent=0 // pred_check
    _
  $region31: #{local_enhancer_forward.27} parent=0 // pred_check_branch
    %384 = sbr.rel (0) target = $region33
  $region32: #{local_enhancer_forward.27} parent=0 // pred_region
    _
  $region33: #{local_enhancer_forward.27} parent=0 // pred_fallthru
    _

// kernel: local_enhancer_forward.28
$region0: #{local_enhancer_forward.28}
  #allocation0 [shape = 'u32[]', space=smem, size = 0x4, offset = 0x4, fixed_abs, tag = 'smem constant byte address 0x4 - core index']
  #allocation1 [shape = 'u32[144,128]{1,0:T(1,128)}', space=vmem, size = 0x12000, scoped, tag = 'internal scratch']
  %s0 = inlined_call_operand.vmem [shape: bf16[8,128], index: 0, kind: input, shape index: {}]
  %s1 = inlined_call_operand.vmem [shape: bf16[128,512], index: 1, kind: input, shape index: {}]
  %s2 = inlined_call_operand.vmem [shape: f32[8,1], index: 2, kind: input, shape index: {}]
  %s3 = inlined_call_operand.vmem [shape: f32[8,1], index: 3, kind: input, shape index: {}]
  %s4 = inlined_call_operand.vmem [shape: f32[8,1], index: 4, kind: input, shape index: {}]
  %s5 = inlined_call_operand.vmem [shape: bf16[8,512], index: 5, kind: output, shape index: {}]
  %s6 = sld [smem:[#allocation0]]
  $region30: #{local_enhancer_forward.28} parent=0
    _
  %s8 = ssub.s32 1, %s6
  %s9 = scalar_select 0, %s8, %s6
  // Predicated region
  $region2: #{local_enhancer_forward.28} parent=0 // pred_check
    _
  $region3: #{local_enhancer_forward.28} parent=0 // pred_check_branch
    %11 = sbr.rel (0) target = $region5
  $region4: #{local_enhancer_forward.28} parent=0 // pred_region
    _
  $region5: #{local_enhancer_forward.28} parent=0 // pred_fallthru
    _
  // Predicated region
  $region6: #{local_enhancer_forward.28} parent=0 // pred_check
    _
  $region7: #{local_enhancer_forward.28} parent=0 // pred_check_branch
    %13 = sbr.rel (0) target = $region9
  $region8: #{local_enhancer_forward.28} parent=0 // pred_region
    _
  $region9: #{local_enhancer_forward.28} parent=0 // pred_fallthru
    _
  // Predicated region
  $region10: #{local_enhancer_forward.28} parent=0 // pred_check
    _
  $region11: #{local_enhancer_forward.28} parent=0 // pred_check_branch
    %15 = sbr.rel (0) target = $region13
  $region12: #{local_enhancer_forward.28} parent=0 // pred_region
    _
  $region13: #{local_enhancer_forward.28} parent=0 // pred_fallthru
    _
  // Predicated region
  $region14: #{local_enhancer_forward.28} parent=0 // pred_check
    _
  $region15: #{local_enhancer_forward.28} parent=0 // pred_check_branch
    %17 = sbr.rel (0) target = $region17
  $region16: #{local_enhancer_forward.28} parent=0 // pred_region
    _
  $region17: #{local_enhancer_forward.28} parent=0 // pred_fallthru
    _
  // Predicated region
  $region18: #{local_enhancer_forward.28} parent=0 // pred_check
    _
  $region19: #{local_enhancer_forward.28} parent=0 // pred_check_branch
    %19 = sbr.rel (0) target = $region21
  $region20: #{local_enhancer_forward.28} parent=0 // pred_region
    _
  $region21: #{local_enhancer_forward.28} parent=0 // pred_fallthru
    _
  %v21 = vld [vmem:[%s0] sm:$0xf]
  %v22 = vld [vmem:[%s1] sm:$0xff]
  %v23 = vld [vmem:[%s1 + $0x8] sm:$0xff]
  %v24 = vld [vmem:[%s1 + $0x10] sm:$0xff]
  %v25 = vld [vmem:[%s1 + $0x18] sm:$0xff]
  %v26 = vld [vmem:[%s1 + $0x20] sm:$0xff]
  %v27 = vld [vmem:[%s1 + $0x28] sm:$0xff]
  %v28 = vld [vmem:[%s1 + $0x30] sm:$0xff]
  %v29 = vld [vmem:[%s1 + $0x38] sm:$0xff]
  %v30 = vld [vmem:[%s1 + $0x40] sm:$0xff]
  %v31 = vld [vmem:[%s1 + $0x48] sm:$0xff]
  %v32 = vld [vmem:[%s1 + $0x50] sm:$0xff]
  %v33 = vld [vmem:[%s1 + $0x58] sm:$0xff]
  %v34 = vld [vmem:[%s1 + $0x60] sm:$0xff]
  %v35 = vld [vmem:[%s1 + $0x68] sm:$0xff]
  %v36 = vld [vmem:[%s1 + $0x70] sm:$0xff]
  %v37 = vld [vmem:[%s1 + $0x78] sm:$0xff]
  %v38 = vld [vmem:[%s1 + $0x80] sm:$0xff]
  %v39 = vld [vmem:[%s1 + $0x88] sm:$0xff]
  %v40 = vld [vmem:[%s1 + $0x90] sm:$0xff]
  %v41 = vld [vmem:[%s1 + $0x98] sm:$0xff]
  %v42 = vld [vmem:[%s1 + $0xa0] sm:$0xff]
  %v43 = vld [vmem:[%s1 + $0xa8] sm:$0xff]
  %v44 = vld [vmem:[%s1 + $0xb0] sm:$0xff]
  %v45 = vld [vmem:[%s1 + $0xb8] sm:$0xff]
  %v46 = vld [vmem:[%s1 + $0xc0] sm:$0xff]
  %v47 = vld [vmem:[%s1 + $0xc8] sm:$0xff]
  %v48 = vld [vmem:[%s1 + $0xd0] sm:$0xff]
  %v49 = vld [vmem:[%s1 + $0xd8] sm:$0xff]
  %v50 = vld [vmem:[%s1 + $0xe0] sm:$0xff]
  %v51 = vld [vmem:[%s1 + $0xe8] sm:$0xff]
  %v52 = vld [vmem:[%s1 + $0xf0] sm:$0xff]
  %v53 = vld [vmem:[%s1 + $0xf8] sm:$0xff]
  %v54 = vld [vmem:[%s2] sm:$0xff]
  %56 = vset.pattern.permute.xlu0 0
  %57 = vperm.xlu0 %56, %v54
  %v58 = vpop.permute.xlu0 %57
  %v92 = vunpack.c.l.b16 %v22
  %v93 = vunpack.c.h.b16 %v22
  %v94 = vunpack.c.l.b16 %v23
  %v95 = vunpack.c.h.b16 %v23
  %v96 = vunpack.c.l.b16 %v24
  %v97 = vunpack.c.h.b16 %v24
  %v98 = vunpack.c.l.b16 %v25
  %v99 = vunpack.c.h.b16 %v25
  %v100 = vunpack.c.l.b16 %v26
  %v101 = vunpack.c.h.b16 %v26
  %v102 = vunpack.c.l.b16 %v27
  %v103 = vunpack.c.h.b16 %v27
  %v104 = vunpack.c.l.b16 %v28
  %v105 = vunpack.c.h.b16 %v28
  %v106 = vunpack.c.l.b16 %v29
  %v107 = vunpack.c.h.b16 %v29
  %v108 = vunpack.c.l.b16 %v30
  %v109 = vunpack.c.h.b16 %v30
  %v110 = vunpack.c.l.b16 %v31
  %v111 = vunpack.c.h.b16 %v31
  %v112 = vunpack.c.l.b16 %v32
  %v113 = vunpack.c.h.b16 %v32
  %v114 = vunpack.c.l.b16 %v33
  %v115 = vunpack.c.h.b16 %v33
  %v116 = vunpack.c.l.b16 %v34
  %v117 = vunpack.c.h.b16 %v34
  %v118 = vunpack.c.l.b16 %v35
  %v119 = vunpack.c.h.b16 %v35
  %v120 = vunpack.c.l.b16 %v36
  %v121 = vunpack.c.h.b16 %v36
  %v122 = vunpack.c.l.b16 %v37
  %v123 = vunpack.c.h.b16 %v37
  %v124 = vunpack.c.l.b16 %v38
  %v125 = vunpack.c.h.b16 %v38
  %v126 = vunpack.c.l.b16 %v39
  %v127 = vunpack.c.h.b16 %v39
  %v128 = vunpack.c.l.b16 %v40
  %v129 = vunpack.c.h.b16 %v40
  %v130 = vunpack.c.l.b16 %v41
  %v131 = vunpack.c.h.b16 %v41
  %v132 = vunpack.c.l.b16 %v42
  %v133 = vunpack.c.h.b16 %v42
  %v134 = vunpack.c.l.b16 %v43
  %v135 = vunpack.c.h.b16 %v43
  %v136 = vunpack.c.l.b16 %v44
  %v137 = vunpack.c.h.b16 %v44
  %v138 = vunpack.c.l.b16 %v45
  %v139 = vunpack.c.h.b16 %v45
  %v140 = vunpack.c.l.b16 %v46
  %v141 = vunpack.c.h.b16 %v46
  %v142 = vunpack.c.l.b16 %v47
  %v143 = vunpack.c.h.b16 %v47
  %v144 = vunpack.c.l.b16 %v48
  %v145 = vunpack.c.h.b16 %v48
  %v146 = vunpack.c.l.b16 %v49
  %v147 = vunpack.c.h.b16 %v49
  %v148 = vunpack.c.l.b16 %v50
  %v149 = vunpack.c.h.b16 %v50
  %v150 = vunpack.c.l.b16 %v51
  %v151 = vunpack.c.h.b16 %v51
  %v152 = vunpack.c.l.b16 %v52
  %v153 = vunpack.c.h.b16 %v52
  %v154 = vunpack.c.l.b16 %v53
  %v155 = vunpack.c.h.b16 %v53
  %v156 = vpack.c.b16 %v96, %v92
  %v157 = vpack.c.b16 %v97, %v93
  %v158 = vpack.c.b16 %v98, %v94
  %v159 = vpack.c.b16 %v99, %v95
  %v160 = vpack.c.b16 %v104, %v100
  %v161 = vpack.c.b16 %v105, %v101
  %v162 = vpack.c.b16 %v106, %v102
  %v163 = vpack.c.b16 %v107, %v103
  %v164 = vpack.c.b16 %v112, %v108
  %v165 = vpack.c.b16 %v113, %v109
  %v166 = vpack.c.b16 %v114, %v110
  %v167 = vpack.c.b16 %v115, %v111
  %v168 = vpack.c.b16 %v120, %v116
  %v169 = vpack.c.b16 %v121, %v117
  %v170 = vpack.c.b16 %v122, %v118
  %v171 = vpack.c.b16 %v123, %v119
  %v172 = vpack.c.b16 %v128, %v124
  %v173 = vpack.c.b16 %v129, %v125
  %v174 = vpack.c.b16 %v130, %v126
  %v175 = vpack.c.b16 %v131, %v127
  %v176 = vpack.c.b16 %v136, %v132
  %v177 = vpack.c.b16 %v137, %v133
  %v178 = vpack.c.b16 %v138, %v134
  %v179 = vpack.c.b16 %v139, %v135
  %v180 = vpack.c.b16 %v144, %v140
  %v181 = vpack.c.b16 %v145, %v141
  %v182 = vpack.c.b16 %v146, %v142
  %v183 = vpack.c.b16 %v147, %v143
  %v184 = vpack.c.b16 %v152, %v148
  %v185 = vpack.c.b16 %v153, %v149
  %v186 = vpack.c.b16 %v154, %v150
  %v187 = vpack.c.b16 %v155, %v151
  %220 = vmatprep.subr.bf16.mxu0 %v157
  %221 = vmatpush1.bf16.msra.mxu0 %v156
  %222 = vmatprep.subr.bf16.mxu0 %v161
  %223 = vmatpush1.bf16.msra.mxu0 %v160
  %224 = vmatprep.subr.bf16.mxu0 %v165
  %225 = vmatpush1.bf16.msra.mxu0 %v164
  %226 = vmatprep.subr.bf16.mxu0 %v169
  %227 = vmatpush1.bf16.msra.mxu0 %v168
  %228 = vmatprep.subr.bf16.mxu0 %v173
  %229 = vmatpush1.bf16.msra.mxu0 %v172
  %230 = vmatprep.subr.bf16.mxu0 %v177
  %231 = vmatpush1.bf16.msra.mxu0 %v176
  %232 = vmatprep.subr.bf16.mxu0 %v181
  %233 = vmatpush1.bf16.msra.mxu0 %v180
  %234 = vmatprep.subr.bf16.mxu0 %v185
  %235 = vmatpush1.bf16.msra.mxu0 %v184
  %236 = vmatprep.subr.bf16.mxu0 0
  %237 = vmatpush1.bf16.msra.mxu0 0
  %238 = vmatprep.subr.bf16.mxu0 0
  %239 = vmatpush1.bf16.msra.mxu0 0
  %240 = vmatprep.subr.bf16.mxu0 0
  %241 = vmatpush1.bf16.msra.mxu0 0
  %242 = vmatprep.subr.bf16.mxu0 0
  %243 = vmatpush1.bf16.msra.mxu0 0
  %244 = vmatprep.subr.bf16.mxu0 0
  %245 = vmatpush1.bf16.msra.mxu0 0
  %246 = vmatprep.subr.bf16.mxu0 0
  %247 = vmatpush1.bf16.msra.mxu0 0
  %248 = vmatprep.subr.bf16.mxu0 0
  %249 = vmatpush1.bf16.msra.mxu0 0
  %250 = vmatprep.subr.bf16.mxu0 0
  %251 = vmatpush1.bf16.msra.mxu0 0
  %252 = vmatprep.mubr.bf16.mxu0 0
  %253 = vmatmul.mubr.bf16.gmra.mrb[0].mxu0 %v21
  %v254 = vpop.f32.mrb[0].mxu0
  %v255 = vadd.f32 %v58, %v254
  %v256 = vpop.f32.mrb[0].mxu0
  %v257 = vadd.f32 %v58, %v256
  %v258 = vpop.f32.mrb[0].mxu0
  %v259 = vpop.f32.mrb[0].mxu0
  %260 = vdwg.mxu0
  %261 = vmatprep.subr.bf16.mxu0 %v159
  %262 = vmatpush1.bf16.msra.mxu0 %v158
  %263 = vmatprep.subr.bf16.mxu0 %v163
  %264 = vmatpush1.bf16.msra.mxu0 %v162
  %265 = vmatprep.subr.bf16.mxu0 %v167
  %266 = vmatpush1.bf16.msra.mxu0 %v166
  %267 = vmatprep.subr.bf16.mxu0 %v171
  %268 = vmatpush1.bf16.msra.mxu0 %v170
  %269 = vmatprep.subr.bf16.mxu0 %v175
  %270 = vmatpush1.bf16.msra.mxu0 %v174
  %271 = vmatprep.subr.bf16.mxu0 %v179
  %272 = vmatpush1.bf16.msra.mxu0 %v178
  %273 = vmatprep.subr.bf16.mxu0 %v183
  %274 = vmatpush1.bf16.msra.mxu0 %v182
  %275 = vmatprep.subr.bf16.mxu0 %v187
  %276 = vmatpush1.bf16.msra.mxu0 %v186
  %277 = vmatprep.subr.bf16.mxu0 0
  %278 = vmatpush1.bf16.msra.mxu0 0
  %279 = vmatprep.subr.bf16.mxu0 0
  %280 = vmatpush1.bf16.msra.mxu0 0
  %281 = vmatprep.subr.bf16.mxu0 0
  %282 = vmatpush1.bf16.msra.mxu0 0
  %283 = vmatprep.subr.bf16.mxu0 0
  %284 = vmatpush1.bf16.msra.mxu0 0
  %285 = vmatprep.subr.bf16.mxu0 0
  %286 = vmatpush1.bf16.msra.mxu0 0
  %287 = vmatprep.subr.bf16.mxu0 0
  %288 = vmatpush1.bf16.msra.mxu0 0
  %289 = vmatprep.subr.bf16.mxu0 0
  %290 = vmatpush1.bf16.msra.mxu0 0
  %291 = vmatprep.subr.bf16.mxu0 0
  %292 = vmatpush1.bf16.msra.mxu0 0
  %293 = vmatprep.mubr.bf16.mxu0 0
  %294 = vmatmul.mubr.bf16.gmra.mrb[0].mxu0 %v21
  %v295 = vpop.f32.mrb[0].mxu0
  %v296 = vadd.f32 %v58, %v295
  %v297 = vpop.f32.mrb[0].mxu0
  %v298 = vadd.f32 %v58, %v297
  %v299 = vpop.f32.mrb[0].mxu0
  %v300 = vpop.f32.mrb[0].mxu0
  %301 = vdwg.mxu0
  %v302 = vadd.f32 %v255, %v257
  %v303 = vadd.f32 %v302, %v296
  %v304 = vadd.f32 %v303, %v298
  %305 = vadd.xlane.f32.xlu0 %v304
  %v306 = vpop.xlane.xlu0 %305
  %v307 = vmul.f32 %v255, %v255
  %v308 = vmul.f32 %v257, %v257
  %v309 = vmul.f32 %v296, %v296
  %v310 = vmul.f32 %v298, %v298
  %v311 = vadd.f32 %v307, %v308
  %v312 = vadd.f32 %v311, %v309
  %v313 = vadd.f32 %v312, %v310
  %314 = vadd.xlane.f32.xlu0 %v313
  %v315 = vpop.xlane.xlu0 %314
  %v316 = vmul.f32 %v306, 0.001953125
  %v317 = vmul.f32 %v315, 0.001953125
  %v318 = vmul.f32 %v316, %v316
  %v319 = vsub.f32 %v317, %v318
  %v320 = vmax.f32 %v319, 0.0
  %v321 = vld [vmem:[%s3] sm:$0xff]
  %v322 = vadd.f32 %v320, 1e-05
  %v323 = vrsqrt.pop %v322
  %v324 = vmul.f32 %v321, %v323
  %v325 = vld [vmem:[%s4] sm:$0xff]
  %v326 = vmul.f32 %v316, %v324
  %v327 = vsub.f32 %v325, %v326
  %329 = vset.pattern.permute.xlu0 0
  %330 = vperm.xlu0 %329, %v324
  %v331 = vpop.permute.xlu0 %330
  %v333 = vmul.f32 %v255, %v331
  %v334 = vmul.f32 %v257, %v331
  %v335 = vmul.f32 %v296, %v331
  %v336 = vmul.f32 %v298, %v331
  %338 = vset.pattern.permute.xlu0 0
  %339 = vperm.xlu0 %338, %v327
  %v340 = vpop.permute.xlu0 %339
  %v342 = vadd.f32 %v333, %v340
  %v343 = vadd.f32 %v334, %v340
  %v344 = vadd.f32 %v335, %v340
  %v345 = vadd.f32 %v336, %v340
  %v346 = vmax.f32 %v342, 0.0
  %v347 = vmax.f32 %v343, 0.0
  %v348 = vmax.f32 %v344, 0.0
  %v349 = vmax.f32 %v345, 0.0
  %v350 = vpack.c.bf16 %v346, %v346
  %v351 = vpack.c.bf16 %v347, %v347
  %v352 = vpack.c.bf16 %v348, %v348
  %v353 = vpack.c.bf16 %v349, %v349
  %v358 = vunpack.c.l.b16 %v350
  %v359 = vunpack.c.l.b16 %v351
  %v360 = vunpack.c.l.b16 %v352
  %v361 = vunpack.c.l.b16 %v353
  %v362 = vpack.c.b16 %v359, %v358
  %v363 = vpack.c.b16 %v361, %v360
  %366 = vst [vmem:[%s5] sm:$0xff] %v362
  %367 = vst [vmem:[%s5 + $0x8] sm:$0xff] %v363
  // Predicated region
  $region22: #{local_enhancer_forward.28} parent=0 // pred_check
    _
  $region23: #{local_enhancer_forward.28} parent=0 // pred_check_branch
    %369 = sbr.rel (0) target = $region25
  $region24: #{local_enhancer_forward.28} parent=0 // pred_region
    _
  $region25: #{local_enhancer_forward.28} parent=0 // pred_fallthru
    _
  // Predicated region
  $region26: #{local_enhancer_forward.28} parent=0 // pred_check
    _
  $region27: #{local_enhancer_forward.28} parent=0 // pred_check_branch
    %371 = sbr.rel (0) target = $region29
  $region28: #{local_enhancer_forward.28} parent=0 // pred_region
    _
  $region29: #{local_enhancer_forward.28} parent=0 // pred_fallthru
    _

// kernel: local_enhancer_forward.29
$region0: #{local_enhancer_forward.29}
  #allocation0 [shape = 'u32[]', space=smem, size = 0x4, offset = 0x4, fixed_abs, tag = 'smem constant byte address 0x4 - core index']
  #allocation1 [shape = 'u32[144,128]{1,0:T(1,128)}', space=vmem, size = 0x12000, scoped, tag = 'internal scratch']
  %s0 = inlined_call_operand.vmem [shape: bf16[8,128], index: 0, kind: input, shape index: {}]
  %s1 = inlined_call_operand.vmem [shape: bf16[128,512], index: 1, kind: input, shape index: {}]
  %s2 = inlined_call_operand.vmem [shape: f32[8,1], index: 2, kind: input, shape index: {}]
  %s3 = inlined_call_operand.vmem [shape: f32[8,1], index: 3, kind: input, shape index: {}]
  %s4 = inlined_call_operand.vmem [shape: f32[8,1], index: 4, kind: input, shape index: {}]
  %s5 = inlined_call_operand.vmem [shape: bf16[8,512], index: 5, kind: input, shape index: {}]
  %s6 = inlined_call_operand.vmem [shape: bf16[8,512], index: 6, kind: output, shape index: {}]
  %s7 = sld [smem:[#allocation0]]
  $region34: #{local_enhancer_forward.29} parent=0
    _
  %s9 = ssub.s32 1, %s7
  %s10 = scalar_select 0, %s9, %s7
  // Predicated region
  $region2: #{local_enhancer_forward.29} parent=0 // pred_check
    _
  $region3: #{local_enhancer_forward.29} parent=0 // pred_check_branch
    %12 = sbr.rel (0) target = $region5
  $region4: #{local_enhancer_forward.29} parent=0 // pred_region
    _
  $region5: #{local_enhancer_forward.29} parent=0 // pred_fallthru
    _
  // Predicated region
  $region6: #{local_enhancer_forward.29} parent=0 // pred_check
    _
  $region7: #{local_enhancer_forward.29} parent=0 // pred_check_branch
    %14 = sbr.rel (0) target = $region9
  $region8: #{local_enhancer_forward.29} parent=0 // pred_region
    _
  $region9: #{local_enhancer_forward.29} parent=0 // pred_fallthru
    _
  // Predicated region
  $region10: #{local_enhancer_forward.29} parent=0 // pred_check
    _
  $region11: #{local_enhancer_forward.29} parent=0 // pred_check_branch
    %16 = sbr.rel (0) target = $region13
  $region12: #{local_enhancer_forward.29} parent=0 // pred_region
    _
  $region13: #{local_enhancer_forward.29} parent=0 // pred_fallthru
    _
  // Predicated region
  $region14: #{local_enhancer_forward.29} parent=0 // pred_check
    _
  $region15: #{local_enhancer_forward.29} parent=0 // pred_check_branch
    %18 = sbr.rel (0) target = $region17
  $region16: #{local_enhancer_forward.29} parent=0 // pred_region
    _
  $region17: #{local_enhancer_forward.29} parent=0 // pred_fallthru
    _
  // Predicated region
  $region18: #{local_enhancer_forward.29} parent=0 // pred_check
    _
  $region19: #{local_enhancer_forward.29} parent=0 // pred_check_branch
    %20 = sbr.rel (0) target = $region21
  $region20: #{local_enhancer_forward.29} parent=0 // pred_region
    _
  $region21: #{local_enhancer_forward.29} parent=0 // pred_fallthru
    _
  // Predicated region
  $region22: #{local_enhancer_forward.29} parent=0 // pred_check
    _
  $region23: #{local_enhancer_forward.29} parent=0 // pred_check_branch
    %22 = sbr.rel (0) target = $region25
  $region24: #{local_enhancer_forward.29} parent=0 // pred_region
    _
  $region25: #{local_enhancer_forward.29} parent=0 // pred_fallthru
    _
  %v24 = vld [vmem:[%s0] sm:$0xf]
  %v25 = vld [vmem:[%s1] sm:$0xff]
  %v26 = vld [vmem:[%s1 + $0x8] sm:$0xff]
  %v27 = vld [vmem:[%s1 + $0x10] sm:$0xff]
  %v28 = vld [vmem:[%s1 + $0x18] sm:$0xff]
  %v29 = vld [vmem:[%s1 + $0x20] sm:$0xff]
  %v30 = vld [vmem:[%s1 + $0x28] sm:$0xff]
  %v31 = vld [vmem:[%s1 + $0x30] sm:$0xff]
  %v32 = vld [vmem:[%s1 + $0x38] sm:$0xff]
  %v33 = vld [vmem:[%s1 + $0x40] sm:$0xff]
  %v34 = vld [vmem:[%s1 + $0x48] sm:$0xff]
  %v35 = vld [vmem:[%s1 + $0x50] sm:$0xff]
  %v36 = vld [vmem:[%s1 + $0x58] sm:$0xff]
  %v37 = vld [vmem:[%s1 + $0x60] sm:$0xff]
  %v38 = vld [vmem:[%s1 + $0x68] sm:$0xff]
  %v39 = vld [vmem:[%s1 + $0x70] sm:$0xff]
  %v40 = vld [vmem:[%s1 + $0x78] sm:$0xff]
  %v41 = vld [vmem:[%s1 + $0x80] sm:$0xff]
  %v42 = vld [vmem:[%s1 + $0x88] sm:$0xff]
  %v43 = vld [vmem:[%s1 + $0x90] sm:$0xff]
  %v44 = vld [vmem:[%s1 + $0x98] sm:$0xff]
  %v45 = vld [vmem:[%s1 + $0xa0] sm:$0xff]
  %v46 = vld [vmem:[%s1 + $0xa8] sm:$0xff]
  %v47 = vld [vmem:[%s1 + $0xb0] sm:$0xff]
  %v48 = vld [vmem:[%s1 + $0xb8] sm:$0xff]
  %v49 = vld [vmem:[%s1 + $0xc0] sm:$0xff]
  %v50 = vld [vmem:[%s1 + $0xc8] sm:$0xff]
  %v51 = vld [vmem:[%s1 + $0xd0] sm:$0xff]
  %v52 = vld [vmem:[%s1 + $0xd8] sm:$0xff]
  %v53 = vld [vmem:[%s1 + $0xe0] sm:$0xff]
  %v54 = vld [vmem:[%s1 + $0xe8] sm:$0xff]
  %v55 = vld [vmem:[%s1 + $0xf0] sm:$0xff]
  %v56 = vld [vmem:[%s1 + $0xf8] sm:$0xff]
  %v57 = vld [vmem:[%s2] sm:$0xff]
  %59 = vset.pattern.permute.xlu0 0
  %60 = vperm.xlu0 %59, %v57
  %v61 = vpop.permute.xlu0 %60
  %v95 = vunpack.c.l.b16 %v25
  %v96 = vunpack.c.h.b16 %v25
  %v97 = vunpack.c.l.b16 %v26
  %v98 = vunpack.c.h.b16 %v26
  %v99 = vunpack.c.l.b16 %v27
  %v100 = vunpack.c.h.b16 %v27
  %v101 = vunpack.c.l.b16 %v28
  %v102 = vunpack.c.h.b16 %v28
  %v103 = vunpack.c.l.b16 %v29
  %v104 = vunpack.c.h.b16 %v29
  %v105 = vunpack.c.l.b16 %v30
  %v106 = vunpack.c.h.b16 %v30
  %v107 = vunpack.c.l.b16 %v31
  %v108 = vunpack.c.h.b16 %v31
  %v109 = vunpack.c.l.b16 %v32
  %v110 = vunpack.c.h.b16 %v32
  %v111 = vunpack.c.l.b16 %v33
  %v112 = vunpack.c.h.b16 %v33
  %v113 = vunpack.c.l.b16 %v34
  %v114 = vunpack.c.h.b16 %v34
  %v115 = vunpack.c.l.b16 %v35
  %v116 = vunpack.c.h.b16 %v35
  %v117 = vunpack.c.l.b16 %v36
  %v118 = vunpack.c.h.b16 %v36
  %v119 = vunpack.c.l.b16 %v37
  %v120 = vunpack.c.h.b16 %v37
  %v121 = vunpack.c.l.b16 %v38
  %v122 = vunpack.c.h.b16 %v38
  %v123 = vunpack.c.l.b16 %v39
  %v124 = vunpack.c.h.b16 %v39
  %v125 = vunpack.c.l.b16 %v40
  %v126 = vunpack.c.h.b16 %v40
  %v127 = vunpack.c.l.b16 %v41
  %v128 = vunpack.c.h.b16 %v41
  %v129 = vunpack.c.l.b16 %v42
  %v130 = vunpack.c.h.b16 %v42
  %v131 = vunpack.c.l.b16 %v43
  %v132 = vunpack.c.h.b16 %v43
  %v133 = vunpack.c.l.b16 %v44
  %v134 = vunpack.c.h.b16 %v44
  %v135 = vunpack.c.l.b16 %v45
  %v136 = vunpack.c.h.b16 %v45
  %v137 = vunpack.c.l.b16 %v46
  %v138 = vunpack.c.h.b16 %v46
  %v139 = vunpack.c.l.b16 %v47
  %v140 = vunpack.c.h.b16 %v47
  %v141 = vunpack.c.l.b16 %v48
  %v142 = vunpack.c.h.b16 %v48
  %v143 = vunpack.c.l.b16 %v49
  %v144 = vunpack.c.h.b16 %v49
  %v145 = vunpack.c.l.b16 %v50
  %v146 = vunpack.c.h.b16 %v50
  %v147 = vunpack.c.l.b16 %v51
  %v148 = vunpack.c.h.b16 %v51
  %v149 = vunpack.c.l.b16 %v52
  %v150 = vunpack.c.h.b16 %v52
  %v151 = vunpack.c.l.b16 %v53
  %v152 = vunpack.c.h.b16 %v53
  %v153 = vunpack.c.l.b16 %v54
  %v154 = vunpack.c.h.b16 %v54
  %v155 = vunpack.c.l.b16 %v55
  %v156 = vunpack.c.h.b16 %v55
  %v157 = vunpack.c.l.b16 %v56
  %v158 = vunpack.c.h.b16 %v56
  %v159 = vpack.c.b16 %v99, %v95
  %v160 = vpack.c.b16 %v100, %v96
  %v161 = vpack.c.b16 %v101, %v97
  %v162 = vpack.c.b16 %v102, %v98
  %v163 = vpack.c.b16 %v107, %v103
  %v164 = vpack.c.b16 %v108, %v104
  %v165 = vpack.c.b16 %v109, %v105
  %v166 = vpack.c.b16 %v110, %v106
  %v167 = vpack.c.b16 %v115, %v111
  %v168 = vpack.c.b16 %v116, %v112
  %v169 = vpack.c.b16 %v117, %v113
  %v170 = vpack.c.b16 %v118, %v114
  %v171 = vpack.c.b16 %v123, %v119
  %v172 = vpack.c.b16 %v124, %v120
  %v173 = vpack.c.b16 %v125, %v121
  %v174 = vpack.c.b16 %v126, %v122
  %v175 = vpack.c.b16 %v131, %v127
  %v176 = vpack.c.b16 %v132, %v128
  %v177 = vpack.c.b16 %v133, %v129
  %v178 = vpack.c.b16 %v134, %v130
  %v179 = vpack.c.b16 %v139, %v135
  %v180 = vpack.c.b16 %v140, %v136
  %v181 = vpack.c.b16 %v141, %v137
  %v182 = vpack.c.b16 %v142, %v138
  %v183 = vpack.c.b16 %v147, %v143
  %v184 = vpack.c.b16 %v148, %v144
  %v185 = vpack.c.b16 %v149, %v145
  %v186 = vpack.c.b16 %v150, %v146
  %v187 = vpack.c.b16 %v155, %v151
  %v188 = vpack.c.b16 %v156, %v152
  %v189 = vpack.c.b16 %v157, %v153
  %v190 = vpack.c.b16 %v158, %v154
  %223 = vmatprep.subr.bf16.mxu0 %v160
  %224 = vmatpush1.bf16.msra.mxu0 %v159
  %225 = vmatprep.subr.bf16.mxu0 %v164
  %226 = vmatpush1.bf16.msra.mxu0 %v163
  %227 = vmatprep.subr.bf16.mxu0 %v168
  %228 = vmatpush1.bf16.msra.mxu0 %v167
  %229 = vmatprep.subr.bf16.mxu0 %v172
  %230 = vmatpush1.bf16.msra.mxu0 %v171
  %231 = vmatprep.subr.bf16.mxu0 %v176
  %232 = vmatpush1.bf16.msra.mxu0 %v175
  %233 = vmatprep.subr.bf16.mxu0 %v180
  %234 = vmatpush1.bf16.msra.mxu0 %v179
  %235 = vmatprep.subr.bf16.mxu0 %v184
  %236 = vmatpush1.bf16.msra.mxu0 %v183
  %237 = vmatprep.subr.bf16.mxu0 %v188
  %238 = vmatpush1.bf16.msra.mxu0 %v187
  %239 = vmatprep.subr.bf16.mxu0 0
  %240 = vmatpush1.bf16.msra.mxu0 0
  %241 = vmatprep.subr.bf16.mxu0 0
  %242 = vmatpush1.bf16.msra.mxu0 0
  %243 = vmatprep.subr.bf16.mxu0 0
  %244 = vmatpush1.bf16.msra.mxu0 0
  %245 = vmatprep.subr.bf16.mxu0 0
  %246 = vmatpush1.bf16.msra.mxu0 0
  %247 = vmatprep.subr.bf16.mxu0 0
  %248 = vmatpush1.bf16.msra.mxu0 0
  %249 = vmatprep.subr.bf16.mxu0 0
  %250 = vmatpush1.bf16.msra.mxu0 0
  %251 = vmatprep.subr.bf16.mxu0 0
  %252 = vmatpush1.bf16.msra.mxu0 0
  %253 = vmatprep.subr.bf16.mxu0 0
  %254 = vmatpush1.bf16.msra.mxu0 0
  %255 = vmatprep.mubr.bf16.mxu0 0
  %256 = vmatmul.mubr.bf16.gmra.mrb[0].mxu0 %v24
  %v257 = vpop.f32.mrb[0].mxu0
  %v258 = vadd.f32 %v61, %v257
  %v259 = vpop.f32.mrb[0].mxu0
  %v260 = vadd.f32 %v61, %v259
  %v261 = vpop.f32.mrb[0].mxu0
  %v262 = vpop.f32.mrb[0].mxu0
  %263 = vdwg.mxu0
  %264 = vmatprep.subr.bf16.mxu0 %v162
  %265 = vmatpush1.bf16.msra.mxu0 %v161
  %266 = vmatprep.subr.bf16.mxu0 %v166
  %267 = vmatpush1.bf16.msra.mxu0 %v165
  %268 = vmatprep.subr.bf16.mxu0 %v170
  %269 = vmatpush1.bf16.msra.mxu0 %v169
  %270 = vmatprep.subr.bf16.mxu0 %v174
  %271 = vmatpush1.bf16.msra.mxu0 %v173
  %272 = vmatprep.subr.bf16.mxu0 %v178
  %273 = vmatpush1.bf16.msra.mxu0 %v177
  %274 = vmatprep.subr.bf16.mxu0 %v182
  %275 = vmatpush1.bf16.msra.mxu0 %v181
  %276 = vmatprep.subr.bf16.mxu0 %v186
  %277 = vmatpush1.bf16.msra.mxu0 %v185
  %278 = vmatprep.subr.bf16.mxu0 %v190
  %279 = vmatpush1.bf16.msra.mxu0 %v189
  %280 = vmatprep.subr.bf16.mxu0 0
  %281 = vmatpush1.bf16.msra.mxu0 0
  %282 = vmatprep.subr.bf16.mxu0 0
  %283 = vmatpush1.bf16.msra.mxu0 0
  %284 = vmatprep.subr.bf16.mxu0 0
  %285 = vmatpush1.bf16.msra.mxu0 0
  %286 = vmatprep.subr.bf16.mxu0 0
  %287 = vmatpush1.bf16.msra.mxu0 0
  %288 = vmatprep.subr.bf16.mxu0 0
  %289 = vmatpush1.bf16.msra.mxu0 0
  %290 = vmatprep.subr.bf16.mxu0 0
  %291 = vmatpush1.bf16.msra.mxu0 0
  %292 = vmatprep.subr.bf16.mxu0 0
  %293 = vmatpush1.bf16.msra.mxu0 0
  %294 = vmatprep.subr.bf16.mxu0 0
  %295 = vmatpush1.bf16.msra.mxu0 0
  %296 = vmatprep.mubr.bf16.mxu0 0
  %297 = vmatmul.mubr.bf16.gmra.mrb[0].mxu0 %v24
  %v298 = vpop.f32.mrb[0].mxu0
  %v299 = vadd.f32 %v61, %v298
  %v300 = vpop.f32.mrb[0].mxu0
  %v301 = vadd.f32 %v61, %v300
  %v302 = vpop.f32.mrb[0].mxu0
  %v303 = vpop.f32.mrb[0].mxu0
  %304 = vdwg.mxu0
  %v305 = vadd.f32 %v258, %v260
  %v306 = vadd.f32 %v305, %v299
  %v307 = vadd.f32 %v306, %v301
  %308 = vadd.xlane.f32.xlu0 %v307
  %v309 = vpop.xlane.xlu0 %308
  %v310 = vmul.f32 %v258, %v258
  %v311 = vmul.f32 %v260, %v260
  %v312 = vmul.f32 %v299, %v299
  %v313 = vmul.f32 %v301, %v301
  %v314 = vadd.f32 %v310, %v311
  %v315 = vadd.f32 %v314, %v312
  %v316 = vadd.f32 %v315, %v313
  %317 = vadd.xlane.f32.xlu0 %v316
  %v318 = vpop.xlane.xlu0 %317
  %v319 = vmul.f32 %v309, 0.001953125
  %v320 = vmul.f32 %v318, 0.001953125
  %v321 = vmul.f32 %v319, %v319
  %v322 = vsub.f32 %v320, %v321
  %v323 = vmax.f32 %v322, 0.0
  %v324 = vld [vmem:[%s3] sm:$0xff]
  %v325 = vadd.f32 %v323, 1e-05
  %v326 = vrsqrt.pop %v325
  %v327 = vmul.f32 %v324, %v326
  %v328 = vld [vmem:[%s4] sm:$0xff]
  %v329 = vmul.f32 %v319, %v327
  %v330 = vsub.f32 %v328, %v329
  %332 = vset.pattern.permute.xlu0 0
  %333 = vperm.xlu0 %332, %v327
  %v334 = vpop.permute.xlu0 %333
  %v336 = vmul.f32 %v258, %v334
  %v337 = vmul.f32 %v260, %v334
  %v338 = vmul.f32 %v299, %v334
  %v339 = vmul.f32 %v301, %v334
  %341 = vset.pattern.permute.xlu0 0
  %342 = vperm.xlu0 %341, %v330
  %v343 = vpop.permute.xlu0 %342
  %v345 = vadd.f32 %v336, %v343
  %v346 = vadd.f32 %v337, %v343
  %v347 = vadd.f32 %v338, %v343
  %v348 = vadd.f32 %v339, %v343
  %v349 = vld [vmem:[%s5] sm:$0xff]
  %v350 = vld [vmem:[%s5 + $0x8] sm:$0xff]
  %v351 = vunpack.c.l.bf16 %v349
  %v352 = vunpack.c.h.bf16 %v349
  %v353 = vunpack.c.l.bf16 %v350
  %v354 = vunpack.c.h.bf16 %v350
  %v355 = vadd.f32 %v345, %v351
  %v356 = vadd.f32 %v346, %v352
  %v357 = vadd.f32 %v347, %v353
  %v358 = vadd.f32 %v348, %v354
  %v359 = vpack.c.bf16 %v355, %v355
  %v360 = vpack.c.bf16 %v356, %v356
  %v361 = vpack.c.bf16 %v357, %v357
  %v362 = vpack.c.bf16 %v358, %v358
  %v367 = vunpack.c.l.b16 %v359
  %v368 = vunpack.c.l.b16 %v360
  %v369 = vunpack.c.l.b16 %v361
  %v370 = vunpack.c.l.b16 %v362
  %v371 = vpack.c.b16 %v368, %v367
  %v372 = vpack.c.b16 %v370, %v369
  %375 = vst [vmem:[%s6] sm:$0xff] %v371
  %376 = vst [vmem:[%s6 + $0x8] sm:$0xff] %v372
  // Predicated region
  $region26: #{local_enhancer_forward.29} parent=0 // pred_check
    _
  $region27: #{local_enhancer_forward.29} parent=0 // pred_check_branch
    %378 = sbr.rel (0) target = $region29
  $region28: #{local_enhancer_forward.29} parent=0 // pred_region
    _
  $region29: #{local_enhancer_forward.29} parent=0 // pred_fallthru
    _
  // Predicated region
  $region30: #{local_enhancer_forward.29} parent=0 // pred_check
    _
  $region31: #{local_enhancer_forward.29} parent=0 // pred_check_branch
    %380 = sbr.rel (0) target = $region33
  $region32: #{local_enhancer_forward.29} parent=0 // pred_region
    _
  $region33: #{local_enhancer_forward.29} parent=0 // pred_fallthru
    _

// kernel: local_enhancer_forward.32
$region0: #{local_enhancer_forward.32}
  #allocation0 [shape = 'u32[]', space=smem, size = 0x4, offset = 0x4, fixed_abs, tag = 'smem constant byte address 0x4 - core index']
  #allocation1 [shape = 'u32[144,128]{1,0:T(1,128)}', space=vmem, size = 0x12000, scoped, tag = 'internal scratch']
  %s0 = inlined_call_operand.vmem [shape: bf16[32,128], index: 0, kind: input, shape index: {}]
  %s1 = inlined_call_operand.vmem [shape: bf16[128,512], index: 1, kind: input, shape index: {}]
  %s2 = inlined_call_operand.vmem [shape: f32[32,1], index: 2, kind: input, shape index: {}]
  %s3 = inlined_call_operand.vmem [shape: f32[8,1], index: 3, kind: input, shape index: {}]
  %s4 = inlined_call_operand.vmem [shape: f32[8,1], index: 4, kind: input, shape index: {}]
  %s5 = inlined_call_operand.vmem [shape: bf16[32,512], index: 5, kind: output, shape index: {}]
  %s6 = sld [smem:[#allocation0]]
  $region30: #{local_enhancer_forward.32} parent=0
    _
  %s8 = ssub.s32 1, %s6
  %s9 = scalar_select 0, %s8, %s6
  // Predicated region
  $region2: #{local_enhancer_forward.32} parent=0 // pred_check
    _
  $region3: #{local_enhancer_forward.32} parent=0 // pred_check_branch
    %11 = sbr.rel (0) target = $region5
  $region4: #{local_enhancer_forward.32} parent=0 // pred_region
    _
  $region5: #{local_enhancer_forward.32} parent=0 // pred_fallthru
    _
  // Predicated region
  $region6: #{local_enhancer_forward.32} parent=0 // pred_check
    _
  $region7: #{local_enhancer_forward.32} parent=0 // pred_check_branch
    %13 = sbr.rel (0) target = $region9
  $region8: #{local_enhancer_forward.32} parent=0 // pred_region
    _
  $region9: #{local_enhancer_forward.32} parent=0 // pred_fallthru
    _
  // Predicated region
  $region10: #{local_enhancer_forward.32} parent=0 // pred_check
    _
  $region11: #{local_enhancer_forward.32} parent=0 // pred_check_branch
    %15 = sbr.rel (0) target = $region13
  $region12: #{local_enhancer_forward.32} parent=0 // pred_region
    _
  $region13: #{local_enhancer_forward.32} parent=0 // pred_fallthru
    _
  // Predicated region
  $region14: #{local_enhancer_forward.32} parent=0 // pred_check
    _
  $region15: #{local_enhancer_forward.32} parent=0 // pred_check_branch
    %17 = sbr.rel (0) target = $region17
  $region16: #{local_enhancer_forward.32} parent=0 // pred_region
    _
  $region17: #{local_enhancer_forward.32} parent=0 // pred_fallthru
    _
  // Predicated region
  $region18: #{local_enhancer_forward.32} parent=0 // pred_check
    _
  $region19: #{local_enhancer_forward.32} parent=0 // pred_check_branch
    %19 = sbr.rel (0) target = $region21
  $region20: #{local_enhancer_forward.32} parent=0 // pred_region
    _
  $region21: #{local_enhancer_forward.32} parent=0 // pred_fallthru
    _
  %v21 = vld [vmem:[%s0] sm:$0xf]
  %v22 = vld [vmem:[%s0 + $0x4] sm:$0xf]
  %v23 = vld [vmem:[%s0 + $0x8] sm:$0xf]
  %v24 = vld [vmem:[%s0 + $0xc] sm:$0xf]
  %v25 = vld [vmem:[%s1] sm:$0xff]
  %v26 = vld [vmem:[%s1 + $0x8] sm:$0xff]
  %v27 = vld [vmem:[%s1 + $0x10] sm:$0xff]
  %v28 = vld [vmem:[%s1 + $0x18] sm:$0xff]
  %v29 = vld [vmem:[%s1 + $0x20] sm:$0xff]
  %v30 = vld [vmem:[%s1 + $0x28] sm:$0xff]
  %v31 = vld [vmem:[%s1 + $0x30] sm:$0xff]
  %v32 = vld [vmem:[%s1 + $0x38] sm:$0xff]
  %v33 = vld [vmem:[%s1 + $0x40] sm:$0xff]
  %v34 = vld [vmem:[%s1 + $0x48] sm:$0xff]
  %v35 = vld [vmem:[%s1 + $0x50] sm:$0xff]
  %v36 = vld [vmem:[%s1 + $0x58] sm:$0xff]
  %v37 = vld [vmem:[%s1 + $0x60] sm:$0xff]
  %v38 = vld [vmem:[%s1 + $0x68] sm:$0xff]
  %v39 = vld [vmem:[%s1 + $0x70] sm:$0xff]
  %v40 = vld [vmem:[%s1 + $0x78] sm:$0xff]
  %v41 = vld [vmem:[%s1 + $0x80] sm:$0xff]
  %v42 = vld [vmem:[%s1 + $0x88] sm:$0xff]
  %v43 = vld [vmem:[%s1 + $0x90] sm:$0xff]
  %v44 = vld [vmem:[%s1 + $0x98] sm:$0xff]
  %v45 = vld [vmem:[%s1 + $0xa0] sm:$0xff]
  %v46 = vld [vmem:[%s1 + $0xa8] sm:$0xff]
  %v47 = vld [vmem:[%s1 + $0xb0] sm:$0xff]
  %v48 = vld [vmem:[%s1 + $0xb8] sm:$0xff]
  %v49 = vld [vmem:[%s1 + $0xc0] sm:$0xff]
  %v50 = vld [vmem:[%s1 + $0xc8] sm:$0xff]
  %v51 = vld [vmem:[%s1 + $0xd0] sm:$0xff]
  %v52 = vld [vmem:[%s1 + $0xd8] sm:$0xff]
  %v53 = vld [vmem:[%s1 + $0xe0] sm:$0xff]
  %v54 = vld [vmem:[%s1 + $0xe8] sm:$0xff]
  %v55 = vld [vmem:[%s1 + $0xf0] sm:$0xff]
  %v56 = vld [vmem:[%s1 + $0xf8] sm:$0xff]
  %v57 = vld [vmem:[%s2] sm:$0xff]
  %v58 = vld [vmem:[%s2 + $0x8] sm:$0xff]
  %v59 = vld [vmem:[%s2 + $0x10] sm:$0xff]
  %v60 = vld [vmem:[%s2 + $0x18] sm:$0xff]
  %62 = vset.pattern.permute.xlu0 0
  %63 = vperm.xlu0 %62, %v57
  %v64 = vpop.permute.xlu0 %63
  %67 = vset.pattern.permute.xlu0 0
  %68 = vperm.xlu0 %67, %v58
  %v69 = vpop.permute.xlu0 %68
  %72 = vset.pattern.permute.xlu0 0
  %73 = vperm.xlu0 %72, %v59
  %v74 = vpop.permute.xlu0 %73
  %77 = vset.pattern.permute.xlu0 0
  %78 = vperm.xlu0 %77, %v60
  %v79 = vpop.permute.xlu0 %78
  %v85 = vunpack.c.l.b16 %v21
  %v86 = vunpack.c.l.b16 %v22
  %v87 = vunpack.c.l.b16 %v23
  %v88 = vunpack.c.l.b16 %v24
  %v89 = vpack.c.b16 %v86, %v85
  %v90 = vpack.c.b16 %v88, %v87
  %v125 = vunpack.c.l.b16 %v25
  %v126 = vunpack.c.h.b16 %v25
  %v127 = vunpack.c.l.b16 %v26
  %v128 = vunpack.c.h.b16 %v26
  %v129 = vunpack.c.l.b16 %v27
  %v130 = vunpack.c.h.b16 %v27
  %v131 = vunpack.c.l.b16 %v28
  %v132 = vunpack.c.h.b16 %v28
  %v133 = vunpack.c.l.b16 %v29
  %v134 = vunpack.c.h.b16 %v29
  %v135 = vunpack.c.l.b16 %v30
  %v136 = vunpack.c.h.b16 %v30
  %v137 = vunpack.c.l.b16 %v31
  %v138 = vunpack.c.h.b16 %v31
  %v139 = vunpack.c.l.b16 %v32
  %v140 = vunpack.c.h.b16 %v32
  %v141 = vunpack.c.l.b16 %v33
  %v142 = vunpack.c.h.b16 %v33
  %v143 = vunpack.c.l.b16 %v34
  %v144 = vunpack.c.h.b16 %v34
  %v145 = vunpack.c.l.b16 %v35
  %v146 = vunpack.c.h.b16 %v35
  %v147 = vunpack.c.l.b16 %v36
  %v148 = vunpack.c.h.b16 %v36
  %v149 = vunpack.c.l.b16 %v37
  %v150 = vunpack.c.h.b16 %v37
  %v151 = vunpack.c.l.b16 %v38
  %v152 = vunpack.c.h.b16 %v38
  %v153 = vunpack.c.l.b16 %v39
  %v154 = vunpack.c.h.b16 %v39
  %v155 = vunpack.c.l.b16 %v40
  %v156 = vunpack.c.h.b16 %v40
  %v157 = vunpack.c.l.b16 %v41
  %v158 = vunpack.c.h.b16 %v41
  %v159 = vunpack.c.l.b16 %v42
  %v160 = vunpack.c.h.b16 %v42
  %v161 = vunpack.c.l.b16 %v43
  %v162 = vunpack.c.h.b16 %v43
  %v163 = vunpack.c.l.b16 %v44
  %v164 = vunpack.c.h.b16 %v44
  %v165 = vunpack.c.l.b16 %v45
  %v166 = vunpack.c.h.b16 %v45
  %v167 = vunpack.c.l.b16 %v46
  %v168 = vunpack.c.h.b16 %v46
  %v169 = vunpack.c.l.b16 %v47
  %v170 = vunpack.c.h.b16 %v47
  %v171 = vunpack.c.l.b16 %v48
  %v172 = vunpack.c.h.b16 %v48
  %v173 = vunpack.c.l.b16 %v49
  %v174 = vunpack.c.h.b16 %v49
  %v175 = vunpack.c.l.b16 %v50
  %v176 = vunpack.c.h.b16 %v50
  %v177 = vunpack.c.l.b16 %v51
  %v178 = vunpack.c.h.b16 %v51
  %v179 = vunpack.c.l.b16 %v52
  %v180 = vunpack.c.h.b16 %v52
  %v181 = vunpack.c.l.b16 %v53
  %v182 = vunpack.c.h.b16 %v53
  %v183 = vunpack.c.l.b16 %v54
  %v184 = vunpack.c.h.b16 %v54
  %v185 = vunpack.c.l.b16 %v55
  %v186 = vunpack.c.h.b16 %v55
  %v187 = vunpack.c.l.b16 %v56
  %v188 = vunpack.c.h.b16 %v56
  %v189 = vpack.c.b16 %v129, %v125
  %v190 = vpack.c.b16 %v130, %v126
  %v191 = vpack.c.b16 %v131, %v127
  %v192 = vpack.c.b16 %v132, %v128
  %v193 = vpack.c.b16 %v137, %v133
  %v194 = vpack.c.b16 %v138, %v134
  %v195 = vpack.c.b16 %v139, %v135
  %v196 = vpack.c.b16 %v140, %v136
  %v197 = vpack.c.b16 %v145, %v141
  %v198 = vpack.c.b16 %v146, %v142
  %v199 = vpack.c.b16 %v147, %v143
  %v200 = vpack.c.b16 %v148, %v144
  %v201 = vpack.c.b16 %v153, %v149
  %v202 = vpack.c.b16 %v154, %v150
  %v203 = vpack.c.b16 %v155, %v151
  %v204 = vpack.c.b16 %v156, %v152
  %v205 = vpack.c.b16 %v161, %v157
  %v206 = vpack.c.b16 %v162, %v158
  %v207 = vpack.c.b16 %v163, %v159
  %v208 = vpack.c.b16 %v164, %v160
  %v209 = vpack.c.b16 %v169, %v165
  %v210 = vpack.c.b16 %v170, %v166
  %v211 = vpack.c.b16 %v171, %v167
  %v212 = vpack.c.b16 %v172, %v168
  %v213 = vpack.c.b16 %v177, %v173
  %v214 = vpack.c.b16 %v178, %v174
  %v215 = vpack.c.b16 %v179, %v175
  %v216 = vpack.c.b16 %v180, %v176
  %v217 = vpack.c.b16 %v185, %v181
  %v218 = vpack.c.b16 %v186, %v182
  %v219 = vpack.c.b16 %v187, %v183
  %v220 = vpack.c.b16 %v188, %v184
  %253 = vmatprep.subr.bf16.mxu0 %v190
  %254 = vmatpush1.bf16.msra.mxu0 %v189
  %255 = vmatprep.subr.bf16.mxu0 %v194
  %256 = vmatpush1.bf16.msra.mxu0 %v193
  %257 = vmatprep.subr.bf16.mxu0 %v198
  %258 = vmatpush1.bf16.msra.mxu0 %v197
  %259 = vmatprep.subr.bf16.mxu0 %v202
  %260 = vmatpush1.bf16.msra.mxu0 %v201
  %261 = vmatprep.subr.bf16.mxu0 %v206
  %262 = vmatpush1.bf16.msra.mxu0 %v205
  %263 = vmatprep.subr.bf16.mxu0 %v210
  %264 = vmatpush1.bf16.msra.mxu0 %v209
  %265 = vmatprep.subr.bf16.mxu0 %v214
  %266 = vmatpush1.bf16.msra.mxu0 %v213
  %267 = vmatprep.subr.bf16.mxu0 %v218
  %268 = vmatpush1.bf16.msra.mxu0 %v217
  %269 = vmatprep.subr.bf16.mxu0 0
  %270 = vmatpush1.bf16.msra.mxu0 0
  %271 = vmatprep.subr.bf16.mxu0 0
  %272 = vmatpush1.bf16.msra.mxu0 0
  %273 = vmatprep.subr.bf16.mxu0 0
  %274 = vmatpush1.bf16.msra.mxu0 0
  %275 = vmatprep.subr.bf16.mxu0 0
  %276 = vmatpush1.bf16.msra.mxu0 0
  %277 = vmatprep.subr.bf16.mxu0 0
  %278 = vmatpush1.bf16.msra.mxu0 0
  %279 = vmatprep.subr.bf16.mxu0 0
  %280 = vmatpush1.bf16.msra.mxu0 0
  %281 = vmatprep.subr.bf16.mxu0 0
  %282 = vmatpush1.bf16.msra.mxu0 0
  %283 = vmatprep.subr.bf16.mxu0 0
  %284 = vmatpush1.bf16.msra.mxu0 0
  %285 = vmatprep.mubr.bf16.mxu0 0
  %286 = vmatmul.mubr.bf16.gmra.mrb[0].mxu0 %v89
  %v287 = vpop.f32.mrb[0].mxu0
  %v288 = vadd.f32 %v64, %v287
  %v289 = vpop.f32.mrb[0].mxu0
  %v290 = vadd.f32 %v64, %v289
  %v291 = vpop.f32.mrb[0].mxu0
  %v292 = vadd.f32 %v69, %v291
  %v293 = vpop.f32.mrb[0].mxu0
  %v294 = vadd.f32 %v69, %v293
  %295 = vmatprep.mubr.bf16.mxu0 0
  %296 = vmatmul.mubr.bf16.gmra.mrb[0].mxu0 %v90
  %v297 = vpop.f32.mrb[0].mxu0
  %v298 = vadd.f32 %v74, %v297
  %v299 = vpop.f32.mrb[0].mxu0
  %v300 = vadd.f32 %v74, %v299
  %v301 = vpop.f32.mrb[0].mxu0
  %v302 = vadd.f32 %v79, %v301
  %v303 = vpop.f32.mrb[0].mxu0
  %v304 = vadd.f32 %v79, %v303
  %305 = vdwg.mxu0
  %306 = vmatprep.subr.bf16.mxu0 %v192
  %307 = vmatpush1.bf16.msra.mxu0 %v191
  %308 = vmatprep.subr.bf16.mxu0 %v196
  %309 = vmatpush1.bf16.msra.mxu0 %v195
  %310 = vmatprep.subr.bf16.mxu0 %v200
  %311 = vmatpush1.bf16.msra.mxu0 %v199
  %312 = vmatprep.subr.bf16.mxu0 %v204
  %313 = vmatpush1.bf16.msra.mxu0 %v203
  %314 = vmatprep.subr.bf16.mxu0 %v208
  %315 = vmatpush1.bf16.msra.mxu0 %v207
  %316 = vmatprep.subr.bf16.mxu0 %v212
  %317 = vmatpush1.bf16.msra.mxu0 %v211
  %318 = vmatprep.subr.bf16.mxu0 %v216
  %319 = vmatpush1.bf16.msra.mxu0 %v215
  %320 = vmatprep.subr.bf16.mxu0 %v220
  %321 = vmatpush1.bf16.msra.mxu0 %v219
  %322 = vmatprep.subr.bf16.mxu0 0
  %323 = vmatpush1.bf16.msra.mxu0 0
  %324 = vmatprep.subr.bf16.mxu0 0
  %325 = vmatpush1.bf16.msra.mxu0 0
  %326 = vmatprep.subr.bf16.mxu0 0
  %327 = vmatpush1.bf16.msra.mxu0 0
  %328 = vmatprep.subr.bf16.mxu0 0
  %329 = vmatpush1.bf16.msra.mxu0 0
  %330 = vmatprep.subr.bf16.mxu0 0
  %331 = vmatpush1.bf16.msra.mxu0 0
  %332 = vmatprep.subr.bf16.mxu0 0
  %333 = vmatpush1.bf16.msra.mxu0 0
  %334 = vmatprep.subr.bf16.mxu0 0
  %335 = vmatpush1.bf16.msra.mxu0 0
  %336 = vmatprep.subr.bf16.mxu0 0
  %337 = vmatpush1.bf16.msra.mxu0 0
  %338 = vmatprep.mubr.bf16.mxu0 0
  %339 = vmatmul.mubr.bf16.gmra.mrb[0].mxu0 %v89
  %v340 = vpop.f32.mrb[0].mxu0
  %v341 = vadd.f32 %v64, %v340
  %v342 = vpop.f32.mrb[0].mxu0
  %v343 = vadd.f32 %v64, %v342
  %v344 = vpop.f32.mrb[0].mxu0
  %v345 = vadd.f32 %v69, %v344
  %v346 = vpop.f32.mrb[0].mxu0
  %v347 = vadd.f32 %v69, %v346
  %348 = vmatprep.mubr.bf16.mxu0 0
  %349 = vmatmul.mubr.bf16.gmra.mrb[0].mxu0 %v90
  %v350 = vpop.f32.mrb[0].mxu0
  %v351 = vadd.f32 %v74, %v350
  %v352 = vpop.f32.mrb[0].mxu0
  %v353 = vadd.f32 %v74, %v352
  %v354 = vpop.f32.mrb[0].mxu0
  %v355 = vadd.f32 %v79, %v354
  %v356 = vpop.f32.mrb[0].mxu0
  %v357 = vadd.f32 %v79, %v356
  %358 = vdwg.mxu0
  %v359 = vadd.f32 %v288, %v290
  %v360 = vadd.f32 %v359, %v341
  %v361 = vadd.f32 %v360, %v343
  %362 = vadd.xlane.f32.xlu0 %v361
  %v363 = vpop.xlane.xlu0 %362
  %v364 = vadd.f32 %v292, %v294
  %v365 = vadd.f32 %v364, %v345
  %v366 = vadd.f32 %v365, %v347
  %367 = vadd.xlane.f32.xlu0 %v366
  %v368 = vpop.xlane.xlu0 %367
  %v369 = vadd.f32 %v298, %v300
  %v370 = vadd.f32 %v369, %v351
  %v371 = vadd.f32 %v370, %v353
  %372 = vadd.xlane.f32.xlu0 %v371
  %v373 = vpop.xlane.xlu0 %372
  %v374 = vadd.f32 %v302, %v304
  %v375 = vadd.f32 %v374, %v355
  %v376 = vadd.f32 %v375, %v357
  %377 = vadd.xlane.f32.xlu0 %v376
  %v378 = vpop.xlane.xlu0 %377
  %v379 = vmul.f32 %v288, %v288
  %v380 = vmul.f32 %v290, %v290
  %v381 = vmul.f32 %v341, %v341
  %v382 = vmul.f32 %v343, %v343
  %v383 = vmul.f32 %v292, %v292
  %v384 = vmul.f32 %v294, %v294
  %v385 = vmul.f32 %v345, %v345
  %v386 = vmul.f32 %v347, %v347
  %v387 = vmul.f32 %v298, %v298
  %v388 = vmul.f32 %v300, %v300
  %v389 = vmul.f32 %v351, %v351
  %v390 = vmul.f32 %v353, %v353
  %v391 = vmul.f32 %v302, %v302
  %v392 = vmul.f32 %v304, %v304
  %v393 = vmul.f32 %v355, %v355
  %v394 = vmul.f32 %v357, %v357
  %v395 = vadd.f32 %v379, %v380
  %v396 = vadd.f32 %v395, %v381
  %v397 = vadd.f32 %v396, %v382
  %398 = vadd.xlane.f32.xlu0 %v397
  %v399 = vpop.xlane.xlu0 %398
  %v400 = vadd.f32 %v383, %v384
  %v401 = vadd.f32 %v400, %v385
  %v402 = vadd.f32 %v401, %v386
  %403 = vadd.xlane.f32.xlu0 %v402
  %v404 = vpop.xlane.xlu0 %403
  %v405 = vadd.f32 %v387, %v388
  %v406 = vadd.f32 %v405, %v389
  %v407 = vadd.f32 %v406, %v390
  %408 = vadd.xlane.f32.xlu0 %v407
  %v409 = vpop.xlane.xlu0 %408
  %v410 = vadd.f32 %v391, %v392
  %v411 = vadd.f32 %v410, %v393
  %v412 = vadd.f32 %v411, %v394
  %413 = vadd.xlane.f32.xlu0 %v412
  %v414 = vpop.xlane.xlu0 %413
  %v415 = vadd.f32 %v363, 0.0
  %v416 = vadd.f32 %v415, %v368
  %v417 = vadd.f32 %v416, %v373
  %v418 = vadd.f32 %v417, %v378
  %v419 = vadd.f32 %v399, 0.0
  %v420 = vadd.f32 %v419, %v404
  %v421 = vadd.f32 %v420, %v409
  %v422 = vadd.f32 %v421, %v414
  %v423 = vmul.f32 %v418, 0.00048828125
  %v424 = vmul.f32 %v422, 0.00048828125
  %v425 = vmul.f32 %v423, %v423
  %v426 = vsub.f32 %v424, %v425
  %v427 = vmax.f32 %v426, 0.0
  %v428 = vld [vmem:[%s3] sm:$0xff]
  %v429 = vadd.f32 %v427, 1e-05
  %v430 = vrsqrt.pop %v429
  %v431 = vmul.f32 %v428, %v430
  %v432 = vld [vmem:[%s4] sm:$0xff]
  %v433 = vmul.f32 %v423, %v431
  %v434 = vsub.f32 %v432, %v433
  %436 = vset.pattern.permute.xlu0 0
  %437 = vperm.xlu0 %436, %v431
  %v438 = vpop.permute.xlu0 %437
  %v440 = vmul.f32 %v288, %v438
  %v441 = vmul.f32 %v290, %v438
  %v442 = vmul.f32 %v341, %v438
  %v443 = vmul.f32 %v343, %v438
  %v444 = vmul.f32 %v292, %v438
  %v445 = vmul.f32 %v294, %v438
  %v446 = vmul.f32 %v345, %v438
  %v447 = vmul.f32 %v347, %v438
  %v448 = vmul.f32 %v298, %v438
  %v449 = vmul.f32 %v300, %v438
  %v450 = vmul.f32 %v351, %v438
  %v451 = vmul.f32 %v353, %v438
  %v452 = vmul.f32 %v302, %v438
  %v453 = vmul.f32 %v304, %v438
  %v454 = vmul.f32 %v355, %v438
  %v455 = vmul.f32 %v357, %v438
  %457 = vset.pattern.permute.xlu0 0
  %458 = vperm.xlu0 %457, %v434
  %v459 = vpop.permute.xlu0 %458
  %v461 = vadd.f32 %v440, %v459
  %v462 = vadd.f32 %v441, %v459
  %v463 = vadd.f32 %v442, %v459
  %v464 = vadd.f32 %v443, %v459
  %v465 = vadd.f32 %v444, %v459
  %v466 = vadd.f32 %v445, %v459
  %v467 = vadd.f32 %v446, %v459
  %v468 = vadd.f32 %v447, %v459
  %v469 = vadd.f32 %v448, %v459
  %v470 = vadd.f32 %v449, %v459
  %v471 = vadd.f32 %v450, %v459
  %v472 = vadd.f32 %v451, %v459
  %v473 = vadd.f32 %v452, %v459
  %v474 = vadd.f32 %v453, %v459
  %v475 = vadd.f32 %v454, %v459
  %v476 = vadd.f32 %v455, %v459
  %v477 = vmax.f32 %v461, 0.0
  %v478 = vmax.f32 %v462, 0.0
  %v479 = vmax.f32 %v463, 0.0
  %v480 = vmax.f32 %v464, 0.0
  %v481 = vmax.f32 %v465, 0.0
  %v482 = vmax.f32 %v466, 0.0
  %v483 = vmax.f32 %v467, 0.0
  %v484 = vmax.f32 %v468, 0.0
  %v485 = vmax.f32 %v469, 0.0
  %v486 = vmax.f32 %v470, 0.0
  %v487 = vmax.f32 %v471, 0.0
  %v488 = vmax.f32 %v472, 0.0
  %v489 = vmax.f32 %v473, 0.0
  %v490 = vmax.f32 %v474, 0.0
  %v491 = vmax.f32 %v475, 0.0
  %v492 = vmax.f32 %v476, 0.0
  %v493 = vpack.c.bf16 %v481, %v477
  %v494 = vpack.c.bf16 %v482, %v478
  %v495 = vpack.c.bf16 %v483, %v479
  %v496 = vpack.c.bf16 %v484, %v480
  %v497 = vpack.c.bf16 %v489, %v485
  %v498 = vpack.c.bf16 %v490, %v486
  %v499 = vpack.c.bf16 %v491, %v487
  %v500 = vpack.c.bf16 %v492, %v488
  %v509 = vunpack.c.l.b16 %v493
  %v510 = vunpack.c.l.b16 %v494
  %v511 = vunpack.c.l.b16 %v495
  %v512 = vunpack.c.l.b16 %v496
  %v513 = vunpack.c.h.b16 %v493
  %v514 = vunpack.c.h.b16 %v494
  %v515 = vunpack.c.h.b16 %v495
  %v516 = vunpack.c.h.b16 %v496
  %v517 = vunpack.c.l.b16 %v497
  %v518 = vunpack.c.l.b16 %v498
  %v519 = vunpack.c.l.b16 %v499
  %v520 = vunpack.c.l.b16 %v500
  %v521 = vunpack.c.h.b16 %v497
  %v522 = vunpack.c.h.b16 %v498
  %v523 = vunpack.c.h.b16 %v499
  %v524 = vunpack.c.h.b16 %v500
  %v525 = vpack.c.b16 %v510, %v509
  %v526 = vpack.c.b16 %v512, %v511
  %v527 = vpack.c.b16 %v514, %v513
  %v528 = vpack.c.b16 %v516, %v515
  %v529 = vpack.c.b16 %v518, %v517
  %v530 = vpack.c.b16 %v520, %v519
  %v531 = vpack.c.b16 %v522, %v521
  %v532 = vpack.c.b16 %v524, %v523
  %541 = vst [vmem:[%s5] sm:$0xff] %v525
  %542 = vst [vmem:[%s5 + $0x8] sm:$0xff] %v526
  %543 = vst [vmem:[%s5 + $0x10] sm:$0xff] %v527
  %544 = vst [vmem:[%s5 + $0x18] sm:$0xff] %v528
  %545 = vst [vmem:[%s5 + $0x20] sm:$0xff] %v529
  %546 = vst [vmem:[%s5 + $0x28] sm:$0xff] %v530
  %547 = vst [vmem:[%s5 + $0x30] sm:$0xff] %v531
  %548 = vst [vmem:[%s5 + $0x38] sm:$0xff] %v532
  // Predicated region
  $region22: #{local_enhancer_forward.32} parent=0 // pred_check
    _
  $region23: #{local_enhancer_forward.32} parent=0 // pred_check_branch
    %550 = sbr.rel (0) target = $region25
  $region24: #{local_enhancer_forward.32} parent=0 // pred_region
    _
  $region25: #{local_enhancer_forward.32} parent=0 // pred_fallthru
    _
  // Predicated region
  $region26: #{local_enhancer_forward.32} parent=0 // pred_check
    _
  $region27: #{local_enhancer_forward.32} parent=0 // pred_check_branch
    %552 = sbr.rel (0) target = $region29
  $region28: #{local_enhancer_forward.32} parent=0 // pred_region
    _
  $region29: #{local_enhancer_forward.32} parent=0 // pred_fallthru
    _

// kernel: local_enhancer_forward.33
$region0: #{local_enhancer_forward.33}
  #allocation0 [shape = 'u32[]', space=smem, size = 0x4, offset = 0x4, fixed_abs, tag = 'smem constant byte address 0x4 - core index']
  #allocation1 [shape = 'u32[144,128]{1,0:T(1,128)}', space=vmem, size = 0x12000, scoped, tag = 'internal scratch']
  %s0 = inlined_call_operand.vmem [shape: bf16[8,512], index: 0, kind: input, shape index: {}]
  %s1 = inlined_call_operand.vmem [shape: bf16[512,2048], index: 1, kind: input, shape index: {}]
  %s2 = inlined_call_operand.vmem [shape: f32[8,1], index: 2, kind: input, shape index: {}]
  %s3 = inlined_call_operand.vmem [shape: bf16[8,2048], index: 3, kind: output, shape index: {}]
  %s4 = sld [smem:[#allocation0]]
  $region22: #{local_enhancer_forward.33} parent=0
    _
  %s6 = ssub.s32 1, %s4
  %s7 = scalar_select 0, %s6, %s4
  // Predicated region
  $region2: #{local_enhancer_forward.33} parent=0 // pred_check
    _
  $region3: #{local_enhancer_forward.33} parent=0 // pred_check_branch
    %9 = sbr.rel (0) target = $region5
  $region4: #{local_enhancer_forward.33} parent=0 // pred_region
    _
  $region5: #{local_enhancer_forward.33} parent=0 // pred_fallthru
    _
  // Predicated region
  $region6: #{local_enhancer_forward.33} parent=0 // pred_check
    _
  $region7: #{local_enhancer_forward.33} parent=0 // pred_check_branch
    %11 = sbr.rel (0) target = $region9
  $region8: #{local_enhancer_forward.33} parent=0 // pred_region
    _
  $region9: #{local_enhancer_forward.33} parent=0 // pred_fallthru
    _
  // Predicated region
  $region10: #{local_enhancer_forward.33} parent=0 // pred_check
    _
  $region11: #{local_enhancer_forward.33} parent=0 // pred_check_branch
    %13 = sbr.rel (0) target = $region13
  $region12: #{local_enhancer_forward.33} parent=0 // pred_region
    _
  $region13: #{local_enhancer_forward.33} parent=0 // pred_fallthru
    _
  %v14 = vld [vmem:[%s0] sm:$0xff]
  %v15 = vld [vmem:[%s0 + $0x8] sm:$0xff]
  %v16 = vld [vmem:[%s1] sm:$0xff]
  %v17 = vld [vmem:[%s1 + $0x8] sm:$0xff]
  %v18 = vld [vmem:[%s1 + $0x10] sm:$0xff]
  %v19 = vld [vmem:[%s1 + $0x18] sm:$0xff]
  %v20 = vld [vmem:[%s1 + $0x20] sm:$0xff]
  %v21 = vld [vmem:[%s1 + $0x28] sm:$0xff]
  %v22 = vld [vmem:[%s1 + $0x30] sm:$0xff]
  %v23 = vld [vmem:[%s1 + $0x38] sm:$0xff]
  %v24 = vld [vmem:[%s1 + $0x40] sm:$0xff]
  %v25 = vld [vmem:[%s1 + $0x48] sm:$0xff]
  %v26 = vld [vmem:[%s1 + $0x50] sm:$0xff]
  %v27 = vld [vmem:[%s1 + $0x58] sm:$0xff]
  %v28 = vld [vmem:[%s1 + $0x60] sm:$0xff]
  %v29 = vld [vmem:[%s1 + $0x68] sm:$0xff]
  %v30 = vld [vmem:[%s1 + $0x70] sm:$0xff]
  %v31 = vld [vmem:[%s1 + $0x78] sm:$0xff]
  %v32 = vld [vmem:[%s1 + $0x80] sm:$0xff]
  %v33 = vld [vmem:[%s1 + $0x88] sm:$0xff]
  %v34 = vld [vmem:[%s1 + $0x90] sm:$0xff]
  %v35 = vld [vmem:[%s1 + $0x98] sm:$0xff]
  %v36 = vld [vmem:[%s1 + $0xa0] sm:$0xff]
  %v37 = vld [vmem:[%s1 + $0xa8] sm:$0xff]
  %v38 = vld [vmem:[%s1 + $0xb0] sm:$0xff]
  %v39 = vld [vmem:[%s1 + $0xb8] sm:$0xff]
  %v40 = vld [vmem:[%s1 + $0xc0] sm:$0xff]
  %v41 = vld [vmem:[%s1 + $0xc8] sm:$0xff]
  %v42 = vld [vmem:[%s1 + $0xd0] sm:$0xff]
  %v43 = vld [vmem:[%s1 + $0xd8] sm:$0xff]
  %v44 = vld [vmem:[%s1 + $0xe0] sm:$0xff]
  %v45 = vld [vmem:[%s1 + $0xe8] sm:$0xff]
  %v46 = vld [vmem:[%s1 + $0xf0] sm:$0xff]
  %v47 = vld [vmem:[%s1 + $0xf8] sm:$0xff]
  %v48 = vld [vmem:[%s1 + $0x100] sm:$0xff]
  %v49 = vld [vmem:[%s1 + $0x108] sm:$0xff]
  %v50 = vld [vmem:[%s1 + $0x110] sm:$0xff]
  %v51 = vld [vmem:[%s1 + $0x118] sm:$0xff]
  %v52 = vld [vmem:[%s1 + $0x120] sm:$0xff]
  %v53 = vld [vmem:[%s1 + $0x128] sm:$0xff]
  %v54 = vld [vmem:[%s1 + $0x130] sm:$0xff]
  %v55 = vld [vmem:[%s1 + $0x138] sm:$0xff]
  %v56 = vld [vmem:[%s1 + $0x140] sm:$0xff]
  %v57 = vld [vmem:[%s1 + $0x148] sm:$0xff]
  %v58 = vld [vmem:[%s1 + $0x150] sm:$0xff]
  %v59 = vld [vmem:[%s1 + $0x158] sm:$0xff]
  %v60 = vld [vmem:[%s1 + $0x160] sm:$0xff]
  %v61 = vld [vmem:[%s1 + $0x168] sm:$0xff]
  %v62 = vld [vmem:[%s1 + $0x170] sm:$0xff]
  %v63 = vld [vmem:[%s1 + $0x178] sm:$0xff]
  %v64 = vld [vmem:[%s1 + $0x180] sm:$0xff]
  %v65 = vld [vmem:[%s1 + $0x188] sm:$0xff]
  %v66 = vld [vmem:[%s1 + $0x190] sm:$0xff]
  %v67 = vld [vmem:[%s1 + $0x198] sm:$0xff]
  %v68 = vld [vmem:[%s1 + $0x1a0] sm:$0xff]
  %v69 = vld [vmem:[%s1 + $0x1a8] sm:$0xff]
  %v70 = vld [vmem:[%s1 + $0x1b0] sm:$0xff]
  %v71 = vld [vmem:[%s1 + $0x1b8] sm:$0xff]
  %v72 = vld [vmem:[%s1 + $0x1c0] sm:$0xff]
  %v73 = vld [vmem:[%s1 + $0x1c8] sm:$0xff]
  %v74 = vld [vmem:[%s1 + $0x1d0] sm:$0xff]
  %v75 = vld [vmem:[%s1 + $0x1d8] sm:$0xff]
  %v76 = vld [vmem:[%s1 + $0x1e0] sm:$0xff]
  %v77 = vld [vmem:[%s1 + $0x1e8] sm:$0xff]
  %v78 = vld [vmem:[%s1 + $0x1f0] sm:$0xff]
  %v79 = vld [vmem:[%s1 + $0x1f8] sm:$0xff]
  %v80 = vld [vmem:[%s1 + $0x200] sm:$0xff]
  %v81 = vld [vmem:[%s1 + $0x208] sm:$0xff]
  %v82 = vld [vmem:[%s1 + $0x210] sm:$0xff]
  %v83 = vld [vmem:[%s1 + $0x218] sm:$0xff]
  %v84 = vld [vmem:[%s1 + $0x220] sm:$0xff]
  %v85 = vld [vmem:[%s1 + $0x228] sm:$0xff]
  %v86 = vld [vmem:[%s1 + $0x230] sm:$0xff]
  %v87 = vld [vmem:[%s1 + $0x238] sm:$0xff]
  %v88 = vld [vmem:[%s1 + $0x240] sm:$0xff]
  %v89 = vld [vmem:[%s1 + $0x248] sm:$0xff]
  %v90 = vld [vmem:[%s1 + $0x250] sm:$0xff]
  %v91 = vld [vmem:[%s1 + $0x258] sm:$0xff]
  %v92 = vld [vmem:[%s1 + $0x260] sm:$0xff]
  %v93 = vld [vmem:[%s1 + $0x268] sm:$0xff]
  %v94 = vld [vmem:[%s1 + $0x270] sm:$0xff]
  %v95 = vld [vmem:[%s1 + $0x278] sm:$0xff]
  %v96 = vld [vmem:[%s1 + $0x280] sm:$0xff]
  %v97 = vld [vmem:[%s1 + $0x288] sm:$0xff]
  %v98 = vld [vmem:[%s1 + $0x290] sm:$0xff]
  %v99 = vld [vmem:[%s1 + $0x298] sm:$0xff]
  %v100 = vld [vmem:[%s1 + $0x2a0] sm:$0xff]
  %v101 = vld [vmem:[%s1 + $0x2a8] sm:$0xff]
  %v102 = vld [vmem:[%s1 + $0x2b0] sm:$0xff]
  %v103 = vld [vmem:[%s1 + $0x2b8] sm:$0xff]
  %v104 = vld [vmem:[%s1 + $0x2c0] sm:$0xff]
  %v105 = vld [vmem:[%s1 + $0x2c8] sm:$0xff]
  %v106 = vld [vmem:[%s1 + $0x2d0] sm:$0xff]
  %v107 = vld [vmem:[%s1 + $0x2d8] sm:$0xff]
  %v108 = vld [vmem:[%s1 + $0x2e0] sm:$0xff]
  %v109 = vld [vmem:[%s1 + $0x2e8] sm:$0xff]
  %v110 = vld [vmem:[%s1 + $0x2f0] sm:$0xff]
  %v111 = vld [vmem:[%s1 + $0x2f8] sm:$0xff]
  %v112 = vld [vmem:[%s1 + $0x300] sm:$0xff]
  %v113 = vld [vmem:[%s1 + $0x308] sm:$0xff]
  %v114 = vld [vmem:[%s1 + $0x310] sm:$0xff]
  %v115 = vld [vmem:[%s1 + $0x318] sm:$0xff]
  %v116 = vld [vmem:[%s1 + $0x320] sm:$0xff]
  %v117 = vld [vmem:[%s1 + $0x328] sm:$0xff]
  %v118 = vld [vmem:[%s1 + $0x330] sm:$0xff]
  %v119 = vld [vmem:[%s1 + $0x338] sm:$0xff]
  %v120 = vld [vmem:[%s1 + $0x340] sm:$0xff]
  %v121 = vld [vmem:[%s1 + $0x348] sm:$0xff]
  %v122 = vld [vmem:[%s1 + $0x350] sm:$0xff]
  %v123 = vld [vmem:[%s1 + $0x358] sm:$0xff]
  %v124 = vld [vmem:[%s1 + $0x360] sm:$0xff]
  %v125 = vld [vmem:[%s1 + $0x368] sm:$0xff]
  %v126 = vld [vmem:[%s1 + $0x370] sm:$0xff]
  %v127 = vld [vmem:[%s1 + $0x378] sm:$0xff]
  %v128 = vld [vmem:[%s1 + $0x380] sm:$0xff]
  %v129 = vld [vmem:[%s1 + $0x388] sm:$0xff]
  %v130 = vld [vmem:[%s1 + $0x390] sm:$0xff]
  %v131 = vld [vmem:[%s1 + $0x398] sm:$0xff]
  %v132 = vld [vmem:[%s1 + $0x3a0] sm:$0xff]
  %v133 = vld [vmem:[%s1 + $0x3a8] sm:$0xff]
  %v134 = vld [vmem:[%s1 + $0x3b0] sm:$0xff]
  %v135 = vld [vmem:[%s1 + $0x3b8] sm:$0xff]
  %v136 = vld [vmem:[%s1 + $0x3c0] sm:$0xff]
  %v137 = vld [vmem:[%s1 + $0x3c8] sm:$0xff]
  %v138 = vld [vmem:[%s1 + $0x3d0] sm:$0xff]
  %v139 = vld [vmem:[%s1 + $0x3d8] sm:$0xff]
  %v140 = vld [vmem:[%s1 + $0x3e0] sm:$0xff]
  %v141 = vld [vmem:[%s1 + $0x3e8] sm:$0xff]
  %v142 = vld [vmem:[%s1 + $0x3f0] sm:$0xff]
  %v143 = vld [vmem:[%s1 + $0x3f8] sm:$0xff]
  %v144 = vld [vmem:[%s1 + $0x400] sm:$0xff]
  %v145 = vld [vmem:[%s1 + $0x408] sm:$0xff]
  %v146 = vld [vmem:[%s1 + $0x410] sm:$0xff]
  %v147 = vld [vmem:[%s1 + $0x418] sm:$0xff]
  %v148 = vld [vmem:[%s1 + $0x420] sm:$0xff]
  %v149 = vld [vmem:[%s1 + $0x428] sm:$0xff]
  %v150 = vld [vmem:[%s1 + $0x430] sm:$0xff]
  %v151 = vld [vmem:[%s1 + $0x438] sm:$0xff]
  %v152 = vld [vmem:[%s1 + $0x440] sm:$0xff]
  %v153 = vld [vmem:[%s1 + $0x448] sm:$0xff]
  %v154 = vld [vmem:[%s1 + $0x450] sm:$0xff]
  %v155 = vld [vmem:[%s1 + $0x458] sm:$0xff]
  %v156 = vld [vmem:[%s1 + $0x460] sm:$0xff]
  %v157 = vld [vmem:[%s1 + $0x468] sm:$0xff]
  %v158 = vld [vmem:[%s1 + $0x470] sm:$0xff]
  %v159 = vld [vmem:[%s1 + $0x478] sm:$0xff]
  %v160 = vld [vmem:[%s1 + $0x480] sm:$0xff]
  %v161 = vld [vmem:[%s1 + $0x488] sm:$0xff]
  %v162 = vld [vmem:[%s1 + $0x490] sm:$0xff]
  %v163 = vld [vmem:[%s1 + $0x498] sm:$0xff]
  %v164 = vld [vmem:[%s1 + $0x4a0] sm:$0xff]
  %v165 = vld [vmem:[%s1 + $0x4a8] sm:$0xff]
  %v166 = vld [vmem:[%s1 + $0x4b0] sm:$0xff]
  %v167 = vld [vmem:[%s1 + $0x4b8] sm:$0xff]
  %v168 = vld [vmem:[%s1 + $0x4c0] sm:$0xff]
  %v169 = vld [vmem:[%s1 + $0x4c8] sm:$0xff]
  %v170 = vld [vmem:[%s1 + $0x4d0] sm:$0xff]
  %v171 = vld [vmem:[%s1 + $0x4d8] sm:$0xff]
  %v172 = vld [vmem:[%s1 + $0x4e0] sm:$0xff]
  %v173 = vld [vmem:[%s1 + $0x4e8] sm:$0xff]
  %v174 = vld [vmem:[%s1 + $0x4f0] sm:$0xff]
  %v175 = vld [vmem:[%s1 + $0x4f8] sm:$0xff]
  %v176 = vld [vmem:[%s1 + $0x500] sm:$0xff]
  %v177 = vld [vmem:[%s1 + $0x508] sm:$0xff]
  %v178 = vld [vmem:[%s1 + $0x510] sm:$0xff]
  %v179 = vld [vmem:[%s1 + $0x518] sm:$0xff]
  %v180 = vld [vmem:[%s1 + $0x520] sm:$0xff]
  %v181 = vld [vmem:[%s1 + $0x528] sm:$0xff]
  %v182 = vld [vmem:[%s1 + $0x530] sm:$0xff]
  %v183 = vld [vmem:[%s1 + $0x538] sm:$0xff]
  %v184 = vld [vmem:[%s1 + $0x540] sm:$0xff]
  %v185 = vld [vmem:[%s1 + $0x548] sm:$0xff]
  %v186 = vld [vmem:[%s1 + $0x550] sm:$0xff]
  %v187 = vld [vmem:[%s1 + $0x558] sm:$0xff]
  %v188 = vld [vmem:[%s1 + $0x560] sm:$0xff]
  %v189 = vld [vmem:[%s1 + $0x568] sm:$0xff]
  %v190 = vld [vmem:[%s1 + $0x570] sm:$0xff]
  %v191 = vld [vmem:[%s1 + $0x578] sm:$0xff]
  %v192 = vld [vmem:[%s1 + $0x580] sm:$0xff]
  %v193 = vld [vmem:[%s1 + $0x588] sm:$0xff]
  %v194 = vld [vmem:[%s1 + $0x590] sm:$0xff]
  %v195 = vld [vmem:[%s1 + $0x598] sm:$0xff]
  %v196 = vld [vmem:[%s1 + $0x5a0] sm:$0xff]
  %v197 = vld [vmem:[%s1 + $0x5a8] sm:$0xff]
  %v198 = vld [vmem:[%s1 + $0x5b0] sm:$0xff]
  %v199 = vld [vmem:[%s1 + $0x5b8] sm:$0xff]
  %v200 = vld [vmem:[%s1 + $0x5c0] sm:$0xff]
  %v201 = vld [vmem:[%s1 + $0x5c8] sm:$0xff]
  %v202 = vld [vmem:[%s1 + $0x5d0] sm:$0xff]
  %v203 = vld [vmem:[%s1 + $0x5d8] sm:$0xff]
  %v204 = vld [vmem:[%s1 + $0x5e0] sm:$0xff]
  %v205 = vld [vmem:[%s1 + $0x5e8] sm:$0xff]
  %v206 = vld [vmem:[%s1 + $0x5f0] sm:$0xff]
  %v207 = vld [vmem:[%s1 + $0x5f8] sm:$0xff]
  %v208 = vld [vmem:[%s1 + $0x600] sm:$0xff]
  %v209 = vld [vmem:[%s1 + $0x608] sm:$0xff]
  %v210 = vld [vmem:[%s1 + $0x610] sm:$0xff]
  %v211 = vld [vmem:[%s1 + $0x618] sm:$0xff]
  %v212 = vld [vmem:[%s1 + $0x620] sm:$0xff]
  %v213 = vld [vmem:[%s1 + $0x628] sm:$0xff]
  %v214 = vld [vmem:[%s1 + $0x630] sm:$0xff]
  %v215 = vld [vmem:[%s1 + $0x638] sm:$0xff]
  %v216 = vld [vmem:[%s1 + $0x640] sm:$0xff]
  %v217 = vld [vmem:[%s1 + $0x648] sm:$0xff]
  %v218 = vld [vmem:[%s1 + $0x650] sm:$0xff]
  %v219 = vld [vmem:[%s1 + $0x658] sm:$0xff]
  %v220 = vld [vmem:[%s1 + $0x660] sm:$0xff]
  %v221 = vld [vmem:[%s1 + $0x668] sm:$0xff]
  %v222 = vld [vmem:[%s1 + $0x670] sm:$0xff]
  %v223 = vld [vmem:[%s1 + $0x678] sm:$0xff]
  %v224 = vld [vmem:[%s1 + $0x680] sm:$0xff]
  %v225 = vld [vmem:[%s1 + $0x688] sm:$0xff]
  %v226 = vld [vmem:[%s1 + $0x690] sm:$0xff]
  %v227 = vld [vmem:[%s1 + $0x698] sm:$0xff]
  %v228 = vld [vmem:[%s1 + $0x6a0] sm:$0xff]
  %v229 = vld [vmem:[%s1 + $0x6a8] sm:$0xff]
  %v230 = vld [vmem:[%s1 + $0x6b0] sm:$0xff]
  %v231 = vld [vmem:[%s1 + $0x6b8] sm:$0xff]
  %v232 = vld [vmem:[%s1 + $0x6c0] sm:$0xff]
  %v233 = vld [vmem:[%s1 + $0x6c8] sm:$0xff]
  %v234 = vld [vmem:[%s1 + $0x6d0] sm:$0xff]
  %v235 = vld [vmem:[%s1 + $0x6d8] sm:$0xff]
  %v236 = vld [vmem:[%s1 + $0x6e0] sm:$0xff]
  %v237 = vld [vmem:[%s1 + $0x6e8] sm:$0xff]
  %v238 = vld [vmem:[%s1 + $0x6f0] sm:$0xff]
  %v239 = vld [vmem:[%s1 + $0x6f8] sm:$0xff]
  %v240 = vld [vmem:[%s1 + $0x700] sm:$0xff]
  %v241 = vld [vmem:[%s1 + $0x708] sm:$0xff]
  %v242 = vld [vmem:[%s1 + $0x710] sm:$0xff]
  %v243 = vld [vmem:[%s1 + $0x718] sm:$0xff]
  %v244 = vld [vmem:[%s1 + $0x720] sm:$0xff]
  %v245 = vld [vmem:[%s1 + $0x728] sm:$0xff]
  %v246 = vld [vmem:[%s1 + $0x730] sm:$0xff]
  %v247 = vld [vmem:[%s1 + $0x738] sm:$0xff]
  %v248 = vld [vmem:[%s1 + $0x740] sm:$0xff]
  %v249 = vld [vmem:[%s1 + $0x748] sm:$0xff]
  %v250 = vld [vmem:[%s1 + $0x750] sm:$0xff]
  %v251 = vld [vmem:[%s1 + $0x758] sm:$0xff]
  %v252 = vld [vmem:[%s1 + $0x760] sm:$0xff]
  %v253 = vld [vmem:[%s1 + $0x768] sm:$0xff]
  %v254 = vld [vmem:[%s1 + $0x770] sm:$0xff]
  %v255 = vld [vmem:[%s1 + $0x778] sm:$0xff]
  %v256 = vld [vmem:[%s1 + $0x780] sm:$0xff]
  %v257 = vld [vmem:[%s1 + $0x788] sm:$0xff]
  %v258 = vld [vmem:[%s1 + $0x790] sm:$0xff]
  %v259 = vld [vmem:[%s1 + $0x798] sm:$0xff]
  %v260 = vld [vmem:[%s1 + $0x7a0] sm:$0xff]
  %v261 = vld [vmem:[%s1 + $0x7a8] sm:$0xff]
  %v262 = vld [vmem:[%s1 + $0x7b0] sm:$0xff]
  %v263 = vld [vmem:[%s1 + $0x7b8] sm:$0xff]
  %v264 = vld [vmem:[%s1 + $0x7c0] sm:$0xff]
  %v265 = vld [vmem:[%s1 + $0x7c8] sm:$0xff]
  %v266 = vld [vmem:[%s1 + $0x7d0] sm:$0xff]
  %v267 = vld [vmem:[%s1 + $0x7d8] sm:$0xff]
  %v268 = vld [vmem:[%s1 + $0x7e0] sm:$0xff]
  %v269 = vld [vmem:[%s1 + $0x7e8] sm:$0xff]
  %v270 = vld [vmem:[%s1 + $0x7f0] sm:$0xff]
  %v271 = vld [vmem:[%s1 + $0x7f8] sm:$0xff]
  %v272 = vld [vmem:[%s1 + $0x800] sm:$0xff]
  %v273 = vld [vmem:[%s1 + $0x808] sm:$0xff]
  %v274 = vld [vmem:[%s1 + $0x810] sm:$0xff]
  %v275 = vld [vmem:[%s1 + $0x818] sm:$0xff]
  %v276 = vld [vmem:[%s1 + $0x820] sm:$0xff]
  %v277 = vld [vmem:[%s1 + $0x828] sm:$0xff]
  %v278 = vld [vmem:[%s1 + $0x830] sm:$0xff]
  %v279 = vld [vmem:[%s1 + $0x838] sm:$0xff]
  %v280 = vld [vmem:[%s1 + $0x840] sm:$0xff]
  %v281 = vld [vmem:[%s1 + $0x848] sm:$0xff]
  %v282 = vld [vmem:[%s1 + $0x850] sm:$0xff]
  %v283 = vld [vmem:[%s1 + $0x858] sm:$0xff]
  %v284 = vld [vmem:[%s1 + $0x860] sm:$0xff]
  %v285 = vld [vmem:[%s1 + $0x868] sm:$0xff]
  %v286 = vld [vmem:[%s1 + $0x870] sm:$0xff]
  %v287 = vld [vmem:[%s1 + $0x878] sm:$0xff]
  %v288 = vld [vmem:[%s1 + $0x880] sm:$0xff]
  %v289 = vld [vmem:[%s1 + $0x888] sm:$0xff]
  %v290 = vld [vmem:[%s1 + $0x890] sm:$0xff]
  %v291 = vld [vmem:[%s1 + $0x898] sm:$0xff]
  %v292 = vld [vmem:[%s1 + $0x8a0] sm:$0xff]
  %v293 = vld [vmem:[%s1 + $0x8a8] sm:$0xff]
  %v294 = vld [vmem:[%s1 + $0x8b0] sm:$0xff]
  %v295 = vld [vmem:[%s1 + $0x8b8] sm:$0xff]
  %v296 = vld [vmem:[%s1 + $0x8c0] sm:$0xff]
  %v297 = vld [vmem:[%s1 + $0x8c8] sm:$0xff]
  %v298 = vld [vmem:[%s1 + $0x8d0] sm:$0xff]
  %v299 = vld [vmem:[%s1 + $0x8d8] sm:$0xff]
  %v300 = vld [vmem:[%s1 + $0x8e0] sm:$0xff]
  %v301 = vld [vmem:[%s1 + $0x8e8] sm:$0xff]
  %v302 = vld [vmem:[%s1 + $0x8f0] sm:$0xff]
  %v303 = vld [vmem:[%s1 + $0x8f8] sm:$0xff]
  %v304 = vld [vmem:[%s1 + $0x900] sm:$0xff]
  %v305 = vld [vmem:[%s1 + $0x908] sm:$0xff]
  %v306 = vld [vmem:[%s1 + $0x910] sm:$0xff]
  %v307 = vld [vmem:[%s1 + $0x918] sm:$0xff]
  %v308 = vld [vmem:[%s1 + $0x920] sm:$0xff]
  %v309 = vld [vmem:[%s1 + $0x928] sm:$0xff]
  %v310 = vld [vmem:[%s1 + $0x930] sm:$0xff]
  %v311 = vld [vmem:[%s1 + $0x938] sm:$0xff]
  %v312 = vld [vmem:[%s1 + $0x940] sm:$0xff]
  %v313 = vld [vmem:[%s1 + $0x948] sm:$0xff]
  %v314 = vld [vmem:[%s1 + $0x950] sm:$0xff]
  %v315 = vld [vmem:[%s1 + $0x958] sm:$0xff]
  %v316 = vld [vmem:[%s1 + $0x960] sm:$0xff]
  %v317 = vld [vmem:[%s1 + $0x968] sm:$0xff]
  %v318 = vld [vmem:[%s1 + $0x970] sm:$0xff]
  %v319 = vld [vmem:[%s1 + $0x978] sm:$0xff]
  %v320 = vld [vmem:[%s1 + $0x980] sm:$0xff]
  %v321 = vld [vmem:[%s1 + $0x988] sm:$0xff]
  %v322 = vld [vmem:[%s1 + $0x990] sm:$0xff]
  %v323 = vld [vmem:[%s1 + $0x998] sm:$0xff]
  %v324 = vld [vmem:[%s1 + $0x9a0] sm:$0xff]
  %v325 = vld [vmem:[%s1 + $0x9a8] sm:$0xff]
  %v326 = vld [vmem:[%s1 + $0x9b0] sm:$0xff]
  %v327 = vld [vmem:[%s1 + $0x9b8] sm:$0xff]
  %v328 = vld [vmem:[%s1 + $0x9c0] sm:$0xff]
  %v329 = vld [vmem:[%s1 + $0x9c8] sm:$0xff]
  %v330 = vld [vmem:[%s1 + $0x9d0] sm:$0xff]
  %v331 = vld [vmem:[%s1 + $0x9d8] sm:$0xff]
  %v332 = vld [vmem:[%s1 + $0x9e0] sm:$0xff]
  %v333 = vld [vmem:[%s1 + $0x9e8] sm:$0xff]
  %v334 = vld [vmem:[%s1 + $0x9f0] sm:$0xff]
  %v335 = vld [vmem:[%s1 + $0x9f8] sm:$0xff]
  %v336 = vld [vmem:[%s1 + $0xa00] sm:$0xff]
  %v337 = vld [vmem:[%s1 + $0xa08] sm:$0xff]
  %v338 = vld [vmem:[%s1 + $0xa10] sm:$0xff]
  %v339 = vld [vmem:[%s1 + $0xa18] sm:$0xff]
  %v340 = vld [vmem:[%s1 + $0xa20] sm:$0xff]
  %v341 = vld [vmem:[%s1 + $0xa28] sm:$0xff]
  %v342 = vld [vmem:[%s1 + $0xa30] sm:$0xff]
  %v343 = vld [vmem:[%s1 + $0xa38] sm:$0xff]
  %v344 = vld [vmem:[%s1 + $0xa40] sm:$0xff]
  %v345 = vld [vmem:[%s1 + $0xa48] sm:$0xff]
  %v346 = vld [vmem:[%s1 + $0xa50] sm:$0xff]
  %v347 = vld [vmem:[%s1 + $0xa58] sm:$0xff]
  %v348 = vld [vmem:[%s1 + $0xa60] sm:$0xff]
  %v349 = vld [vmem:[%s1 + $0xa68] sm:$0xff]
  %v350 = vld [vmem:[%s1 + $0xa70] sm:$0xff]
  %v351 = vld [vmem:[%s1 + $0xa78] sm:$0xff]
  %v352 = vld [vmem:[%s1 + $0xa80] sm:$0xff]
  %v353 = vld [vmem:[%s1 + $0xa88] sm:$0xff]
  %v354 = vld [vmem:[%s1 + $0xa90] sm:$0xff]
  %v355 = vld [vmem:[%s1 + $0xa98] sm:$0xff]
  %v356 = vld [vmem:[%s1 + $0xaa0] sm:$0xff]
  %v357 = vld [vmem:[%s1 + $0xaa8] sm:$0xff]
  %v358 = vld [vmem:[%s1 + $0xab0] sm:$0xff]
  %v359 = vld [vmem:[%s1 + $0xab8] sm:$0xff]
  %v360 = vld [vmem:[%s1 + $0xac0] sm:$0xff]
  %v361 = vld [vmem:[%s1 + $0xac8] sm:$0xff]
  %v362 = vld [vmem:[%s1 + $0xad0] sm:$0xff]
  %v363 = vld [vmem:[%s1 + $0xad8] sm:$0xff]
  %v364 = vld [vmem:[%s1 + $0xae0] sm:$0xff]
  %v365 = vld [vmem:[%s1 + $0xae8] sm:$0xff]
  %v366 = vld [vmem:[%s1 + $0xaf0] sm:$0xff]
  %v367 = vld [vmem:[%s1 + $0xaf8] sm:$0xff]
  %v368 = vld [vmem:[%s1 + $0xb00] sm:$0xff]
  %v369 = vld [vmem:[%s1 + $0xb08] sm:$0xff]
  %v370 = vld [vmem:[%s1 + $0xb10] sm:$0xff]
  %v371 = vld [vmem:[%s1 + $0xb18] sm:$0xff]
  %v372 = vld [vmem:[%s1 + $0xb20] sm:$0xff]
  %v373 = vld [vmem:[%s1 + $0xb28] sm:$0xff]
  %v374 = vld [vmem:[%s1 + $0xb30] sm:$0xff]
  %v375 = vld [vmem:[%s1 + $0xb38] sm:$0xff]
  %v376 = vld [vmem:[%s1 + $0xb40] sm:$0xff]
  %v377 = vld [vmem:[%s1 + $0xb48] sm:$0xff]
  %v378 = vld [vmem:[%s1 + $0xb50] sm:$0xff]
  %v379 = vld [vmem:[%s1 + $0xb58] sm:$0xff]
  %v380 = vld [vmem:[%s1 + $0xb60] sm:$0xff]
  %v381 = vld [vmem:[%s1 + $0xb68] sm:$0xff]
  %v382 = vld [vmem:[%s1 + $0xb70] sm:$0xff]
  %v383 = vld [vmem:[%s1 + $0xb78] sm:$0xff]
  %v384 = vld [vmem:[%s1 + $0xb80] sm:$0xff]
  %v385 = vld [vmem:[%s1 + $0xb88] sm:$0xff]
  %v386 = vld [vmem:[%s1 + $0xb90] sm:$0xff]
  %v387 = vld [vmem:[%s1 + $0xb98] sm:$0xff]
  %v388 = vld [vmem:[%s1 + $0xba0] sm:$0xff]
  %v389 = vld [vmem:[%s1 + $0xba8] sm:$0xff]
  %v390 = vld [vmem:[%s1 + $0xbb0] sm:$0xff]
  %v391 = vld [vmem:[%s1 + $0xbb8] sm:$0xff]
  %v392 = vld [vmem:[%s1 + $0xbc0] sm:$0xff]
  %v393 = vld [vmem:[%s1 + $0xbc8] sm:$0xff]
  %v394 = vld [vmem:[%s1 + $0xbd0] sm:$0xff]
  %v395 = vld [vmem:[%s1 + $0xbd8] sm:$0xff]
  %v396 = vld [vmem:[%s1 + $0xbe0] sm:$0xff]
  %v397 = vld [vmem:[%s1 + $0xbe8] sm:$0xff]
  %v398 = vld [vmem:[%s1 + $0xbf0] sm:$0xff]
  %v399 = vld [vmem:[%s1 + $0xbf8] sm:$0xff]
  %v400 = vld [vmem:[%s1 + $0xc00] sm:$0xff]
  %v401 = vld [vmem:[%s1 + $0xc08] sm:$0xff]
  %v402 = vld [vmem:[%s1 + $0xc10] sm:$0xff]
  %v403 = vld [vmem:[%s1 + $0xc18] sm:$0xff]
  %v404 = vld [vmem:[%s1 + $0xc20] sm:$0xff]
  %v405 = vld [vmem:[%s1 + $0xc28] sm:$0xff]
  %v406 = vld [vmem:[%s1 + $0xc30] sm:$0xff]
  %v407 = vld [vmem:[%s1 + $0xc38] sm:$0xff]
  %v408 = vld [vmem:[%s1 + $0xc40] sm:$0xff]
  %v409 = vld [vmem:[%s1 + $0xc48] sm:$0xff]
  %v410 = vld [vmem:[%s1 + $0xc50] sm:$0xff]
  %v411 = vld [vmem:[%s1 + $0xc58] sm:$0xff]
  %v412 = vld [vmem:[%s1 + $0xc60] sm:$0xff]
  %v413 = vld [vmem:[%s1 + $0xc68] sm:$0xff]
  %v414 = vld [vmem:[%s1 + $0xc70] sm:$0xff]
  %v415 = vld [vmem:[%s1 + $0xc78] sm:$0xff]
  %v416 = vld [vmem:[%s1 + $0xc80] sm:$0xff]
  %v417 = vld [vmem:[%s1 + $0xc88] sm:$0xff]
  %v418 = vld [vmem:[%s1 + $0xc90] sm:$0xff]
  %v419 = vld [vmem:[%s1 + $0xc98] sm:$0xff]
  %v420 = vld [vmem:[%s1 + $0xca0] sm:$0xff]
  %v421 = vld [vmem:[%s1 + $0xca8] sm:$0xff]
  %v422 = vld [vmem:[%s1 + $0xcb0] sm:$0xff]
  %v423 = vld [vmem:[%s1 + $0xcb8] sm:$0xff]
  %v424 = vld [vmem:[%s1 + $0xcc0] sm:$0xff]
  %v425 = vld [vmem:[%s1 + $0xcc8] sm:$0xff]
  %v426 = vld [vmem:[%s1 + $0xcd0] sm:$0xff]
  %v427 = vld [vmem:[%s1 + $0xcd8] sm:$0xff]
  %v428 = vld [vmem:[%s1 + $0xce0] sm:$0xff]
  %v429 = vld [vmem:[%s1 + $0xce8] sm:$0xff]
  %v430 = vld [vmem:[%s1 + $0xcf0] sm:$0xff]
  %v431 = vld [vmem:[%s1 + $0xcf8] sm:$0xff]
  %v432 = vld [vmem:[%s1 + $0xd00] sm:$0xff]
  %v433 = vld [vmem:[%s1 + $0xd08] sm:$0xff]
  %v434 = vld [vmem:[%s1 + $0xd10] sm:$0xff]
  %v435 = vld [vmem:[%s1 + $0xd18] sm:$0xff]
  %v436 = vld [vmem:[%s1 + $0xd20] sm:$0xff]
  %v437 = vld [vmem:[%s1 + $0xd28] sm:$0xff]
  %v438 = vld [vmem:[%s1 + $0xd30] sm:$0xff]
  %v439 = vld [vmem:[%s1 + $0xd38] sm:$0xff]
  %v440 = vld [vmem:[%s1 + $0xd40] sm:$0xff]
  %v441 = vld [vmem:[%s1 + $0xd48] sm:$0xff]
  %v442 = vld [vmem:[%s1 + $0xd50] sm:$0xff]
  %v443 = vld [vmem:[%s1 + $0xd58] sm:$0xff]
  %v444 = vld [vmem:[%s1 + $0xd60] sm:$0xff]
  %v445 = vld [vmem:[%s1 + $0xd68] sm:$0xff]
  %v446 = vld [vmem:[%s1 + $0xd70] sm:$0xff]
  %v447 = vld [vmem:[%s1 + $0xd78] sm:$0xff]
  %v448 = vld [vmem:[%s1 + $0xd80] sm:$0xff]
  %v449 = vld [vmem:[%s1 + $0xd88] sm:$0xff]
  %v450 = vld [vmem:[%s1 + $0xd90] sm:$0xff]
  %v451 = vld [vmem:[%s1 + $0xd98] sm:$0xff]
  %v452 = vld [vmem:[%s1 + $0xda0] sm:$0xff]
  %v453 = vld [vmem:[%s1 + $0xda8] sm:$0xff]
  %v454 = vld [vmem:[%s1 + $0xdb0] sm:$0xff]
  %v455 = vld [vmem:[%s1 + $0xdb8] sm:$0xff]
  %v456 = vld [vmem:[%s1 + $0xdc0] sm:$0xff]
  %v457 = vld [vmem:[%s1 + $0xdc8] sm:$0xff]
  %v458 = vld [vmem:[%s1 + $0xdd0] sm:$0xff]
  %v459 = vld [vmem:[%s1 + $0xdd8] sm:$0xff]
  %v460 = vld [vmem:[%s1 + $0xde0] sm:$0xff]
  %v461 = vld [vmem:[%s1 + $0xde8] sm:$0xff]
  %v462 = vld [vmem:[%s1 + $0xdf0] sm:$0xff]
  %v463 = vld [vmem:[%s1 + $0xdf8] sm:$0xff]
  %v464 = vld [vmem:[%s1 + $0xe00] sm:$0xff]
  %v465 = vld [vmem:[%s1 + $0xe08] sm:$0xff]
  %v466 = vld [vmem:[%s1 + $0xe10] sm:$0xff]
  %v467 = vld [vmem:[%s1 + $0xe18] sm:$0xff]
  %v468 = vld [vmem:[%s1 + $0xe20] sm:$0xff]
  %v469 = vld [vmem:[%s1 + $0xe28] sm:$0xff]
  %v470 = vld [vmem:[%s1 + $0xe30] sm:$0xff]
  %v471 = vld [vmem:[%s1 + $0xe38] sm:$0xff]
  %v472 = vld [vmem:[%s1 + $0xe40] sm:$0xff]
  %v473 = vld [vmem:[%s1 + $0xe48] sm:$0xff]
  %v474 = vld [vmem:[%s1 + $0xe50] sm:$0xff]
  %v475 = vld [vmem:[%s1 + $0xe58] sm:$0xff]
  %v476 = vld [vmem:[%s1 + $0xe60] sm:$0xff]
  %v477 = vld [vmem:[%s1 + $0xe68] sm:$0xff]
  %v478 = vld [vmem:[%s1 + $0xe70] sm:$0xff]
  %v479 = vld [vmem:[%s1 + $0xe78] sm:$0xff]
  %v480 = vld [vmem:[%s1 + $0xe80] sm:$0xff]
  %v481 = vld [vmem:[%s1 + $0xe88] sm:$0xff]
  %v482 = vld [vmem:[%s1 + $0xe90] sm:$0xff]
  %v483 = vld [vmem:[%s1 + $0xe98] sm:$0xff]
  %v484 = vld [vmem:[%s1 + $0xea0] sm:$0xff]
  %v485 = vld [vmem:[%s1 + $0xea8] sm:$0xff]
  %v486 = vld [vmem:[%s1 + $0xeb0] sm:$0xff]
  %v487 = vld [vmem:[%s1 + $0xeb8] sm:$0xff]
  %v488 = vld [vmem:[%s1 + $0xec0] sm:$0xff]
  %v489 = vld [vmem:[%s1 + $0xec8] sm:$0xff]
  %v490 = vld [vmem:[%s1 + $0xed0] sm:$0xff]
  %v491 = vld [vmem:[%s1 + $0xed8] sm:$0xff]
  %v492 = vld [vmem:[%s1 + $0xee0] sm:$0xff]
  %v493 = vld [vmem:[%s1 + $0xee8] sm:$0xff]
  %v494 = vld [vmem:[%s1 + $0xef0] sm:$0xff]
  %v495 = vld [vmem:[%s1 + $0xef8] sm:$0xff]
  %v496 = vld [vmem:[%s1 + $0xf00] sm:$0xff]
  %v497 = vld [vmem:[%s1 + $0xf08] sm:$0xff]
  %v498 = vld [vmem:[%s1 + $0xf10] sm:$0xff]
  %v499 = vld [vmem:[%s1 + $0xf18] sm:$0xff]
  %v500 = vld [vmem:[%s1 + $0xf20] sm:$0xff]
  %v501 = vld [vmem:[%s1 + $0xf28] sm:$0xff]
  %v502 = vld [vmem:[%s1 + $0xf30] sm:$0xff]
  %v503 = vld [vmem:[%s1 + $0xf38] sm:$0xff]
  %v504 = vld [vmem:[%s1 + $0xf40] sm:$0xff]
  %v505 = vld [vmem:[%s1 + $0xf48] sm:$0xff]
  %v506 = vld [vmem:[%s1 + $0xf50] sm:$0xff]
  %v507 = vld [vmem:[%s1 + $0xf58] sm:$0xff]
  %v508 = vld [vmem:[%s1 + $0xf60] sm:$0xff]
  %v509 = vld [vmem:[%s1 + $0xf68] sm:$0xff]
  %v510 = vld [vmem:[%s1 + $0xf70] sm:$0xff]
  %v511 = vld [vmem:[%s1 + $0xf78] sm:$0xff]
  %v512 = vld [vmem:[%s1 + $0xf80] sm:$0xff]
  %v513 = vld [vmem:[%s1 + $0xf88] sm:$0xff]
  %v514 = vld [vmem:[%s1 + $0xf90] sm:$0xff]
  %v515 = vld [vmem:[%s1 + $0xf98] sm:$0xff]
  %v516 = vld [vmem:[%s1 + $0xfa0] sm:$0xff]
  %v517 = vld [vmem:[%s1 + $0xfa8] sm:$0xff]
  %v518 = vld [vmem:[%s1 + $0xfb0] sm:$0xff]
  %v519 = vld [vmem:[%s1 + $0xfb8] sm:$0xff]
  %v520 = vld [vmem:[%s1 + $0xfc0] sm:$0xff]
  %v521 = vld [vmem:[%s1 + $0xfc8] sm:$0xff]
  %v522 = vld [vmem:[%s1 + $0xfd0] sm:$0xff]
  %v523 = vld [vmem:[%s1 + $0xfd8] sm:$0xff]
  %v524 = vld [vmem:[%s1 + $0xfe0] sm:$0xff]
  %v525 = vld [vmem:[%s1 + $0xfe8] sm:$0xff]
  %v526 = vld [vmem:[%s1 + $0xff0] sm:$0xff]
  %v527 = vld [vmem:[%s1 + $0xff8] sm:$0xff]
  %v528 = vld [vmem:[%s2] sm:$0xff]
  %530 = vset.pattern.permute.xlu0 0
  %531 = vperm.xlu0 %530, %v528
  %v532 = vpop.permute.xlu0 %531
  %v536 = vunpack.c.l.b16 %v14
  %v537 = vunpack.c.h.b16 %v14
  %v538 = vunpack.c.l.b16 %v15
  %v539 = vunpack.c.h.b16 %v15
  %v540 = vpack.c.b16 %v536, %v536
  %v541 = vpack.c.b16 %v537, %v537
  %v542 = vpack.c.b16 %v538, %v538
  %v543 = vpack.c.b16 %v539, %v539
  %v1060 = vunpack.c.l.b16 %v16
  %v1061 = vunpack.c.h.b16 %v16
  %v1062 = vunpack.c.l.b16 %v17
  %v1063 = vunpack.c.h.b16 %v17
  %v1064 = vunpack.c.l.b16 %v18
  %v1065 = vunpack.c.h.b16 %v18
  %v1066 = vunpack.c.l.b16 %v19
  %v1067 = vunpack.c.h.b16 %v19
  %v1068 = vunpack.c.l.b16 %v20
  %v1069 = vunpack.c.h.b16 %v20
  %v1070 = vunpack.c.l.b16 %v21
  %v1071 = vunpack.c.h.b16 %v21
  %v1072 = vunpack.c.l.b16 %v22
  %v1073 = vunpack.c.h.b16 %v22
  %v1074 = vunpack.c.l.b16 %v23
  %v1075 = vunpack.c.h.b16 %v23
  %v1076 = vunpack.c.l.b16 %v24
  %v1077 = vunpack.c.h.b16 %v24
  %v1078 = vunpack.c.l.b16 %v25
  %v1079 = vunpack.c.h.b16 %v25
  %v1080 = vunpack.c.l.b16 %v26
  %v1081 = vunpack.c.h.b16 %v26
  %v1082 = vunpack.c.l.b16 %v27
  %v1083 = vunpack.c.h.b16 %v27
  %v1084 = vunpack.c.l.b16 %v28
  %v1085 = vunpack.c.h.b16 %v28
  %v1086 = vunpack.c.l.b16 %v29
  %v1087 = vunpack.c.h.b16 %v29
  %v1088 = vunpack.c.l.b16 %v30
  %v1089 = vunpack.c.h.b16 %v30
  %v1090 = vunpack.c.l.b16 %v31
  %v1091 = vunpack.c.h.b16 %v31
  %v1092 = vunpack.c.l.b16 %v32
  %v1093 = vunpack.c.h.b16 %v32
  %v1094 = vunpack.c.l.b16 %v33
  %v1095 = vunpack.c.h.b16 %v33
  %v1096 = vunpack.c.l.b16 %v34
  %v1097 = vunpack.c.h.b16 %v34
  %v1098 = vunpack.c.l.b16 %v35
  %v1099 = vunpack.c.h.b16 %v35
  %v1100 = vunpack.c.l.b16 %v36
  %v1101 = vunpack.c.h.b16 %v36
  %v1102 = vunpack.c.l.b16 %v37
  %v1103 = vunpack.c.h.b16 %v37
  %v1104 = vunpack.c.l.b16 %v38
  %v1105 = vunpack.c.h.b16 %v38
  %v1106 = vunpack.c.l.b16 %v39
  %v1107 = vunpack.c.h.b16 %v39
  %v1108 = vunpack.c.l.b16 %v40
  %v1109 = vunpack.c.h.b16 %v40
  %v1110 = vunpack.c.l.b16 %v41
  %v1111 = vunpack.c.h.b16 %v41
  %v1112 = vunpack.c.l.b16 %v42
  %v1113 = vunpack.c.h.b16 %v42
  %v1114 = vunpack.c.l.b16 %v43
  %v1115 = vunpack.c.h.b16 %v43
  %v1116 = vunpack.c.l.b16 %v44
  %v1117 = vunpack.c.h.b16 %v44
  %v1118 = vunpack.c.l.b16 %v45
  %v1119 = vunpack.c.h.b16 %v45
  %v1120 = vunpack.c.l.b16 %v46
  %v1121 = vunpack.c.h.b16 %v46
  %v1122 = vunpack.c.l.b16 %v47
  %v1123 = vunpack.c.h.b16 %v47
  %v1124 = vunpack.c.l.b16 %v48
  %v1125 = vunpack.c.h.b16 %v48
  %v1126 = vunpack.c.l.b16 %v49
  %v1127 = vunpack.c.h.b16 %v49
  %v1128 = vunpack.c.l.b16 %v50
  %v1129 = vunpack.c.h.b16 %v50
  %v1130 = vunpack.c.l.b16 %v51
  %v1131 = vunpack.c.h.b16 %v51
  %v1132 = vunpack.c.l.b16 %v52
  %v1133 = vunpack.c.h.b16 %v52
  %v1134 = vunpack.c.l.b16 %v53
  %v1135 = vunpack.c.h.b16 %v53
  %v1136 = vunpack.c.l.b16 %v54
  %v1137 = vunpack.c.h.b16 %v54
  %v1138 = vunpack.c.l.b16 %v55
  %v1139 = vunpack.c.h.b16 %v55
  %v1140 = vunpack.c.l.b16 %v56
  %v1141 = vunpack.c.h.b16 %v56
  %v1142 = vunpack.c.l.b16 %v57
  %v1143 = vunpack.c.h.b16 %v57
  %v1144 = vunpack.c.l.b16 %v58
  %v1145 = vunpack.c.h.b16 %v58
  %v1146 = vunpack.c.l.b16 %v59
  %v1147 = vunpack.c.h.b16 %v59
  %v1148 = vunpack.c.l.b16 %v60
  %v1149 = vunpack.c.h.b16 %v60
  %v1150 = vunpack.c.l.b16 %v61
  %v1151 = vunpack.c.h.b16 %v61
  %v1152 = vunpack.c.l.b16 %v62
  %v1153 = vunpack.c.h.b16 %v62
  %v1154 = vunpack.c.l.b16 %v63
  %v1155 = vunpack.c.h.b16 %v63
  %v1156 = vunpack.c.l.b16 %v64
  %v1157 = vunpack.c.h.b16 %v64
  %v1158 = vunpack.c.l.b16 %v65
  %v1159 = vunpack.c.h.b16 %v65
  %v1160 = vunpack.c.l.b16 %v66
  %v1161 = vunpack.c.h.b16 %v66
  %v1162 = vunpack.c.l.b16 %v67
  %v1163 = vunpack.c.h.b16 %v67
  %v1164 = vunpack.c.l.b16 %v68
  %v1165 = vunpack.c.h.b16 %v68
  %v1166 = vunpack.c.l.b16 %v69
  %v1167 = vunpack.c.h.b16 %v69
  %v1168 = vunpack.c.l.b16 %v70
  %v1169 = vunpack.c.h.b16 %v70
  %v1170 = vunpack.c.l.b16 %v71
  %v1171 = vunpack.c.h.b16 %v71
  %v1172 = vunpack.c.l.b16 %v72
  %v1173 = vunpack.c.h.b16 %v72
  %v1174 = vunpack.c.l.b16 %v73
  %v1175 = vunpack.c.h.b16 %v73
  %v1176 = vunpack.c.l.b16 %v74
  %v1177 = vunpack.c.h.b16 %v74
  %v1178 = vunpack.c.l.b16 %v75
  %v1179 = vunpack.c.h.b16 %v75
  %v1180 = vunpack.c.l.b16 %v76
  %v1181 = vunpack.c.h.b16 %v76
  %v1182 = vunpack.c.l.b16 %v77
  %v1183 = vunpack.c.h.b16 %v77
  %v1184 = vunpack.c.l.b16 %v78
  %v1185 = vunpack.c.h.b16 %v78
  %v1186 = vunpack.c.l.b16 %v79
  %v1187 = vunpack.c.h.b16 %v79
  %v1188 = vunpack.c.l.b16 %v80
  %v1189 = vunpack.c.h.b16 %v80
  %v1190 = vunpack.c.l.b16 %v81
  %v1191 = vunpack.c.h.b16 %v81
  %v1192 = vunpack.c.l.b16 %v82
  %v1193 = vunpack.c.h.b16 %v82
  %v1194 = vunpack.c.l.b16 %v83
  %v1195 = vunpack.c.h.b16 %v83
  %v1196 = vunpack.c.l.b16 %v84
  %v1197 = vunpack.c.h.b16 %v84
  %v1198 = vunpack.c.l.b16 %v85
  %v1199 = vunpack.c.h.b16 %v85
  %v1200 = vunpack.c.l.b16 %v86
  %v1201 = vunpack.c.h.b16 %v86
  %v1202 = vunpack.c.l.b16 %v87
  %v1203 = vunpack.c.h.b16 %v87
  %v1204 = vunpack.c.l.b16 %v88
  %v1205 = vunpack.c.h.b16 %v88
  %v1206 = vunpack.c.l.b16 %v89
  %v1207 = vunpack.c.h.b16 %v89
  %v1208 = vunpack.c.l.b16 %v90
  %v1209 = vunpack.c.h.b16 %v90
  %v1210 = vunpack.c.l.b16 %v91
  %v1211 = vunpack.c.h.b16 %v91
  %v1212 = vunpack.c.l.b16 %v92
  %v1213 = vunpack.c.h.b16 %v92
  %v1214 = vunpack.c.l.b16 %v93
  %v1215 = vunpack.c.h.b16 %v93
  %v1216 = vunpack.c.l.b16 %v94
  %v1217 = vunpack.c.h.b16 %v94
  %v1218 = vunpack.c.l.b16 %v95
  %v1219 = vunpack.c.h.b16 %v95
  %v1220 = vunpack.c.l.b16 %v96
  %v1221 = vunpack.c.h.b16 %v96
  %v1222 = vunpack.c.l.b16 %v97
  %v1223 = vunpack.c.h.b16 %v97
  %v1224 = vunpack.c.l.b16 %v98
  %v1225 = vunpack.c.h.b16 %v98
  %v1226 = vunpack.c.l.b16 %v99
  %v1227 = vunpack.c.h.b16 %v99
  %v1228 = vunpack.c.l.b16 %v100
  %v1229 = vunpack.c.h.b16 %v100
  %v1230 = vunpack.c.l.b16 %v101
  %v1231 = vunpack.c.h.b16 %v101
  %v1232 = vunpack.c.l.b16 %v102
  %v1233 = vunpack.c.h.b16 %v102
  %v1234 = vunpack.c.l.b16 %v103
  %v1235 = vunpack.c.h.b16 %v103
  %v1236 = vunpack.c.l.b16 %v104
  %v1237 = vunpack.c.h.b16 %v104
  %v1238 = vunpack.c.l.b16 %v105
  %v1239 = vunpack.c.h.b16 %v105
  %v1240 = vunpack.c.l.b16 %v106
  %v1241 = vunpack.c.h.b16 %v106
  %v1242 = vunpack.c.l.b16 %v107
  %v1243 = vunpack.c.h.b16 %v107
  %v1244 = vunpack.c.l.b16 %v108
  %v1245 = vunpack.c.h.b16 %v108
  %v1246 = vunpack.c.l.b16 %v109
  %v1247 = vunpack.c.h.b16 %v109
  %v1248 = vunpack.c.l.b16 %v110
  %v1249 = vunpack.c.h.b16 %v110
  %v1250 = vunpack.c.l.b16 %v111
  %v1251 = vunpack.c.h.b16 %v111
  %v1252 = vunpack.c.l.b16 %v112
  %v1253 = vunpack.c.h.b16 %v112
  %v1254 = vunpack.c.l.b16 %v113
  %v1255 = vunpack.c.h.b16 %v113
  %v1256 = vunpack.c.l.b16 %v114
  %v1257 = vunpack.c.h.b16 %v114
  %v1258 = vunpack.c.l.b16 %v115
  %v1259 = vunpack.c.h.b16 %v115
  %v1260 = vunpack.c.l.b16 %v116
  %v1261 = vunpack.c.h.b16 %v116
  %v1262 = vunpack.c.l.b16 %v117
  %v1263 = vunpack.c.h.b16 %v117
  %v1264 = vunpack.c.l.b16 %v118
  %v1265 = vunpack.c.h.b16 %v118
  %v1266 = vunpack.c.l.b16 %v119
  %v1267 = vunpack.c.h.b16 %v119
  %v1268 = vunpack.c.l.b16 %v120
  %v1269 = vunpack.c.h.b16 %v120
  %v1270 = vunpack.c.l.b16 %v121
  %v1271 = vunpack.c.h.b16 %v121
  %v1272 = vunpack.c.l.b16 %v122
  %v1273 = vunpack.c.h.b16 %v122
  %v1274 = vunpack.c.l.b16 %v123
  %v1275 = vunpack.c.h.b16 %v123
  %v1276 = vunpack.c.l.b16 %v124
  %v1277 = vunpack.c.h.b16 %v124
  %v1278 = vunpack.c.l.b16 %v125
  %v1279 = vunpack.c.h.b16 %v125
  %v1280 = vunpack.c.l.b16 %v126
  %v1281 = vunpack.c.h.b16 %v126
  %v1282 = vunpack.c.l.b16 %v127
  %v1283 = vunpack.c.h.b16 %v127
  %v1284 = vunpack.c.l.b16 %v128
  %v1285 = vunpack.c.h.b16 %v128
  %v1286 = vunpack.c.l.b16 %v129
  %v1287 = vunpack.c.h.b16 %v129
  %v1288 = vunpack.c.l.b16 %v130
  %v1289 = vunpack.c.h.b16 %v130
  %v1290 = vunpack.c.l.b16 %v131
  %v1291 = vunpack.c.h.b16 %v131
  %v1292 = vunpack.c.l.b16 %v132
  %v1293 = vunpack.c.h.b16 %v132
  %v1294 = vunpack.c.l.b16 %v133
  %v1295 = vunpack.c.h.b16 %v133
  %v1296 = vunpack.c.l.b16 %v134
  %v1297 = vunpack.c.h.b16 %v134
  %v1298 = vunpack.c.l.b16 %v135
  %v1299 = vunpack.c.h.b16 %v135
  %v1300 = vunpack.c.l.b16 %v136
  %v1301 = vunpack.c.h.b16 %v136
  %v1302 = vunpack.c.l.b16 %v137
  %v1303 = vunpack.c.h.b16 %v137
  %v1304 = vunpack.c.l.b16 %v138
  %v1305 = vunpack.c.h.b16 %v138
  %v1306 = vunpack.c.l.b16 %v139
  %v1307 = vunpack.c.h.b16 %v139
  %v1308 = vunpack.c.l.b16 %v140
  %v1309 = vunpack.c.h.b16 %v140
  %v1310 = vunpack.c.l.b16 %v141
  %v1311 = vunpack.c.h.b16 %v141
  %v1312 = vunpack.c.l.b16 %v142
  %v1313 = vunpack.c.h.b16 %v142
  %v1314 = vunpack.c.l.b16 %v143
  %v1315 = vunpack.c.h.b16 %v143
  %v1316 = vunpack.c.l.b16 %v144
  %v1317 = vunpack.c.h.b16 %v144
  %v1318 = vunpack.c.l.b16 %v145
  %v1319 = vunpack.c.h.b16 %v145
  %v1320 = vunpack.c.l.b16 %v146
  %v1321 = vunpack.c.h.b16 %v146
  %v1322 = vunpack.c.l.b16 %v147
  %v1323 = vunpack.c.h.b16 %v147
  %v1324 = vunpack.c.l.b16 %v148
  %v1325 = vunpack.c.h.b16 %v148
  %v1326 = vunpack.c.l.b16 %v149
  %v1327 = vunpack.c.h.b16 %v149
  %v1328 = vunpack.c.l.b16 %v150
  %v1329 = vunpack.c.h.b16 %v150
  %v1330 = vunpack.c.l.b16 %v151
  %v1331 = vunpack.c.h.b16 %v151
  %v1332 = vunpack.c.l.b16 %v152
  %v1333 = vunpack.c.h.b16 %v152
  %v1334 = vunpack.c.l.b16 %v153
  %v1335 = vunpack.c.h.b16 %v153
  %v1336 = vunpack.c.l.b16 %v154
  %v1337 = vunpack.c.h.b16 %v154
  %v1338 = vunpack.c.l.b16 %v155
  %v1339 = vunpack.c.h.b16 %v155
  %v1340 = vunpack.c.l.b16 %v156
  %v1341 = vunpack.c.h.b16 %v156
  %v1342 = vunpack.c.l.b16 %v157
  %v1343 = vunpack.c.h.b16 %v157
  %v1344 = vunpack.c.l.b16 %v158
  %v1345 = vunpack.c.h.b16 %v158
  %v1346 = vunpack.c.l.b16 %v159
  %v1347 = vunpack.c.h.b16 %v159
  %v1348 = vunpack.c.l.b16 %v160
  %v1349 = vunpack.c.h.b16 %v160
  %v1350 = vunpack.c.l.b16 %v161
  %v1351 = vunpack.c.h.b16 %v161
  %v1352 = vunpack.c.l.b16 %v162
  %v1353 = vunpack.c.h.b16 %v162
  %v1354 = vunpack.c.l.b16 %v163
  %v1355 = vunpack.c.h.b16 %v163
  %v1356 = vunpack.c.l.b16 %v164
  %v1357 = vunpack.c.h.b16 %v164
  %v1358 = vunpack.c.l.b16 %v165
  %v1359 = vunpack.c.h.b16 %v165
  %v1360 = vunpack.c.l.b16 %v166
  %v1361 = vunpack.c.h.b16 %v166
  %v1362 = vunpack.c.l.b16 %v167
  %v1363 = vunpack.c.h.b16 %v167
  %v1364 = vunpack.c.l.b16 %v168
  %v1365 = vunpack.c.h.b16 %v168
  %v1366 = vunpack.c.l.b16 %v169
  %v1367 = vunpack.c.h.b16 %v169
  %v1368 = vunpack.c.l.b16 %v170
  %v1369 = vunpack.c.h.b16 %v170
  %v1370 = vunpack.c.l.b16 %v171
  %v1371 = vunpack.c.h.b16 %v171
  %v1372 = vunpack.c.l.b16 %v172
  %v1373 = vunpack.c.h.b16 %v172
  %v1374 = vunpack.c.l.b16 %v173
  %v1375 = vunpack.c.h.b16 %v173
  %v1376 = vunpack.c.l.b16 %v174
  %v1377 = vunpack.c.h.b16 %v174
  %v1378 = vunpack.c.l.b16 %v175
  %v1379 = vunpack.c.h.b16 %v175
  %v1380 = vunpack.c.l.b16 %v176
  %v1381 = vunpack.c.h.b16 %v176
  %v1382 = vunpack.c.l.b16 %v177
  %v1383 = vunpack.c.h.b16 %v177
  %v1384 = vunpack.c.l.b16 %v178
  %v1385 = vunpack.c.h.b16 %v178
  %v1386 = vunpack.c.l.b16 %v179
  %v1387 = vunpack.c.h.b16 %v179
  %v1388 = vunpack.c.l.b16 %v180
  %v1389 = vunpack.c.h.b16 %v180
  %v1390 = vunpack.c.l.b16 %v181
  %v1391 = vunpack.c.h.b16 %v181
  %v1392 = vunpack.c.l.b16 %v182
  %v1393 = vunpack.c.h.b16 %v182
  %v1394 = vunpack.c.l.b16 %v183
  %v1395 = vunpack.c.h.b16 %v183
  %v1396 = vunpack.c.l.b16 %v184
  %v1397 = vunpack.c.h.b16 %v184
  %v1398 = vunpack.c.l.b16 %v185
  %v1399 = vunpack.c.h.b16 %v185
  %v1400 = vunpack.c.l.b16 %v186
  %v1401 = vunpack.c.h.b16 %v186
  %v1402 = vunpack.c.l.b16 %v187
  %v1403 = vunpack.c.h.b16 %v187
  %v1404 = vunpack.c.l.b16 %v188
  %v1405 = vunpack.c.h.b16 %v188
  %v1406 = vunpack.c.l.b16 %v189
  %v1407 = vunpack.c.h.b16 %v189
  %v1408 = vunpack.c.l.b16 %v190
  %v1409 = vunpack.c.h.b16 %v190
  %v1410 = vunpack.c.l.b16 %v191
  %v1411 = vunpack.c.h.b16 %v191
  %v1412 = vunpack.c.l.b16 %v192
  %v1413 = vunpack.c.h.b16 %v192
  %v1414 = vunpack.c.l.b16 %v193
  %v1415 = vunpack.c.h.b16 %v193
  %v1416 = vunpack.c.l.b16 %v194
  %v1417 = vunpack.c.h.b16 %v194
  %v1418 = vunpack.c.l.b16 %v195
  %v1419 = vunpack.c.h.b16 %v195
  %v1420 = vunpack.c.l.b16 %v196
  %v1421 = vunpack.c.h.b16 %v196
  %v1422 = vunpack.c.l.b16 %v197
  %v1423 = vunpack.c.h.b16 %v197
  %v1424 = vunpack.c.l.b16 %v198
  %v1425 = vunpack.c.h.b16 %v198
  %v1426 = vunpack.c.l.b16 %v199
  %v1427 = vunpack.c.h.b16 %v199
  %v1428 = vunpack.c.l.b16 %v200
  %v1429 = vunpack.c.h.b16 %v200
  %v1430 = vunpack.c.l.b16 %v201
  %v1431 = vunpack.c.h.b16 %v201
  %v1432 = vunpack.c.l.b16 %v202
  %v1433 = vunpack.c.h.b16 %v202
  %v1434 = vunpack.c.l.b16 %v203
  %v1435 = vunpack.c.h.b16 %v203
  %v1436 = vunpack.c.l.b16 %v204
  %v1437 = vunpack.c.h.b16 %v204
  %v1438 = vunpack.c.l.b16 %v205
  %v1439 = vunpack.c.h.b16 %v205
  %v1440 = vunpack.c.l.b16 %v206
  %v1441 = vunpack.c.h.b16 %v206
  %v1442 = vunpack.c.l.b16 %v207
  %v1443 = vunpack.c.h.b16 %v207
  %v1444 = vunpack.c.l.b16 %v208
  %v1445 = vunpack.c.h.b16 %v208
  %v1446 = vunpack.c.l.b16 %v209
  %v1447 = vunpack.c.h.b16 %v209
  %v1448 = vunpack.c.l.b16 %v210
  %v1449 = vunpack.c.h.b16 %v210
  %v1450 = vunpack.c.l.b16 %v211
  %v1451 = vunpack.c.h.b16 %v211
  %v1452 = vunpack.c.l.b16 %v212
  %v1453 = vunpack.c.h.b16 %v212
  %v1454 = vunpack.c.l.b16 %v213
  %v1455 = vunpack.c.h.b16 %v213
  %v1456 = vunpack.c.l.b16 %v214
  %v1457 = vunpack.c.h.b16 %v214
  %v1458 = vunpack.c.l.b16 %v215
  %v1459 = vunpack.c.h.b16 %v215
  %v1460 = vunpack.c.l.b16 %v216
  %v1461 = vunpack.c.h.b16 %v216
  %v1462 = vunpack.c.l.b16 %v217
  %v1463 = vunpack.c.h.b16 %v217
  %v1464 = vunpack.c.l.b16 %v218
  %v1465 = vunpack.c.h.b16 %v218
  %v1466 = vunpack.c.l.b16 %v219
  %v1467 = vunpack.c.h.b16 %v219
  %v1468 = vunpack.c.l.b16 %v220
  %v1469 = vunpack.c.h.b16 %v220
  %v1470 = vunpack.c.l.b16 %v221
  %v1471 = vunpack.c.h.b16 %v221
  %v1472 = vunpack.c.l.b16 %v222
  %v1473 = vunpack.c.h.b16 %v222
  %v1474 = vunpack.c.l.b16 %v223
  %v1475 = vunpack.c.h.b16 %v223
  %v1476 = vunpack.c.l.b16 %v224
  %v1477 = vunpack.c.h.b16 %v224
  %v1478 = vunpack.c.l.b16 %v225
  %v1479 = vunpack.c.h.b16 %v225
  %v1480 = vunpack.c.l.b16 %v226
  %v1481 = vunpack.c.h.b16 %v226
  %v1482 = vunpack.c.l.b16 %v227
  %v1483 = vunpack.c.h.b16 %v227
  %v1484 = vunpack.c.l.b16 %v228
  %v1485 = vunpack.c.h.b16 %v228
  %v1486 = vunpack.c.l.b16 %v229
  %v1487 = vunpack.c.h.b16 %v229
  %v1488 = vunpack.c.l.b16 %v230
  %v1489 = vunpack.c.h.b16 %v230
  %v1490 = vunpack.c.l.b16 %v231
  %v1491 = vunpack.c.h.b16 %v231
  %v1492 = vunpack.c.l.b16 %v232
  %v1493 = vunpack.c.h.b16 %v232
  %v1494 = vunpack.c.l.b16 %v233
  %v1495 = vunpack.c.h.b16 %v233
  %v1496 = vunpack.c.l.b16 %v234
  %v1497 = vunpack.c.h.b16 %v234
  %v1498 = vunpack.c.l.b16 %v235
  %v1499 = vunpack.c.h.b16 %v235
  %v1500 = vunpack.c.l.b16 %v236
  %v1501 = vunpack.c.h.b16 %v236
  %v1502 = vunpack.c.l.b16 %v237
  %v1503 = vunpack.c.h.b16 %v237
  %v1504 = vunpack.c.l.b16 %v238
  %v1505 = vunpack.c.h.b16 %v238
  %v1506 = vunpack.c.l.b16 %v239
  %v1507 = vunpack.c.h.b16 %v239
  %v1508 = vunpack.c.l.b16 %v240
  %v1509 = vunpack.c.h.b16 %v240
  %v1510 = vunpack.c.l.b16 %v241
  %v1511 = vunpack.c.h.b16 %v241
  %v1512 = vunpack.c.l.b16 %v242
  %v1513 = vunpack.c.h.b16 %v242
  %v1514 = vunpack.c.l.b16 %v243
  %v1515 = vunpack.c.h.b16 %v243
  %v1516 = vunpack.c.l.b16 %v244
  %v1517 = vunpack.c.h.b16 %v244
  %v1518 = vunpack.c.l.b16 %v245
  %v1519 = vunpack.c.h.b16 %v245
  %v1520 = vunpack.c.l.b16 %v246
  %v1521 = vunpack.c.h.b16 %v246
  %v1522 = vunpack.c.l.b16 %v247
  %v1523 = vunpack.c.h.b16 %v247
  %v1524 = vunpack.c.l.b16 %v248
  %v1525 = vunpack.c.h.b16 %v248
  %v1526 = vunpack.c.l.b16 %v249
  %v1527 = vunpack.c.h.b16 %v249
  %v1528 = vunpack.c.l.b16 %v250
  %v1529 = vunpack.c.h.b16 %v250
  %v1530 = vunpack.c.l.b16 %v251
  %v1531 = vunpack.c.h.b16 %v251
  %v1532 = vunpack.c.l.b16 %v252
  %v1533 = vunpack.c.h.b16 %v252
  %v1534 = vunpack.c.l.b16 %v253
  %v1535 = vunpack.c.h.b16 %v253
  %v1536 = vunpack.c.l.b16 %v254
  %v1537 = vunpack.c.h.b16 %v254
  %v1538 = vunpack.c.l.b16 %v255
  %v1539 = vunpack.c.h.b16 %v255
  %v1540 = vunpack.c.l.b16 %v256
  %v1541 = vunpack.c.h.b16 %v256
  %v1542 = vunpack.c.l.b16 %v257
  %v1543 = vunpack.c.h.b16 %v257
  %v1544 = vunpack.c.l.b16 %v258
  %v1545 = vunpack.c.h.b16 %v258
  %v1546 = vunpack.c.l.b16 %v259
  %v1547 = vunpack.c.h.b16 %v259
  %v1548 = vunpack.c.l.b16 %v260
  %v1549 = vunpack.c.h.b16 %v260
  %v1550 = vunpack.c.l.b16 %v261
  %v1551 = vunpack.c.h.b16 %v261
  %v1552 = vunpack.c.l.b16 %v262
  %v1553 = vunpack.c.h.b16 %v262
  %v1554 = vunpack.c.l.b16 %v263
  %v1555 = vunpack.c.h.b16 %v263
  %v1556 = vunpack.c.l.b16 %v264
  %v1557 = vunpack.c.h.b16 %v264
  %v1558 = vunpack.c.l.b16 %v265
  %v1559 = vunpack.c.h.b16 %v265
  %v1560 = vunpack.c.l.b16 %v266
  %v1561 = vunpack.c.h.b16 %v266
  %v1562 = vunpack.c.l.b16 %v267
  %v1563 = vunpack.c.h.b16 %v267
  %v1564 = vunpack.c.l.b16 %v268
  %v1565 = vunpack.c.h.b16 %v268
  %v1566 = vunpack.c.l.b16 %v269
  %v1567 = vunpack.c.h.b16 %v269
  %v1568 = vunpack.c.l.b16 %v270
  %v1569 = vunpack.c.h.b16 %v270
  %v1570 = vunpack.c.l.b16 %v271
  %v1571 = vunpack.c.h.b16 %v271
  %v1572 = vunpack.c.l.b16 %v272
  %v1573 = vunpack.c.h.b16 %v272
  %v1574 = vunpack.c.l.b16 %v273
  %v1575 = vunpack.c.h.b16 %v273
  %v1576 = vunpack.c.l.b16 %v274
  %v1577 = vunpack.c.h.b16 %v274
  %v1578 = vunpack.c.l.b16 %v275
  %v1579 = vunpack.c.h.b16 %v275
  %v1580 = vunpack.c.l.b16 %v276
  %v1581 = vunpack.c.h.b16 %v276
  %v1582 = vunpack.c.l.b16 %v277
  %v1583 = vunpack.c.h.b16 %v277
  %v1584 = vunpack.c.l.b16 %v278
  %v1585 = vunpack.c.h.b16 %v278
  %v1586 = vunpack.c.l.b16 %v279
  %v1587 = vunpack.c.h.b16 %v279
  %v1588 = vunpack.c.l.b16 %v280
  %v1589 = vunpack.c.h.b16 %v280
  %v1590 = vunpack.c.l.b16 %v281
  %v1591 = vunpack.c.h.b16 %v281
  %v1592 = vunpack.c.l.b16 %v282
  %v1593 = vunpack.c.h.b16 %v282
  %v1594 = vunpack.c.l.b16 %v283
  %v1595 = vunpack.c.h.b16 %v283
  %v1596 = vunpack.c.l.b16 %v284
  %v1597 = vunpack.c.h.b16 %v284
  %v1598 = vunpack.c.l.b16 %v285
  %v1599 = vunpack.c.h.b16 %v285
  %v1600 = vunpack.c.l.b16 %v286
  %v1601 = vunpack.c.h.b16 %v286
  %v1602 = vunpack.c.l.b16 %v287
  %v1603 = vunpack.c.h.b16 %v287
  %v1604 = vunpack.c.l.b16 %v288
  %v1605 = vunpack.c.h.b16 %v288
  %v1606 = vunpack.c.l.b16 %v289
  %v1607 = vunpack.c.h.b16 %v289
  %v1608 = vunpack.c.l.b16 %v290
  %v1609 = vunpack.c.h.b16 %v290
  %v1610 = vunpack.c.l.b16 %v291
  %v1611 = vunpack.c.h.b16 %v291
  %v1612 = vunpack.c.l.b16 %v292
  %v1613 = vunpack.c.h.b16 %v292
  %v1614 = vunpack.c.l.b16 %v293
  %v1615 = vunpack.c.h.b16 %v293
  %v1616 = vunpack.c.l.b16 %v294
  %v1617 = vunpack.c.h.b16 %v294
  %v1618 = vunpack.c.l.b16 %v295
  %v1619 = vunpack.c.h.b16 %v295
  %v1620 = vunpack.c.l.b16 %v296
  %v1621 = vunpack.c.h.b16 %v296
  %v1622 = vunpack.c.l.b16 %v297
  %v1623 = vunpack.c.h.b16 %v297
  %v1624 = vunpack.c.l.b16 %v298
  %v1625 = vunpack.c.h.b16 %v298
  %v1626 = vunpack.c.l.b16 %v299
  %v1627 = vunpack.c.h.b16 %v299
  %v1628 = vunpack.c.l.b16 %v300
  %v1629 = vunpack.c.h.b16 %v300
  %v1630 = vunpack.c.l.b16 %v301
  %v1631 = vunpack.c.h.b16 %v301
  %v1632 = vunpack.c.l.b16 %v302
  %v1633 = vunpack.c.h.b16 %v302
  %v1634 = vunpack.c.l.b16 %v303
  %v1635 = vunpack.c.h.b16 %v303
  %v1636 = vunpack.c.l.b16 %v304
  %v1637 = vunpack.c.h.b16 %v304
  %v1638 = vunpack.c.l.b16 %v305
  %v1639 = vunpack.c.h.b16 %v305
  %v1640 = vunpack.c.l.b16 %v306
  %v1641 = vunpack.c.h.b16 %v306
  %v1642 = vunpack.c.l.b16 %v307
  %v1643 = vunpack.c.h.b16 %v307
  %v1644 = vunpack.c.l.b16 %v308
  %v1645 = vunpack.c.h.b16 %v308
  %v1646 = vunpack.c.l.b16 %v309
  %v1647 = vunpack.c.h.b16 %v309
  %v1648 = vunpack.c.l.b16 %v310
  %v1649 = vunpack.c.h.b16 %v310
  %v1650 = vunpack.c.l.b16 %v311
  %v1651 = vunpack.c.h.b16 %v311
  %v1652 = vunpack.c.l.b16 %v312
  %v1653 = vunpack.c.h.b16 %v312
  %v1654 = vunpack.c.l.b16 %v313
  %v1655 = vunpack.c.h.b16 %v313
  %v1656 = vunpack.c.l.b16 %v314
  %v1657 = vunpack.c.h.b16 %v314
  %v1658 = vunpack.c.l.b16 %v315
  %v1659 = vunpack.c.h.b16 %v315
  %v1660 = vunpack.c.l.b16 %v316
  %v1661 = vunpack.c.h.b16 %v316
  %v1662 = vunpack.c.l.b16 %v317
  %v1663 = vunpack.c.h.b16 %v317
  %v1664 = vunpack.c.l.b16 %v318
  %v1665 = vunpack.c.h.b16 %v318
  %v1666 = vunpack.c.l.b16 %v319
  %v1667 = vunpack.c.h.b16 %v319
  %v1668 = vunpack.c.l.b16 %v320
  %v1669 = vunpack.c.h.b16 %v320
  %v1670 = vunpack.c.l.b16 %v321
  %v1671 = vunpack.c.h.b16 %v321
  %v1672 = vunpack.c.l.b16 %v322
  %v1673 = vunpack.c.h.b16 %v322
  %v1674 = vunpack.c.l.b16 %v323
  %v1675 = vunpack.c.h.b16 %v323
  %v1676 = vunpack.c.l.b16 %v324
  %v1677 = vunpack.c.h.b16 %v324
  %v1678 = vunpack.c.l.b16 %v325
  %v1679 = vunpack.c.h.b16 %v325
  %v1680 = vunpack.c.l.b16 %v326
  %v1681 = vunpack.c.h.b16 %v326
  %v1682 = vunpack.c.l.b16 %v327
  %v1683 = vunpack.c.h.b16 %v327
  %v1684 = vunpack.c.l.b16 %v328
  %v1685 = vunpack.c.h.b16 %v328
  %v1686 = vunpack.c.l.b16 %v329
  %v1687 = vunpack.c.h.b16 %v329
  %v1688 = vunpack.c.l.b16 %v330
  %v1689 = vunpack.c.h.b16 %v330
  %v1690 = vunpack.c.l.b16 %v331
  %v1691 = vunpack.c.h.b16 %v331
  %v1692 = vunpack.c.l.b16 %v332
  %v1693 = vunpack.c.h.b16 %v332
  %v1694 = vunpack.c.l.b16 %v333
  %v1695 = vunpack.c.h.b16 %v333
  %v1696 = vunpack.c.l.b16 %v334
  %v1697 = vunpack.c.h.b16 %v334
  %v1698 = vunpack.c.l.b16 %v335
  %v1699 = vunpack.c.h.b16 %v335
  %v1700 = vunpack.c.l.b16 %v336
  %v1701 = vunpack.c.h.b16 %v336
  %v1702 = vunpack.c.l.b16 %v337
  %v1703 = vunpack.c.h.b16 %v337
  %v1704 = vunpack.c.l.b16 %v338
  %v1705 = vunpack.c.h.b16 %v338
  %v1706 = vunpack.c.l.b16 %v339
  %v1707 = vunpack.c.h.b16 %v339
  %v1708 = vunpack.c.l.b16 %v340
  %v1709 = vunpack.c.h.b16 %v340
  %v1710 = vunpack.c.l.b16 %v341
  %v1711 = vunpack.c.h.b16 %v341
  %v1712 = vunpack.c.l.b16 %v342
  %v1713 = vunpack.c.h.b16 %v342
  %v1714 = vunpack.c.l.b16 %v343
  %v1715 = vunpack.c.h.b16 %v343
  %v1716 = vunpack.c.l.b16 %v344
  %v1717 = vunpack.c.h.b16 %v344
  %v1718 = vunpack.c.l.b16 %v345
  %v1719 = vunpack.c.h.b16 %v345
  %v1720 = vunpack.c.l.b16 %v346
  %v1721 = vunpack.c.h.b16 %v346
  %v1722 = vunpack.c.l.b16 %v347
  %v1723 = vunpack.c.h.b16 %v347
  %v1724 = vunpack.c.l.b16 %v348
  %v1725 = vunpack.c.h.b16 %v348
  %v1726 = vunpack.c.l.b16 %v349
  %v1727 = vunpack.c.h.b16 %v349
  %v1728 = vunpack.c.l.b16 %v350
  %v1729 = vunpack.c.h.b16 %v350
  %v1730 = vunpack.c.l.b16 %v351
  %v1731 = vunpack.c.h.b16 %v351
  %v1732 = vunpack.c.l.b16 %v352
  %v1733 = vunpack.c.h.b16 %v352
  %v1734 = vunpack.c.l.b16 %v353
  %v1735 = vunpack.c.h.b16 %v353
  %v1736 = vunpack.c.l.b16 %v354
  %v1737 = vunpack.c.h.b16 %v354
  %v1738 = vunpack.c.l.b16 %v355
  %v1739 = vunpack.c.h.b16 %v355
  %v1740 = vunpack.c.l.b16 %v356
  %v1741 = vunpack.c.h.b16 %v356
  %v1742 = vunpack.c.l.b16 %v357
  %v1743 = vunpack.c.h.b16 %v357
  %v1744 = vunpack.c.l.b16 %v358
  %v1745 = vunpack.c.h.b16 %v358
  %v1746 = vunpack.c.l.b16 %v359
  %v1747 = vunpack.c.h.b16 %v359
  %v1748 = vunpack.c.l.b16 %v360
  %v1749 = vunpack.c.h.b16 %v360
  %v1750 = vunpack.c.l.b16 %v361
  %v1751 = vunpack.c.h.b16 %v361
  %v1752 = vunpack.c.l.b16 %v362
  %v1753 = vunpack.c.h.b16 %v362
  %v1754 = vunpack.c.l.b16 %v363
  %v1755 = vunpack.c.h.b16 %v363
  %v1756 = vunpack.c.l.b16 %v364
  %v1757 = vunpack.c.h.b16 %v364
  %v1758 = vunpack.c.l.b16 %v365
  %v1759 = vunpack.c.h.b16 %v365
  %v1760 = vunpack.c.l.b16 %v366
  %v1761 = vunpack.c.h.b16 %v366
  %v1762 = vunpack.c.l.b16 %v367
  %v1763 = vunpack.c.h.b16 %v367
  %v1764 = vunpack.c.l.b16 %v368
  %v1765 = vunpack.c.h.b16 %v368
  %v1766 = vunpack.c.l.b16 %v369
  %v1767 = vunpack.c.h.b16 %v369
  %v1768 = vunpack.c.l.b16 %v370
  %v1769 = vunpack.c.h.b16 %v370
  %v1770 = vunpack.c.l.b16 %v371
  %v1771 = vunpack.c.h.b16 %v371
  %v1772 = vunpack.c.l.b16 %v372
  %v1773 = vunpack.c.h.b16 %v372
  %v1774 = vunpack.c.l.b16 %v373
  %v1775 = vunpack.c.h.b16 %v373
  %v1776 = vunpack.c.l.b16 %v374
  %v1777 = vunpack.c.h.b16 %v374
  %v1778 = vunpack.c.l.b16 %v375
  %v1779 = vunpack.c.h.b16 %v375
  %v1780 = vunpack.c.l.b16 %v376
  %v1781 = vunpack.c.h.b16 %v376
  %v1782 = vunpack.c.l.b16 %v377
  %v1783 = vunpack.c.h.b16 %v377
  %v1784 = vunpack.c.l.b16 %v378
  %v1785 = vunpack.c.h.b16 %v378
  %v1786 = vunpack.c.l.b16 %v379
  %v1787 = vunpack.c.h.b16 %v379
  %v1788 = vunpack.c.l.b16 %v380
  %v1789 = vunpack.c.h.b16 %v380
  %v1790 = vunpack.c.l.b16 %v381
  %v1791 = vunpack.c.h.b16 %v381
  %v1792 = vunpack.c.l.b16 %v382
  %v1793 = vunpack.c.h.b16 %v382
  %v1794 = vunpack.c.l.b16 %v383
  %v1795 = vunpack.c.h.b16 %v383
  %v1796 = vunpack.c.l.b16 %v384
  %v1797 = vunpack.c.h.b16 %v384
  %v1798 = vunpack.c.l.b16 %v385
  %v1799 = vunpack.c.h.b16 %v385
  %v1800 = vunpack.c.l.b16 %v386
  %v1801 = vunpack.c.h.b16 %v386
  %v1802 = vunpack.c.l.b16 %v387
  %v1803 = vunpack.c.h.b16 %v387
  %v1804 = vunpack.c.l.b16 %v388
  %v1805 = vunpack.c.h.b16 %v388
  %v1806 = vunpack.c.l.b16 %v389
  %v1807 = vunpack.c.h.b16 %v389
  %v1808 = vunpack.c.l.b16 %v390
  %v1809 = vunpack.c.h.b16 %v390
  %v1810 = vunpack.c.l.b16 %v391
  %v1811 = vunpack.c.h.b16 %v391
  %v1812 = vunpack.c.l.b16 %v392
  %v1813 = vunpack.c.h.b16 %v392
  %v1814 = vunpack.c.l.b16 %v393
  %v1815 = vunpack.c.h.b16 %v393
  %v1816 = vunpack.c.l.b16 %v394
  %v1817 = vunpack.c.h.b16 %v394
  %v1818 = vunpack.c.l.b16 %v395
  %v1819 = vunpack.c.h.b16 %v395
  %v1820 = vunpack.c.l.b16 %v396
  %v1821 = vunpack.c.h.b16 %v396
  %v1822 = vunpack.c.l.b16 %v397
  %v1823 = vunpack.c.h.b16 %v397
  %v1824 = vunpack.c.l.b16 %v398
  %v1825 = vunpack.c.h.b16 %v398
  %v1826 = vunpack.c.l.b16 %v399
  %v1827 = vunpack.c.h.b16 %v399
  %v1828 = vunpack.c.l.b16 %v400
  %v1829 = vunpack.c.h.b16 %v400
  %v1830 = vunpack.c.l.b16 %v401
  %v1831 = vunpack.c.h.b16 %v401
  %v1832 = vunpack.c.l.b16 %v402
  %v1833 = vunpack.c.h.b16 %v402
  %v1834 = vunpack.c.l.b16 %v403
  %v1835 = vunpack.c.h.b16 %v403
  %v1836 = vunpack.c.l.b16 %v404
  %v1837 = vunpack.c.h.b16 %v404
  %v1838 = vunpack.c.l.b16 %v405
  %v1839 = vunpack.c.h.b16 %v405
  %v1840 = vunpack.c.l.b16 %v406
  %v1841 = vunpack.c.h.b16 %v406
  %v1842 = vunpack.c.l.b16 %v407
  %v1843 = vunpack.c.h.b16 %v407
  %v1844 = vunpack.c.l.b16 %v408
  %v1845 = vunpack.c.h.b16 %v408
  %v1846 = vunpack.c.l.b16 %v409
  %v1847 = vunpack.c.h.b16 %v409
  %v1848 = vunpack.c.l.b16 %v410
  %v1849 = vunpack.c.h.b16 %v410
  %v1850 = vunpack.c.l.b16 %v411
  %v1851 = vunpack.c.h.b16 %v411
  %v1852 = vunpack.c.l.b16 %v412
  %v1853 = vunpack.c.h.b16 %v412
  %v1854 = vunpack.c.l.b16 %v413
  %v1855 = vunpack.c.h.b16 %v413
  %v1856 = vunpack.c.l.b16 %v414
  %v1857 = vunpack.c.h.b16 %v414
  %v1858 = vunpack.c.l.b16 %v415
  %v1859 = vunpack.c.h.b16 %v415
  %v1860 = vunpack.c.l.b16 %v416
  %v1861 = vunpack.c.h.b16 %v416
  %v1862 = vunpack.c.l.b16 %v417
  %v1863 = vunpack.c.h.b16 %v417
  %v1864 = vunpack.c.l.b16 %v418
  %v1865 = vunpack.c.h.b16 %v418
  %v1866 = vunpack.c.l.b16 %v419
  %v1867 = vunpack.c.h.b16 %v419
  %v1868 = vunpack.c.l.b16 %v420
  %v1869 = vunpack.c.h.b16 %v420
  %v1870 = vunpack.c.l.b16 %v421
  %v1871 = vunpack.c.h.b16 %v421
  %v1872 = vunpack.c.l.b16 %v422
  %v1873 = vunpack.c.h.b16 %v422
  %v1874 = vunpack.c.l.b16 %v423
  %v1875 = vunpack.c.h.b16 %v423
  %v1876 = vunpack.c.l.b16 %v424
  %v1877 = vunpack.c.h.b16 %v424
  %v1878 = vunpack.c.l.b16 %v425
  %v1879 = vunpack.c.h.b16 %v425
  %v1880 = vunpack.c.l.b16 %v426
  %v1881 = vunpack.c.h.b16 %v426
  %v1882 = vunpack.c.l.b16 %v427
  %v1883 = vunpack.c.h.b16 %v427
  %v1884 = vunpack.c.l.b16 %v428
  %v1885 = vunpack.c.h.b16 %v428
  %v1886 = vunpack.c.l.b16 %v429
  %v1887 = vunpack.c.h.b16 %v429
  %v1888 = vunpack.c.l.b16 %v430
  %v1889 = vunpack.c.h.b16 %v430
  %v1890 = vunpack.c.l.b16 %v431
  %v1891 = vunpack.c.h.b16 %v431
  %v1892 = vunpack.c.l.b16 %v432
  %v1893 = vunpack.c.h.b16 %v432
  %v1894 = vunpack.c.l.b16 %v433
  %v1895 = vunpack.c.h.b16 %v433
  %v1896 = vunpack.c.l.b16 %v434
  %v1897 = vunpack.c.h.b16 %v434
  %v1898 = vunpack.c.l.b16 %v435
  %v1899 = vunpack.c.h.b16 %v435
  %v1900 = vunpack.c.l.b16 %v436
  %v1901 = vunpack.c.h.b16 %v436
  %v1902 = vunpack.c.l.b16 %v437
  %v1903 = vunpack.c.h.b16 %v437
  %v1904 = vunpack.c.l.b16 %v438
  %v1905 = vunpack.c.h.b16 %v438
  %v1906 = vunpack.c.l.b16 %v439
  %v1907 = vunpack.c.h.b16 %v439
  %v1908 = vunpack.c.l.b16 %v440
  %v1909 = vunpack.c.h.b16 %v440
  %v1910 = vunpack.c.l.b16 %v441
  %v1911 = vunpack.c.h.b16 %v441
  %v1912 = vunpack.c.l.b16 %v442
  %v1913 = vunpack.c.h.b16 %v442
  %v1914 = vunpack.c.l.b16 %v443
  %v1915 = vunpack.c.h.b16 %v443
  %v1916 = vunpack.c.l.b16 %v444
  %v1917 = vunpack.c.h.b16 %v444
  %v1918 = vunpack.c.l.b16 %v445
  %v1919 = vunpack.c.h.b16 %v445
  %v1920 = vunpack.c.l.b16 %v446
  %v1921 = vunpack.c.h.b16 %v446
  %v1922 = vunpack.c.l.b16 %v447
  %v1923 = vunpack.c.h.b16 %v447
  %v1924 = vunpack.c.l.b16 %v448
  %v1925 = vunpack.c.h.b16 %v448
  %v1926 = vunpack.c.l.b16 %v449
  %v1927 = vunpack.c.h.b16 %v449
  %v1928 = vunpack.c.l.b16 %v450
  %v1929 = vunpack.c.h.b16 %v450
  %v1930 = vunpack.c.l.b16 %v451
  %v1931 = vunpack.c.h.b16 %v451
  %v1932 = vunpack.c.l.b16 %v452
  %v1933 = vunpack.c.h.b16 %v452
  %v1934 = vunpack.c.l.b16 %v453
  %v1935 = vunpack.c.h.b16 %v453
  %v1936 = vunpack.c.l.b16 %v454
  %v1937 = vunpack.c.h.b16 %v454
  %v1938 = vunpack.c.l.b16 %v455
  %v1939 = vunpack.c.h.b16 %v455
  %v1940 = vunpack.c.l.b16 %v456
  %v1941 = vunpack.c.h.b16 %v456
  %v1942 = vunpack.c.l.b16 %v457
  %v1943 = vunpack.c.h.b16 %v457
  %v1944 = vunpack.c.l.b16 %v458
  %v1945 = vunpack.c.h.b16 %v458
  %v1946 = vunpack.c.l.b16 %v459
  %v1947 = vunpack.c.h.b16 %v459
  %v1948 = vunpack.c.l.b16 %v460
  %v1949 = vunpack.c.h.b16 %v460
  %v1950 = vunpack.c.l.b16 %v461
  %v1951 = vunpack.c.h.b16 %v461
  %v1952 = vunpack.c.l.b16 %v462
  %v1953 = vunpack.c.h.b16 %v462
  %v1954 = vunpack.c.l.b16 %v463
  %v1955 = vunpack.c.h.b16 %v463
  %v1956 = vunpack.c.l.b16 %v464
  %v1957 = vunpack.c.h.b16 %v464
  %v1958 = vunpack.c.l.b16 %v465
  %v1959 = vunpack.c.h.b16 %v465
  %v1960 = vunpack.c.l.b16 %v466
  %v1961 = vunpack.c.h.b16 %v466
  %v1962 = vunpack.c.l.b16 %v467
  %v1963 = vunpack.c.h.b16 %v467
  %v1964 = vunpack.c.l.b16 %v468
  %v1965 = vunpack.c.h.b16 %v468
  %v1966 = vunpack.c.l.b16 %v469
  %v1967 = vunpack.c.h.b16 %v469
  %v1968 = vunpack.c.l.b16 %v470
  %v1969 = vunpack.c.h.b16 %v470
  %v1970 = vunpack.c.l.b16 %v471
  %v1971 = vunpack.c.h.b16 %v471
  %v1972 = vunpack.c.l.b16 %v472
  %v1973 = vunpack.c.h.b16 %v472
  %v1974 = vunpack.c.l.b16 %v473
  %v1975 = vunpack.c.h.b16 %v473
  %v1976 = vunpack.c.l.b16 %v474
  %v1977 = vunpack.c.h.b16 %v474
  %v1978 = vunpack.c.l.b16 %v475
  %v1979 = vunpack.c.h.b16 %v475
  %v1980 = vunpack.c.l.b16 %v476
  %v1981 = vunpack.c.h.b16 %v476
  %v1982 = vunpack.c.l.b16 %v477
  %v1983 = vunpack.c.h.b16 %v477
  %v1984 = vunpack.c.l.b16 %v478
  %v1985 = vunpack.c.h.b16 %v478
  %v1986 = vunpack.c.l.b16 %v479
  %v1987 = vunpack.c.h.b16 %v479
  %v1988 = vunpack.c.l.b16 %v480
  %v1989 = vunpack.c.h.b16 %v480
  %v1990 = vunpack.c.l.b16 %v481
  %v1991 = vunpack.c.h.b16 %v481
  %v1992 = vunpack.c.l.b16 %v482
  %v1993 = vunpack.c.h.b16 %v482
  %v1994 = vunpack.c.l.b16 %v483
  %v1995 = vunpack.c.h.b16 %v483
  %v1996 = vunpack.c.l.b16 %v484
  %v1997 = vunpack.c.h.b16 %v484
  %v1998 = vunpack.c.l.b16 %v485
  %v1999 = vunpack.c.h.b16 %v485
  %v2000 = vunpack.c.l.b16 %v486
  %v2001 = vunpack.c.h.b16 %v486
  %v2002 = vunpack.c.l.b16 %v487
  %v2003 = vunpack.c.h.b16 %v487
  %v2004 = vunpack.c.l.b16 %v488
  %v2005 = vunpack.c.h.b16 %v488
  %v2006 = vunpack.c.l.b16 %v489
  %v2007 = vunpack.c.h.b16 %v489
  %v2008 = vunpack.c.l.b16 %v490
  %v2009 = vunpack.c.h.b16 %v490
  %v2010 = vunpack.c.l.b16 %v491
  %v2011 = vunpack.c.h.b16 %v491
  %v2012 = vunpack.c.l.b16 %v492
  %v2013 = vunpack.c.h.b16 %v492
  %v2014 = vunpack.c.l.b16 %v493
  %v2015 = vunpack.c.h.b16 %v493
  %v2016 = vunpack.c.l.b16 %v494
  %v2017 = vunpack.c.h.b16 %v494
  %v2018 = vunpack.c.l.b16 %v495
  %v2019 = vunpack.c.h.b16 %v495
  %v2020 = vunpack.c.l.b16 %v496
  %v2021 = vunpack.c.h.b16 %v496
  %v2022 = vunpack.c.l.b16 %v497
  %v2023 = vunpack.c.h.b16 %v497
  %v2024 = vunpack.c.l.b16 %v498
  %v2025 = vunpack.c.h.b16 %v498
  %v2026 = vunpack.c.l.b16 %v499
  %v2027 = vunpack.c.h.b16 %v499
  %v2028 = vunpack.c.l.b16 %v500
  %v2029 = vunpack.c.h.b16 %v500
  %v2030 = vunpack.c.l.b16 %v501
  %v2031 = vunpack.c.h.b16 %v501
  %v2032 = vunpack.c.l.b16 %v502
  %v2033 = vunpack.c.h.b16 %v502
  %v2034 = vunpack.c.l.b16 %v503
  %v2035 = vunpack.c.h.b16 %v503
  %v2036 = vunpack.c.l.b16 %v504
  %v2037 = vunpack.c.h.b16 %v504
  %v2038 = vunpack.c.l.b16 %v505
  %v2039 = vunpack.c.h.b16 %v505
  %v2040 = vunpack.c.l.b16 %v506
  %v2041 = vunpack.c.h.b16 %v506
  %v2042 = vunpack.c.l.b16 %v507
  %v2043 = vunpack.c.h.b16 %v507
  %v2044 = vunpack.c.l.b16 %v508
  %v2045 = vunpack.c.h.b16 %v508
  %v2046 = vunpack.c.l.b16 %v509
  %v2047 = vunpack.c.h.b16 %v509
  %v2048 = vunpack.c.l.b16 %v510
  %v2049 = vunpack.c.h.b16 %v510
  %v2050 = vunpack.c.l.b16 %v511
  %v2051 = vunpack.c.h.b16 %v511
  %v2052 = vunpack.c.l.b16 %v512
  %v2053 = vunpack.c.h.b16 %v512
  %v2054 = vunpack.c.l.b16 %v513
  %v2055 = vunpack.c.h.b16 %v513
  %v2056 = vunpack.c.l.b16 %v514
  %v2057 = vunpack.c.h.b16 %v514
  %v2058 = vunpack.c.l.b16 %v515
  %v2059 = vunpack.c.h.b16 %v515
  %v2060 = vunpack.c.l.b16 %v516
  %v2061 = vunpack.c.h.b16 %v516
  %v2062 = vunpack.c.l.b16 %v517
  %v2063 = vunpack.c.h.b16 %v517
  %v2064 = vunpack.c.l.b16 %v518
  %v2065 = vunpack.c.h.b16 %v518
  %v2066 = vunpack.c.l.b16 %v519
  %v2067 = vunpack.c.h.b16 %v519
  %v2068 = vunpack.c.l.b16 %v520
  %v2069 = vunpack.c.h.b16 %v520
  %v2070 = vunpack.c.l.b16 %v521
  %v2071 = vunpack.c.h.b16 %v521
  %v2072 = vunpack.c.l.b16 %v522
  %v2073 = vunpack.c.h.b16 %v522
  %v2074 = vunpack.c.l.b16 %v523
  %v2075 = vunpack.c.h.b16 %v523
  %v2076 = vunpack.c.l.b16 %v524
  %v2077 = vunpack.c.h.b16 %v524
  %v2078 = vunpack.c.l.b16 %v525
  %v2079 = vunpack.c.h.b16 %v525
  %v2080 = vunpack.c.l.b16 %v526
  %v2081 = vunpack.c.h.b16 %v526
  %v2082 = vunpack.c.l.b16 %v527
  %v2083 = vunpack.c.h.b16 %v527
  %v2084 = vpack.c.b16 %v1076, %v1060
  %v2085 = vpack.c.b16 %v1077, %v1061
  %v2086 = vpack.c.b16 %v1078, %v1062
  %v2087 = vpack.c.b16 %v1079, %v1063
  %v2088 = vpack.c.b16 %v1080, %v1064
  %v2089 = vpack.c.b16 %v1081, %v1065
  %v2090 = vpack.c.b16 %v1082, %v1066
  %v2091 = vpack.c.b16 %v1083, %v1067
  %v2092 = vpack.c.b16 %v1084, %v1068
  %v2093 = vpack.c.b16 %v1085, %v1069
  %v2094 = vpack.c.b16 %v1086, %v1070
  %v2095 = vpack.c.b16 %v1087, %v1071
  %v2096 = vpack.c.b16 %v1088, %v1072
  %v2097 = vpack.c.b16 %v1089, %v1073
  %v2098 = vpack.c.b16 %v1090, %v1074
  %v2099 = vpack.c.b16 %v1091, %v1075
  %v2100 = vpack.c.b16 %v1108, %v1092
  %v2101 = vpack.c.b16 %v1109, %v1093
  %v2102 = vpack.c.b16 %v1110, %v1094
  %v2103 = vpack.c.b16 %v1111, %v1095
  %v2104 = vpack.c.b16 %v1112, %v1096
  %v2105 = vpack.c.b16 %v1113, %v1097
  %v2106 = vpack.c.b16 %v1114, %v1098
  %v2107 = vpack.c.b16 %v1115, %v1099
  %v2108 = vpack.c.b16 %v1116, %v1100
  %v2109 = vpack.c.b16 %v1117, %v1101
  %v2110 = vpack.c.b16 %v1118, %v1102
  %v2111 = vpack.c.b16 %v1119, %v1103
  %v2112 = vpack.c.b16 %v1120, %v1104
  %v2113 = vpack.c.b16 %v1121, %v1105
  %v2114 = vpack.c.b16 %v1122, %v1106
  %v2115 = vpack.c.b16 %v1123, %v1107
  %v2116 = vpack.c.b16 %v1140, %v1124
  %v2117 = vpack.c.b16 %v1141, %v1125
  %v2118 = vpack.c.b16 %v1142, %v1126
  %v2119 = vpack.c.b16 %v1143, %v1127
  %v2120 = vpack.c.b16 %v1144, %v1128
  %v2121 = vpack.c.b16 %v1145, %v1129
  %v2122 = vpack.c.b16 %v1146, %v1130
  %v2123 = vpack.c.b16 %v1147, %v1131
  %v2124 = vpack.c.b16 %v1148, %v1132
  %v2125 = vpack.c.b16 %v1149, %v1133
  %v2126 = vpack.c.b16 %v1150, %v1134
  %v2127 = vpack.c.b16 %v1151, %v1135
  %v2128 = vpack.c.b16 %v1152, %v1136
  %v2129 = vpack.c.b16 %v1153, %v1137
  %v2130 = vpack.c.b16 %v1154, %v1138
  %v2131 = vpack.c.b16 %v1155, %v1139
  %v2132 = vpack.c.b16 %v1172, %v1156
  %v2133 = vpack.c.b16 %v1173, %v1157
  %v2134 = vpack.c.b16 %v1174, %v1158
  %v2135 = vpack.c.b16 %v1175, %v1159
  %v2136 = vpack.c.b16 %v1176, %v1160
  %v2137 = vpack.c.b16 %v1177, %v1161
  %v2138 = vpack.c.b16 %v1178, %v1162
  %v2139 = vpack.c.b16 %v1179, %v1163
  %v2140 = vpack.c.b16 %v1180, %v1164
  %v2141 = vpack.c.b16 %v1181, %v1165
  %v2142 = vpack.c.b16 %v1182, %v1166
  %v2143 = vpack.c.b16 %v1183, %v1167
  %v2144 = vpack.c.b16 %v1184, %v1168
  %v2145 = vpack.c.b16 %v1185, %v1169
  %v2146 = vpack.c.b16 %v1186, %v1170
  %v2147 = vpack.c.b16 %v1187, %v1171
  %v2148 = vpack.c.b16 %v1204, %v1188
  %v2149 = vpack.c.b16 %v1205, %v1189
  %v2150 = vpack.c.b16 %v1206, %v1190
  %v2151 = vpack.c.b16 %v1207, %v1191
  %v2152 = vpack.c.b16 %v1208, %v1192
  %v2153 = vpack.c.b16 %v1209, %v1193
  %v2154 = vpack.c.b16 %v1210, %v1194
  %v2155 = vpack.c.b16 %v1211, %v1195
  %v2156 = vpack.c.b16 %v1212, %v1196
  %v2157 = vpack.c.b16 %v1213, %v1197
  %v2158 = vpack.c.b16 %v1214, %v1198
  %v2159 = vpack.c.b16 %v1215, %v1199
  %v2160 = vpack.c.b16 %v1216, %v1200
  %v2161 = vpack.c.b16 %v1217, %v1201
  %v2162 = vpack.c.b16 %v1218, %v1202
  %v2163 = vpack.c.b16 %v1219, %v1203
  %v2164 = vpack.c.b16 %v1236, %v1220
  %v2165 = vpack.c.b16 %v1237, %v1221
  %v2166 = vpack.c.b16 %v1238, %v1222
  %v2167 = vpack.c.b16 %v1239, %v1223
  %v2168 = vpack.c.b16 %v1240, %v1224
  %v2169 = vpack.c.b16 %v1241, %v1225
  %v2170 = vpack.c.b16 %v1242, %v1226
  %v2171 = vpack.c.b16 %v1243, %v1227
  %v2172 = vpack.c.b16 %v1244, %v1228
  %v2173 = vpack.c.b16 %v1245, %v1229
  %v2174 = vpack.c.b16 %v1246, %v1230
  %v2175 = vpack.c.b16 %v1247, %v1231
  %v2176 = vpack.c.b16 %v1248, %v1232
  %v2177 = vpack.c.b16 %v1249, %v1233
  %v2178 = vpack.c.b16 %v1250, %v1234
  %v2179 = vpack.c.b16 %v1251, %v1235
  %v2180 = vpack.c.b16 %v1268, %v1252
  %v2181 = vpack.c.b16 %v1269, %v1253
  %v2182 = vpack.c.b16 %v1270, %v1254
  %v2183 = vpack.c.b16 %v1271, %v1255
  %v2184 = vpack.c.b16 %v1272, %v1256
  %v2185 = vpack.c.b16 %v1273, %v1257
  %v2186 = vpack.c.b16 %v1274, %v1258
  %v2187 = vpack.c.b16 %v1275, %v1259
  %v2188 = vpack.c.b16 %v1276, %v1260
  %v2189 = vpack.c.b16 %v1277, %v1261
  %v2190 = vpack.c.b16 %v1278, %v1262
  %v2191 = vpack.c.b16 %v1279, %v1263
  %v2192 = vpack.c.b16 %v1280, %v1264
  %v2193 = vpack.c.b16 %v1281, %v1265
  %v2194 = vpack.c.b16 %v1282, %v1266
  %v2195 = vpack.c.b16 %v1283, %v1267
  %v2196 = vpack.c.b16 %v1300, %v1284
  %v2197 = vpack.c.b16 %v1301, %v1285
  %v2198 = vpack.c.b16 %v1302, %v1286
  %v2199 = vpack.c.b16 %v1303, %v1287
  %v2200 = vpack.c.b16 %v1304, %v1288
  %v2201 = vpack.c.b16 %v1305, %v1289
  %v2202 = vpack.c.b16 %v1306, %v1290
  %v2203 = vpack.c.b16 %v1307, %v1291
  %v2204 = vpack.c.b16 %v1308, %v1292
  %v2205 = vpack.c.b16 %v1309, %v1293
  %v2206 = vpack.c.b16 %v1310, %v1294
  %v2207 = vpack.c.b16 %v1311, %v1295
  %v2208 = vpack.c.b16 %v1312, %v1296
  %v2209 = vpack.c.b16 %v1313, %v1297
  %v2210 = vpack.c.b16 %v1314, %v1298
  %v2211 = vpack.c.b16 %v1315, %v1299
  %v2212 = vpack.c.b16 %v1332, %v1316
  %v2213 = vpack.c.b16 %v1333, %v1317
  %v2214 = vpack.c.b16 %v1334, %v1318
  %v2215 = vpack.c.b16 %v1335, %v1319
  %v2216 = vpack.c.b16 %v1336, %v1320
  %v2217 = vpack.c.b16 %v1337, %v1321
  %v2218 = vpack.c.b16 %v1338, %v1322
  %v2219 = vpack.c.b16 %v1339, %v1323
  %v2220 = vpack.c.b16 %v1340, %v1324
  %v2221 = vpack.c.b16 %v1341, %v1325
  %v2222 = vpack.c.b16 %v1342, %v1326
  %v2223 = vpack.c.b16 %v1343, %v1327
  %v2224 = vpack.c.b16 %v1344, %v1328
  %v2225 = vpack.c.b16 %v1345, %v1329
  %v2226 = vpack.c.b16 %v1346, %v1330
  %v2227 = vpack.c.b16 %v1347, %v1331
  %v2228 = vpack.c.b16 %v1364, %v1348
  %v2229 = vpack.c.b16 %v1365, %v1349
  %v2230 = vpack.c.b16 %v1366, %v1350
  %v2231 = vpack.c.b16 %v1367, %v1351
  %v2232 = vpack.c.b16 %v1368, %v1352
  %v2233 = vpack.c.b16 %v1369, %v1353
  %v2234 = vpack.c.b16 %v1370, %v1354
  %v2235 = vpack.c.b16 %v1371, %v1355
  %v2236 = vpack.c.b16 %v1372, %v1356
  %v2237 = vpack.c.b16 %v1373, %v1357
  %v2238 = vpack.c.b16 %v1374, %v1358
  %v2239 = vpack.c.b16 %v1375, %v1359
  %v2240 = vpack.c.b16 %v1376, %v1360
  %v2241 = vpack.c.b16 %v1377, %v1361
  %v2242 = vpack.c.b16 %v1378, %v1362
  %v2243 = vpack.c.b16 %v1379, %v1363
  %v2244 = vpack.c.b16 %v1396, %v1380
  %v2245 = vpack.c.b16 %v1397, %v1381
  %v2246 = vpack.c.b16 %v1398, %v1382
  %v2247 = vpack.c.b16 %v1399, %v1383
  %v2248 = vpack.c.b16 %v1400, %v1384
  %v2249 = vpack.c.b16 %v1401, %v1385
  %v2250 = vpack.c.b16 %v1402, %v1386
  %v2251 = vpack.c.b16 %v1403, %v1387
  %v2252 = vpack.c.b16 %v1404, %v1388
  %v2253 = vpack.c.b16 %v1405, %v1389
  %v2254 = vpack.c.b16 %v1406, %v1390
  %v2255 = vpack.c.b16 %v1407, %v1391
  %v2256 = vpack.c.b16 %v1408, %v1392
  %v2257 = vpack.c.b16 %v1409, %v1393
  %v2258 = vpack.c.b16 %v1410, %v1394
  %v2259 = vpack.c.b16 %v1411, %v1395
  %v2260 = vpack.c.b16 %v1428, %v1412
  %v2261 = vpack.c.b16 %v1429, %v1413
  %v2262 = vpack.c.b16 %v1430, %v1414
  %v2263 = vpack.c.b16 %v1431, %v1415
  %v2264 = vpack.c.b16 %v1432, %v1416
  %v2265 = vpack.c.b16 %v1433, %v1417
  %v2266 = vpack.c.b16 %v1434, %v1418
  %v2267 = vpack.c.b16 %v1435, %v1419
  %v2268 = vpack.c.b16 %v1436, %v1420
  %v2269 = vpack.c.b16 %v1437, %v1421
  %v2270 = vpack.c.b16 %v1438, %v1422
  %v2271 = vpack.c.b16 %v1439, %v1423
  %v2272 = vpack.c.b16 %v1440, %v1424
  %v2273 = vpack.c.b16 %v1441, %v1425
  %v2274 = vpack.c.b16 %v1442, %v1426
  %v2275 = vpack.c.b16 %v1443, %v1427
  %v2276 = vpack.c.b16 %v1460, %v1444
  %v2277 = vpack.c.b16 %v1461, %v1445
  %v2278 = vpack.c.b16 %v1462, %v1446
  %v2279 = vpack.c.b16 %v1463, %v1447
  %v2280 = vpack.c.b16 %v1464, %v1448
  %v2281 = vpack.c.b16 %v1465, %v1449
  %v2282 = vpack.c.b16 %v1466, %v1450
  %v2283 = vpack.c.b16 %v1467, %v1451
  %v2284 = vpack.c.b16 %v1468, %v1452
  %v2285 = vpack.c.b16 %v1469, %v1453
  %v2286 = vpack.c.b16 %v1470, %v1454
  %v2287 = vpack.c.b16 %v1471, %v1455
  %v2288 = vpack.c.b16 %v1472, %v1456
  %v2289 = vpack.c.b16 %v1473, %v1457
  %v2290 = vpack.c.b16 %v1474, %v1458
  %v2291 = vpack.c.b16 %v1475, %v1459
  %v2292 = vpack.c.b16 %v1492, %v1476
  %v2293 = vpack.c.b16 %v1493, %v1477
  %v2294 = vpack.c.b16 %v1494, %v1478
  %v2295 = vpack.c.b16 %v1495, %v1479
  %v2296 = vpack.c.b16 %v1496, %v1480
  %v2297 = vpack.c.b16 %v1497, %v1481
  %v2298 = vpack.c.b16 %v1498, %v1482
  %v2299 = vpack.c.b16 %v1499, %v1483
  %v2300 = vpack.c.b16 %v1500, %v1484
  %v2301 = vpack.c.b16 %v1501, %v1485
  %v2302 = vpack.c.b16 %v1502, %v1486
  %v2303 = vpack.c.b16 %v1503, %v1487
  %v2304 = vpack.c.b16 %v1504, %v1488
  %v2305 = vpack.c.b16 %v1505, %v1489
  %v2306 = vpack.c.b16 %v1506, %v1490
  %v2307 = vpack.c.b16 %v1507, %v1491
  %v2308 = vpack.c.b16 %v1524, %v1508
  %v2309 = vpack.c.b16 %v1525, %v1509
  %v2310 = vpack.c.b16 %v1526, %v1510
  %v2311 = vpack.c.b16 %v1527, %v1511
  %v2312 = vpack.c.b16 %v1528, %v1512
  %v2313 = vpack.c.b16 %v1529, %v1513
  %v2314 = vpack.c.b16 %v1530, %v1514
  %v2315 = vpack.c.b16 %v1531, %v1515
  %v2316 = vpack.c.b16 %v1532, %v1516
  %v2317 = vpack.c.b16 %v1533, %v1517
  %v2318 = vpack.c.b16 %v1534, %v1518
  %v2319 = vpack.c.b16 %v1535, %v1519
  %v2320 = vpack.c.b16 %v1536, %v1520
  %v2321 = vpack.c.b16 %v1537, %v1521
  %v2322 = vpack.c.b16 %v1538, %v1522
  %v2323 = vpack.c.b16 %v1539, %v1523
  %v2324 = vpack.c.b16 %v1556, %v1540
  %v2325 = vpack.c.b16 %v1557, %v1541
  %v2326 = vpack.c.b16 %v1558, %v1542
  %v2327 = vpack.c.b16 %v1559, %v1543
  %v2328 = vpack.c.b16 %v1560, %v1544
  %v2329 = vpack.c.b16 %v1561, %v1545
  %v2330 = vpack.c.b16 %v1562, %v1546
  %v2331 = vpack.c.b16 %v1563, %v1547
  %v2332 = vpack.c.b16 %v1564, %v1548
  %v2333 = vpack.c.b16 %v1565, %v1549
  %v2334 = vpack.c.b16 %v1566, %v1550
  %v2335 = vpack.c.b16 %v1567, %v1551
  %v2336 = vpack.c.b16 %v1568, %v1552
  %v2337 = vpack.c.b16 %v1569, %v1553
  %v2338 = vpack.c.b16 %v1570, %v1554
  %v2339 = vpack.c.b16 %v1571, %v1555
  %v2340 = vpack.c.b16 %v1588, %v1572
  %v2341 = vpack.c.b16 %v1589, %v1573
  %v2342 = vpack.c.b16 %v1590, %v1574
  %v2343 = vpack.c.b16 %v1591, %v1575
  %v2344 = vpack.c.b16 %v1592, %v1576
  %v2345 = vpack.c.b16 %v1593, %v1577
  %v2346 = vpack.c.b16 %v1594, %v1578
  %v2347 = vpack.c.b16 %v1595, %v1579
  %v2348 = vpack.c.b16 %v1596, %v1580
  %v2349 = vpack.c.b16 %v1597, %v1581
  %v2350 = vpack.c.b16 %v1598, %v1582
  %v2351 = vpack.c.b16 %v1599, %v1583
  %v2352 = vpack.c.b16 %v1600, %v1584
  %v2353 = vpack.c.b16 %v1601, %v1585
  %v2354 = vpack.c.b16 %v1602, %v1586
  %v2355 = vpack.c.b16 %v1603, %v1587
  %v2356 = vpack.c.b16 %v1620, %v1604
  %v2357 = vpack.c.b16 %v1621, %v1605
  %v2358 = vpack.c.b16 %v1622, %v1606
  %v2359 = vpack.c.b16 %v1623, %v1607
  %v2360 = vpack.c.b16 %v1624, %v1608
  %v2361 = vpack.c.b16 %v1625, %v1609
  %v2362 = vpack.c.b16 %v1626, %v1610
  %v2363 = vpack.c.b16 %v1627, %v1611
  %v2364 = vpack.c.b16 %v1628, %v1612
  %v2365 = vpack.c.b16 %v1629, %v1613
  %v2366 = vpack.c.b16 %v1630, %v1614
  %v2367 = vpack.c.b16 %v1631, %v1615
  %v2368 = vpack.c.b16 %v1632, %v1616
  %v2369 = vpack.c.b16 %v1633, %v1617
  %v2370 = vpack.c.b16 %v1634, %v1618
  %v2371 = vpack.c.b16 %v1635, %v1619
  %v2372 = vpack.c.b16 %v1652, %v1636
  %v2373 = vpack.c.b16 %v1653, %v1637
  %v2374 = vpack.c.b16 %v1654, %v1638
  %v2375 = vpack.c.b16 %v1655, %v1639
  %v2376 = vpack.c.b16 %v1656, %v1640
  %v2377 = vpack.c.b16 %v1657, %v1641
  %v2378 = vpack.c.b16 %v1658, %v1642
  %v2379 = vpack.c.b16 %v1659, %v1643
  %v2380 = vpack.c.b16 %v1660, %v1644
  %v2381 = vpack.c.b16 %v1661, %v1645
  %v2382 = vpack.c.b16 %v1662, %v1646
  %v2383 = vpack.c.b16 %v1663, %v1647
  %v2384 = vpack.c.b16 %v1664, %v1648
  %v2385 = vpack.c.b16 %v1665, %v1649
  %v2386 = vpack.c.b16 %v1666, %v1650
  %v2387 = vpack.c.b16 %v1667, %v1651
  %v2388 = vpack.c.b16 %v1684, %v1668
  %v2389 = vpack.c.b16 %v1685, %v1669
  %v2390 = vpack.c.b16 %v1686, %v1670
  %v2391 = vpack.c.b16 %v1687, %v1671
  %v2392 = vpack.c.b16 %v1688, %v1672
  %v2393 = vpack.c.b16 %v1689, %v1673
  %v2394 = vpack.c.b16 %v1690, %v1674
  %v2395 = vpack.c.b16 %v1691, %v1675
  %v2396 = vpack.c.b16 %v1692, %v1676
  %v2397 = vpack.c.b16 %v1693, %v1677
  %v2398 = vpack.c.b16 %v1694, %v1678
  %v2399 = vpack.c.b16 %v1695, %v1679
  %v2400 = vpack.c.b16 %v1696, %v1680
  %v2401 = vpack.c.b16 %v1697, %v1681
  %v2402 = vpack.c.b16 %v1698, %v1682
  %v2403 = vpack.c.b16 %v1699, %v1683
  %v2404 = vpack.c.b16 %v1716, %v1700
  %v2405 = vpack.c.b16 %v1717, %v1701
  %v2406 = vpack.c.b16 %v1718, %v1702
  %v2407 = vpack.c.b16 %v1719, %v1703
  %v2408 = vpack.c.b16 %v1720, %v1704
  %v2409 = vpack.c.b16 %v1721, %v1705
  %v2410 = vpack.c.b16 %v1722, %v1706
  %v2411 = vpack.c.b16 %v1723, %v1707
  %v2412 = vpack.c.b16 %v1724, %v1708
  %v2413 = vpack.c.b16 %v1725, %v1709
  %v2414 = vpack.c.b16 %v1726, %v1710
  %v2415 = vpack.c.b16 %v1727, %v1711
  %v2416 = vpack.c.b16 %v1728, %v1712
  %v2417 = vpack.c.b16 %v1729, %v1713
  %v2418 = vpack.c.b16 %v1730, %v1714
  %v2419 = vpack.c.b16 %v1731, %v1715
  %v2420 = vpack.c.b16 %v1748, %v1732
  %v2421 = vpack.c.b16 %v1749, %v1733
  %v2422 = vpack.c.b16 %v1750, %v1734
  %v2423 = vpack.c.b16 %v1751, %v1735
  %v2424 = vpack.c.b16 %v1752, %v1736
  %v2425 = vpack.c.b16 %v1753, %v1737
  %v2426 = vpack.c.b16 %v1754, %v1738
  %v2427 = vpack.c.b16 %v1755, %v1739
  %v2428 = vpack.c.b16 %v1756, %v1740
  %v2429 = vpack.c.b16 %v1757, %v1741
  %v2430 = vpack.c.b16 %v1758, %v1742
  %v2431 = vpack.c.b16 %v1759, %v1743
  %v2432 = vpack.c.b16 %v1760, %v1744
  %v2433 = vpack.c.b16 %v1761, %v1745
  %v2434 = vpack.c.b16 %v1762, %v1746
  %v2435 = vpack.c.b16 %v1763, %v1747
  %v2436 = vpack.c.b16 %v1780, %v1764
  %v2437 = vpack.c.b16 %v1781, %v1765
  %v2438 = vpack.c.b16 %v1782, %v1766
  %v2439 = vpack.c.b16 %v1783, %v1767
  %v2440 = vpack.c.b16 %v1784, %v1768
  %v2441 = vpack.c.b16 %v1785, %v1769
  %v2442 = vpack.c.b16 %v1786, %v1770
  %v2443 = vpack.c.b16 %v1787, %v1771
  %v2444 = vpack.c.b16 %v1788, %v1772
  %v2445 = vpack.c.b16 %v1789, %v1773
  %v2446 = vpack.c.b16 %v1790, %v1774
  %v2447 = vpack.c.b16 %v1791, %v1775
  %v2448 = vpack.c.b16 %v1792, %v1776
  %v2449 = vpack.c.b16 %v1793, %v1777
  %v2450 = vpack.c.b16 %v1794, %v1778
  %v2451 = vpack.c.b16 %v1795, %v1779
  %v2452 = vpack.c.b16 %v1812, %v1796
  %v2453 = vpack.c.b16 %v1813, %v1797
  %v2454 = vpack.c.b16 %v1814, %v1798
  %v2455 = vpack.c.b16 %v1815, %v1799
  %v2456 = vpack.c.b16 %v1816, %v1800
  %v2457 = vpack.c.b16 %v1817, %v1801
  %v2458 = vpack.c.b16 %v1818, %v1802
  %v2459 = vpack.c.b16 %v1819, %v1803
  %v2460 = vpack.c.b16 %v1820, %v1804
  %v2461 = vpack.c.b16 %v1821, %v1805
  %v2462 = vpack.c.b16 %v1822, %v1806
  %v2463 = vpack.c.b16 %v1823, %v1807
  %v2464 = vpack.c.b16 %v1824, %v1808
  %v2465 = vpack.c.b16 %v1825, %v1809
  %v2466 = vpack.c.b16 %v1826, %v1810
  %v2467 = vpack.c.b16 %v1827, %v1811
  %v2468 = vpack.c.b16 %v1844, %v1828
  %v2469 = vpack.c.b16 %v1845, %v1829
  %v2470 = vpack.c.b16 %v1846, %v1830
  %v2471 = vpack.c.b16 %v1847, %v1831
  %v2472 = vpack.c.b16 %v1848, %v1832
  %v2473 = vpack.c.b16 %v1849, %v1833
  %v2474 = vpack.c.b16 %v1850, %v1834
  %v2475 = vpack.c.b16 %v1851, %v1835
  %v2476 = vpack.c.b16 %v1852, %v1836
  %v2477 = vpack.c.b16 %v1853, %v1837
  %v2478 = vpack.c.b16 %v1854, %v1838
  %v2479 = vpack.c.b16 %v1855, %v1839
  %v2480 = vpack.c.b16 %v1856, %v1840
  %v2481 = vpack.c.b16 %v1857, %v1841
  %v2482 = vpack.c.b16 %v1858, %v1842
  %v2483 = vpack.c.b16 %v1859, %v1843
  %v2484 = vpack.c.b16 %v1876, %v1860
  %v2485 = vpack.c.b16 %v1877, %v1861
  %v2486 = vpack.c.b16 %v1878, %v1862
  %v2487 = vpack.c.b16 %v1879, %v1863
  %v2488 = vpack.c.b16 %v1880, %v1864
  %v2489 = vpack.c.b16 %v1881, %v1865
  %v2490 = vpack.c.b16 %v1882, %v1866
  %v2491 = vpack.c.b16 %v1883, %v1867
  %v2492 = vpack.c.b16 %v1884, %v1868
  %v2493 = vpack.c.b16 %v1885, %v1869
  %v2494 = vpack.c.b16 %v1886, %v1870
  %v2495 = vpack.c.b16 %v1887, %v1871
  %v2496 = vpack.c.b16 %v1888, %v1872
  %v2497 = vpack.c.b16 %v1889, %v1873
  %v2498 = vpack.c.b16 %v1890, %v1874
  %v2499 = vpack.c.b16 %v1891, %v1875
  %v2500 = vpack.c.b16 %v1908, %v1892
  %v2501 = vpack.c.b16 %v1909, %v1893
  %v2502 = vpack.c.b16 %v1910, %v1894
  %v2503 = vpack.c.b16 %v1911, %v1895
  %v2504 = vpack.c.b16 %v1912, %v1896
  %v2505 = vpack.c.b16 %v1913, %v1897
  %v2506 = vpack.c.b16 %v1914, %v1898
  %v2507 = vpack.c.b16 %v1915, %v1899
  %v2508 = vpack.c.b16 %v1916, %v1900
  %v2509 = vpack.c.b16 %v1917, %v1901
  %v2510 = vpack.c.b16 %v1918, %v1902
  %v2511 = vpack.c.b16 %v1919, %v1903
  %v2512 = vpack.c.b16 %v1920, %v1904
  %v2513 = vpack.c.b16 %v1921, %v1905
  %v2514 = vpack.c.b16 %v1922, %v1906
  %v2515 = vpack.c.b16 %v1923, %v1907
  %v2516 = vpack.c.b16 %v1940, %v1924
  %v2517 = vpack.c.b16 %v1941, %v1925
  %v2518 = vpack.c.b16 %v1942, %v1926
  %v2519 = vpack.c.b16 %v1943, %v1927
  %v2520 = vpack.c.b16 %v1944, %v1928
  %v2521 = vpack.c.b16 %v1945, %v1929
  %v2522 = vpack.c.b16 %v1946, %v1930
  %v2523 = vpack.c.b16 %v1947, %v1931
  %v2524 = vpack.c.b16 %v1948, %v1932
  %v2525 = vpack.c.b16 %v1949, %v1933
  %v2526 = vpack.c.b16 %v1950, %v1934
  %v2527 = vpack.c.b16 %v1951, %v1935
  %v2528 = vpack.c.b16 %v1952, %v1936
  %v2529 = vpack.c.b16 %v1953, %v1937
  %v2530 = vpack.c.b16 %v1954, %v1938
  %v2531 = vpack.c.b16 %v1955, %v1939
  %v2532 = vpack.c.b16 %v1972, %v1956
  %v2533 = vpack.c.b16 %v1973, %v1957
  %v2534 = vpack.c.b16 %v1974, %v1958
  %v2535 = vpack.c.b16 %v1975, %v1959
  %v2536 = vpack.c.b16 %v1976, %v1960
  %v2537 = vpack.c.b16 %v1977, %v1961
  %v2538 = vpack.c.b16 %v1978, %v1962
  %v2539 = vpack.c.b16 %v1979, %v1963
  %v2540 = vpack.c.b16 %v1980, %v1964
  %v2541 = vpack.c.b16 %v1981, %v1965
  %v2542 = vpack.c.b16 %v1982, %v1966
  %v2543 = vpack.c.b16 %v1983, %v1967
  %v2544 = vpack.c.b16 %v1984, %v1968
  %v2545 = vpack.c.b16 %v1985, %v1969
  %v2546 = vpack.c.b16 %v1986, %v1970
  %v2547 = vpack.c.b16 %v1987, %v1971
  %v2548 = vpack.c.b16 %v2004, %v1988
  %v2549 = vpack.c.b16 %v2005, %v1989
  %v2550 = vpack.c.b16 %v2006, %v1990
  %v2551 = vpack.c.b16 %v2007, %v1991
  %v2552 = vpack.c.b16 %v2008, %v1992
  %v2553 = vpack.c.b16 %v2009, %v1993
  %v2554 = vpack.c.b16 %v2010, %v1994
  %v2555 = vpack.c.b16 %v2011, %v1995
  %v2556 = vpack.c.b16 %v2012, %v1996
  %v2557 = vpack.c.b16 %v2013, %v1997
  %v2558 = vpack.c.b16 %v2014, %v1998
  %v2559 = vpack.c.b16 %v2015, %v1999
  %v2560 = vpack.c.b16 %v2016, %v2000
  %v2561 = vpack.c.b16 %v2017, %v2001
  %v2562 = vpack.c.b16 %v2018, %v2002
  %v2563 = vpack.c.b16 %v2019, %v2003
  %v2564 = vpack.c.b16 %v2036, %v2020
  %v2565 = vpack.c.b16 %v2037, %v2021
  %v2566 = vpack.c.b16 %v2038, %v2022
  %v2567 = vpack.c.b16 %v2039, %v2023
  %v2568 = vpack.c.b16 %v2040, %v2024
  %v2569 = vpack.c.b16 %v2041, %v2025
  %v2570 = vpack.c.b16 %v2042, %v2026
  %v2571 = vpack.c.b16 %v2043, %v2027
  %v2572 = vpack.c.b16 %v2044, %v2028
  %v2573 = vpack.c.b16 %v2045, %v2029
  %v2574 = vpack.c.b16 %v2046, %v2030
  %v2575 = vpack.c.b16 %v2047, %v2031
  %v2576 = vpack.c.b16 %v2048, %v2032
  %v2577 = vpack.c.b16 %v2049, %v2033
  %v2578 = vpack.c.b16 %v2050, %v2034
  %v2579 = vpack.c.b16 %v2051, %v2035
  %v2580 = vpack.c.b16 %v2068, %v2052
  %v2581 = vpack.c.b16 %v2069, %v2053
  %v2582 = vpack.c.b16 %v2070, %v2054
  %v2583 = vpack.c.b16 %v2071, %v2055
  %v2584 = vpack.c.b16 %v2072, %v2056
  %v2585 = vpack.c.b16 %v2073, %v2057
  %v2586 = vpack.c.b16 %v2074, %v2058
  %v2587 = vpack.c.b16 %v2075, %v2059
  %v2588 = vpack.c.b16 %v2076, %v2060
  %v2589 = vpack.c.b16 %v2077, %v2061
  %v2590 = vpack.c.b16 %v2078, %v2062
  %v2591 = vpack.c.b16 %v2079, %v2063
  %v2592 = vpack.c.b16 %v2080, %v2064
  %v2593 = vpack.c.b16 %v2081, %v2065
  %v2594 = vpack.c.b16 %v2082, %v2066
  %v2595 = vpack.c.b16 %v2083, %v2067
  %3108 = vmatprep.subr.bf16.mxu0 %v2085
  %3109 = vmatpush1.bf16.msra.mxu0 %v2084
  %3110 = vmatprep.subr.bf16.mxu0 %v2101
  %3111 = vmatpush1.bf16.msra.mxu0 %v2100
  %3112 = vmatprep.subr.bf16.mxu0 %v2117
  %3113 = vmatpush1.bf16.msra.mxu0 %v2116
  %3114 = vmatprep.subr.bf16.mxu0 %v2133
  %3115 = vmatpush1.bf16.msra.mxu0 %v2132
  %3116 = vmatprep.subr.bf16.mxu0 %v2149
  %3117 = vmatpush1.bf16.msra.mxu0 %v2148
  %3118 = vmatprep.subr.bf16.mxu0 %v2165
  %3119 = vmatpush1.bf16.msra.mxu0 %v2164
  %3120 = vmatprep.subr.bf16.mxu0 %v2181
  %3121 = vmatpush1.bf16.msra.mxu0 %v2180
  %3122 = vmatprep.subr.bf16.mxu0 %v2197
  %3123 = vmatpush1.bf16.msra.mxu0 %v2196
  %3124 = vmatprep.subr.bf16.mxu0 %v2213
  %3125 = vmatpush1.bf16.msra.mxu0 %v2212
  %3126 = vmatprep.subr.bf16.mxu0 %v2229
  %3127 = vmatpush1.bf16.msra.mxu0 %v2228
  %3128 = vmatprep.subr.bf16.mxu0 %v2245
  %3129 = vmatpush1.bf16.msra.mxu0 %v2244
  %3130 = vmatprep.subr.bf16.mxu0 %v2261
  %3131 = vmatpush1.bf16.msra.mxu0 %v2260
  %3132 = vmatprep.subr.bf16.mxu0 %v2277
  %3133 = vmatpush1.bf16.msra.mxu0 %v2276
  %3134 = vmatprep.subr.bf16.mxu0 %v2293
  %3135 = vmatpush1.bf16.msra.mxu0 %v2292
  %3136 = vmatprep.subr.bf16.mxu0 %v2309
  %3137 = vmatpush1.bf16.msra.mxu0 %v2308
  %3138 = vmatprep.subr.bf16.mxu0 %v2325
  %3139 = vmatpush1.bf16.msra.mxu0 %v2324
  %3140 = vmatprep.mubr.bf16.mxu0 %v541
  %3141 = vmatmul.mubr.bf16.gmra.mrb[0].mxu0 %v540
  %v3142 = vpop.f32.mrb[0].mxu0
  %v3143 = vadd.f32 %v532, %v3142
  %v3144 = vpop.f32.mrb[0].mxu0
  %v3145 = vadd.f32 %v532, %v3144
  %v3146 = vpop.f32.mrb[0].mxu0
  %v3147 = vpop.f32.mrb[0].mxu0
  %3148 = vdwg.mxu0
  %3149 = vmatprep.subr.bf16.mxu0 %v2341
  %3150 = vmatpush1.bf16.msra.mxu0 %v2340
  %3151 = vmatprep.subr.bf16.mxu0 %v2357
  %3152 = vmatpush1.bf16.msra.mxu0 %v2356
  %3153 = vmatprep.subr.bf16.mxu0 %v2373
  %3154 = vmatpush1.bf16.msra.mxu0 %v2372
  %3155 = vmatprep.subr.bf16.mxu0 %v2389
  %3156 = vmatpush1.bf16.msra.mxu0 %v2388
  %3157 = vmatprep.subr.bf16.mxu0 %v2405
  %3158 = vmatpush1.bf16.msra.mxu0 %v2404
  %3159 = vmatprep.subr.bf16.mxu0 %v2421
  %3160 = vmatpush1.bf16.msra.mxu0 %v2420
  %3161 = vmatprep.subr.bf16.mxu0 %v2437
  %3162 = vmatpush1.bf16.msra.mxu0 %v2436
  %3163 = vmatprep.subr.bf16.mxu0 %v2453
  %3164 = vmatpush1.bf16.msra.mxu0 %v2452
  %3165 = vmatprep.subr.bf16.mxu0 %v2469
  %3166 = vmatpush1.bf16.msra.mxu0 %v2468
  %3167 = vmatprep.subr.bf16.mxu0 %v2485
  %3168 = vmatpush1.bf16.msra.mxu0 %v2484
  %3169 = vmatprep.subr.bf16.mxu0 %v2501
  %3170 = vmatpush1.bf16.msra.mxu0 %v2500
  %3171 = vmatprep.subr.bf16.mxu0 %v2517
  %3172 = vmatpush1.bf16.msra.mxu0 %v2516
  %3173 = vmatprep.subr.bf16.mxu0 %v2533
  %3174 = vmatpush1.bf16.msra.mxu0 %v2532
  %3175 = vmatprep.subr.bf16.mxu0 %v2549
  %3176 = vmatpush1.bf16.msra.mxu0 %v2548
  %3177 = vmatprep.subr.bf16.mxu0 %v2565
  %3178 = vmatpush1.bf16.msra.mxu0 %v2564
  %3179 = vmatprep.subr.bf16.mxu0 %v2581
  %3180 = vmatpush1.bf16.msra.mxu0 %v2580
  %3181 = vmatprep.mubr.bf16.mxu0 %v543
  %3182 = vmatmul.mubr.bf16.gmra.mrb[0].mxu0 %v542
  %v3183 = vpop.f32.mrb[0].mxu0
  %v3184 = vadd.f32 %v3143, %v3183
  %v3185 = vpop.f32.mrb[0].mxu0
  %v3186 = vadd.f32 %v3145, %v3185
  %v3187 = vpop.f32.mrb[0].mxu0
  %v3188 = vpop.f32.mrb[0].mxu0
  %3189 = vdwg.mxu0
  %3190 = vmatprep.subr.bf16.mxu0 %v2087
  %3191 = vmatpush1.bf16.msra.mxu0 %v2086
  %3192 = vmatprep.subr.bf16.mxu0 %v2103
  %3193 = vmatpush1.bf16.msra.mxu0 %v2102
  %3194 = vmatprep.subr.bf16.mxu0 %v2119
  %3195 = vmatpush1.bf16.msra.mxu0 %v2118
  %3196 = vmatprep.subr.bf16.mxu0 %v2135
  %3197 = vmatpush1.bf16.msra.mxu0 %v2134
  %3198 = vmatprep.subr.bf16.mxu0 %v2151
  %3199 = vmatpush1.bf16.msra.mxu0 %v2150
  %3200 = vmatprep.subr.bf16.mxu0 %v2167
  %3201 = vmatpush1.bf16.msra.mxu0 %v2166
  %3202 = vmatprep.subr.bf16.mxu0 %v2183
  %3203 = vmatpush1.bf16.msra.mxu0 %v2182
  %3204 = vmatprep.subr.bf16.mxu0 %v2199
  %3205 = vmatpush1.bf16.msra.mxu0 %v2198
  %3206 = vmatprep.subr.bf16.mxu0 %v2215
  %3207 = vmatpush1.bf16.msra.mxu0 %v2214
  %3208 = vmatprep.subr.bf16.mxu0 %v2231
  %3209 = vmatpush1.bf16.msra.mxu0 %v2230
  %3210 = vmatprep.subr.bf16.mxu0 %v2247
  %3211 = vmatpush1.bf16.msra.mxu0 %v2246
  %3212 = vmatprep.subr.bf16.mxu0 %v2263
  %3213 = vmatpush1.bf16.msra.mxu0 %v2262
  %3214 = vmatprep.subr.bf16.mxu0 %v2279
  %3215 = vmatpush1.bf16.msra.mxu0 %v2278
  %3216 = vmatprep.subr.bf16.mxu0 %v2295
  %3217 = vmatpush1.bf16.msra.mxu0 %v2294
  %3218 = vmatprep.subr.bf16.mxu0 %v2311
  %3219 = vmatpush1.bf16.msra.mxu0 %v2310
  %3220 = vmatprep.subr.bf16.mxu0 %v2327
  %3221 = vmatpush1.bf16.msra.mxu0 %v2326
  %3222 = vmatprep.mubr.bf16.mxu0 %v541
  %3223 = vmatmul.mubr.bf16.gmra.mrb[0].mxu0 %v540
  %v3224 = vpop.f32.mrb[0].mxu0
  %v3225 = vadd.f32 %v532, %v3224
  %v3226 = vpop.f32.mrb[0].mxu0
  %v3227 = vadd.f32 %v532, %v3226
  %v3228 = vpop.f32.mrb[0].mxu0
  %v3229 = vpop.f32.mrb[0].mxu0
  %3230 = vdwg.mxu0
  %3231 = vmatprep.subr.bf16.mxu0 %v2343
  %3232 = vmatpush1.bf16.msra.mxu0 %v2342
  %3233 = vmatprep.subr.bf16.mxu0 %v2359
  %3234 = vmatpush1.bf16.msra.mxu0 %v2358
  %3235 = vmatprep.subr.bf16.mxu0 %v2375
  %3236 = vmatpush1.bf16.msra.mxu0 %v2374
  %3237 = vmatprep.subr.bf16.mxu0 %v2391
  %3238 = vmatpush1.bf16.msra.mxu0 %v2390
  %3239 = vmatprep.subr.bf16.mxu0 %v2407
  %3240 = vmatpush1.bf16.msra.mxu0 %v2406
  %3241 = vmatprep.subr.bf16.mxu0 %v2423
  %3242 = vmatpush1.bf16.msra.mxu0 %v2422
  %3243 = vmatprep.subr.bf16.mxu0 %v2439
  %3244 = vmatpush1.bf16.msra.mxu0 %v2438
  %3245 = vmatprep.subr.bf16.mxu0 %v2455
  %3246 = vmatpush1.bf16.msra.mxu0 %v2454
  %3247 = vmatprep.subr.bf16.mxu0 %v2471
  %3248 = vmatpush1.bf16.msra.mxu0 %v2470
  %3249 = vmatprep.subr.bf16.mxu0 %v2487
  %3250 = vmatpush1.bf16.msra.mxu0 %v2486
  %3251 = vmatprep.subr.bf16.mxu0 %v2503
  %3252 = vmatpush1.bf16.msra.mxu0 %v2502
  %3253 = vmatprep.subr.bf16.mxu0 %v2519
  %3254 = vmatpush1.bf16.msra.mxu0 %v2518
  %3255 = vmatprep.subr.bf16.mxu0 %v2535
  %3256 = vmatpush1.bf16.msra.mxu0 %v2534
  %3257 = vmatprep.subr.bf16.mxu0 %v2551
  %3258 = vmatpush1.bf16.msra.mxu0 %v2550
  %3259 = vmatprep.subr.bf16.mxu0 %v2567
  %3260 = vmatpush1.bf16.msra.mxu0 %v2566
  %3261 = vmatprep.subr.bf16.mxu0 %v2583
  %3262 = vmatpush1.bf16.msra.mxu0 %v2582
  %3263 = vmatprep.mubr.bf16.mxu0 %v543
  %3264 = vmatmul.mubr.bf16.gmra.mrb[0].mxu0 %v542
  %v3265 = vpop.f32.mrb[0].mxu0
  %v3266 = vadd.f32 %v3225, %v3265
  %v3267 = vpop.f32.mrb[0].mxu0
  %v3268 = vadd.f32 %v3227, %v3267
  %v3269 = vpop.f32.mrb[0].mxu0
  %v3270 = vpop.f32.mrb[0].mxu0
  %3271 = vdwg.mxu0
  %3272 = vmatprep.subr.bf16.mxu0 %v2089
  %3273 = vmatpush1.bf16.msra.mxu0 %v2088
  %3274 = vmatprep.subr.bf16.mxu0 %v2105
  %3275 = vmatpush1.bf16.msra.mxu0 %v2104
  %3276 = vmatprep.subr.bf16.mxu0 %v2121
  %3277 = vmatpush1.bf16.msra.mxu0 %v2120
  %3278 = vmatprep.subr.bf16.mxu0 %v2137
  %3279 = vmatpush1.bf16.msra.mxu0 %v2136
  %3280 = vmatprep.subr.bf16.mxu0 %v2153
  %3281 = vmatpush1.bf16.msra.mxu0 %v2152
  %3282 = vmatprep.subr.bf16.mxu0 %v2169
  %3283 = vmatpush1.bf16.msra.mxu0 %v2168
  %3284 = vmatprep.subr.bf16.mxu0 %v2185
  %3285 = vmatpush1.bf16.msra.mxu0 %v2184
  %3286 = vmatprep.subr.bf16.mxu0 %v2201
  %3287 = vmatpush1.bf16.msra.mxu0 %v2200
  %3288 = vmatprep.subr.bf16.mxu0 %v2217
  %3289 = vmatpush1.bf16.msra.mxu0 %v2216
  %3290 = vmatprep.subr.bf16.mxu0 %v2233
  %3291 = vmatpush1.bf16.msra.mxu0 %v2232
  %3292 = vmatprep.subr.bf16.mxu0 %v2249
  %3293 = vmatpush1.bf16.msra.mxu0 %v2248
  %3294 = vmatprep.subr.bf16.mxu0 %v2265
  %3295 = vmatpush1.bf16.msra.mxu0 %v2264
  %3296 = vmatprep.subr.bf16.mxu0 %v2281
  %3297 = vmatpush1.bf16.msra.mxu0 %v2280
  %3298 = vmatprep.subr.bf16.mxu0 %v2297
  %3299 = vmatpush1.bf16.msra.mxu0 %v2296
  %3300 = vmatprep.subr.bf16.mxu0 %v2313
  %3301 = vmatpush1.bf16.msra.mxu0 %v2312
  %3302 = vmatprep.subr.bf16.mxu0 %v2329
  %3303 = vmatpush1.bf16.msra.mxu0 %v2328
  %3304 = vmatprep.mubr.bf16.mxu0 %v541
  %3305 = vmatmul.mubr.bf16.gmra.mrb[0].mxu0 %v540
  %v3306 = vpop.f32.mrb[0].mxu0
  %v3307 = vadd.f32 %v532, %v3306
  %v3308 = vpop.f32.mrb[0].mxu0
  %v3309 = vadd.f32 %v532, %v3308
  %v3310 = vpop.f32.mrb[0].mxu0
  %v3311 = vpop.f32.mrb[0].mxu0
  %3312 = vdwg.mxu0
  %3313 = vmatprep.subr.bf16.mxu0 %v2345
  %3314 = vmatpush1.bf16.msra.mxu0 %v2344
  %3315 = vmatprep.subr.bf16.mxu0 %v2361
  %3316 = vmatpush1.bf16.msra.mxu0 %v2360
  %3317 = vmatprep.subr.bf16.mxu0 %v2377
  %3318 = vmatpush1.bf16.msra.mxu0 %v2376
  %3319 = vmatprep.subr.bf16.mxu0 %v2393
  %3320 = vmatpush1.bf16.msra.mxu0 %v2392
  %3321 = vmatprep.subr.bf16.mxu0 %v2409
  %3322 = vmatpush1.bf16.msra.mxu0 %v2408
  %3323 = vmatprep.subr.bf16.mxu0 %v2425
  %3324 = vmatpush1.bf16.msra.mxu0 %v2424
  %3325 = vmatprep.subr.bf16.mxu0 %v2441
  %3326 = vmatpush1.bf16.msra.mxu0 %v2440
  %3327 = vmatprep.subr.bf16.mxu0 %v2457
  %3328 = vmatpush1.bf16.msra.mxu0 %v2456
  %3329 = vmatprep.subr.bf16.mxu0 %v2473
  %3330 = vmatpush1.bf16.msra.mxu0 %v2472
  %3331 = vmatprep.subr.bf16.mxu0 %v2489
  %3332 = vmatpush1.bf16.msra.mxu0 %v2488
  %3333 = vmatprep.subr.bf16.mxu0 %v2505
  %3334 = vmatpush1.bf16.msra.mxu0 %v2504
  %3335 = vmatprep.subr.bf16.mxu0 %v2521
  %3336 = vmatpush1.bf16.msra.mxu0 %v2520
  %3337 = vmatprep.subr.bf16.mxu0 %v2537
  %3338 = vmatpush1.bf16.msra.mxu0 %v2536
  %3339 = vmatprep.subr.bf16.mxu0 %v2553
  %3340 = vmatpush1.bf16.msra.mxu0 %v2552
  %3341 = vmatprep.subr.bf16.mxu0 %v2569
  %3342 = vmatpush1.bf16.msra.mxu0 %v2568
  %3343 = vmatprep.subr.bf16.mxu0 %v2585
  %3344 = vmatpush1.bf16.msra.mxu0 %v2584
  %3345 = vmatprep.mubr.bf16.mxu0 %v543
  %3346 = vmatmul.mubr.bf16.gmra.mrb[0].mxu0 %v542
  %v3347 = vpop.f32.mrb[0].mxu0
  %v3348 = vadd.f32 %v3307, %v3347
  %v3349 = vpop.f32.mrb[0].mxu0
  %v3350 = vadd.f32 %v3309, %v3349
  %v3351 = vpop.f32.mrb[0].mxu0
  %v3352 = vpop.f32.mrb[0].mxu0
  %3353 = vdwg.mxu0
  %3354 = vmatprep.subr.bf16.mxu0 %v2091
  %3355 = vmatpush1.bf16.msra.mxu0 %v2090
  %3356 = vmatprep.subr.bf16.mxu0 %v2107
  %3357 = vmatpush1.bf16.msra.mxu0 %v2106
  %3358 = vmatprep.subr.bf16.mxu0 %v2123
  %3359 = vmatpush1.bf16.msra.mxu0 %v2122
  %3360 = vmatprep.subr.bf16.mxu0 %v2139
  %3361 = vmatpush1.bf16.msra.mxu0 %v2138
  %3362 = vmatprep.subr.bf16.mxu0 %v2155
  %3363 = vmatpush1.bf16.msra.mxu0 %v2154
  %3364 = vmatprep.subr.bf16.mxu0 %v2171
  %3365 = vmatpush1.bf16.msra.mxu0 %v2170
  %3366 = vmatprep.subr.bf16.mxu0 %v2187
  %3367 = vmatpush1.bf16.msra.mxu0 %v2186
  %3368 = vmatprep.subr.bf16.mxu0 %v2203
  %3369 = vmatpush1.bf16.msra.mxu0 %v2202
  %3370 = vmatprep.subr.bf16.mxu0 %v2219
  %3371 = vmatpush1.bf16.msra.mxu0 %v2218
  %3372 = vmatprep.subr.bf16.mxu0 %v2235
  %3373 = vmatpush1.bf16.msra.mxu0 %v2234
  %3374 = vmatprep.subr.bf16.mxu0 %v2251
  %3375 = vmatpush1.bf16.msra.mxu0 %v2250
  %3376 = vmatprep.subr.bf16.mxu0 %v2267
  %3377 = vmatpush1.bf16.msra.mxu0 %v2266
  %3378 = vmatprep.subr.bf16.mxu0 %v2283
  %3379 = vmatpush1.bf16.msra.mxu0 %v2282
  %3380 = vmatprep.subr.bf16.mxu0 %v2299
  %3381 = vmatpush1.bf16.msra.mxu0 %v2298
  %3382 = vmatprep.subr.bf16.mxu0 %v2315
  %3383 = vmatpush1.bf16.msra.mxu0 %v2314
  %3384 = vmatprep.subr.bf16.mxu0 %v2331
  %3385 = vmatpush1.bf16.msra.mxu0 %v2330
  %3386 = vmatprep.mubr.bf16.mxu0 %v541
  %3387 = vmatmul.mubr.bf16.gmra.mrb[0].mxu0 %v540
  %v3388 = vpop.f32.mrb[0].mxu0
  %v3389 = vadd.f32 %v532, %v3388
  %v3390 = vpop.f32.mrb[0].mxu0
  %v3391 = vadd.f32 %v532, %v3390
  %v3392 = vpop.f32.mrb[0].mxu0
  %v3393 = vpop.f32.mrb[0].mxu0
  %3394 = vdwg.mxu0
  %3395 = vmatprep.subr.bf16.mxu0 %v2347
  %3396 = vmatpush1.bf16.msra.mxu0 %v2346
  %3397 = vmatprep.subr.bf16.mxu0 %v2363
  %3398 = vmatpush1.bf16.msra.mxu0 %v2362
  %3399 = vmatprep.subr.bf16.mxu0 %v2379
  %3400 = vmatpush1.bf16.msra.mxu0 %v2378
  %3401 = vmatprep.subr.bf16.mxu0 %v2395
  %3402 = vmatpush1.bf16.msra.mxu0 %v2394
  %3403 = vmatprep.subr.bf16.mxu0 %v2411
  %3404 = vmatpush1.bf16.msra.mxu0 %v2410
  %3405 = vmatprep.subr.bf16.mxu0 %v2427
  %3406 = vmatpush1.bf16.msra.mxu0 %v2426
  %3407 = vmatprep.subr.bf16.mxu0 %v2443
  %3408 = vmatpush1.bf16.msra.mxu0 %v2442
  %3409 = vmatprep.subr.bf16.mxu0 %v2459
  %3410 = vmatpush1.bf16.msra.mxu0 %v2458
  %3411 = vmatprep.subr.bf16.mxu0 %v2475
  %3412 = vmatpush1.bf16.msra.mxu0 %v2474
  %3413 = vmatprep.subr.bf16.mxu0 %v2491
  %3414 = vmatpush1.bf16.msra.mxu0 %v2490
  %3415 = vmatprep.subr.bf16.mxu0 %v2507
  %3416 = vmatpush1.bf16.msra.mxu0 %v2506
  %3417 = vmatprep.subr.bf16.mxu0 %v2523
  %3418 = vmatpush1.bf16.msra.mxu0 %v2522
  %3419 = vmatprep.subr.bf16.mxu0 %v2539
  %3420 = vmatpush1.bf16.msra.mxu0 %v2538
  %3421 = vmatprep.subr.bf16.mxu0 %v2555
  %3422 = vmatpush1.bf16.msra.mxu0 %v2554
  %3423 = vmatprep.subr.bf16.mxu0 %v2571
  %3424 = vmatpush1.bf16.msra.mxu0 %v2570
  %3425 = vmatprep.subr.bf16.mxu0 %v2587
  %3426 = vmatpush1.bf16.msra.mxu0 %v2586
  %3427 = vmatprep.mubr.bf16.mxu0 %v543
  %3428 = vmatmul.mubr.bf16.gmra.mrb[0].mxu0 %v542
  %v3429 = vpop.f32.mrb[0].mxu0
  %v3430 = vadd.f32 %v3389, %v3429
  %v3431 = vpop.f32.mrb[0].mxu0
  %v3432 = vadd.f32 %v3391, %v3431
  %v3433 = vpop.f32.mrb[0].mxu0
  %v3434 = vpop.f32.mrb[0].mxu0
  %3435 = vdwg.mxu0
  %3436 = vmatprep.subr.bf16.mxu0 %v2093
  %3437 = vmatpush1.bf16.msra.mxu0 %v2092
  %3438 = vmatprep.subr.bf16.mxu0 %v2109
  %3439 = vmatpush1.bf16.msra.mxu0 %v2108
  %3440 = vmatprep.subr.bf16.mxu0 %v2125
  %3441 = vmatpush1.bf16.msra.mxu0 %v2124
  %3442 = vmatprep.subr.bf16.mxu0 %v2141
  %3443 = vmatpush1.bf16.msra.mxu0 %v2140
  %3444 = vmatprep.subr.bf16.mxu0 %v2157
  %3445 = vmatpush1.bf16.msra.mxu0 %v2156
  %3446 = vmatprep.subr.bf16.mxu0 %v2173
  %3447 = vmatpush1.bf16.msra.mxu0 %v2172
  %3448 = vmatprep.subr.bf16.mxu0 %v2189
  %3449 = vmatpush1.bf16.msra.mxu0 %v2188
  %3450 = vmatprep.subr.bf16.mxu0 %v2205
  %3451 = vmatpush1.bf16.msra.mxu0 %v2204
  %3452 = vmatprep.subr.bf16.mxu0 %v2221
  %3453 = vmatpush1.bf16.msra.mxu0 %v2220
  %3454 = vmatprep.subr.bf16.mxu0 %v2237
  %3455 = vmatpush1.bf16.msra.mxu0 %v2236
  %3456 = vmatprep.subr.bf16.mxu0 %v2253
  %3457 = vmatpush1.bf16.msra.mxu0 %v2252
  %3458 = vmatprep.subr.bf16.mxu0 %v2269
  %3459 = vmatpush1.bf16.msra.mxu0 %v2268
  %3460 = vmatprep.subr.bf16.mxu0 %v2285
  %3461 = vmatpush1.bf16.msra.mxu0 %v2284
  %3462 = vmatprep.subr.bf16.mxu0 %v2301
  %3463 = vmatpush1.bf16.msra.mxu0 %v2300
  %3464 = vmatprep.subr.bf16.mxu0 %v2317
  %3465 = vmatpush1.bf16.msra.mxu0 %v2316
  %3466 = vmatprep.subr.bf16.mxu0 %v2333
  %3467 = vmatpush1.bf16.msra.mxu0 %v2332
  %3468 = vmatprep.mubr.bf16.mxu0 %v541
  %3469 = vmatmul.mubr.bf16.gmra.mrb[0].mxu0 %v540
  %v3470 = vpop.f32.mrb[0].mxu0
  %v3471 = vadd.f32 %v532, %v3470
  %v3472 = vpop.f32.mrb[0].mxu0
  %v3473 = vadd.f32 %v532, %v3472
  %v3474 = vpop.f32.mrb[0].mxu0
  %v3475 = vpop.f32.mrb[0].mxu0
  %3476 = vdwg.mxu0
  %3477 = vmatprep.subr.bf16.mxu0 %v2349
  %3478 = vmatpush1.bf16.msra.mxu0 %v2348
  %3479 = vmatprep.subr.bf16.mxu0 %v2365
  %3480 = vmatpush1.bf16.msra.mxu0 %v2364
  %3481 = vmatprep.subr.bf16.mxu0 %v2381
  %3482 = vmatpush1.bf16.msra.mxu0 %v2380
  %3483 = vmatprep.subr.bf16.mxu0 %v2397
  %3484 = vmatpush1.bf16.msra.mxu0 %v2396
  %3485 = vmatprep.subr.bf16.mxu0 %v2413
  %3486 = vmatpush1.bf16.msra.mxu0 %v2412
  %3487 = vmatprep.subr.bf16.mxu0 %v2429
  %3488 = vmatpush1.bf16.msra.mxu0 %v2428
  %3489 = vmatprep.subr.bf16.mxu0 %v2445
  %3490 = vmatpush1.bf16.msra.mxu0 %v2444
  %3491 = vmatprep.subr.bf16.mxu0 %v2461
  %3492 = vmatpush1.bf16.msra.mxu0 %v2460
  %3493 = vmatprep.subr.bf16.mxu0 %v2477
  %3494 = vmatpush1.bf16.msra.mxu0 %v2476
  %3495 = vmatprep.subr.bf16.mxu0 %v2493
  %3496 = vmatpush1.bf16.msra.mxu0 %v2492
  %3497 = vmatprep.subr.bf16.mxu0 %v2509
  %3498 = vmatpush1.bf16.msra.mxu0 %v2508
  %3499 = vmatprep.subr.bf16.mxu0 %v2525
  %3500 = vmatpush1.bf16.msra.mxu0 %v2524
  %3501 = vmatprep.subr.bf16.mxu0 %v2541
  %3502 = vmatpush1.bf16.msra.mxu0 %v2540
  %3503 = vmatprep.subr.bf16.mxu0 %v2557
  %3504 = vmatpush1.bf16.msra.mxu0 %v2556
  %3505 = vmatprep.subr.bf16.mxu0 %v2573
  %3506 = vmatpush1.bf16.msra.mxu0 %v2572
  %3507 = vmatprep.subr.bf16.mxu0 %v2589
  %3508 = vmatpush1.bf16.msra.mxu0 %v2588
  %3509 = vmatprep.mubr.bf16.mxu0 %v543
  %3510 = vmatmul.mubr.bf16.gmra.mrb[0].mxu0 %v542
  %v3511 = vpop.f32.mrb[0].mxu0
  %v3512 = vadd.f32 %v3471, %v3511
  %v3513 = vpop.f32.mrb[0].mxu0
  %v3514 = vadd.f32 %v3473, %v3513
  %v3515 = vpop.f32.mrb[0].mxu0
  %v3516 = vpop.f32.mrb[0].mxu0
  %3517 = vdwg.mxu0
  %3518 = vmatprep.subr.bf16.mxu0 %v2095
  %3519 = vmatpush1.bf16.msra.mxu0 %v2094
  %3520 = vmatprep.subr.bf16.mxu0 %v2111
  %3521 = vmatpush1.bf16.msra.mxu0 %v2110
  %3522 = vmatprep.subr.bf16.mxu0 %v2127
  %3523 = vmatpush1.bf16.msra.mxu0 %v2126
  %3524 = vmatprep.subr.bf16.mxu0 %v2143
  %3525 = vmatpush1.bf16.msra.mxu0 %v2142
  %3526 = vmatprep.subr.bf16.mxu0 %v2159
  %3527 = vmatpush1.bf16.msra.mxu0 %v2158
  %3528 = vmatprep.subr.bf16.mxu0 %v2175
  %3529 = vmatpush1.bf16.msra.mxu0 %v2174
  %3530 = vmatprep.subr.bf16.mxu0 %v2191
  %3531 = vmatpush1.bf16.msra.mxu0 %v2190
  %3532 = vmatprep.subr.bf16.mxu0 %v2207
  %3533 = vmatpush1.bf16.msra.mxu0 %v2206
  %3534 = vmatprep.subr.bf16.mxu0 %v2223
  %3535 = vmatpush1.bf16.msra.mxu0 %v2222
  %3536 = vmatprep.subr.bf16.mxu0 %v2239
  %3537 = vmatpush1.bf16.msra.mxu0 %v2238
  %3538 = vmatprep.subr.bf16.mxu0 %v2255
  %3539 = vmatpush1.bf16.msra.mxu0 %v2254
  %3540 = vmatprep.subr.bf16.mxu0 %v2271
  %3541 = vmatpush1.bf16.msra.mxu0 %v2270
  %3542 = vmatprep.subr.bf16.mxu0 %v2287
  %3543 = vmatpush1.bf16.msra.mxu0 %v2286
  %3544 = vmatprep.subr.bf16.mxu0 %v2303
  %3545 = vmatpush1.bf16.msra.mxu0 %v2302
  %3546 = vmatprep.subr.bf16.mxu0 %v2319
  %3547 = vmatpush1.bf16.msra.mxu0 %v2318
  %3548 = vmatprep.subr.bf16.mxu0 %v2335
  %3549 = vmatpush1.bf16.msra.mxu0 %v2334
  %3550 = vmatprep.mubr.bf16.mxu0 %v541
  %3551 = vmatmul.mubr.bf16.gmra.mrb[0].mxu0 %v540
  %v3552 = vpop.f32.mrb[0].mxu0
  %v3553 = vadd.f32 %v532, %v3552
  %v3554 = vpop.f32.mrb[0].mxu0
  %v3555 = vadd.f32 %v532, %v3554
  %v3556 = vpop.f32.mrb[0].mxu0
  %v3557 = vpop.f32.mrb[0].mxu0
  %3558 = vdwg.mxu0
  %3559 = vmatprep.subr.bf16.mxu0 %v2351
  %3560 = vmatpush1.bf16.msra.mxu0 %v2350
  %3561 = vmatprep.subr.bf16.mxu0 %v2367
  %3562 = vmatpush1.bf16.msra.mxu0 %v2366
  %3563 = vmatprep.subr.bf16.mxu0 %v2383
  %3564 = vmatpush1.bf16.msra.mxu0 %v2382
  %3565 = vmatprep.subr.bf16.mxu0 %v2399
  %3566 = vmatpush1.bf16.msra.mxu0 %v2398
  %3567 = vmatprep.subr.bf16.mxu0 %v2415
  %3568 = vmatpush1.bf16.msra.mxu0 %v2414
  %3569 = vmatprep.subr.bf16.mxu0 %v2431
  %3570 = vmatpush1.bf16.msra.mxu0 %v2430
  %3571 = vmatprep.subr.bf16.mxu0 %v2447
  %3572 = vmatpush1.bf16.msra.mxu0 %v2446
  %3573 = vmatprep.subr.bf16.mxu0 %v2463
  %3574 = vmatpush1.bf16.msra.mxu0 %v2462
  %3575 = vmatprep.subr.bf16.mxu0 %v2479
  %3576 = vmatpush1.bf16.msra.mxu0 %v2478
  %3577 = vmatprep.subr.bf16.mxu0 %v2495
  %3578 = vmatpush1.bf16.msra.mxu0 %v2494
  %3579 = vmatprep.subr.bf16.mxu0 %v2511
  %3580 = vmatpush1.bf16.msra.mxu0 %v2510
  %3581 = vmatprep.subr.bf16.mxu0 %v2527
  %3582 = vmatpush1.bf16.msra.mxu0 %v2526
  %3583 = vmatprep.subr.bf16.mxu0 %v2543
  %3584 = vmatpush1.bf16.msra.mxu0 %v2542
  %3585 = vmatprep.subr.bf16.mxu0 %v2559
  %3586 = vmatpush1.bf16.msra.mxu0 %v2558
  %3587 = vmatprep.subr.bf16.mxu0 %v2575
  %3588 = vmatpush1.bf16.msra.mxu0 %v2574
  %3589 = vmatprep.subr.bf16.mxu0 %v2591
  %3590 = vmatpush1.bf16.msra.mxu0 %v2590
  %3591 = vmatprep.mubr.bf16.mxu0 %v543
  %3592 = vmatmul.mubr.bf16.gmra.mrb[0].mxu0 %v542
  %v3593 = vpop.f32.mrb[0].mxu0
  %v3594 = vadd.f32 %v3553, %v3593
  %v3595 = vpop.f32.mrb[0].mxu0
  %v3596 = vadd.f32 %v3555, %v3595
  %v3597 = vpop.f32.mrb[0].mxu0
  %v3598 = vpop.f32.mrb[0].mxu0
  %3599 = vdwg.mxu0
  %3600 = vmatprep.subr.bf16.mxu0 %v2097
  %3601 = vmatpush1.bf16.msra.mxu0 %v2096
  %3602 = vmatprep.subr.bf16.mxu0 %v2113
  %3603 = vmatpush1.bf16.msra.mxu0 %v2112
  %3604 = vmatprep.subr.bf16.mxu0 %v2129
  %3605 = vmatpush1.bf16.msra.mxu0 %v2128
  %3606 = vmatprep.subr.bf16.mxu0 %v2145
  %3607 = vmatpush1.bf16.msra.mxu0 %v2144
  %3608 = vmatprep.subr.bf16.mxu0 %v2161
  %3609 = vmatpush1.bf16.msra.mxu0 %v2160
  %3610 = vmatprep.subr.bf16.mxu0 %v2177
  %3611 = vmatpush1.bf16.msra.mxu0 %v2176
  %3612 = vmatprep.subr.bf16.mxu0 %v2193
  %3613 = vmatpush1.bf16.msra.mxu0 %v2192
  %3614 = vmatprep.subr.bf16.mxu0 %v2209
  %3615 = vmatpush1.bf16.msra.mxu0 %v2208
  %3616 = vmatprep.subr.bf16.mxu0 %v2225
  %3617 = vmatpush1.bf16.msra.mxu0 %v2224
  %3618 = vmatprep.subr.bf16.mxu0 %v2241
  %3619 = vmatpush1.bf16.msra.mxu0 %v2240
  %3620 = vmatprep.subr.bf16.mxu0 %v2257
  %3621 = vmatpush1.bf16.msra.mxu0 %v2256
  %3622 = vmatprep.subr.bf16.mxu0 %v2273
  %3623 = vmatpush1.bf16.msra.mxu0 %v2272
  %3624 = vmatprep.subr.bf16.mxu0 %v2289
  %3625 = vmatpush1.bf16.msra.mxu0 %v2288
  %3626 = vmatprep.subr.bf16.mxu0 %v2305
  %3627 = vmatpush1.bf16.msra.mxu0 %v2304
  %3628 = vmatprep.subr.bf16.mxu0 %v2321
  %3629 = vmatpush1.bf16.msra.mxu0 %v2320
  %3630 = vmatprep.subr.bf16.mxu0 %v2337
  %3631 = vmatpush1.bf16.msra.mxu0 %v2336
  %3632 = vmatprep.mubr.bf16.mxu0 %v541
  %3633 = vmatmul.mubr.bf16.gmra.mrb[0].mxu0 %v540
  %v3634 = vpop.f32.mrb[0].mxu0
  %v3635 = vadd.f32 %v532, %v3634
  %v3636 = vpop.f32.mrb[0].mxu0
  %v3637 = vadd.f32 %v532, %v3636
  %v3638 = vpop.f32.mrb[0].mxu0
  %v3639 = vpop.f32.mrb[0].mxu0
  %3640 = vdwg.mxu0
  %3641 = vmatprep.subr.bf16.mxu0 %v2353
  %3642 = vmatpush1.bf16.msra.mxu0 %v2352
  %3643 = vmatprep.subr.bf16.mxu0 %v2369
  %3644 = vmatpush1.bf16.msra.mxu0 %v2368
  %3645 = vmatprep.subr.bf16.mxu0 %v2385
  %3646 = vmatpush1.bf16.msra.mxu0 %v2384
  %3647 = vmatprep.subr.bf16.mxu0 %v2401
  %3648 = vmatpush1.bf16.msra.mxu0 %v2400
  %3649 = vmatprep.subr.bf16.mxu0 %v2417
  %3650 = vmatpush1.bf16.msra.mxu0 %v2416
  %3651 = vmatprep.subr.bf16.mxu0 %v2433
  %3652 = vmatpush1.bf16.msra.mxu0 %v2432
  %3653 = vmatprep.subr.bf16.mxu0 %v2449
  %3654 = vmatpush1.bf16.msra.mxu0 %v2448
  %3655 = vmatprep.subr.bf16.mxu0 %v2465
  %3656 = vmatpush1.bf16.msra.mxu0 %v2464
  %3657 = vmatprep.subr.bf16.mxu0 %v2481
  %3658 = vmatpush1.bf16.msra.mxu0 %v2480
  %3659 = vmatprep.subr.bf16.mxu0 %v2497
  %3660 = vmatpush1.bf16.msra.mxu0 %v2496
  %3661 = vmatprep.subr.bf16.mxu0 %v2513
  %3662 = vmatpush1.bf16.msra.mxu0 %v2512
  %3663 = vmatprep.subr.bf16.mxu0 %v2529
  %3664 = vmatpush1.bf16.msra.mxu0 %v2528
  %3665 = vmatprep.subr.bf16.mxu0 %v2545
  %3666 = vmatpush1.bf16.msra.mxu0 %v2544
  %3667 = vmatprep.subr.bf16.mxu0 %v2561
  %3668 = vmatpush1.bf16.msra.mxu0 %v2560
  %3669 = vmatprep.subr.bf16.mxu0 %v2577
  %3670 = vmatpush1.bf16.msra.mxu0 %v2576
  %3671 = vmatprep.subr.bf16.mxu0 %v2593
  %3672 = vmatpush1.bf16.msra.mxu0 %v2592
  %3673 = vmatprep.mubr.bf16.mxu0 %v543
  %3674 = vmatmul.mubr.bf16.gmra.mrb[0].mxu0 %v542
  %v3675 = vpop.f32.mrb[0].mxu0
  %v3676 = vadd.f32 %v3635, %v3675
  %v3677 = vpop.f32.mrb[0].mxu0
  %v3678 = vadd.f32 %v3637, %v3677
  %v3679 = vpop.f32.mrb[0].mxu0
  %v3680 = vpop.f32.mrb[0].mxu0
  %3681 = vdwg.mxu0
  %3682 = vmatprep.subr.bf16.mxu0 %v2099
  %3683 = vmatpush1.bf16.msra.mxu0 %v2098
  %3684 = vmatprep.subr.bf16.mxu0 %v2115
  %3685 = vmatpush1.bf16.msra.mxu0 %v2114
  %3686 = vmatprep.subr.bf16.mxu0 %v2131
  %3687 = vmatpush1.bf16.msra.mxu0 %v2130
  %3688 = vmatprep.subr.bf16.mxu0 %v2147
  %3689 = vmatpush1.bf16.msra.mxu0 %v2146
  %3690 = vmatprep.subr.bf16.mxu0 %v2163
  %3691 = vmatpush1.bf16.msra.mxu0 %v2162
  %3692 = vmatprep.subr.bf16.mxu0 %v2179
  %3693 = vmatpush1.bf16.msra.mxu0 %v2178
  %3694 = vmatprep.subr.bf16.mxu0 %v2195
  %3695 = vmatpush1.bf16.msra.mxu0 %v2194
  %3696 = vmatprep.subr.bf16.mxu0 %v2211
  %3697 = vmatpush1.bf16.msra.mxu0 %v2210
  %3698 = vmatprep.subr.bf16.mxu0 %v2227
  %3699 = vmatpush1.bf16.msra.mxu0 %v2226
  %3700 = vmatprep.subr.bf16.mxu0 %v2243
  %3701 = vmatpush1.bf16.msra.mxu0 %v2242
  %3702 = vmatprep.subr.bf16.mxu0 %v2259
  %3703 = vmatpush1.bf16.msra.mxu0 %v2258
  %3704 = vmatprep.subr.bf16.mxu0 %v2275
  %3705 = vmatpush1.bf16.msra.mxu0 %v2274
  %3706 = vmatprep.subr.bf16.mxu0 %v2291
  %3707 = vmatpush1.bf16.msra.mxu0 %v2290
  %3708 = vmatprep.subr.bf16.mxu0 %v2307
  %3709 = vmatpush1.bf16.msra.mxu0 %v2306
  %3710 = vmatprep.subr.bf16.mxu0 %v2323
  %3711 = vmatpush1.bf16.msra.mxu0 %v2322
  %3712 = vmatprep.subr.bf16.mxu0 %v2339
  %3713 = vmatpush1.bf16.msra.mxu0 %v2338
  %3714 = vmatprep.mubr.bf16.mxu0 %v541
  %3715 = vmatmul.mubr.bf16.gmra.mrb[0].mxu0 %v540
  %v3716 = vpop.f32.mrb[0].mxu0
  %v3717 = vadd.f32 %v532, %v3716
  %v3718 = vpop.f32.mrb[0].mxu0
  %v3719 = vadd.f32 %v532, %v3718
  %v3720 = vpop.f32.mrb[0].mxu0
  %v3721 = vpop.f32.mrb[0].mxu0
  %3722 = vdwg.mxu0
  %3723 = vmatprep.subr.bf16.mxu0 %v2355
  %3724 = vmatpush1.bf16.msra.mxu0 %v2354
  %3725 = vmatprep.subr.bf16.mxu0 %v2371
  %3726 = vmatpush1.bf16.msra.mxu0 %v2370
  %3727 = vmatprep.subr.bf16.mxu0 %v2387
  %3728 = vmatpush1.bf16.msra.mxu0 %v2386
  %3729 = vmatprep.subr.bf16.mxu0 %v2403
  %3730 = vmatpush1.bf16.msra.mxu0 %v2402
  %3731 = vmatprep.subr.bf16.mxu0 %v2419
  %3732 = vmatpush1.bf16.msra.mxu0 %v2418
  %3733 = vmatprep.subr.bf16.mxu0 %v2435
  %3734 = vmatpush1.bf16.msra.mxu0 %v2434
  %3735 = vmatprep.subr.bf16.mxu0 %v2451
  %3736 = vmatpush1.bf16.msra.mxu0 %v2450
  %3737 = vmatprep.subr.bf16.mxu0 %v2467
  %3738 = vmatpush1.bf16.msra.mxu0 %v2466
  %3739 = vmatprep.subr.bf16.mxu0 %v2483
  %3740 = vmatpush1.bf16.msra.mxu0 %v2482
  %3741 = vmatprep.subr.bf16.mxu0 %v2499
  %3742 = vmatpush1.bf16.msra.mxu0 %v2498
  %3743 = vmatprep.subr.bf16.mxu0 %v2515
  %3744 = vmatpush1.bf16.msra.mxu0 %v2514
  %3745 = vmatprep.subr.bf16.mxu0 %v2531
  %3746 = vmatpush1.bf16.msra.mxu0 %v2530
  %3747 = vmatprep.subr.bf16.mxu0 %v2547
  %3748 = vmatpush1.bf16.msra.mxu0 %v2546
  %3749 = vmatprep.subr.bf16.mxu0 %v2563
  %3750 = vmatpush1.bf16.msra.mxu0 %v2562
  %3751 = vmatprep.subr.bf16.mxu0 %v2579
  %3752 = vmatpush1.bf16.msra.mxu0 %v2578
  %3753 = vmatprep.subr.bf16.mxu0 %v2595
  %3754 = vmatpush1.bf16.msra.mxu0 %v2594
  %3755 = vmatprep.mubr.bf16.mxu0 %v543
  %3756 = vmatmul.mubr.bf16.gmra.mrb[0].mxu0 %v542
  %v3757 = vpop.f32.mrb[0].mxu0
  %v3758 = vadd.f32 %v3717, %v3757
  %v3759 = vpop.f32.mrb[0].mxu0
  %v3760 = vadd.f32 %v3719, %v3759
  %v3761 = vpop.f32.mrb[0].mxu0
  %v3762 = vpop.f32.mrb[0].mxu0
  %3763 = vdwg.mxu0
  %v3764 = vtanh.pop %v3184
  %v3765 = vtanh.pop %v3186
  %v3766 = vtanh.pop %v3266
  %v3767 = vtanh.pop %v3268
  %v3768 = vtanh.pop %v3348
  %v3769 = vtanh.pop %v3350
  %v3770 = vtanh.pop %v3430
  %v3771 = vtanh.pop %v3432
  %v3772 = vtanh.pop %v3512
  %v3773 = vtanh.pop %v3514
  %v3774 = vtanh.pop %v3594
  %v3775 = vtanh.pop %v3596
  %v3776 = vtanh.pop %v3676
  %v3777 = vtanh.pop %v3678
  %v3778 = vtanh.pop %v3758
  %v3779 = vtanh.pop %v3760
  %v3780 = vpack.c.bf16 %v3764, %v3764
  %v3781 = vpack.c.bf16 %v3765, %v3765
  %v3782 = vpack.c.bf16 %v3766, %v3766
  %v3783 = vpack.c.bf16 %v3767, %v3767
  %v3784 = vpack.c.bf16 %v3768, %v3768
  %v3785 = vpack.c.bf16 %v3769, %v3769
  %v3786 = vpack.c.bf16 %v3770, %v3770
  %v3787 = vpack.c.bf16 %v3771, %v3771
  %v3788 = vpack.c.bf16 %v3772, %v3772
  %v3789 = vpack.c.bf16 %v3773, %v3773
  %v3790 = vpack.c.bf16 %v3774, %v3774
  %v3791 = vpack.c.bf16 %v3775, %v3775
  %v3792 = vpack.c.bf16 %v3776, %v3776
  %v3793 = vpack.c.bf16 %v3777, %v3777
  %v3794 = vpack.c.bf16 %v3778, %v3778
  %v3795 = vpack.c.bf16 %v3779, %v3779
  %v3812 = vunpack.c.l.b16 %v3780
  %v3813 = vunpack.c.l.b16 %v3781
  %v3814 = vunpack.c.l.b16 %v3782
  %v3815 = vunpack.c.l.b16 %v3783
  %v3816 = vunpack.c.l.b16 %v3784
  %v3817 = vunpack.c.l.b16 %v3785
  %v3818 = vunpack.c.l.b16 %v3786
  %v3819 = vunpack.c.l.b16 %v3787
  %v3820 = vunpack.c.l.b16 %v3788
  %v3821 = vunpack.c.l.b16 %v3789
  %v3822 = vunpack.c.l.b16 %v3790
  %v3823 = vunpack.c.l.b16 %v3791
  %v3824 = vunpack.c.l.b16 %v3792
  %v3825 = vunpack.c.l.b16 %v3793
  %v3826 = vunpack.c.l.b16 %v3794
  %v3827 = vunpack.c.l.b16 %v3795
  %v3828 = vpack.c.b16 %v3813, %v3812
  %v3829 = vpack.c.b16 %v3815, %v3814
  %v3830 = vpack.c.b16 %v3817, %v3816
  %v3831 = vpack.c.b16 %v3819, %v3818
  %v3832 = vpack.c.b16 %v3821, %v3820
  %v3833 = vpack.c.b16 %v3823, %v3822
  %v3834 = vpack.c.b16 %v3825, %v3824
  %v3835 = vpack.c.b16 %v3827, %v3826
  %3844 = vst [vmem:[%s3] sm:$0xff] %v3828
  %3845 = vst [vmem:[%s3 + $0x8] sm:$0xff] %v3829
  %3846 = vst [vmem:[%s3 + $0x10] sm:$0xff] %v3830
  %3847 = vst [vmem:[%s3 + $0x18] sm:$0xff] %v3831
  %3848 = vst [vmem:[%s3 + $0x20] sm:$0xff] %v3832
  %3849 = vst [vmem:[%s3 + $0x28] sm:$0xff] %v3833
  %3850 = vst [vmem:[%s3 + $0x30] sm:$0xff] %v3834
  %3851 = vst [vmem:[%s3 + $0x38] sm:$0xff] %v3835
  // Predicated region
  $region14: #{local_enhancer_forward.33} parent=0 // pred_check
    _
  $region15: #{local_enhancer_forward.33} parent=0 // pred_check_branch
    %3853 = sbr.rel (0) target = $region17
  $region16: #{local_enhancer_forward.33} parent=0 // pred_region
    _
  $region17: #{local_enhancer_forward.33} parent=0 // pred_fallthru
    _
  // Predicated region
  $region18: #{local_enhancer_forward.33} parent=0 // pred_check
    _
  $region19: #{local_enhancer_forward.33} parent=0 // pred_check_branch
    %3855 = sbr.rel (0) target = $region21
  $region20: #{local_enhancer_forward.33} parent=0 // pred_region
    _
  $region21: #{local_enhancer_forward.33} parent=0 // pred_fallthru
    _

</llo_original>
